<compile_context>
chip_gen: v7x
topology: tpu7x:2x2x1
jax: 0.10.0
libtpu: 0.0.40
codegen_flags: <defaults>
</compile_context>

<pallas_src>
import jax
import jax.numpy as jnp
import numpy as np
from jax.experimental import pallas as pl
from jax.experimental.pallas import tpu as pltpu

D_MODEL = 256      # nn.Linear(input_dim, 256)
D_FF = 2048        # TransformerEncoderLayer default dim_feedforward
N_LAYERS = 3       # num_layers=3
N_HEADS = 8        # nhead=8 (head_dim=32); numerically irrelevant for seq_len=1
LN_EPS = 1e-5      # PyTorch LayerNorm default eps

BF16 = jnp.bfloat16


def _round_up(v, m):
    return ((v + m - 1) // m) * m


def _layer_norm(x, gamma, beta):
    mu = jnp.mean(x, axis=-1, keepdims=True)
    var = jnp.mean((x - mu) ** 2, axis=-1, keepdims=True)
    return (x - mu) * jax.lax.rsqrt(var + LN_EPS) * gamma + beta


def transformer_kernel(x_ref, w_emb_ref, b_emb_ref,
                       wv_ref, bv_ref, wo_ref, bo_ref,
                       ln1g_ref, ln1b_ref,
                       w1_ref, b1_ref, w2_ref, b2_ref,
                       ln2g_ref, ln2b_ref,
                       wc_ref, bc_ref,
                       out_ref):
    # Embedding: (tm, in_pad) @ (in_pad, D_MODEL) -> f32
    h = (jnp.dot(x_ref[...], w_emb_ref[...],
                 preferred_element_type=jnp.float32) + b_emb_ref[...])

    # Encoder layers: unrolled (static) loop, all weights VMEM-resident.
    for l in range(N_LAYERS):
        # Self-attention, seq_len == 1: softmax weight is exactly 1.0,
        # so attention output == out_proj(v_proj(h)) exactly.
        v = jnp.dot(h.astype(BF16), wv_ref[l],
                    preferred_element_type=jnp.float32) + bv_ref[l]
        attn = jnp.dot(v.astype(BF16), wo_ref[l],
                       preferred_element_type=jnp.float32) + bo_ref[l]
        h = _layer_norm(h + attn, ln1g_ref[l], ln1b_ref[l])  # post-norm (default)

        # Feed-forward: Linear(256,2048) -> ReLU -> Linear(2048,256)
        ff = jnp.maximum(
            jnp.dot(h.astype(BF16), w1_ref[l],
                    preferred_element_type=jnp.float32) + b1_ref[l],
            0.0).astype(BF16)                       # bf16 intermediate (2x smaller)
        ff = jnp.dot(ff, w2_ref[l],
                     preferred_element_type=jnp.float32) + b2_ref[l]
        h = _layer_norm(h + ff, ln2g_ref[l], ln2b_ref[l])

    # Classifier head -> lane-dense padded output (unmasked vst).
    out = jnp.dot(h.astype(BF16), wc_ref[...],
                  preferred_element_type=jnp.float32) + bc_ref[...]
    out_ref[...] = out.astype(out_ref.dtype)


def prepare_params(params, input_dim, n_classes):
    """One-time padding / transposition / bf16 cast of the weights.

    Done once at init (NOT per forward call) so the per-call wrapper does no
    weight-sized HBM traffic.
    """
    in_pad = _round_up(max(input_dim, 128), 128)
    nc_pad = _round_up(max(n_classes, 128), 128)

    prepared = dict(
        in_pad=in_pad, nc_pad=nc_pad,
        input_dim=input_dim, n_classes=n_classes,
        # bf16 matmul weights (f32 MXU accumulation); biases / LN stay f32.
        w_emb=jnp.pad(params["w_emb"],
                      ((0, in_pad - input_dim), (0, 0))).astype(BF16),
        b_emb=params["b_emb"],
        wv=params["wv"].astype(BF16), bv=params["bv"],
        wo=params["wo"].astype(BF16), bo=params["bo"],
        ln1g=params["ln1g"], ln1b=params["ln1b"],
        w1=params["w1"].astype(BF16), b1=params["b1"],
        w2=params["w2"].astype(BF16), b2=params["b2"],
        ln2g=params["ln2g"], ln2b=params["ln2b"],
        wc=jnp.pad(params["wc"],
                   ((0, 0), (0, nc_pad - n_classes))).astype(BF16),
        bc=jnp.pad(params["bc"], ((0, 0), (0, nc_pad - n_classes))),
    )
    return prepared


def _pick_row_tile(n):
    """Row tile: big tiles for large batches, >=2 tiles when possible so v7x's
    two TensorCores both get work (row axis is 'parallel')."""
    if n <= 8:
        return _round_up(n, 8)
    if n < 256:
        return _round_up(pl.cdiv(n, 2), 8)         # 2 tiles, 8-aligned
    if n < 1024:
        return _round_up(pl.cdiv(n, 2), 128)       # 2 tiles, 128-aligned (MXU M)
    return 512


def simple_transformer_forward(x, p):
    n, input_dim = x.shape
    assert input_dim == p["input_dim"]
    in_pad, nc_pad = p["in_pad"], p["nc_pad"]
    n_classes = p["n_classes"]

    tm = _pick_row_tile(n)
    n_pad = _round_up(n, tm)

    xp = jnp.pad(x, ((0, n_pad - n), (0, in_pad - input_dim))).astype(BF16)

    grid = (n_pad // tm,)

    def const_spec(*shape):          # whole array, VMEM-resident across the grid
        nd = len(shape)
        return pl.BlockSpec(shape, lambda i, _n=nd: (0,) * _n)

    in_specs = [
        pl.BlockSpec((tm, in_pad), lambda i: (i, 0)),              # x rows
        const_spec(in_pad, D_MODEL), const_spec(1, D_MODEL),       # embedding W, b
        const_spec(N_LAYERS, D_MODEL, D_MODEL),                    # Wv
        const_spec(N_LAYERS, 1, D_MODEL),                          # bv
        const_spec(N_LAYERS, D_MODEL, D_MODEL),                    # Wo
        const_spec(N_LAYERS, 1, D_MODEL),                          # bo
        const_spec(N_LAYERS, 1, D_MODEL),                          # ln1 gamma
        const_spec(N_LAYERS, 1, D_MODEL),                          # ln1 beta
        const_spec(N_LAYERS, D_MODEL, D_FF),                       # W1
        const_spec(N_LAYERS, 1, D_FF),                             # b1
        const_spec(N_LAYERS, D_FF, D_MODEL),                       # W2
        const_spec(N_LAYERS, 1, D_MODEL),                          # b2
        const_spec(N_LAYERS, 1, D_MODEL),                          # ln2 gamma
        const_spec(N_LAYERS, 1, D_MODEL),                          # ln2 beta
        const_spec(D_MODEL, nc_pad), const_spec(1, nc_pad),        # classifier W, b
    ]

    out = pl.pallas_call(
        transformer_kernel,
        out_shape=jax.ShapeDtypeStruct((n_pad, nc_pad), jnp.float32),
        grid=grid,
        in_specs=in_specs,
        out_specs=pl.BlockSpec((tm, nc_pad), lambda i: (i, 0)),
        compiler_params=pltpu.CompilerParams(
            dimension_semantics=("parallel",),
            vmem_limit_bytes=48 << 20),   # ~15 MiB weights + <10 MiB live -> safe on v7x 64 MiB
    )(xp, p["w_emb"], p["b_emb"],
      p["wv"], p["bv"], p["wo"], p["bo"],
      p["ln1g"], p["ln1b"],
      p["w1"], p["b1"], p["w2"], p["b2"],
      p["ln2g"], p["ln2b"],
      p["wc"], p["bc"])
    return out[:n, :n_classes]


def init_params(key, input_dim, n_classes):
    ks = jax.random.split(key, 12)
    scale = 0.02

    def rnd(k, shape):
        return jax.random.normal(k, shape, jnp.float32) * scale

    return dict(
        w_emb=rnd(ks[0], (input_dim, D_MODEL)),
        b_emb=rnd(ks[1], (1, D_MODEL)),
        wv=rnd(ks[2], (N_LAYERS, D_MODEL, D_MODEL)),
        bv=rnd(ks[3], (N_LAYERS, 1, D_MODEL)),
        wo=rnd(ks[4], (N_LAYERS, D_MODEL, D_MODEL)),
        bo=rnd(ks[5], (N_LAYERS, 1, D_MODEL)),
        ln1g=jnp.ones((N_LAYERS, 1, D_MODEL), jnp.float32),
        ln1b=jnp.zeros((N_LAYERS, 1, D_MODEL), jnp.float32),
        w1=rnd(ks[6], (N_LAYERS, D_MODEL, D_FF)),
        b1=rnd(ks[7], (N_LAYERS, 1, D_FF)),
        w2=rnd(ks[8], (N_LAYERS, D_FF, D_MODEL)),
        b2=rnd(ks[9], (N_LAYERS, 1, D_MODEL)),
        ln2g=jnp.ones((N_LAYERS, 1, D_MODEL), jnp.float32),
        ln2b=jnp.zeros((N_LAYERS, 1, D_MODEL), jnp.float32),
        wc=rnd(ks[10], (D_MODEL, n_classes)),
        bc=rnd(ks[11], (1, n_classes)),
    )


def reference_forward(x, p):
    """Pure-JAX reference of the same math (eval-mode PyTorch semantics),
    mirroring the kernel's bf16 matmul operands with f32 accumulation."""
    def mm(a, w):
        return jnp.dot(a.astype(BF16), w.astype(BF16),
                       preferred_element_type=jnp.float32)

    h = mm(x, p["w_emb"]) + p["b_emb"]
    for l in range(N_LAYERS):
        v = mm(h, p["wv"][l]) + p["bv"][l]
        attn = mm(v, p["wo"][l]) + p["bo"][l]
        h = _layer_norm(h + attn, p["ln1g"][l], p["ln1b"][l])
        ff = jnp.maximum(mm(h, p["w1"][l]) + p["b1"][l], 0.0).astype(BF16)
        ff = mm(ff, p["w2"][l]) + p["b2"][l]
        h = _layer_norm(h + ff, p["ln2g"][l], p["ln2b"][l])
    return mm(h, p["wc"]) + p["bc"]


if __name__ == "__main__":
    key = jax.random.PRNGKey(0)
    k_x, k_p = jax.random.split(key)

    N, INPUT_DIM, N_CLASSES = 8, 32, 5   # small NSL-KDD-like shapes
    x = jax.random.normal(k_x, (N, INPUT_DIM), jnp.float32)
    params = init_params(k_p, INPUT_DIM, N_CLASSES)

    prepared = prepare_params(params, INPUT_DIM, N_CLASSES)   # one-time pad/cast

    out = simple_transformer_forward(x, prepared)
    out = jax.block_until_ready(out)
    assert out.shape == (N, N_CLASSES)

    ref = reference_forward(x, params)
    np.testing.assert_allclose(np.asarray(out), np.asarray(ref),
                               rtol=2e-2, atol=2e-2)
    print("KERNEL_OK")
</pallas_src>

<mosaic_0001>
module attributes {stable_mosaic.version = 11 : i64} {
  func.func @transformer_kernel(%arg0: i32, %arg1: memref<8x128xbf16, #tpu.memory_space<vmem>>, %arg2: memref<128x256xbf16, #tpu.memory_space<vmem>>, %arg3: memref<1x256xf32, #tpu.memory_space<vmem>>, %arg4: memref<3x256x256xbf16, #tpu.memory_space<vmem>>, %arg5: memref<3x1x256xf32, #tpu.memory_space<vmem>>, %arg6: memref<3x256x256xbf16, #tpu.memory_space<vmem>>, %arg7: memref<3x1x256xf32, #tpu.memory_space<vmem>>, %arg8: memref<3x1x256xf32, #tpu.memory_space<vmem>>, %arg9: memref<3x1x256xf32, #tpu.memory_space<vmem>>, %arg10: memref<3x256x2048xbf16, #tpu.memory_space<vmem>>, %arg11: memref<3x1x2048xf32, #tpu.memory_space<vmem>>, %arg12: memref<3x2048x256xbf16, #tpu.memory_space<vmem>>, %arg13: memref<3x1x256xf32, #tpu.memory_space<vmem>>, %arg14: memref<3x1x256xf32, #tpu.memory_space<vmem>>, %arg15: memref<3x1x256xf32, #tpu.memory_space<vmem>>, %arg16: memref<256x128xbf16, #tpu.memory_space<vmem>>, %arg17: memref<1x128xf32, #tpu.memory_space<vmem>>, %arg18: memref<8x128xf32, #tpu.memory_space<vmem>>) attributes {dimension_semantics = [#tpu.dimension_semantics<parallel>], iteration_bounds = array<i64: 1>, scalar_prefetch = 0 : i64, scratch_operands = 0 : i64, tpu.core_type = #tpu.core_type<tc>, window_params = [{transform_indices = @transform_0, window_bounds = array<i64: 8, 128>}, {pipeline_mode = #tpu.pipeline_mode<synchronous>, transform_indices = @transform_1, window_bounds = array<i64: 128, 256>}, {pipeline_mode = #tpu.pipeline_mode<synchronous>, transform_indices = @transform_2, window_bounds = array<i64: 1, 256>}, {pipeline_mode = #tpu.pipeline_mode<synchronous>, transform_indices = @transform_3, window_bounds = array<i64: 3, 256, 256>}, {pipeline_mode = #tpu.pipeline_mode<synchronous>, transform_indices = @transform_4, window_bounds = array<i64: 3, 1, 256>}, {pipeline_mode = #tpu.pipeline_mode<synchronous>, transform_indices = @transform_5, window_bounds = array<i64: 3, 256, 256>}, {pipeline_mode = #tpu.pipeline_mode<synchronous>, transform_indices = @transform_6, window_bounds = array<i64: 3, 1, 256>}, {pipeline_mode = #tpu.pipeline_mode<synchronous>, transform_indices = @transform_7, window_bounds = array<i64: 3, 1, 256>}, {pipeline_mode = #tpu.pipeline_mode<synchronous>, transform_indices = @transform_8, window_bounds = array<i64: 3, 1, 256>}, {pipeline_mode = #tpu.pipeline_mode<synchronous>, transform_indices = @transform_9, window_bounds = array<i64: 3, 256, 2048>}, {pipeline_mode = #tpu.pipeline_mode<synchronous>, transform_indices = @transform_10, window_bounds = array<i64: 3, 1, 2048>}, {pipeline_mode = #tpu.pipeline_mode<synchronous>, transform_indices = @transform_11, window_bounds = array<i64: 3, 2048, 256>}, {pipeline_mode = #tpu.pipeline_mode<synchronous>, transform_indices = @transform_12, window_bounds = array<i64: 3, 1, 256>}, {pipeline_mode = #tpu.pipeline_mode<synchronous>, transform_indices = @transform_13, window_bounds = array<i64: 3, 1, 256>}, {pipeline_mode = #tpu.pipeline_mode<synchronous>, transform_indices = @transform_14, window_bounds = array<i64: 3, 1, 256>}, {pipeline_mode = #tpu.pipeline_mode<synchronous>, transform_indices = @transform_15, window_bounds = array<i64: 256, 128>}, {pipeline_mode = #tpu.pipeline_mode<synchronous>, transform_indices = @transform_16, window_bounds = array<i64: 1, 128>}, {transform_indices = @transform_17, window_bounds = array<i64: 8, 128>}]} {
    %c0 = arith.constant 0 : index
    %c0_0 = arith.constant 0 : index
    %0 = vector.load %arg1[%c0, %c0_0] : memref<8x128xbf16, #tpu.memory_space<vmem>>, vector<8x128xbf16>
    %c0_1 = arith.constant 0 : index
    %c0_2 = arith.constant 0 : index
    %1 = vector.load %arg2[%c0_1, %c0_2] : memref<128x256xbf16, #tpu.memory_space<vmem>>, vector<128x256xbf16>
    %cst = arith.constant dense<0.000000e+00> : vector<8x256xf32>
    %2 = tpu.matmul %0, %1, %cst {dimension_numbers = #tpu.dot_dimension_numbers<[1], [0], [0], [1], [0, 0, 1, 1], [], []>} : vector<8x128xbf16>, vector<128x256xbf16>, vector<8x256xf32> -> vector<8x256xf32>
    %c0_3 = arith.constant 0 : index
    %c0_4 = arith.constant 0 : index
    %3 = vector.load %arg3[%c0_3, %c0_4] : memref<1x256xf32, #tpu.memory_space<vmem>>, vector<1x256xf32>
    %4 = vector.broadcast %3 : vector<1x256xf32> to vector<8x256xf32>
    %5 = arith.addf %2, %4 : vector<8x256xf32>
    %6 = arith.truncf %5 : vector<8x256xf32> to vector<8x256xbf16>
    %c0_5 = arith.constant 0 : index
    %c0_6 = arith.constant 0 : index
    %c0_7 = arith.constant 0 : index
    %7 = vector.load %arg4[%c0_5, %c0_6, %c0_7] : memref<3x256x256xbf16, #tpu.memory_space<vmem>>, vector<1x256x256xbf16>
    %8 = vector.shape_cast %7 : vector<1x256x256xbf16> to vector<256x256xbf16>
    %cst_8 = arith.constant dense<0.000000e+00> : vector<8x256xf32>
    %9 = tpu.matmul %6, %8, %cst_8 {dimension_numbers = #tpu.dot_dimension_numbers<[1], [0], [0], [1], [0, 0, 1, 1], [], []>} : vector<8x256xbf16>, vector<256x256xbf16>, vector<8x256xf32> -> vector<8x256xf32>
    %c0_9 = arith.constant 0 : index
    %c0_10 = arith.constant 0 : index
    %c0_11 = arith.constant 0 : index
    %10 = vector.load %arg5[%c0_9, %c0_10, %c0_11] : memref<3x1x256xf32, #tpu.memory_space<vmem>>, vector<1x1x256xf32>
    %11 = vector.shape_cast %10 : vector<1x1x256xf32> to vector<1x256xf32>
    %12 = vector.broadcast %11 : vector<1x256xf32> to vector<8x256xf32>
    %13 = arith.addf %9, %12 : vector<8x256xf32>
    %14 = arith.truncf %13 : vector<8x256xf32> to vector<8x256xbf16>
    %c0_12 = arith.constant 0 : index
    %c0_13 = arith.constant 0 : index
    %c0_14 = arith.constant 0 : index
    %15 = vector.load %arg6[%c0_12, %c0_13, %c0_14] : memref<3x256x256xbf16, #tpu.memory_space<vmem>>, vector<1x256x256xbf16>
    %16 = vector.shape_cast %15 : vector<1x256x256xbf16> to vector<256x256xbf16>
    %cst_15 = arith.constant dense<0.000000e+00> : vector<8x256xf32>
    %17 = tpu.matmul %14, %16, %cst_15 {dimension_numbers = #tpu.dot_dimension_numbers<[1], [0], [0], [1], [0, 0, 1, 1], [], []>} : vector<8x256xbf16>, vector<256x256xbf16>, vector<8x256xf32> -> vector<8x256xf32>
    %c0_16 = arith.constant 0 : index
    %c0_17 = arith.constant 0 : index
    %c0_18 = arith.constant 0 : index
    %18 = vector.load %arg7[%c0_16, %c0_17, %c0_18] : memref<3x1x256xf32, #tpu.memory_space<vmem>>, vector<1x1x256xf32>
    %19 = vector.shape_cast %18 : vector<1x1x256xf32> to vector<1x256xf32>
    %20 = vector.broadcast %19 : vector<1x256xf32> to vector<8x256xf32>
    %21 = arith.addf %17, %20 : vector<8x256xf32>
    %22 = arith.addf %5, %21 : vector<8x256xf32>
    %c0_19 = arith.constant 0 : index
    %c0_20 = arith.constant 0 : index
    %c0_21 = arith.constant 0 : index
    %23 = vector.load %arg8[%c0_19, %c0_20, %c0_21] : memref<3x1x256xf32, #tpu.memory_space<vmem>>, vector<1x1x256xf32>
    %24 = vector.shape_cast %23 : vector<1x1x256xf32> to vector<1x256xf32>
    %c0_22 = arith.constant 0 : index
    %c0_23 = arith.constant 0 : index
    %c0_24 = arith.constant 0 : index
    %25 = vector.load %arg9[%c0_22, %c0_23, %c0_24] : memref<3x1x256xf32, #tpu.memory_space<vmem>>, vector<1x1x256xf32>
    %26 = vector.shape_cast %25 : vector<1x1x256xf32> to vector<1x256xf32>
    %cst_25 = arith.constant dense<0.000000e+00> : vector<8xf32>
    %27 = vector.multi_reduction <add>, %22, %cst_25 [1] : vector<8x256xf32> to vector<8xf32>
    %28 = vector.shape_cast %27 : vector<8xf32> to vector<8x1xf32>
    %cst_26 = arith.constant 2.560000e+02 : f32
    %29 = vector.broadcast %cst_26 : f32 to vector<8x1xf32>
    %30 = arith.divf %28, %29 : vector<8x1xf32>
    %31 = vector.broadcast %30 : vector<8x1xf32> to vector<8x256xf32>
    %32 = arith.subf %22, %31 : vector<8x256xf32>
    %33 = arith.mulf %32, %32 : vector<8x256xf32>
    %cst_27 = arith.constant dense<0.000000e+00> : vector<8xf32>
    %34 = vector.multi_reduction <add>, %33, %cst_27 [1] : vector<8x256xf32> to vector<8xf32>
    %35 = vector.shape_cast %34 : vector<8xf32> to vector<8x1xf32>
    %cst_28 = arith.constant 2.560000e+02 : f32
    %36 = vector.broadcast %cst_28 : f32 to vector<8x1xf32>
    %37 = arith.divf %35, %36 : vector<8x1xf32>
    %38 = vector.broadcast %30 : vector<8x1xf32> to vector<8x256xf32>
    %39 = arith.subf %22, %38 : vector<8x256xf32>
    %cst_29 = arith.constant 9.99999974E-6 : f32
    %40 = vector.broadcast %cst_29 : f32 to vector<8x1xf32>
    %41 = arith.addf %37, %40 : vector<8x1xf32>
    %42 = math.rsqrt %41 : vector<8x1xf32>
    %43 = vector.broadcast %42 : vector<8x1xf32> to vector<8x256xf32>
    %44 = arith.mulf %39, %43 : vector<8x256xf32>
    %45 = vector.broadcast %24 : vector<1x256xf32> to vector<8x256xf32>
    %46 = arith.mulf %44, %45 : vector<8x256xf32>
    %47 = vector.broadcast %26 : vector<1x256xf32> to vector<8x256xf32>
    %48 = arith.addf %46, %47 : vector<8x256xf32>
    %49 = arith.truncf %48 : vector<8x256xf32> to vector<8x256xbf16>
    %c0_30 = arith.constant 0 : index
    %c0_31 = arith.constant 0 : index
    %c0_32 = arith.constant 0 : index
    %50 = vector.load %arg10[%c0_30, %c0_31, %c0_32] : memref<3x256x2048xbf16, #tpu.memory_space<vmem>>, vector<1x256x2048xbf16>
    %51 = vector.shape_cast %50 : vector<1x256x2048xbf16> to vector<256x2048xbf16>
    %cst_33 = arith.constant dense<0.000000e+00> : vector<8x2048xf32>
    %52 = tpu.matmul %49, %51, %cst_33 {dimension_numbers = #tpu.dot_dimension_numbers<[1], [0], [0], [1], [0, 0, 1, 1], [], []>} : vector<8x256xbf16>, vector<256x2048xbf16>, vector<8x2048xf32> -> vector<8x2048xf32>
    %c0_34 = arith.constant 0 : index
    %c0_35 = arith.constant 0 : index
    %c0_36 = arith.constant 0 : index
    %53 = vector.load %arg11[%c0_34, %c0_35, %c0_36] : memref<3x1x2048xf32, #tpu.memory_space<vmem>>, vector<1x1x2048xf32>
    %54 = vector.shape_cast %53 : vector<1x1x2048xf32> to vector<1x2048xf32>
    %55 = vector.broadcast %54 : vector<1x2048xf32> to vector<8x2048xf32>
    %56 = arith.addf %52, %55 : vector<8x2048xf32>
    %cst_37 = arith.constant 0.000000e+00 : f32
    %57 = vector.broadcast %cst_37 : f32 to vector<8x2048xf32>
    %58 = arith.maximumf %56, %57 : vector<8x2048xf32>
    %59 = arith.truncf %58 : vector<8x2048xf32> to vector<8x2048xbf16>
    %c0_38 = arith.constant 0 : index
    %c0_39 = arith.constant 0 : index
    %c0_40 = arith.constant 0 : index
    %60 = vector.load %arg12[%c0_38, %c0_39, %c0_40] : memref<3x2048x256xbf16, #tpu.memory_space<vmem>>, vector<1x2048x256xbf16>
    %61 = vector.shape_cast %60 : vector<1x2048x256xbf16> to vector<2048x256xbf16>
    %cst_41 = arith.constant dense<0.000000e+00> : vector<8x256xf32>
    %62 = tpu.matmul %59, %61, %cst_41 {dimension_numbers = #tpu.dot_dimension_numbers<[1], [0], [0], [1], [0, 0, 1, 1], [], []>} : vector<8x2048xbf16>, vector<2048x256xbf16>, vector<8x256xf32> -> vector<8x256xf32>
    %c0_42 = arith.constant 0 : index
    %c0_43 = arith.constant 0 : index
    %c0_44 = arith.constant 0 : index
    %63 = vector.load %arg13[%c0_42, %c0_43, %c0_44] : memref<3x1x256xf32, #tpu.memory_space<vmem>>, vector<1x1x256xf32>
    %64 = vector.shape_cast %63 : vector<1x1x256xf32> to vector<1x256xf32>
    %65 = vector.broadcast %64 : vector<1x256xf32> to vector<8x256xf32>
    %66 = arith.addf %62, %65 : vector<8x256xf32>
    %67 = arith.addf %48, %66 : vector<8x256xf32>
    %c0_45 = arith.constant 0 : index
    %c0_46 = arith.constant 0 : index
    %c0_47 = arith.constant 0 : index
    %68 = vector.load %arg14[%c0_45, %c0_46, %c0_47] : memref<3x1x256xf32, #tpu.memory_space<vmem>>, vector<1x1x256xf32>
    %69 = vector.shape_cast %68 : vector<1x1x256xf32> to vector<1x256xf32>
    %c0_48 = arith.constant 0 : index
    %c0_49 = arith.constant 0 : index
    %c0_50 = arith.constant 0 : index
    %70 = vector.load %arg15[%c0_48, %c0_49, %c0_50] : memref<3x1x256xf32, #tpu.memory_space<vmem>>, vector<1x1x256xf32>
    %71 = vector.shape_cast %70 : vector<1x1x256xf32> to vector<1x256xf32>
    %cst_51 = arith.constant dense<0.000000e+00> : vector<8xf32>
    %72 = vector.multi_reduction <add>, %67, %cst_51 [1] : vector<8x256xf32> to vector<8xf32>
    %73 = vector.shape_cast %72 : vector<8xf32> to vector<8x1xf32>
    %cst_52 = arith.constant 2.560000e+02 : f32
    %74 = vector.broadcast %cst_52 : f32 to vector<8x1xf32>
    %75 = arith.divf %73, %74 : vector<8x1xf32>
    %76 = vector.broadcast %75 : vector<8x1xf32> to vector<8x256xf32>
    %77 = arith.subf %67, %76 : vector<8x256xf32>
    %78 = arith.mulf %77, %77 : vector<8x256xf32>
    %cst_53 = arith.constant dense<0.000000e+00> : vector<8xf32>
    %79 = vector.multi_reduction <add>, %78, %cst_53 [1] : vector<8x256xf32> to vector<8xf32>
    %80 = vector.shape_cast %79 : vector<8xf32> to vector<8x1xf32>
    %cst_54 = arith.constant 2.560000e+02 : f32
    %81 = vector.broadcast %cst_54 : f32 to vector<8x1xf32>
    %82 = arith.divf %80, %81 : vector<8x1xf32>
    %83 = vector.broadcast %75 : vector<8x1xf32> to vector<8x256xf32>
    %84 = arith.subf %67, %83 : vector<8x256xf32>
    %cst_55 = arith.constant 9.99999974E-6 : f32
    %85 = vector.broadcast %cst_55 : f32 to vector<8x1xf32>
    %86 = arith.addf %82, %85 : vector<8x1xf32>
    %87 = math.rsqrt %86 : vector<8x1xf32>
    %88 = vector.broadcast %87 : vector<8x1xf32> to vector<8x256xf32>
    %89 = arith.mulf %84, %88 : vector<8x256xf32>
    %90 = vector.broadcast %69 : vector<1x256xf32> to vector<8x256xf32>
    %91 = arith.mulf %89, %90 : vector<8x256xf32>
    %92 = vector.broadcast %71 : vector<1x256xf32> to vector<8x256xf32>
    %93 = arith.addf %91, %92 : vector<8x256xf32>
    %94 = arith.truncf %93 : vector<8x256xf32> to vector<8x256xbf16>
    %c1 = arith.constant 1 : index
    %c0_56 = arith.constant 0 : index
    %c0_57 = arith.constant 0 : index
    %95 = vector.load %arg4[%c1, %c0_56, %c0_57] : memref<3x256x256xbf16, #tpu.memory_space<vmem>>, vector<1x256x256xbf16>
    %96 = vector.shape_cast %95 : vector<1x256x256xbf16> to vector<256x256xbf16>
    %cst_58 = arith.constant dense<0.000000e+00> : vector<8x256xf32>
    %97 = tpu.matmul %94, %96, %cst_58 {dimension_numbers = #tpu.dot_dimension_numbers<[1], [0], [0], [1], [0, 0, 1, 1], [], []>} : vector<8x256xbf16>, vector<256x256xbf16>, vector<8x256xf32> -> vector<8x256xf32>
    %c1_59 = arith.constant 1 : index
    %c0_60 = arith.constant 0 : index
    %c0_61 = arith.constant 0 : index
    %98 = vector.load %arg5[%c1_59, %c0_60, %c0_61] : memref<3x1x256xf32, #tpu.memory_space<vmem>>, vector<1x1x256xf32>
    %99 = vector.shape_cast %98 : vector<1x1x256xf32> to vector<1x256xf32>
    %100 = vector.broadcast %99 : vector<1x256xf32> to vector<8x256xf32>
    %101 = arith.addf %97, %100 : vector<8x256xf32>
    %102 = arith.truncf %101 : vector<8x256xf32> to vector<8x256xbf16>
    %c1_62 = arith.constant 1 : index
    %c0_63 = arith.constant 0 : index
    %c0_64 = arith.constant 0 : index
    %103 = vector.load %arg6[%c1_62, %c0_63, %c0_64] : memref<3x256x256xbf16, #tpu.memory_space<vmem>>, vector<1x256x256xbf16>
    %104 = vector.shape_cast %103 : vector<1x256x256xbf16> to vector<256x256xbf16>
    %cst_65 = arith.constant dense<0.000000e+00> : vector<8x256xf32>
    %105 = tpu.matmul %102, %104, %cst_65 {dimension_numbers = #tpu.dot_dimension_numbers<[1], [0], [0], [1], [0, 0, 1, 1], [], []>} : vector<8x256xbf16>, vector<256x256xbf16>, vector<8x256xf32> -> vector<8x256xf32>
    %c1_66 = arith.constant 1 : index
    %c0_67 = arith.constant 0 : index
    %c0_68 = arith.constant 0 : index
    %106 = vector.load %arg7[%c1_66, %c0_67, %c0_68] : memref<3x1x256xf32, #tpu.memory_space<vmem>>, vector<1x1x256xf32>
    %107 = vector.shape_cast %106 : vector<1x1x256xf32> to vector<1x256xf32>
    %108 = vector.broadcast %107 : vector<1x256xf32> to vector<8x256xf32>
    %109 = arith.addf %105, %108 : vector<8x256xf32>
    %110 = arith.addf %93, %109 : vector<8x256xf32>
    %c1_69 = arith.constant 1 : index
    %c0_70 = arith.constant 0 : index
    %c0_71 = arith.constant 0 : index
    %111 = vector.load %arg8[%c1_69, %c0_70, %c0_71] : memref<3x1x256xf32, #tpu.memory_space<vmem>>, vector<1x1x256xf32>
    %112 = vector.shape_cast %111 : vector<1x1x256xf32> to vector<1x256xf32>
    %c1_72 = arith.constant 1 : index
    %c0_73 = arith.constant 0 : index
    %c0_74 = arith.constant 0 : index
    %113 = vector.load %arg9[%c1_72, %c0_73, %c0_74] : memref<3x1x256xf32, #tpu.memory_space<vmem>>, vector<1x1x256xf32>
    %114 = vector.shape_cast %113 : vector<1x1x256xf32> to vector<1x256xf32>
    %cst_75 = arith.constant dense<0.000000e+00> : vector<8xf32>
    %115 = vector.multi_reduction <add>, %110, %cst_75 [1] : vector<8x256xf32> to vector<8xf32>
    %116 = vector.shape_cast %115 : vector<8xf32> to vector<8x1xf32>
    %cst_76 = arith.constant 2.560000e+02 : f32
    %117 = vector.broadcast %cst_76 : f32 to vector<8x1xf32>
    %118 = arith.divf %116, %117 : vector<8x1xf32>
    %119 = vector.broadcast %118 : vector<8x1xf32> to vector<8x256xf32>
    %120 = arith.subf %110, %119 : vector<8x256xf32>
    %121 = arith.mulf %120, %120 : vector<8x256xf32>
    %cst_77 = arith.constant dense<0.000000e+00> : vector<8xf32>
    %122 = vector.multi_reduction <add>, %121, %cst_77 [1] : vector<8x256xf32> to vector<8xf32>
    %123 = vector.shape_cast %122 : vector<8xf32> to vector<8x1xf32>
    %cst_78 = arith.constant 2.560000e+02 : f32
    %124 = vector.broadcast %cst_78 : f32 to vector<8x1xf32>
    %125 = arith.divf %123, %124 : vector<8x1xf32>
    %126 = vector.broadcast %118 : vector<8x1xf32> to vector<8x256xf32>
    %127 = arith.subf %110, %126 : vector<8x256xf32>
    %cst_79 = arith.constant 9.99999974E-6 : f32
    %128 = vector.broadcast %cst_79 : f32 to vector<8x1xf32>
    %129 = arith.addf %125, %128 : vector<8x1xf32>
    %130 = math.rsqrt %129 : vector<8x1xf32>
    %131 = vector.broadcast %130 : vector<8x1xf32> to vector<8x256xf32>
    %132 = arith.mulf %127, %131 : vector<8x256xf32>
    %133 = vector.broadcast %112 : vector<1x256xf32> to vector<8x256xf32>
    %134 = arith.mulf %132, %133 : vector<8x256xf32>
    %135 = vector.broadcast %114 : vector<1x256xf32> to vector<8x256xf32>
    %136 = arith.addf %134, %135 : vector<8x256xf32>
    %137 = arith.truncf %136 : vector<8x256xf32> to vector<8x256xbf16>
    %c1_80 = arith.constant 1 : index
    %c0_81 = arith.constant 0 : index
    %c0_82 = arith.constant 0 : index
    %138 = vector.load %arg10[%c1_80, %c0_81, %c0_82] : memref<3x256x2048xbf16, #tpu.memory_space<vmem>>, vector<1x256x2048xbf16>
    %139 = vector.shape_cast %138 : vector<1x256x2048xbf16> to vector<256x2048xbf16>
    %cst_83 = arith.constant dense<0.000000e+00> : vector<8x2048xf32>
    %140 = tpu.matmul %137, %139, %cst_83 {dimension_numbers = #tpu.dot_dimension_numbers<[1], [0], [0], [1], [0, 0, 1, 1], [], []>} : vector<8x256xbf16>, vector<256x2048xbf16>, vector<8x2048xf32> -> vector<8x2048xf32>
    %c1_84 = arith.constant 1 : index
    %c0_85 = arith.constant 0 : index
    %c0_86 = arith.constant 0 : index
    %141 = vector.load %arg11[%c1_84, %c0_85, %c0_86] : memref<3x1x2048xf32, #tpu.memory_space<vmem>>, vector<1x1x2048xf32>
    %142 = vector.shape_cast %141 : vector<1x1x2048xf32> to vector<1x2048xf32>
    %143 = vector.broadcast %142 : vector<1x2048xf32> to vector<8x2048xf32>
    %144 = arith.addf %140, %143 : vector<8x2048xf32>
    %cst_87 = arith.constant 0.000000e+00 : f32
    %145 = vector.broadcast %cst_87 : f32 to vector<8x2048xf32>
    %146 = arith.maximumf %144, %145 : vector<8x2048xf32>
    %147 = arith.truncf %146 : vector<8x2048xf32> to vector<8x2048xbf16>
    %c1_88 = arith.constant 1 : index
    %c0_89 = arith.constant 0 : index
    %c0_90 = arith.constant 0 : index
    %148 = vector.load %arg12[%c1_88, %c0_89, %c0_90] : memref<3x2048x256xbf16, #tpu.memory_space<vmem>>, vector<1x2048x256xbf16>
    %149 = vector.shape_cast %148 : vector<1x2048x256xbf16> to vector<2048x256xbf16>
    %cst_91 = arith.constant dense<0.000000e+00> : vector<8x256xf32>
    %150 = tpu.matmul %147, %149, %cst_91 {dimension_numbers = #tpu.dot_dimension_numbers<[1], [0], [0], [1], [0, 0, 1, 1], [], []>} : vector<8x2048xbf16>, vector<2048x256xbf16>, vector<8x256xf32> -> vector<8x256xf32>
    %c1_92 = arith.constant 1 : index
    %c0_93 = arith.constant 0 : index
    %c0_94 = arith.constant 0 : index
    %151 = vector.load %arg13[%c1_92, %c0_93, %c0_94] : memref<3x1x256xf32, #tpu.memory_space<vmem>>, vector<1x1x256xf32>
    %152 = vector.shape_cast %151 : vector<1x1x256xf32> to vector<1x256xf32>
    %153 = vector.broadcast %152 : vector<1x256xf32> to vector<8x256xf32>
    %154 = arith.addf %150, %153 : vector<8x256xf32>
    %155 = arith.addf %136, %154 : vector<8x256xf32>
    %c1_95 = arith.constant 1 : index
    %c0_96 = arith.constant 0 : index
    %c0_97 = arith.constant 0 : index
    %156 = vector.load %arg14[%c1_95, %c0_96, %c0_97] : memref<3x1x256xf32, #tpu.memory_space<vmem>>, vector<1x1x256xf32>
    %157 = vector.shape_cast %156 : vector<1x1x256xf32> to vector<1x256xf32>
    %c1_98 = arith.constant 1 : index
    %c0_99 = arith.constant 0 : index
    %c0_100 = arith.constant 0 : index
    %158 = vector.load %arg15[%c1_98, %c0_99, %c0_100] : memref<3x1x256xf32, #tpu.memory_space<vmem>>, vector<1x1x256xf32>
    %159 = vector.shape_cast %158 : vector<1x1x256xf32> to vector<1x256xf32>
    %cst_101 = arith.constant dense<0.000000e+00> : vector<8xf32>
    %160 = vector.multi_reduction <add>, %155, %cst_101 [1] : vector<8x256xf32> to vector<8xf32>
    %161 = vector.shape_cast %160 : vector<8xf32> to vector<8x1xf32>
    %cst_102 = arith.constant 2.560000e+02 : f32
    %162 = vector.broadcast %cst_102 : f32 to vector<8x1xf32>
    %163 = arith.divf %161, %162 : vector<8x1xf32>
    %164 = vector.broadcast %163 : vector<8x1xf32> to vector<8x256xf32>
    %165 = arith.subf %155, %164 : vector<8x256xf32>
    %166 = arith.mulf %165, %165 : vector<8x256xf32>
    %cst_103 = arith.constant dense<0.000000e+00> : vector<8xf32>
    %167 = vector.multi_reduction <add>, %166, %cst_103 [1] : vector<8x256xf32> to vector<8xf32>
    %168 = vector.shape_cast %167 : vector<8xf32> to vector<8x1xf32>
    %cst_104 = arith.constant 2.560000e+02 : f32
    %169 = vector.broadcast %cst_104 : f32 to vector<8x1xf32>
    %170 = arith.divf %168, %169 : vector<8x1xf32>
    %171 = vector.broadcast %163 : vector<8x1xf32> to vector<8x256xf32>
    %172 = arith.subf %155, %171 : vector<8x256xf32>
    %cst_105 = arith.constant 9.99999974E-6 : f32
    %173 = vector.broadcast %cst_105 : f32 to vector<8x1xf32>
    %174 = arith.addf %170, %173 : vector<8x1xf32>
    %175 = math.rsqrt %174 : vector<8x1xf32>
    %176 = vector.broadcast %175 : vector<8x1xf32> to vector<8x256xf32>
    %177 = arith.mulf %172, %176 : vector<8x256xf32>
    %178 = vector.broadcast %157 : vector<1x256xf32> to vector<8x256xf32>
    %179 = arith.mulf %177, %178 : vector<8x256xf32>
    %180 = vector.broadcast %159 : vector<1x256xf32> to vector<8x256xf32>
    %181 = arith.addf %179, %180 : vector<8x256xf32>
    %182 = arith.truncf %181 : vector<8x256xf32> to vector<8x256xbf16>
    %c2 = arith.constant 2 : index
    %c0_106 = arith.constant 0 : index
    %c0_107 = arith.constant 0 : index
    %183 = vector.load %arg4[%c2, %c0_106, %c0_107] : memref<3x256x256xbf16, #tpu.memory_space<vmem>>, vector<1x256x256xbf16>
    %184 = vector.shape_cast %183 : vector<1x256x256xbf16> to vector<256x256xbf16>
    %cst_108 = arith.constant dense<0.000000e+00> : vector<8x256xf32>
    %185 = tpu.matmul %182, %184, %cst_108 {dimension_numbers = #tpu.dot_dimension_numbers<[1], [0], [0], [1], [0, 0, 1, 1], [], []>} : vector<8x256xbf16>, vector<256x256xbf16>, vector<8x256xf32> -> vector<8x256xf32>
    %c2_109 = arith.constant 2 : index
    %c0_110 = arith.constant 0 : index
    %c0_111 = arith.constant 0 : index
    %186 = vector.load %arg5[%c2_109, %c0_110, %c0_111] : memref<3x1x256xf32, #tpu.memory_space<vmem>>, vector<1x1x256xf32>
    %187 = vector.shape_cast %186 : vector<1x1x256xf32> to vector<1x256xf32>
    %188 = vector.broadcast %187 : vector<1x256xf32> to vector<8x256xf32>
    %189 = arith.addf %185, %188 : vector<8x256xf32>
    %190 = arith.truncf %189 : vector<8x256xf32> to vector<8x256xbf16>
    %c2_112 = arith.constant 2 : index
    %c0_113 = arith.constant 0 : index
    %c0_114 = arith.constant 0 : index
    %191 = vector.load %arg6[%c2_112, %c0_113, %c0_114] : memref<3x256x256xbf16, #tpu.memory_space<vmem>>, vector<1x256x256xbf16>
    %192 = vector.shape_cast %191 : vector<1x256x256xbf16> to vector<256x256xbf16>
    %cst_115 = arith.constant dense<0.000000e+00> : vector<8x256xf32>
    %193 = tpu.matmul %190, %192, %cst_115 {dimension_numbers = #tpu.dot_dimension_numbers<[1], [0], [0], [1], [0, 0, 1, 1], [], []>} : vector<8x256xbf16>, vector<256x256xbf16>, vector<8x256xf32> -> vector<8x256xf32>
    %c2_116 = arith.constant 2 : index
    %c0_117 = arith.constant 0 : index
    %c0_118 = arith.constant 0 : index
    %194 = vector.load %arg7[%c2_116, %c0_117, %c0_118] : memref<3x1x256xf32, #tpu.memory_space<vmem>>, vector<1x1x256xf32>
    %195 = vector.shape_cast %194 : vector<1x1x256xf32> to vector<1x256xf32>
    %196 = vector.broadcast %195 : vector<1x256xf32> to vector<8x256xf32>
    %197 = arith.addf %193, %196 : vector<8x256xf32>
    %198 = arith.addf %181, %197 : vector<8x256xf32>
    %c2_119 = arith.constant 2 : index
    %c0_120 = arith.constant 0 : index
    %c0_121 = arith.constant 0 : index
    %199 = vector.load %arg8[%c2_119, %c0_120, %c0_121] : memref<3x1x256xf32, #tpu.memory_space<vmem>>, vector<1x1x256xf32>
    %200 = vector.shape_cast %199 : vector<1x1x256xf32> to vector<1x256xf32>
    %c2_122 = arith.constant 2 : index
    %c0_123 = arith.constant 0 : index
    %c0_124 = arith.constant 0 : index
    %201 = vector.load %arg9[%c2_122, %c0_123, %c0_124] : memref<3x1x256xf32, #tpu.memory_space<vmem>>, vector<1x1x256xf32>
    %202 = vector.shape_cast %201 : vector<1x1x256xf32> to vector<1x256xf32>
    %cst_125 = arith.constant dense<0.000000e+00> : vector<8xf32>
    %203 = vector.multi_reduction <add>, %198, %cst_125 [1] : vector<8x256xf32> to vector<8xf32>
    %204 = vector.shape_cast %203 : vector<8xf32> to vector<8x1xf32>
    %cst_126 = arith.constant 2.560000e+02 : f32
    %205 = vector.broadcast %cst_126 : f32 to vector<8x1xf32>
    %206 = arith.divf %204, %205 : vector<8x1xf32>
    %207 = vector.broadcast %206 : vector<8x1xf32> to vector<8x256xf32>
    %208 = arith.subf %198, %207 : vector<8x256xf32>
    %209 = arith.mulf %208, %208 : vector<8x256xf32>
    %cst_127 = arith.constant dense<0.000000e+00> : vector<8xf32>
    %210 = vector.multi_reduction <add>, %209, %cst_127 [1] : vector<8x256xf32> to vector<8xf32>
    %211 = vector.shape_cast %210 : vector<8xf32> to vector<8x1xf32>
    %cst_128 = arith.constant 2.560000e+02 : f32
    %212 = vector.broadcast %cst_128 : f32 to vector<8x1xf32>
    %213 = arith.divf %211, %212 : vector<8x1xf32>
    %214 = vector.broadcast %206 : vector<8x1xf32> to vector<8x256xf32>
    %215 = arith.subf %198, %214 : vector<8x256xf32>
    %cst_129 = arith.constant 9.99999974E-6 : f32
    %216 = vector.broadcast %cst_129 : f32 to vector<8x1xf32>
    %217 = arith.addf %213, %216 : vector<8x1xf32>
    %218 = math.rsqrt %217 : vector<8x1xf32>
    %219 = vector.broadcast %218 : vector<8x1xf32> to vector<8x256xf32>
    %220 = arith.mulf %215, %219 : vector<8x256xf32>
    %221 = vector.broadcast %200 : vector<1x256xf32> to vector<8x256xf32>
    %222 = arith.mulf %220, %221 : vector<8x256xf32>
    %223 = vector.broadcast %202 : vector<1x256xf32> to vector<8x256xf32>
    %224 = arith.addf %222, %223 : vector<8x256xf32>
    %225 = arith.truncf %224 : vector<8x256xf32> to vector<8x256xbf16>
    %c2_130 = arith.constant 2 : index
    %c0_131 = arith.constant 0 : index
    %c0_132 = arith.constant 0 : index
    %226 = vector.load %arg10[%c2_130, %c0_131, %c0_132] : memref<3x256x2048xbf16, #tpu.memory_space<vmem>>, vector<1x256x2048xbf16>
    %227 = vector.shape_cast %226 : vector<1x256x2048xbf16> to vector<256x2048xbf16>
    %cst_133 = arith.constant dense<0.000000e+00> : vector<8x2048xf32>
    %228 = tpu.matmul %225, %227, %cst_133 {dimension_numbers = #tpu.dot_dimension_numbers<[1], [0], [0], [1], [0, 0, 1, 1], [], []>} : vector<8x256xbf16>, vector<256x2048xbf16>, vector<8x2048xf32> -> vector<8x2048xf32>
    %c2_134 = arith.constant 2 : index
    %c0_135 = arith.constant 0 : index
    %c0_136 = arith.constant 0 : index
    %229 = vector.load %arg11[%c2_134, %c0_135, %c0_136] : memref<3x1x2048xf32, #tpu.memory_space<vmem>>, vector<1x1x2048xf32>
    %230 = vector.shape_cast %229 : vector<1x1x2048xf32> to vector<1x2048xf32>
    %231 = vector.broadcast %230 : vector<1x2048xf32> to vector<8x2048xf32>
    %232 = arith.addf %228, %231 : vector<8x2048xf32>
    %cst_137 = arith.constant 0.000000e+00 : f32
    %233 = vector.broadcast %cst_137 : f32 to vector<8x2048xf32>
    %234 = arith.maximumf %232, %233 : vector<8x2048xf32>
    %235 = arith.truncf %234 : vector<8x2048xf32> to vector<8x2048xbf16>
    %c2_138 = arith.constant 2 : index
    %c0_139 = arith.constant 0 : index
    %c0_140 = arith.constant 0 : index
    %236 = vector.load %arg12[%c2_138, %c0_139, %c0_140] : memref<3x2048x256xbf16, #tpu.memory_space<vmem>>, vector<1x2048x256xbf16>
    %237 = vector.shape_cast %236 : vector<1x2048x256xbf16> to vector<2048x256xbf16>
    %cst_141 = arith.constant dense<0.000000e+00> : vector<8x256xf32>
    %238 = tpu.matmul %235, %237, %cst_141 {dimension_numbers = #tpu.dot_dimension_numbers<[1], [0], [0], [1], [0, 0, 1, 1], [], []>} : vector<8x2048xbf16>, vector<2048x256xbf16>, vector<8x256xf32> -> vector<8x256xf32>
    %c2_142 = arith.constant 2 : index
    %c0_143 = arith.constant 0 : index
    %c0_144 = arith.constant 0 : index
    %239 = vector.load %arg13[%c2_142, %c0_143, %c0_144] : memref<3x1x256xf32, #tpu.memory_space<vmem>>, vector<1x1x256xf32>
    %240 = vector.shape_cast %239 : vector<1x1x256xf32> to vector<1x256xf32>
    %241 = vector.broadcast %240 : vector<1x256xf32> to vector<8x256xf32>
    %242 = arith.addf %238, %241 : vector<8x256xf32>
    %243 = arith.addf %224, %242 : vector<8x256xf32>
    %c2_145 = arith.constant 2 : index
    %c0_146 = arith.constant 0 : index
    %c0_147 = arith.constant 0 : index
    %244 = vector.load %arg14[%c2_145, %c0_146, %c0_147] : memref<3x1x256xf32, #tpu.memory_space<vmem>>, vector<1x1x256xf32>
    %245 = vector.shape_cast %244 : vector<1x1x256xf32> to vector<1x256xf32>
    %c2_148 = arith.constant 2 : index
    %c0_149 = arith.constant 0 : index
    %c0_150 = arith.constant 0 : index
    %246 = vector.load %arg15[%c2_148, %c0_149, %c0_150] : memref<3x1x256xf32, #tpu.memory_space<vmem>>, vector<1x1x256xf32>
    %247 = vector.shape_cast %246 : vector<1x1x256xf32> to vector<1x256xf32>
    %cst_151 = arith.constant dense<0.000000e+00> : vector<8xf32>
    %248 = vector.multi_reduction <add>, %243, %cst_151 [1] : vector<8x256xf32> to vector<8xf32>
    %249 = vector.shape_cast %248 : vector<8xf32> to vector<8x1xf32>
    %cst_152 = arith.constant 2.560000e+02 : f32
    %250 = vector.broadcast %cst_152 : f32 to vector<8x1xf32>
    %251 = arith.divf %249, %250 : vector<8x1xf32>
    %252 = vector.broadcast %251 : vector<8x1xf32> to vector<8x256xf32>
    %253 = arith.subf %243, %252 : vector<8x256xf32>
    %254 = arith.mulf %253, %253 : vector<8x256xf32>
    %cst_153 = arith.constant dense<0.000000e+00> : vector<8xf32>
    %255 = vector.multi_reduction <add>, %254, %cst_153 [1] : vector<8x256xf32> to vector<8xf32>
    %256 = vector.shape_cast %255 : vector<8xf32> to vector<8x1xf32>
    %cst_154 = arith.constant 2.560000e+02 : f32
    %257 = vector.broadcast %cst_154 : f32 to vector<8x1xf32>
    %258 = arith.divf %256, %257 : vector<8x1xf32>
    %259 = vector.broadcast %251 : vector<8x1xf32> to vector<8x256xf32>
    %260 = arith.subf %243, %259 : vector<8x256xf32>
    %cst_155 = arith.constant 9.99999974E-6 : f32
    %261 = vector.broadcast %cst_155 : f32 to vector<8x1xf32>
    %262 = arith.addf %258, %261 : vector<8x1xf32>
    %263 = math.rsqrt %262 : vector<8x1xf32>
    %264 = vector.broadcast %263 : vector<8x1xf32> to vector<8x256xf32>
    %265 = arith.mulf %260, %264 : vector<8x256xf32>
    %266 = vector.broadcast %245 : vector<1x256xf32> to vector<8x256xf32>
    %267 = arith.mulf %265, %266 : vector<8x256xf32>
    %268 = vector.broadcast %247 : vector<1x256xf32> to vector<8x256xf32>
    %269 = arith.addf %267, %268 : vector<8x256xf32>
    %270 = arith.truncf %269 : vector<8x256xf32> to vector<8x256xbf16>
    %c0_156 = arith.constant 0 : index
    %c0_157 = arith.constant 0 : index
    %271 = vector.load %arg16[%c0_156, %c0_157] : memref<256x128xbf16, #tpu.memory_space<vmem>>, vector<256x128xbf16>
    %cst_158 = arith.constant dense<0.000000e+00> : vector<8x128xf32>
    %272 = tpu.matmul %270, %271, %cst_158 {dimension_numbers = #tpu.dot_dimension_numbers<[1], [0], [0], [1], [0, 0, 1, 1], [], []>} : vector<8x256xbf16>, vector<256x128xbf16>, vector<8x128xf32> -> vector<8x128xf32>
    %c0_159 = arith.constant 0 : index
    %c0_160 = arith.constant 0 : index
    %273 = vector.load %arg17[%c0_159, %c0_160] : memref<1x128xf32, #tpu.memory_space<vmem>>, vector<1x128xf32>
    %274 = vector.broadcast %273 : vector<1x128xf32> to vector<8x128xf32>
    %275 = arith.addf %272, %274 : vector<8x128xf32>
    %c0_161 = arith.constant 0 : index
    %c0_162 = arith.constant 0 : index
    %276 = vector.load %arg18[%c0_161, %c0_162] : memref<8x128xf32, #tpu.memory_space<vmem>>, vector<8x128xf32>
    tpu.vector_store %arg18[%c0_161, %c0_162], %275 {strides = array<i32>} : memref<8x128xf32, #tpu.memory_space<vmem>>, vector<8x128xf32>,
    return
  }
  func.func @transform_0(%arg0: i32) -> (i32, i32) {
    %c0_i32 = arith.constant 0 : i32
    %c0_i32_0 = arith.constant 0 : i32
    return %arg0, %c0_i32 : i32, i32
  }
  func.func @transform_1(%arg0: i32) -> (i32, i32) {
    %c0_i32 = arith.constant 0 : i32
    %c0_i32_0 = arith.constant 0 : i32
    %c0_i32_1 = arith.constant 0 : i32
    return %c0_i32, %c0_i32_0 : i32, i32
  }
  func.func @transform_2(%arg0: i32) -> (i32, i32) {
    %c0_i32 = arith.constant 0 : i32
    %c0_i32_0 = arith.constant 0 : i32
    %c0_i32_1 = arith.constant 0 : i32
    return %c0_i32, %c0_i32_0 : i32, i32
  }
  func.func @transform_3(%arg0: i32) -> (i32, i32, i32) {
    %c0_i32 = arith.constant 0 : i32
    %c0_i32_0 = arith.constant 0 : i32
    %c0_i32_1 = arith.constant 0 : i32
    %c0_i32_2 = arith.constant 0 : i32
    return %c0_i32, %c0_i32_0, %c0_i32_1 : i32, i32, i32
  }
  func.func @transform_4(%arg0: i32) -> (i32, i32, i32) {
    %c0_i32 = arith.constant 0 : i32
    %c0_i32_0 = arith.constant 0 : i32
    %c0_i32_1 = arith.constant 0 : i32
    %c0_i32_2 = arith.constant 0 : i32
    return %c0_i32, %c0_i32_0, %c0_i32_1 : i32, i32, i32
  }
  func.func @transform_5(%arg0: i32) -> (i32, i32, i32) {
    %c0_i32 = arith.constant 0 : i32
    %c0_i32_0 = arith.constant 0 : i32
    %c0_i32_1 = arith.constant 0 : i32
    %c0_i32_2 = arith.constant 0 : i32
    return %c0_i32, %c0_i32_0, %c0_i32_1 : i32, i32, i32
  }
  func.func @transform_6(%arg0: i32) -> (i32, i32, i32) {
    %c0_i32 = arith.constant 0 : i32
    %c0_i32_0 = arith.constant 0 : i32
    %c0_i32_1 = arith.constant 0 : i32
    %c0_i32_2 = arith.constant 0 : i32
    return %c0_i32, %c0_i32_0, %c0_i32_1 : i32, i32, i32
  }
  func.func @transform_7(%arg0: i32) -> (i32, i32, i32) {
    %c0_i32 = arith.constant 0 : i32
    %c0_i32_0 = arith.constant 0 : i32
    %c0_i32_1 = arith.constant 0 : i32
    %c0_i32_2 = arith.constant 0 : i32
    return %c0_i32, %c0_i32_0, %c0_i32_1 : i32, i32, i32
  }
  func.func @transform_8(%arg0: i32) -> (i32, i32, i32) {
    %c0_i32 = arith.constant 0 : i32
    %c0_i32_0 = arith.constant 0 : i32
    %c0_i32_1 = arith.constant 0 : i32
    %c0_i32_2 = arith.constant 0 : i32
    return %c0_i32, %c0_i32_0, %c0_i32_1 : i32, i32, i32
  }
  func.func @transform_9(%arg0: i32) -> (i32, i32, i32) {
    %c0_i32 = arith.constant 0 : i32
    %c0_i32_0 = arith.constant 0 : i32
    %c0_i32_1 = arith.constant 0 : i32
    %c0_i32_2 = arith.constant 0 : i32
    return %c0_i32, %c0_i32_0, %c0_i32_1 : i32, i32, i32
  }
  func.func @transform_10(%arg0: i32) -> (i32, i32, i32) {
    %c0_i32 = arith.constant 0 : i32
    %c0_i32_0 = arith.constant 0 : i32
    %c0_i32_1 = arith.constant 0 : i32
    %c0_i32_2 = arith.constant 0 : i32
    return %c0_i32, %c0_i32_0, %c0_i32_1 : i32, i32, i32
  }
  func.func @transform_11(%arg0: i32) -> (i32, i32, i32) {
    %c0_i32 = arith.constant 0 : i32
    %c0_i32_0 = arith.constant 0 : i32
    %c0_i32_1 = arith.constant 0 : i32
    %c0_i32_2 = arith.constant 0 : i32
    return %c0_i32, %c0_i32_0, %c0_i32_1 : i32, i32, i32
  }
  func.func @transform_12(%arg0: i32) -> (i32, i32, i32) {
    %c0_i32 = arith.constant 0 : i32
    %c0_i32_0 = arith.constant 0 : i32
    %c0_i32_1 = arith.constant 0 : i32
    %c0_i32_2 = arith.constant 0 : i32
    return %c0_i32, %c0_i32_0, %c0_i32_1 : i32, i32, i32
  }
  func.func @transform_13(%arg0: i32) -> (i32, i32, i32) {
    %c0_i32 = arith.constant 0 : i32
    %c0_i32_0 = arith.constant 0 : i32
    %c0_i32_1 = arith.constant 0 : i32
    %c0_i32_2 = arith.constant 0 : i32
    return %c0_i32, %c0_i32_0, %c0_i32_1 : i32, i32, i32
  }
  func.func @transform_14(%arg0: i32) -> (i32, i32, i32) {
    %c0_i32 = arith.constant 0 : i32
    %c0_i32_0 = arith.constant 0 : i32
    %c0_i32_1 = arith.constant 0 : i32
    %c0_i32_2 = arith.constant 0 : i32
    return %c0_i32, %c0_i32_0, %c0_i32_1 : i32, i32, i32
  }
  func.func @transform_15(%arg0: i32) -> (i32, i32) {
    %c0_i32 = arith.constant 0 : i32
    %c0_i32_0 = arith.constant 0 : i32
    %c0_i32_1 = arith.constant 0 : i32
    return %c0_i32, %c0_i32_0 : i32, i32
  }
  func.func @transform_16(%arg0: i32) -> (i32, i32) {
    %c0_i32 = arith.constant 0 : i32
    %c0_i32_0 = arith.constant 0 : i32
    %c0_i32_1 = arith.constant 0 : i32
    return %c0_i32, %c0_i32_0 : i32, i32
  }
  func.func @transform_17(%arg0: i32) -> (i32, i32) {
    %c0_i32 = arith.constant 0 : i32
    %c0_i32_0 = arith.constant 0 : i32
    return %arg0, %c0_i32 : i32, i32
  }
}

</mosaic_0001>

<llo_original>
// kernel: tpu_custom_call.1
$region0: #{tpu_custom_call.1}
  #allocation0 [shape = 'u32[]', space=smem, size = 0x4, offset = 0x4, fixed_abs, tag = 'smem constant byte address 0x4 - core index']
  #allocation1 [shape = 'u32[144,128]{1,0:T(1,128)}', space=vmem, size = 0x12000, scoped, tag = 'internal scratch']
  %s0 = inlined_call_operand.hbm [shape: bf16[8,128], index: 0, kind: input, shape index: {}]
  %s1 = inlined_call_operand.hbm [shape: bf16[128,256], index: 1, kind: input, shape index: {}]
  %s2 = inlined_call_operand.hbm [shape: f32[1,256], index: 2, kind: input, shape index: {}]
  %s3 = inlined_call_operand.hbm [shape: bf16[3,256,256], index: 3, kind: input, shape index: {}]
  %s4 = inlined_call_operand.hbm [shape: f32[3,1,256], index: 4, kind: input, shape index: {}]
  %s5 = inlined_call_operand.hbm [shape: bf16[3,256,256], index: 5, kind: input, shape index: {}]
  %s6 = inlined_call_operand.hbm [shape: f32[3,1,256], index: 6, kind: input, shape index: {}]
  %s7 = inlined_call_operand.hbm [shape: f32[3,1,256], index: 7, kind: input, shape index: {}]
  %s8 = inlined_call_operand.hbm [shape: f32[3,1,256], index: 8, kind: input, shape index: {}]
  %s9 = inlined_call_operand.hbm [shape: bf16[3,256,2048], index: 9, kind: input, shape index: {}]
  %s10 = inlined_call_operand.hbm [shape: f32[3,1,2048], index: 10, kind: input, shape index: {}]
  %s11 = inlined_call_operand.hbm [shape: bf16[3,2048,256], index: 11, kind: input, shape index: {}]
  %s12 = inlined_call_operand.hbm [shape: f32[3,1,256], index: 12, kind: input, shape index: {}]
  %s13 = inlined_call_operand.hbm [shape: f32[3,1,256], index: 13, kind: input, shape index: {}]
  %s14 = inlined_call_operand.hbm [shape: f32[3,1,256], index: 14, kind: input, shape index: {}]
  %s15 = inlined_call_operand.hbm [shape: bf16[256,128], index: 15, kind: input, shape index: {}]
  %s16 = inlined_call_operand.hbm [shape: f32[1,128], index: 16, kind: input, shape index: {}]
  %s17 = inlined_call_operand.hbm [shape: f32[8,128], index: 17, kind: output, shape index: {}]
  %s18 = sld [smem:[#allocation0]]
  $region146: #{tpu_custom_call.1} parent=0
    _
  %s20 = ssub.s32 1, %s18
  %s21 = scalar_select 0, %s20, %s18
  $region1: #{tpu_custom_call.1} parent=0
    #allocation2 [shape = 'u8[2048]{0}', space=vmem, size = 0x800, scoped, tag = 'input window, operand 0, single buffered']
    #allocation3 [shape = 's32[1]{0}', space=sflag, size = 0x4, scoped, tag = 'scoped memory for tpu_custom_call.1']
    #allocation4 [shape = 's32[1]{0}', space=sflag, size = 0x4, scoped, tag = 'scoped memory for tpu_custom_call.1']
    #allocation5 [shape = 'u8[65536]{0}', space=vmem, size = 0x10000, scoped, tag = 'input window, operand 1, single buffered']
    #allocation6 [shape = 's32[1]{0}', space=sflag, size = 0x4, scoped, tag = 'scoped memory for tpu_custom_call.1']
    #allocation7 [shape = 'u8[1024]{0}', space=vmem, size = 0x400, scoped, tag = 'input window, operand 2, single buffered']
    #allocation8 [shape = 'u8[393216]{0}', space=vmem, size = 0x60000, scoped, tag = 'input window, operand 3, single buffered']
    #allocation9 [shape = 's32[1]{0}', space=sflag, size = 0x4, scoped, tag = 'scoped memory for tpu_custom_call.1']
    #allocation10 [shape = 'u8[3072]{0}', space=vmem, size = 0xc00, scoped, tag = 'input window, operand 4, single buffered']
    #allocation11 [shape = 'u8[393216]{0}', space=vmem, size = 0x60000, scoped, tag = 'input window, operand 5, single buffered']
    #allocation12 [shape = 's32[1]{0}', space=sflag, size = 0x4, scoped, tag = 'scoped memory for tpu_custom_call.1']
    #allocation13 [shape = 'u8[3072]{0}', space=vmem, size = 0xc00, scoped, tag = 'input window, operand 6, single buffered']
    #allocation14 [shape = 'u8[3072]{0}', space=vmem, size = 0xc00, scoped, tag = 'input window, operand 7, single buffered']
    #allocation15 [shape = 's32[1]{0}', space=sflag, size = 0x4, scoped, tag = 'scoped memory for tpu_custom_call.1']
    #allocation16 [shape = 'u8[3072]{0}', space=vmem, size = 0xc00, scoped, tag = 'input window, operand 8, single buffered']
    #allocation17 [shape = 'u8[3145728]{0}', space=vmem, size = 0x300000, scoped, tag = 'input window, operand 9, single buffered']
    #allocation18 [shape = 's32[1]{0}', space=sflag, size = 0x4, scoped, tag = 'scoped memory for tpu_custom_call.1']
    #allocation19 [shape = 'u8[24576]{0}', space=vmem, size = 0x6000, scoped, tag = 'input window, operand 10, single buffered']
    #allocation20 [shape = 'u8[3145728]{0}', space=vmem, size = 0x300000, scoped, tag = 'input window, operand 11, single buffered']
    #allocation21 [shape = 's32[1]{0}', space=sflag, size = 0x4, scoped, tag = 'scoped memory for tpu_custom_call.1']
    #allocation22 [shape = 'u8[3072]{0}', space=vmem, size = 0xc00, scoped, tag = 'input window, operand 12, single buffered']
    #allocation23 [shape = 'u8[3072]{0}', space=vmem, size = 0xc00, scoped, tag = 'input window, operand 13, single buffered']
    #allocation24 [shape = 's32[1]{0}', space=sflag, size = 0x4, scoped, tag = 'scoped memory for tpu_custom_call.1']
    #allocation25 [shape = 'u8[3072]{0}', space=vmem, size = 0xc00, scoped, tag = 'input window, operand 14, single buffered']
    #allocation26 [shape = 'u8[65536]{0}', space=vmem, size = 0x10000, scoped, tag = 'input window, operand 15, single buffered']
    #allocation27 [shape = 's32[1]{0}', space=sflag, size = 0x4, scoped, tag = 'scoped memory for tpu_custom_call.1']
    #allocation28 [shape = 'u8[512]{0}', space=vmem, size = 0x400, scoped, tag = 'input window, operand 16, single buffered']
    #allocation29 [shape = 'u8[4096]{0}', space=vmem, size = 0x1000, scoped, tag = 'output window, operand 0, single buffered']
    %22 = vsyncpa [#allocation3], 0
    %23 = vsyncpa [#allocation6], 0
    %24 = vsyncpa [#allocation9], 0
    %25 = vsyncpa [#allocation12], 0
    %26 = vsyncpa [#allocation15], 0
    %27 = vsyncpa [#allocation18], 0
    %28 = vsyncpa [#allocation21], 0
    %29 = vsyncpa [#allocation24], 0
    %30 = vsyncpa [#allocation27], 0
    %31 = vsyncpa [#allocation4], 0
    // Predicated region
    $region2: #{tpu_custom_call.1} parent=1 // pred_check
      _
    $region3: #{tpu_custom_call.1} parent=1 // pred_check_branch
      %33 = sbr.rel (0) target = $region5
    $region4: #{tpu_custom_call.1} parent=1 // pred_region
      %s35 = ssub.s32 64, 64
      %36 = vsyncadd [#allocation3], %s35
      %s38 = sshll.u32 [#allocation2], 4
      %s39 = int_to_ptr.vmem [resolvable:$true] %s38
      %41 = dma.hbm_to_vmem [thread:$0]  %s0, 64, %s39, [#allocation3]
    $region5: #{tpu_custom_call.1} parent=1 // pred_fallthru
      _
    // Predicated region
    $region6: #{tpu_custom_call.1} parent=1 // pred_check
      _
    $region7: #{tpu_custom_call.1} parent=1 // pred_check_branch
      %43 = sbr.rel (0) target = $region9
    $region8: #{tpu_custom_call.1} parent=1 // pred_region
      %s45 = ssub.s32 2048, 2048
      %46 = vsyncadd [#allocation6], %s45
      %s47 = sshll.u32 [#allocation5], 4
      %s48 = int_to_ptr.vmem [resolvable:$true] %s47
      %53 = dma.hbm_to_vmem [thread:$0]  %s1, 2048, %s48, [#allocation6], 128, 128, 8
    $region9: #{tpu_custom_call.1} parent=1 // pred_fallthru
      _
    // Predicated region
    $region10: #{tpu_custom_call.1} parent=1 // pred_check
      _
    $region11: #{tpu_custom_call.1} parent=1 // pred_check_branch
      %55 = sbr.rel (0) target = $region13
    $region12: #{tpu_custom_call.1} parent=1 // pred_region
      %s57 = ssub.s32 32, 32
      %58 = vsyncadd [#allocation6], %s57
      %s60 = sshll.u32 [#allocation7], 4
      %s61 = int_to_ptr.vmem [resolvable:$true] %s60
      %63 = dma.hbm_to_vmem [thread:$0]  %s2, 32, %s61, [#allocation6]
    $region13: #{tpu_custom_call.1} parent=1 // pred_fallthru
      _
    // Predicated region
    $region14: #{tpu_custom_call.1} parent=1 // pred_check
      _
    $region15: #{tpu_custom_call.1} parent=1 // pred_check_branch
      %65 = sbr.rel (0) target = $region17
    $region16: #{tpu_custom_call.1} parent=1 // pred_region
      %s67 = ssub.s32 12288, 12288
      %68 = vsyncadd [#allocation9], %s67
      %s69 = sshll.u32 [#allocation8], 4
      %s70 = int_to_ptr.vmem [resolvable:$true] %s69
      %75 = dma.hbm_to_vmem [thread:$0]  %s3, 12288, %s70, [#allocation9], 128, 128, 8
    $region17: #{tpu_custom_call.1} parent=1 // pred_fallthru
      _
    // Predicated region
    $region18: #{tpu_custom_call.1} parent=1 // pred_check
      _
    $region19: #{tpu_custom_call.1} parent=1 // pred_check_branch
      %77 = sbr.rel (0) target = $region21
    $region20: #{tpu_custom_call.1} parent=1 // pred_region
      %s79 = ssub.s32 96, 96
      %80 = vsyncadd [#allocation9], %s79
      %s81 = sshll.u32 [#allocation10], 4
      %s82 = int_to_ptr.vmem [resolvable:$true] %s81
      %87 = dma.hbm_to_vmem [thread:$0]  %s4, 96, %s82, [#allocation9], 32, 32, 2
    $region21: #{tpu_custom_call.1} parent=1 // pred_fallthru
      _
    // Predicated region
    $region22: #{tpu_custom_call.1} parent=1 // pred_check
      _
    $region23: #{tpu_custom_call.1} parent=1 // pred_check_branch
      %89 = sbr.rel (0) target = $region25
    $region24: #{tpu_custom_call.1} parent=1 // pred_region
      %s91 = ssub.s32 12288, 12288
      %92 = vsyncadd [#allocation12], %s91
      %s93 = sshll.u32 [#allocation11], 4
      %s94 = int_to_ptr.vmem [resolvable:$true] %s93
      %99 = dma.hbm_to_vmem [thread:$0]  %s5, 12288, %s94, [#allocation12], 128, 128, 8
    $region25: #{tpu_custom_call.1} parent=1 // pred_fallthru
      _
    // Predicated region
    $region26: #{tpu_custom_call.1} parent=1 // pred_check
      _
    $region27: #{tpu_custom_call.1} parent=1 // pred_check_branch
      %101 = sbr.rel (0) target = $region29
    $region28: #{tpu_custom_call.1} parent=1 // pred_region
      %s103 = ssub.s32 96, 96
      %104 = vsyncadd [#allocation12], %s103
      %s105 = sshll.u32 [#allocation13], 4
      %s106 = int_to_ptr.vmem [resolvable:$true] %s105
      %111 = dma.hbm_to_vmem [thread:$0]  %s6, 96, %s106, [#allocation12], 32, 32, 2
    $region29: #{tpu_custom_call.1} parent=1 // pred_fallthru
      _
    // Predicated region
    $region30: #{tpu_custom_call.1} parent=1 // pred_check
      _
    $region31: #{tpu_custom_call.1} parent=1 // pred_check_branch
      %113 = sbr.rel (0) target = $region33
    $region32: #{tpu_custom_call.1} parent=1 // pred_region
      %s115 = ssub.s32 96, 96
      %116 = vsyncadd [#allocation15], %s115
      %s117 = sshll.u32 [#allocation14], 4
      %s118 = int_to_ptr.vmem [resolvable:$true] %s117
      %123 = dma.hbm_to_vmem [thread:$0]  %s7, 96, %s118, [#allocation15], 32, 32, 2
    $region33: #{tpu_custom_call.1} parent=1 // pred_fallthru
      _
    // Predicated region
    $region34: #{tpu_custom_call.1} parent=1 // pred_check
      _
    $region35: #{tpu_custom_call.1} parent=1 // pred_check_branch
      %125 = sbr.rel (0) target = $region37
    $region36: #{tpu_custom_call.1} parent=1 // pred_region
      %s127 = ssub.s32 96, 96
      %128 = vsyncadd [#allocation15], %s127
      %s129 = sshll.u32 [#allocation16], 4
      %s130 = int_to_ptr.vmem [resolvable:$true] %s129
      %135 = dma.hbm_to_vmem [thread:$0]  %s8, 96, %s130, [#allocation15], 32, 32, 2
    $region37: #{tpu_custom_call.1} parent=1 // pred_fallthru
      _
    // Predicated region
    $region38: #{tpu_custom_call.1} parent=1 // pred_check
      _
    $region39: #{tpu_custom_call.1} parent=1 // pred_check_branch
      %137 = sbr.rel (0) target = $region41
    $region40: #{tpu_custom_call.1} parent=1 // pred_region
      %s139 = ssub.s32 98304, 98304
      %140 = vsyncadd [#allocation18], %s139
      %s141 = sshll.u32 [#allocation17], 4
      %s142 = int_to_ptr.vmem [resolvable:$true] %s141
      %147 = dma.hbm_to_vmem [thread:$0]  %s9, 98304, %s142, [#allocation18], 1024, 1024, 64
    $region41: #{tpu_custom_call.1} parent=1 // pred_fallthru
      _
    // Predicated region
    $region42: #{tpu_custom_call.1} parent=1 // pred_check
      _
    $region43: #{tpu_custom_call.1} parent=1 // pred_check_branch
      %149 = sbr.rel (0) target = $region45
    $region44: #{tpu_custom_call.1} parent=1 // pred_region
      %s151 = ssub.s32 768, 768
      %152 = vsyncadd [#allocation18], %s151
      %s153 = sshll.u32 [#allocation19], 4
      %s154 = int_to_ptr.vmem [resolvable:$true] %s153
      %159 = dma.hbm_to_vmem [thread:$0]  %s10, 768, %s154, [#allocation18], 256, 256, 16
    $region45: #{tpu_custom_call.1} parent=1 // pred_fallthru
      _
    // Predicated region
    $region46: #{tpu_custom_call.1} parent=1 // pred_check
      _
    $region47: #{tpu_custom_call.1} parent=1 // pred_check_branch
      %161 = sbr.rel (0) target = $region49
    $region48: #{tpu_custom_call.1} parent=1 // pred_region
      %s163 = ssub.s32 98304, 98304
      %164 = vsyncadd [#allocation21], %s163
      %s165 = sshll.u32 [#allocation20], 4
      %s166 = int_to_ptr.vmem [resolvable:$true] %s165
      %171 = dma.hbm_to_vmem [thread:$0]  %s11, 98304, %s166, [#allocation21], 128, 128, 8
    $region49: #{tpu_custom_call.1} parent=1 // pred_fallthru
      _
    // Predicated region
    $region50: #{tpu_custom_call.1} parent=1 // pred_check
      _
    $region51: #{tpu_custom_call.1} parent=1 // pred_check_branch
      %173 = sbr.rel (0) target = $region53
    $region52: #{tpu_custom_call.1} parent=1 // pred_region
      %s175 = ssub.s32 96, 96
      %176 = vsyncadd [#allocation21], %s175
      %s177 = sshll.u32 [#allocation22], 4
      %s178 = int_to_ptr.vmem [resolvable:$true] %s177
      %183 = dma.hbm_to_vmem [thread:$0]  %s12, 96, %s178, [#allocation21], 32, 32, 2
    $region53: #{tpu_custom_call.1} parent=1 // pred_fallthru
      _
    // Predicated region
    $region54: #{tpu_custom_call.1} parent=1 // pred_check
      _
    $region55: #{tpu_custom_call.1} parent=1 // pred_check_branch
      %185 = sbr.rel (0) target = $region57
    $region56: #{tpu_custom_call.1} parent=1 // pred_region
      %s187 = ssub.s32 96, 96
      %188 = vsyncadd [#allocation24], %s187
      %s189 = sshll.u32 [#allocation23], 4
      %s190 = int_to_ptr.vmem [resolvable:$true] %s189
      %195 = dma.hbm_to_vmem [thread:$0]  %s13, 96, %s190, [#allocation24], 32, 32, 2
    $region57: #{tpu_custom_call.1} parent=1 // pred_fallthru
      _
    // Predicated region
    $region58: #{tpu_custom_call.1} parent=1 // pred_check
      _
    $region59: #{tpu_custom_call.1} parent=1 // pred_check_branch
      %197 = sbr.rel (0) target = $region61
    $region60: #{tpu_custom_call.1} parent=1 // pred_region
      %s199 = ssub.s32 96, 96
      %200 = vsyncadd [#allocation24], %s199
      %s201 = sshll.u32 [#allocation25], 4
      %s202 = int_to_ptr.vmem [resolvable:$true] %s201
      %207 = dma.hbm_to_vmem [thread:$0]  %s14, 96, %s202, [#allocation24], 32, 32, 2
    $region61: #{tpu_custom_call.1} parent=1 // pred_fallthru
      _
    // Predicated region
    $region62: #{tpu_custom_call.1} parent=1 // pred_check
      _
    $region63: #{tpu_custom_call.1} parent=1 // pred_check_branch
      %209 = sbr.rel (0) target = $region65
    $region64: #{tpu_custom_call.1} parent=1 // pred_region
      %s211 = ssub.s32 2048, 2048
      %212 = vsyncadd [#allocation27], %s211
      %s213 = sshll.u32 [#allocation26], 4
      %s214 = int_to_ptr.vmem [resolvable:$true] %s213
      %219 = dma.hbm_to_vmem [thread:$0]  %s15, 2048, %s214, [#allocation27], 64, 64, 4
    $region65: #{tpu_custom_call.1} parent=1 // pred_fallthru
      _
    // Predicated region
    $region66: #{tpu_custom_call.1} parent=1 // pred_check
      _
    $region67: #{tpu_custom_call.1} parent=1 // pred_check_branch
      %221 = sbr.rel (0) target = $region69
    $region68: #{tpu_custom_call.1} parent=1 // pred_region
      %s223 = ssub.s32 16, 16
      %224 = vsyncadd [#allocation27], %s223
      %s226 = sshll.u32 [#allocation28], 4
      %s227 = int_to_ptr.vmem [resolvable:$true] %s226
      %229 = dma.hbm_to_vmem [thread:$0]  %s16, 16, %s227, [#allocation27]
    $region69: #{tpu_custom_call.1} parent=1 // pred_fallthru
      _
    // Predicated region
    $region70: #{tpu_custom_call.1} parent=1 // pred_check
      _
    $region71: #{tpu_custom_call.1} parent=1 // pred_check_branch
      %231 = sbr.rel (0) target = $region73
    $region72: #{tpu_custom_call.1} parent=1 // pred_region
      %232 = dma.done [#allocation3], 64
    $region73: #{tpu_custom_call.1} parent=1 // pred_fallthru
      _
    // Predicated region
    $region74: #{tpu_custom_call.1} parent=1 // pred_check
      _
    $region75: #{tpu_custom_call.1} parent=1 // pred_check_branch
      %234 = sbr.rel (0) target = $region77
    $region76: #{tpu_custom_call.1} parent=1 // pred_region
      %235 = dma.done [#allocation6], 2048
    $region77: #{tpu_custom_call.1} parent=1 // pred_fallthru
      _
    // Predicated region
    $region78: #{tpu_custom_call.1} parent=1 // pred_check
      _
    $region79: #{tpu_custom_call.1} parent=1 // pred_check_branch
      %237 = sbr.rel (0) target = $region81
    $region80: #{tpu_custom_call.1} parent=1 // pred_region
      %238 = dma.done [#allocation6], 32
    $region81: #{tpu_custom_call.1} parent=1 // pred_fallthru
      _
    // Predicated region
    $region82: #{tpu_custom_call.1} parent=1 // pred_check
      _
    $region83: #{tpu_custom_call.1} parent=1 // pred_check_branch
      %240 = sbr.rel (0) target = $region85
    $region84: #{tpu_custom_call.1} parent=1 // pred_region
      %241 = dma.done [#allocation9], 12288
    $region85: #{tpu_custom_call.1} parent=1 // pred_fallthru
      _
    // Predicated region
    $region86: #{tpu_custom_call.1} parent=1 // pred_check
      _
    $region87: #{tpu_custom_call.1} parent=1 // pred_check_branch
      %243 = sbr.rel (0) target = $region89
    $region88: #{tpu_custom_call.1} parent=1 // pred_region
      %244 = dma.done [#allocation9], 96
    $region89: #{tpu_custom_call.1} parent=1 // pred_fallthru
      _
    // Predicated region
    $region90: #{tpu_custom_call.1} parent=1 // pred_check
      _
    $region91: #{tpu_custom_call.1} parent=1 // pred_check_branch
      %246 = sbr.rel (0) target = $region93
    $region92: #{tpu_custom_call.1} parent=1 // pred_region
      %247 = dma.done [#allocation12], 12288
    $region93: #{tpu_custom_call.1} parent=1 // pred_fallthru
      _
    // Predicated region
    $region94: #{tpu_custom_call.1} parent=1 // pred_check
      _
    $region95: #{tpu_custom_call.1} parent=1 // pred_check_branch
      %249 = sbr.rel (0) target = $region97
    $region96: #{tpu_custom_call.1} parent=1 // pred_region
      %250 = dma.done [#allocation12], 96
    $region97: #{tpu_custom_call.1} parent=1 // pred_fallthru
      _
    // Predicated region
    $region98: #{tpu_custom_call.1} parent=1 // pred_check
      _
    $region99: #{tpu_custom_call.1} parent=1 // pred_check_branch
      %252 = sbr.rel (0) target = $region101
    $region100: #{tpu_custom_call.1} parent=1 // pred_region
      %253 = dma.done [#allocation15], 96
    $region101: #{tpu_custom_call.1} parent=1 // pred_fallthru
      _
    // Predicated region
    $region102: #{tpu_custom_call.1} parent=1 // pred_check
      _
    $region103: #{tpu_custom_call.1} parent=1 // pred_check_branch
      %255 = sbr.rel (0) target = $region105
    $region104: #{tpu_custom_call.1} parent=1 // pred_region
      %256 = dma.done [#allocation15], 96
    $region105: #{tpu_custom_call.1} parent=1 // pred_fallthru
      _
    // Predicated region
    $region106: #{tpu_custom_call.1} parent=1 // pred_check
      _
    $region107: #{tpu_custom_call.1} parent=1 // pred_check_branch
      %258 = sbr.rel (0) target = $region109
    $region108: #{tpu_custom_call.1} parent=1 // pred_region
      %259 = dma.done [#allocation18], 98304
    $region109: #{tpu_custom_call.1} parent=1 // pred_fallthru
      _
    // Predicated region
    $region110: #{tpu_custom_call.1} parent=1 // pred_check
      _
    $region111: #{tpu_custom_call.1} parent=1 // pred_check_branch
      %261 = sbr.rel (0) target = $region113
    $region112: #{tpu_custom_call.1} parent=1 // pred_region
      %262 = dma.done [#allocation18], 768
    $region113: #{tpu_custom_call.1} parent=1 // pred_fallthru
      _
    // Predicated region
    $region114: #{tpu_custom_call.1} parent=1 // pred_check
      _
    $region115: #{tpu_custom_call.1} parent=1 // pred_check_branch
      %264 = sbr.rel (0) target = $region117
    $region116: #{tpu_custom_call.1} parent=1 // pred_region
      %265 = dma.done [#allocation21], 98304
    $region117: #{tpu_custom_call.1} parent=1 // pred_fallthru
      _
    // Predicated region
    $region118: #{tpu_custom_call.1} parent=1 // pred_check
      _
    $region119: #{tpu_custom_call.1} parent=1 // pred_check_branch
      %267 = sbr.rel (0) target = $region121
    $region120: #{tpu_custom_call.1} parent=1 // pred_region
      %268 = dma.done [#allocation21], 96
    $region121: #{tpu_custom_call.1} parent=1 // pred_fallthru
      _
    // Predicated region
    $region122: #{tpu_custom_call.1} parent=1 // pred_check
      _
    $region123: #{tpu_custom_call.1} parent=1 // pred_check_branch
      %270 = sbr.rel (0) target = $region125
    $region124: #{tpu_custom_call.1} parent=1 // pred_region
      %271 = dma.done [#allocation24], 96
    $region125: #{tpu_custom_call.1} parent=1 // pred_fallthru
      _
    // Predicated region
    $region126: #{tpu_custom_call.1} parent=1 // pred_check
      _
    $region127: #{tpu_custom_call.1} parent=1 // pred_check_branch
      %273 = sbr.rel (0) target = $region129
    $region128: #{tpu_custom_call.1} parent=1 // pred_region
      %274 = dma.done [#allocation24], 96
    $region129: #{tpu_custom_call.1} parent=1 // pred_fallthru
      _
    // Predicated region
    $region130: #{tpu_custom_call.1} parent=1 // pred_check
      _
    $region131: #{tpu_custom_call.1} parent=1 // pred_check_branch
      %276 = sbr.rel (0) target = $region133
    $region132: #{tpu_custom_call.1} parent=1 // pred_region
      %277 = dma.done [#allocation27], 2048
    $region133: #{tpu_custom_call.1} parent=1 // pred_fallthru
      _
    // Predicated region
    $region134: #{tpu_custom_call.1} parent=1 // pred_check
      _
    $region135: #{tpu_custom_call.1} parent=1 // pred_check_branch
      %279 = sbr.rel (0) target = $region137
    $region136: #{tpu_custom_call.1} parent=1 // pred_region
      %280 = dma.done [#allocation27], 16
    $region137: #{tpu_custom_call.1} parent=1 // pred_fallthru
      _
    %v282 = vld [vmem:[#allocation2] sm:$0xf]
    %v283 = vld [vmem:[#allocation5] sm:$0xff]
    %v284 = vld [vmem:[#allocation5 + $0x8] sm:$0xff]
    %v285 = vld [vmem:[#allocation5 + $0x10] sm:$0xff]
    %v286 = vld [vmem:[#allocation5 + $0x18] sm:$0xff]
    %v287 = vld [vmem:[#allocation5 + $0x20] sm:$0xff]
    %v288 = vld [vmem:[#allocation5 + $0x28] sm:$0xff]
    %v289 = vld [vmem:[#allocation5 + $0x30] sm:$0xff]
    %v290 = vld [vmem:[#allocation5 + $0x38] sm:$0xff]
    %v291 = vld [vmem:[#allocation5 + $0x40] sm:$0xff]
    %v292 = vld [vmem:[#allocation5 + $0x48] sm:$0xff]
    %v293 = vld [vmem:[#allocation5 + $0x50] sm:$0xff]
    %v294 = vld [vmem:[#allocation5 + $0x58] sm:$0xff]
    %v295 = vld [vmem:[#allocation5 + $0x60] sm:$0xff]
    %v296 = vld [vmem:[#allocation5 + $0x68] sm:$0xff]
    %v297 = vld [vmem:[#allocation5 + $0x70] sm:$0xff]
    %v298 = vld [vmem:[#allocation5 + $0x78] sm:$0xff]
    %v299 = vld [vmem:[#allocation7] sm:$0x3]
    %v301 = vlaneseq
    %v302 = vshrl.u32 %v301, 7
    %v303 = vsub.s32 0, %v302
    %v304 = vrot.slane %v299, %v303
    %v305 = vlaneseq
    %v306 = vshrl.u32 %v305, 7
    %v307 = vsub.s32 1, %v306
    %v308 = vrot.slane %v299, %v307
    %v327 = vunpack.c.l.b16 %v283
    %v328 = vunpack.c.h.b16 %v283
    %v329 = vunpack.c.l.b16 %v284
    %v330 = vunpack.c.h.b16 %v284
    %v331 = vunpack.c.l.b16 %v285
    %v332 = vunpack.c.h.b16 %v285
    %v333 = vunpack.c.l.b16 %v286
    %v334 = vunpack.c.h.b16 %v286
    %v335 = vunpack.c.l.b16 %v287
    %v336 = vunpack.c.h.b16 %v287
    %v337 = vunpack.c.l.b16 %v288
    %v338 = vunpack.c.h.b16 %v288
    %v339 = vunpack.c.l.b16 %v289
    %v340 = vunpack.c.h.b16 %v289
    %v341 = vunpack.c.l.b16 %v290
    %v342 = vunpack.c.h.b16 %v290
    %v343 = vunpack.c.l.b16 %v291
    %v344 = vunpack.c.h.b16 %v291
    %v345 = vunpack.c.l.b16 %v292
    %v346 = vunpack.c.h.b16 %v292
    %v347 = vunpack.c.l.b16 %v293
    %v348 = vunpack.c.h.b16 %v293
    %v349 = vunpack.c.l.b16 %v294
    %v350 = vunpack.c.h.b16 %v294
    %v351 = vunpack.c.l.b16 %v295
    %v352 = vunpack.c.h.b16 %v295
    %v353 = vunpack.c.l.b16 %v296
    %v354 = vunpack.c.h.b16 %v296
    %v355 = vunpack.c.l.b16 %v297
    %v356 = vunpack.c.h.b16 %v297
    %v357 = vunpack.c.l.b16 %v298
    %v358 = vunpack.c.h.b16 %v298
    %v359 = vpack.c.b16 %v329, %v327
    %v360 = vpack.c.b16 %v330, %v328
    %v361 = vpack.c.b16 %v333, %v331
    %v362 = vpack.c.b16 %v334, %v332
    %v363 = vpack.c.b16 %v337, %v335
    %v364 = vpack.c.b16 %v338, %v336
    %v365 = vpack.c.b16 %v341, %v339
    %v366 = vpack.c.b16 %v342, %v340
    %v367 = vpack.c.b16 %v345, %v343
    %v368 = vpack.c.b16 %v346, %v344
    %v369 = vpack.c.b16 %v349, %v347
    %v370 = vpack.c.b16 %v350, %v348
    %v371 = vpack.c.b16 %v353, %v351
    %v372 = vpack.c.b16 %v354, %v352
    %v373 = vpack.c.b16 %v357, %v355
    %v374 = vpack.c.b16 %v358, %v356
    %391 = vmatprep.subr.bf16.mxu0 %v360
    %392 = vmatpush1.bf16.msra.mxu0 %v359
    %393 = vmatprep.subr.bf16.mxu0 %v362
    %394 = vmatpush1.bf16.msra.mxu0 %v361
    %395 = vmatprep.subr.bf16.mxu0 %v364
    %396 = vmatpush1.bf16.msra.mxu0 %v363
    %397 = vmatprep.subr.bf16.mxu0 %v366
    %398 = vmatpush1.bf16.msra.mxu0 %v365
    %399 = vmatprep.subr.bf16.mxu0 %v368
    %400 = vmatpush1.bf16.msra.mxu0 %v367
    %401 = vmatprep.subr.bf16.mxu0 %v370
    %402 = vmatpush1.bf16.msra.mxu0 %v369
    %403 = vmatprep.subr.bf16.mxu0 %v372
    %404 = vmatpush1.bf16.msra.mxu0 %v371
    %405 = vmatprep.subr.bf16.mxu0 %v374
    %406 = vmatpush1.bf16.msra.mxu0 %v373
    %407 = vmatprep.subr.bf16.mxu0 0
    %408 = vmatpush1.bf16.msra.mxu0 0
    %409 = vmatprep.subr.bf16.mxu0 0
    %410 = vmatpush1.bf16.msra.mxu0 0
    %411 = vmatprep.subr.bf16.mxu0 0
    %412 = vmatpush1.bf16.msra.mxu0 0
    %413 = vmatprep.subr.bf16.mxu0 0
    %414 = vmatpush1.bf16.msra.mxu0 0
    %415 = vmatprep.subr.bf16.mxu0 0
    %416 = vmatpush1.bf16.msra.mxu0 0
    %417 = vmatprep.subr.bf16.mxu0 0
    %418 = vmatpush1.bf16.msra.mxu0 0
    %419 = vmatprep.subr.bf16.mxu0 0
    %420 = vmatpush1.bf16.msra.mxu0 0
    %421 = vmatprep.subr.bf16.mxu0 0
    %422 = vmatpush1.bf16.msra.mxu0 0
    %423 = vmatprep.mubr.bf16.mxu0 0
    %424 = vmatmul.mubr.bf16.gmra.mrb[0].mxu0 %v282
    %v425 = vpop.f32.mrb[0].mxu0
    %v426 = vadd.f32 %v304, %v425
    %v427 = vpop.f32.mrb[0].mxu0
    %v428 = vadd.f32 %v308, %v427
    %v429 = vpop.f32.mrb[0].mxu0
    %v430 = vpop.f32.mrb[0].mxu0
    %431 = vdwg.mxu0
    %v432 = vpack.c.bf16 %v426, %v426
    %v433 = vpack.c.bf16 %v428, %v428
    %v434 = vld [vmem:[#allocation8] sm:$0xff]
    %v435 = vld [vmem:[#allocation8 + $0x8] sm:$0xff]
    %v436 = vld [vmem:[#allocation8 + $0x10] sm:$0xff]
    %v437 = vld [vmem:[#allocation8 + $0x18] sm:$0xff]
    %v438 = vld [vmem:[#allocation8 + $0x20] sm:$0xff]
    %v439 = vld [vmem:[#allocation8 + $0x28] sm:$0xff]
    %v440 = vld [vmem:[#allocation8 + $0x30] sm:$0xff]
    %v441 = vld [vmem:[#allocation8 + $0x38] sm:$0xff]
    %v442 = vld [vmem:[#allocation8 + $0x40] sm:$0xff]
    %v443 = vld [vmem:[#allocation8 + $0x48] sm:$0xff]
    %v444 = vld [vmem:[#allocation8 + $0x50] sm:$0xff]
    %v445 = vld [vmem:[#allocation8 + $0x58] sm:$0xff]
    %v446 = vld [vmem:[#allocation8 + $0x60] sm:$0xff]
    %v447 = vld [vmem:[#allocation8 + $0x68] sm:$0xff]
    %v448 = vld [vmem:[#allocation8 + $0x70] sm:$0xff]
    %v449 = vld [vmem:[#allocation8 + $0x78] sm:$0xff]
    %v450 = vld [vmem:[#allocation8 + $0x80] sm:$0xff]
    %v451 = vld [vmem:[#allocation8 + $0x88] sm:$0xff]
    %v452 = vld [vmem:[#allocation8 + $0x90] sm:$0xff]
    %v453 = vld [vmem:[#allocation8 + $0x98] sm:$0xff]
    %v454 = vld [vmem:[#allocation8 + $0xa0] sm:$0xff]
    %v455 = vld [vmem:[#allocation8 + $0xa8] sm:$0xff]
    %v456 = vld [vmem:[#allocation8 + $0xb0] sm:$0xff]
    %v457 = vld [vmem:[#allocation8 + $0xb8] sm:$0xff]
    %v458 = vld [vmem:[#allocation8 + $0xc0] sm:$0xff]
    %v459 = vld [vmem:[#allocation8 + $0xc8] sm:$0xff]
    %v460 = vld [vmem:[#allocation8 + $0xd0] sm:$0xff]
    %v461 = vld [vmem:[#allocation8 + $0xd8] sm:$0xff]
    %v462 = vld [vmem:[#allocation8 + $0xe0] sm:$0xff]
    %v463 = vld [vmem:[#allocation8 + $0xe8] sm:$0xff]
    %v464 = vld [vmem:[#allocation8 + $0xf0] sm:$0xff]
    %v465 = vld [vmem:[#allocation8 + $0xf8] sm:$0xff]
    %v466 = vld [vmem:[#allocation10] sm:$0x3]
    %v468 = vlaneseq
    %v469 = vshrl.u32 %v468, 7
    %v470 = vsub.s32 0, %v469
    %v471 = vrot.slane %v466, %v470
    %v472 = vlaneseq
    %v473 = vshrl.u32 %v472, 7
    %v474 = vsub.s32 1, %v473
    %v475 = vrot.slane %v466, %v474
    %v510 = vunpack.c.l.b16 %v434
    %v511 = vunpack.c.h.b16 %v434
    %v512 = vunpack.c.l.b16 %v435
    %v513 = vunpack.c.h.b16 %v435
    %v514 = vunpack.c.l.b16 %v436
    %v515 = vunpack.c.h.b16 %v436
    %v516 = vunpack.c.l.b16 %v437
    %v517 = vunpack.c.h.b16 %v437
    %v518 = vunpack.c.l.b16 %v438
    %v519 = vunpack.c.h.b16 %v438
    %v520 = vunpack.c.l.b16 %v439
    %v521 = vunpack.c.h.b16 %v439
    %v522 = vunpack.c.l.b16 %v440
    %v523 = vunpack.c.h.b16 %v440
    %v524 = vunpack.c.l.b16 %v441
    %v525 = vunpack.c.h.b16 %v441
    %v526 = vunpack.c.l.b16 %v442
    %v527 = vunpack.c.h.b16 %v442
    %v528 = vunpack.c.l.b16 %v443
    %v529 = vunpack.c.h.b16 %v443
    %v530 = vunpack.c.l.b16 %v444
    %v531 = vunpack.c.h.b16 %v444
    %v532 = vunpack.c.l.b16 %v445
    %v533 = vunpack.c.h.b16 %v445
    %v534 = vunpack.c.l.b16 %v446
    %v535 = vunpack.c.h.b16 %v446
    %v536 = vunpack.c.l.b16 %v447
    %v537 = vunpack.c.h.b16 %v447
    %v538 = vunpack.c.l.b16 %v448
    %v539 = vunpack.c.h.b16 %v448
    %v540 = vunpack.c.l.b16 %v449
    %v541 = vunpack.c.h.b16 %v449
    %v542 = vunpack.c.l.b16 %v450
    %v543 = vunpack.c.h.b16 %v450
    %v544 = vunpack.c.l.b16 %v451
    %v545 = vunpack.c.h.b16 %v451
    %v546 = vunpack.c.l.b16 %v452
    %v547 = vunpack.c.h.b16 %v452
    %v548 = vunpack.c.l.b16 %v453
    %v549 = vunpack.c.h.b16 %v453
    %v550 = vunpack.c.l.b16 %v454
    %v551 = vunpack.c.h.b16 %v454
    %v552 = vunpack.c.l.b16 %v455
    %v553 = vunpack.c.h.b16 %v455
    %v554 = vunpack.c.l.b16 %v456
    %v555 = vunpack.c.h.b16 %v456
    %v556 = vunpack.c.l.b16 %v457
    %v557 = vunpack.c.h.b16 %v457
    %v558 = vunpack.c.l.b16 %v458
    %v559 = vunpack.c.h.b16 %v458
    %v560 = vunpack.c.l.b16 %v459
    %v561 = vunpack.c.h.b16 %v459
    %v562 = vunpack.c.l.b16 %v460
    %v563 = vunpack.c.h.b16 %v460
    %v564 = vunpack.c.l.b16 %v461
    %v565 = vunpack.c.h.b16 %v461
    %v566 = vunpack.c.l.b16 %v462
    %v567 = vunpack.c.h.b16 %v462
    %v568 = vunpack.c.l.b16 %v463
    %v569 = vunpack.c.h.b16 %v463
    %v570 = vunpack.c.l.b16 %v464
    %v571 = vunpack.c.h.b16 %v464
    %v572 = vunpack.c.l.b16 %v465
    %v573 = vunpack.c.h.b16 %v465
    %v574 = vpack.c.b16 %v512, %v510
    %v575 = vpack.c.b16 %v513, %v511
    %v576 = vpack.c.b16 %v516, %v514
    %v577 = vpack.c.b16 %v517, %v515
    %v578 = vpack.c.b16 %v520, %v518
    %v579 = vpack.c.b16 %v521, %v519
    %v580 = vpack.c.b16 %v524, %v522
    %v581 = vpack.c.b16 %v525, %v523
    %v582 = vpack.c.b16 %v528, %v526
    %v583 = vpack.c.b16 %v529, %v527
    %v584 = vpack.c.b16 %v532, %v530
    %v585 = vpack.c.b16 %v533, %v531
    %v586 = vpack.c.b16 %v536, %v534
    %v587 = vpack.c.b16 %v537, %v535
    %v588 = vpack.c.b16 %v540, %v538
    %v589 = vpack.c.b16 %v541, %v539
    %v590 = vpack.c.b16 %v544, %v542
    %v591 = vpack.c.b16 %v545, %v543
    %v592 = vpack.c.b16 %v548, %v546
    %v593 = vpack.c.b16 %v549, %v547
    %v594 = vpack.c.b16 %v552, %v550
    %v595 = vpack.c.b16 %v553, %v551
    %v596 = vpack.c.b16 %v556, %v554
    %v597 = vpack.c.b16 %v557, %v555
    %v598 = vpack.c.b16 %v560, %v558
    %v599 = vpack.c.b16 %v561, %v559
    %v600 = vpack.c.b16 %v564, %v562
    %v601 = vpack.c.b16 %v565, %v563
    %v602 = vpack.c.b16 %v568, %v566
    %v603 = vpack.c.b16 %v569, %v567
    %v604 = vpack.c.b16 %v572, %v570
    %v605 = vpack.c.b16 %v573, %v571
    %638 = vmatprep.subr.bf16.mxu0 %v575
    %639 = vmatpush1.bf16.msra.mxu0 %v574
    %640 = vmatprep.subr.bf16.mxu0 %v577
    %641 = vmatpush1.bf16.msra.mxu0 %v576
    %642 = vmatprep.subr.bf16.mxu0 %v579
    %643 = vmatpush1.bf16.msra.mxu0 %v578
    %644 = vmatprep.subr.bf16.mxu0 %v581
    %645 = vmatpush1.bf16.msra.mxu0 %v580
    %646 = vmatprep.subr.bf16.mxu0 %v583
    %647 = vmatpush1.bf16.msra.mxu0 %v582
    %648 = vmatprep.subr.bf16.mxu0 %v585
    %649 = vmatpush1.bf16.msra.mxu0 %v584
    %650 = vmatprep.subr.bf16.mxu0 %v587
    %651 = vmatpush1.bf16.msra.mxu0 %v586
    %652 = vmatprep.subr.bf16.mxu0 %v589
    %653 = vmatpush1.bf16.msra.mxu0 %v588
    %654 = vmatprep.subr.bf16.mxu0 %v591
    %655 = vmatpush1.bf16.msra.mxu0 %v590
    %656 = vmatprep.subr.bf16.mxu0 %v593
    %657 = vmatpush1.bf16.msra.mxu0 %v592
    %658 = vmatprep.subr.bf16.mxu0 %v595
    %659 = vmatpush1.bf16.msra.mxu0 %v594
    %660 = vmatprep.subr.bf16.mxu0 %v597
    %661 = vmatpush1.bf16.msra.mxu0 %v596
    %662 = vmatprep.subr.bf16.mxu0 %v599
    %663 = vmatpush1.bf16.msra.mxu0 %v598
    %664 = vmatprep.subr.bf16.mxu0 %v601
    %665 = vmatpush1.bf16.msra.mxu0 %v600
    %666 = vmatprep.subr.bf16.mxu0 %v603
    %667 = vmatpush1.bf16.msra.mxu0 %v602
    %668 = vmatprep.subr.bf16.mxu0 %v605
    %669 = vmatpush1.bf16.msra.mxu0 %v604
    %670 = vmatprep.mubr.bf16.mxu0 %v433
    %671 = vmatmul.mubr.bf16.gmra.mrb[0].mxu0 %v432
    %v672 = vpop.f32.mrb[0].mxu0
    %v673 = vadd.f32 %v471, %v672
    %v674 = vpop.f32.mrb[0].mxu0
    %v675 = vadd.f32 %v475, %v674
    %v676 = vpop.f32.mrb[0].mxu0
    %v677 = vpop.f32.mrb[0].mxu0
    %678 = vdwg.mxu0
    %v679 = vpack.c.bf16 %v673, %v673
    %v680 = vpack.c.bf16 %v675, %v675
    %v681 = vld [vmem:[#allocation11] sm:$0xff]
    %v682 = vld [vmem:[#allocation11 + $0x8] sm:$0xff]
    %v683 = vld [vmem:[#allocation11 + $0x10] sm:$0xff]
    %v684 = vld [vmem:[#allocation11 + $0x18] sm:$0xff]
    %v685 = vld [vmem:[#allocation11 + $0x20] sm:$0xff]
    %v686 = vld [vmem:[#allocation11 + $0x28] sm:$0xff]
    %v687 = vld [vmem:[#allocation11 + $0x30] sm:$0xff]
    %v688 = vld [vmem:[#allocation11 + $0x38] sm:$0xff]
    %v689 = vld [vmem:[#allocation11 + $0x40] sm:$0xff]
    %v690 = vld [vmem:[#allocation11 + $0x48] sm:$0xff]
    %v691 = vld [vmem:[#allocation11 + $0x50] sm:$0xff]
    %v692 = vld [vmem:[#allocation11 + $0x58] sm:$0xff]
    %v693 = vld [vmem:[#allocation11 + $0x60] sm:$0xff]
    %v694 = vld [vmem:[#allocation11 + $0x68] sm:$0xff]
    %v695 = vld [vmem:[#allocation11 + $0x70] sm:$0xff]
    %v696 = vld [vmem:[#allocation11 + $0x78] sm:$0xff]
    %v697 = vld [vmem:[#allocation11 + $0x80] sm:$0xff]
    %v698 = vld [vmem:[#allocation11 + $0x88] sm:$0xff]
    %v699 = vld [vmem:[#allocation11 + $0x90] sm:$0xff]
    %v700 = vld [vmem:[#allocation11 + $0x98] sm:$0xff]
    %v701 = vld [vmem:[#allocation11 + $0xa0] sm:$0xff]
    %v702 = vld [vmem:[#allocation11 + $0xa8] sm:$0xff]
    %v703 = vld [vmem:[#allocation11 + $0xb0] sm:$0xff]
    %v704 = vld [vmem:[#allocation11 + $0xb8] sm:$0xff]
    %v705 = vld [vmem:[#allocation11 + $0xc0] sm:$0xff]
    %v706 = vld [vmem:[#allocation11 + $0xc8] sm:$0xff]
    %v707 = vld [vmem:[#allocation11 + $0xd0] sm:$0xff]
    %v708 = vld [vmem:[#allocation11 + $0xd8] sm:$0xff]
    %v709 = vld [vmem:[#allocation11 + $0xe0] sm:$0xff]
    %v710 = vld [vmem:[#allocation11 + $0xe8] sm:$0xff]
    %v711 = vld [vmem:[#allocation11 + $0xf0] sm:$0xff]
    %v712 = vld [vmem:[#allocation11 + $0xf8] sm:$0xff]
    %v713 = vld [vmem:[#allocation13] sm:$0x3]
    %v715 = vlaneseq
    %v716 = vshrl.u32 %v715, 7
    %v717 = vsub.s32 0, %v716
    %v718 = vrot.slane %v713, %v717
    %v719 = vlaneseq
    %v720 = vshrl.u32 %v719, 7
    %v721 = vsub.s32 1, %v720
    %v722 = vrot.slane %v713, %v721
    %v757 = vunpack.c.l.b16 %v681
    %v758 = vunpack.c.h.b16 %v681
    %v759 = vunpack.c.l.b16 %v682
    %v760 = vunpack.c.h.b16 %v682
    %v761 = vunpack.c.l.b16 %v683
    %v762 = vunpack.c.h.b16 %v683
    %v763 = vunpack.c.l.b16 %v684
    %v764 = vunpack.c.h.b16 %v684
    %v765 = vunpack.c.l.b16 %v685
    %v766 = vunpack.c.h.b16 %v685
    %v767 = vunpack.c.l.b16 %v686
    %v768 = vunpack.c.h.b16 %v686
    %v769 = vunpack.c.l.b16 %v687
    %v770 = vunpack.c.h.b16 %v687
    %v771 = vunpack.c.l.b16 %v688
    %v772 = vunpack.c.h.b16 %v688
    %v773 = vunpack.c.l.b16 %v689
    %v774 = vunpack.c.h.b16 %v689
    %v775 = vunpack.c.l.b16 %v690
    %v776 = vunpack.c.h.b16 %v690
    %v777 = vunpack.c.l.b16 %v691
    %v778 = vunpack.c.h.b16 %v691
    %v779 = vunpack.c.l.b16 %v692
    %v780 = vunpack.c.h.b16 %v692
    %v781 = vunpack.c.l.b16 %v693
    %v782 = vunpack.c.h.b16 %v693
    %v783 = vunpack.c.l.b16 %v694
    %v784 = vunpack.c.h.b16 %v694
    %v785 = vunpack.c.l.b16 %v695
    %v786 = vunpack.c.h.b16 %v695
    %v787 = vunpack.c.l.b16 %v696
    %v788 = vunpack.c.h.b16 %v696
    %v789 = vunpack.c.l.b16 %v697
    %v790 = vunpack.c.h.b16 %v697
    %v791 = vunpack.c.l.b16 %v698
    %v792 = vunpack.c.h.b16 %v698
    %v793 = vunpack.c.l.b16 %v699
    %v794 = vunpack.c.h.b16 %v699
    %v795 = vunpack.c.l.b16 %v700
    %v796 = vunpack.c.h.b16 %v700
    %v797 = vunpack.c.l.b16 %v701
    %v798 = vunpack.c.h.b16 %v701
    %v799 = vunpack.c.l.b16 %v702
    %v800 = vunpack.c.h.b16 %v702
    %v801 = vunpack.c.l.b16 %v703
    %v802 = vunpack.c.h.b16 %v703
    %v803 = vunpack.c.l.b16 %v704
    %v804 = vunpack.c.h.b16 %v704
    %v805 = vunpack.c.l.b16 %v705
    %v806 = vunpack.c.h.b16 %v705
    %v807 = vunpack.c.l.b16 %v706
    %v808 = vunpack.c.h.b16 %v706
    %v809 = vunpack.c.l.b16 %v707
    %v810 = vunpack.c.h.b16 %v707
    %v811 = vunpack.c.l.b16 %v708
    %v812 = vunpack.c.h.b16 %v708
    %v813 = vunpack.c.l.b16 %v709
    %v814 = vunpack.c.h.b16 %v709
    %v815 = vunpack.c.l.b16 %v710
    %v816 = vunpack.c.h.b16 %v710
    %v817 = vunpack.c.l.b16 %v711
    %v818 = vunpack.c.h.b16 %v711
    %v819 = vunpack.c.l.b16 %v712
    %v820 = vunpack.c.h.b16 %v712
    %v821 = vpack.c.b16 %v759, %v757
    %v822 = vpack.c.b16 %v760, %v758
    %v823 = vpack.c.b16 %v763, %v761
    %v824 = vpack.c.b16 %v764, %v762
    %v825 = vpack.c.b16 %v767, %v765
    %v826 = vpack.c.b16 %v768, %v766
    %v827 = vpack.c.b16 %v771, %v769
    %v828 = vpack.c.b16 %v772, %v770
    %v829 = vpack.c.b16 %v775, %v773
    %v830 = vpack.c.b16 %v776, %v774
    %v831 = vpack.c.b16 %v779, %v777
    %v832 = vpack.c.b16 %v780, %v778
    %v833 = vpack.c.b16 %v783, %v781
    %v834 = vpack.c.b16 %v784, %v782
    %v835 = vpack.c.b16 %v787, %v785
    %v836 = vpack.c.b16 %v788, %v786
    %v837 = vpack.c.b16 %v791, %v789
    %v838 = vpack.c.b16 %v792, %v790
    %v839 = vpack.c.b16 %v795, %v793
    %v840 = vpack.c.b16 %v796, %v794
    %v841 = vpack.c.b16 %v799, %v797
    %v842 = vpack.c.b16 %v800, %v798
    %v843 = vpack.c.b16 %v803, %v801
    %v844 = vpack.c.b16 %v804, %v802
    %v845 = vpack.c.b16 %v807, %v805
    %v846 = vpack.c.b16 %v808, %v806
    %v847 = vpack.c.b16 %v811, %v809
    %v848 = vpack.c.b16 %v812, %v810
    %v849 = vpack.c.b16 %v815, %v813
    %v850 = vpack.c.b16 %v816, %v814
    %v851 = vpack.c.b16 %v819, %v817
    %v852 = vpack.c.b16 %v820, %v818
    %885 = vmatprep.subr.bf16.mxu0 %v822
    %886 = vmatpush1.bf16.msra.mxu0 %v821
    %887 = vmatprep.subr.bf16.mxu0 %v824
    %888 = vmatpush1.bf16.msra.mxu0 %v823
    %889 = vmatprep.subr.bf16.mxu0 %v826
    %890 = vmatpush1.bf16.msra.mxu0 %v825
    %891 = vmatprep.subr.bf16.mxu0 %v828
    %892 = vmatpush1.bf16.msra.mxu0 %v827
    %893 = vmatprep.subr.bf16.mxu0 %v830
    %894 = vmatpush1.bf16.msra.mxu0 %v829
    %895 = vmatprep.subr.bf16.mxu0 %v832
    %896 = vmatpush1.bf16.msra.mxu0 %v831
    %897 = vmatprep.subr.bf16.mxu0 %v834
    %898 = vmatpush1.bf16.msra.mxu0 %v833
    %899 = vmatprep.subr.bf16.mxu0 %v836
    %900 = vmatpush1.bf16.msra.mxu0 %v835
    %901 = vmatprep.subr.bf16.mxu0 %v838
    %902 = vmatpush1.bf16.msra.mxu0 %v837
    %903 = vmatprep.subr.bf16.mxu0 %v840
    %904 = vmatpush1.bf16.msra.mxu0 %v839
    %905 = vmatprep.subr.bf16.mxu0 %v842
    %906 = vmatpush1.bf16.msra.mxu0 %v841
    %907 = vmatprep.subr.bf16.mxu0 %v844
    %908 = vmatpush1.bf16.msra.mxu0 %v843
    %909 = vmatprep.subr.bf16.mxu0 %v846
    %910 = vmatpush1.bf16.msra.mxu0 %v845
    %911 = vmatprep.subr.bf16.mxu0 %v848
    %912 = vmatpush1.bf16.msra.mxu0 %v847
    %913 = vmatprep.subr.bf16.mxu0 %v850
    %914 = vmatpush1.bf16.msra.mxu0 %v849
    %915 = vmatprep.subr.bf16.mxu0 %v852
    %916 = vmatpush1.bf16.msra.mxu0 %v851
    %917 = vmatprep.mubr.bf16.mxu0 %v680
    %918 = vmatmul.mubr.bf16.gmra.mrb[0].mxu0 %v679
    %v919 = vpop.f32.mrb[0].mxu0
    %v920 = vadd.f32 %v718, %v919
    %v921 = vpop.f32.mrb[0].mxu0
    %v922 = vadd.f32 %v722, %v921
    %v923 = vpop.f32.mrb[0].mxu0
    %v924 = vpop.f32.mrb[0].mxu0
    %925 = vdwg.mxu0
    %v926 = vadd.f32 %v426, %v920
    %v927 = vadd.f32 %v428, %v922
    %v928 = vld [vmem:[#allocation14] sm:$0x3]
    %v929 = vld [vmem:[#allocation16] sm:$0x3]
    %v930 = vadd.f32 %v926, %v927
    %931 = vadd.xlane.f32.xlu0 %v930
    %v932 = vpop.xlane.xlu0 %931
    %v933 = vrcp.pop 256.0
    %v934 = vmul.f32 %v932, %v933
    %v935 = vsub.f32 %v926, %v934
    %v936 = vsub.f32 %v927, %v934
    %v937 = vmul.f32 %v935, %v935
    %v938 = vmul.f32 %v936, %v936
    %v939 = vadd.f32 %v937, %v938
    %940 = vadd.xlane.f32.xlu0 %v939
    %v941 = vpop.xlane.xlu0 %940
    %v942 = vmul.f32 %v941, %v933
    %v943 = vadd.f32 %v942, 1e-05
    %v944 = vrsqrt.pop %v943
    %v945 = vmul.f32 %v935, %v944
    %v946 = vmul.f32 %v936, %v944
    %v948 = vlaneseq
    %v949 = vshrl.u32 %v948, 7
    %v950 = vsub.s32 0, %v949
    %v951 = vrot.slane %v928, %v950
    %v952 = vlaneseq
    %v953 = vshrl.u32 %v952, 7
    %v954 = vsub.s32 1, %v953
    %v955 = vrot.slane %v928, %v954
    %v958 = vmul.f32 %v945, %v951
    %v959 = vmul.f32 %v946, %v955
    %v961 = vlaneseq
    %v962 = vshrl.u32 %v961, 7
    %v963 = vsub.s32 0, %v962
    %v964 = vrot.slane %v929, %v963
    %v965 = vlaneseq
    %v966 = vshrl.u32 %v965, 7
    %v967 = vsub.s32 1, %v966
    %v968 = vrot.slane %v929, %v967
    %v971 = vadd.f32 %v958, %v964
    %v972 = vadd.f32 %v959, %v968
    %v973 = vpack.c.bf16 %v971, %v971
    %v974 = vpack.c.bf16 %v972, %v972
    %v975 = vld [vmem:[#allocation17] sm:$0xff]
    %v976 = vld [vmem:[#allocation17 + $0x8] sm:$0xff]
    %v977 = vld [vmem:[#allocation17 + $0x10] sm:$0xff]
    %v978 = vld [vmem:[#allocation17 + $0x18] sm:$0xff]
    %v979 = vld [vmem:[#allocation17 + $0x20] sm:$0xff]
    %v980 = vld [vmem:[#allocation17 + $0x28] sm:$0xff]
    %v981 = vld [vmem:[#allocation17 + $0x30] sm:$0xff]
    %v982 = vld [vmem:[#allocation17 + $0x38] sm:$0xff]
    %v983 = vld [vmem:[#allocation17 + $0x40] sm:$0xff]
    %v984 = vld [vmem:[#allocation17 + $0x48] sm:$0xff]
    %v985 = vld [vmem:[#allocation17 + $0x50] sm:$0xff]
    %v986 = vld [vmem:[#allocation17 + $0x58] sm:$0xff]
    %v987 = vld [vmem:[#allocation17 + $0x60] sm:$0xff]
    %v988 = vld [vmem:[#allocation17 + $0x68] sm:$0xff]
    %v989 = vld [vmem:[#allocation17 + $0x70] sm:$0xff]
    %v990 = vld [vmem:[#allocation17 + $0x78] sm:$0xff]
    %v991 = vld [vmem:[#allocation17 + $0x80] sm:$0xff]
    %v992 = vld [vmem:[#allocation17 + $0x88] sm:$0xff]
    %v993 = vld [vmem:[#allocation17 + $0x90] sm:$0xff]
    %v994 = vld [vmem:[#allocation17 + $0x98] sm:$0xff]
    %v995 = vld [vmem:[#allocation17 + $0xa0] sm:$0xff]
    %v996 = vld [vmem:[#allocation17 + $0xa8] sm:$0xff]
    %v997 = vld [vmem:[#allocation17 + $0xb0] sm:$0xff]
    %v998 = vld [vmem:[#allocation17 + $0xb8] sm:$0xff]
    %v999 = vld [vmem:[#allocation17 + $0xc0] sm:$0xff]
    %v1000 = vld [vmem:[#allocation17 + $0xc8] sm:$0xff]
    %v1001 = vld [vmem:[#allocation17 + $0xd0] sm:$0xff]
    %v1002 = vld [vmem:[#allocation17 + $0xd8] sm:$0xff]
    %v1003 = vld [vmem:[#allocation17 + $0xe0] sm:$0xff]
    %v1004 = vld [vmem:[#allocation17 + $0xe8] sm:$0xff]
    %v1005 = vld [vmem:[#allocation17 + $0xf0] sm:$0xff]
    %v1006 = vld [vmem:[#allocation17 + $0xf8] sm:$0xff]
    %v1007 = vld [vmem:[#allocation17 + $0x100] sm:$0xff]
    %v1008 = vld [vmem:[#allocation17 + $0x108] sm:$0xff]
    %v1009 = vld [vmem:[#allocation17 + $0x110] sm:$0xff]
    %v1010 = vld [vmem:[#allocation17 + $0x118] sm:$0xff]
    %v1011 = vld [vmem:[#allocation17 + $0x120] sm:$0xff]
    %v1012 = vld [vmem:[#allocation17 + $0x128] sm:$0xff]
    %v1013 = vld [vmem:[#allocation17 + $0x130] sm:$0xff]
    %v1014 = vld [vmem:[#allocation17 + $0x138] sm:$0xff]
    %v1015 = vld [vmem:[#allocation17 + $0x140] sm:$0xff]
    %v1016 = vld [vmem:[#allocation17 + $0x148] sm:$0xff]
    %v1017 = vld [vmem:[#allocation17 + $0x150] sm:$0xff]
    %v1018 = vld [vmem:[#allocation17 + $0x158] sm:$0xff]
    %v1019 = vld [vmem:[#allocation17 + $0x160] sm:$0xff]
    %v1020 = vld [vmem:[#allocation17 + $0x168] sm:$0xff]
    %v1021 = vld [vmem:[#allocation17 + $0x170] sm:$0xff]
    %v1022 = vld [vmem:[#allocation17 + $0x178] sm:$0xff]
    %v1023 = vld [vmem:[#allocation17 + $0x180] sm:$0xff]
    %v1024 = vld [vmem:[#allocation17 + $0x188] sm:$0xff]
    %v1025 = vld [vmem:[#allocation17 + $0x190] sm:$0xff]
    %v1026 = vld [vmem:[#allocation17 + $0x198] sm:$0xff]
    %v1027 = vld [vmem:[#allocation17 + $0x1a0] sm:$0xff]
    %v1028 = vld [vmem:[#allocation17 + $0x1a8] sm:$0xff]
    %v1029 = vld [vmem:[#allocation17 + $0x1b0] sm:$0xff]
    %v1030 = vld [vmem:[#allocation17 + $0x1b8] sm:$0xff]
    %v1031 = vld [vmem:[#allocation17 + $0x1c0] sm:$0xff]
    %v1032 = vld [vmem:[#allocation17 + $0x1c8] sm:$0xff]
    %v1033 = vld [vmem:[#allocation17 + $0x1d0] sm:$0xff]
    %v1034 = vld [vmem:[#allocation17 + $0x1d8] sm:$0xff]
    %v1035 = vld [vmem:[#allocation17 + $0x1e0] sm:$0xff]
    %v1036 = vld [vmem:[#allocation17 + $0x1e8] sm:$0xff]
    %v1037 = vld [vmem:[#allocation17 + $0x1f0] sm:$0xff]
    %v1038 = vld [vmem:[#allocation17 + $0x1f8] sm:$0xff]
    %v1039 = vld [vmem:[#allocation17 + $0x200] sm:$0xff]
    %v1040 = vld [vmem:[#allocation17 + $0x208] sm:$0xff]
    %v1041 = vld [vmem:[#allocation17 + $0x210] sm:$0xff]
    %v1042 = vld [vmem:[#allocation17 + $0x218] sm:$0xff]
    %v1043 = vld [vmem:[#allocation17 + $0x220] sm:$0xff]
    %v1044 = vld [vmem:[#allocation17 + $0x228] sm:$0xff]
    %v1045 = vld [vmem:[#allocation17 + $0x230] sm:$0xff]
    %v1046 = vld [vmem:[#allocation17 + $0x238] sm:$0xff]
    %v1047 = vld [vmem:[#allocation17 + $0x240] sm:$0xff]
    %v1048 = vld [vmem:[#allocation17 + $0x248] sm:$0xff]
    %v1049 = vld [vmem:[#allocation17 + $0x250] sm:$0xff]
    %v1050 = vld [vmem:[#allocation17 + $0x258] sm:$0xff]
    %v1051 = vld [vmem:[#allocation17 + $0x260] sm:$0xff]
    %v1052 = vld [vmem:[#allocation17 + $0x268] sm:$0xff]
    %v1053 = vld [vmem:[#allocation17 + $0x270] sm:$0xff]
    %v1054 = vld [vmem:[#allocation17 + $0x278] sm:$0xff]
    %v1055 = vld [vmem:[#allocation17 + $0x280] sm:$0xff]
    %v1056 = vld [vmem:[#allocation17 + $0x288] sm:$0xff]
    %v1057 = vld [vmem:[#allocation17 + $0x290] sm:$0xff]
    %v1058 = vld [vmem:[#allocation17 + $0x298] sm:$0xff]
    %v1059 = vld [vmem:[#allocation17 + $0x2a0] sm:$0xff]
    %v1060 = vld [vmem:[#allocation17 + $0x2a8] sm:$0xff]
    %v1061 = vld [vmem:[#allocation17 + $0x2b0] sm:$0xff]
    %v1062 = vld [vmem:[#allocation17 + $0x2b8] sm:$0xff]
    %v1063 = vld [vmem:[#allocation17 + $0x2c0] sm:$0xff]
    %v1064 = vld [vmem:[#allocation17 + $0x2c8] sm:$0xff]
    %v1065 = vld [vmem:[#allocation17 + $0x2d0] sm:$0xff]
    %v1066 = vld [vmem:[#allocation17 + $0x2d8] sm:$0xff]
    %v1067 = vld [vmem:[#allocation17 + $0x2e0] sm:$0xff]
    %v1068 = vld [vmem:[#allocation17 + $0x2e8] sm:$0xff]
    %v1069 = vld [vmem:[#allocation17 + $0x2f0] sm:$0xff]
    %v1070 = vld [vmem:[#allocation17 + $0x2f8] sm:$0xff]
    %v1071 = vld [vmem:[#allocation17 + $0x300] sm:$0xff]
    %v1072 = vld [vmem:[#allocation17 + $0x308] sm:$0xff]
    %v1073 = vld [vmem:[#allocation17 + $0x310] sm:$0xff]
    %v1074 = vld [vmem:[#allocation17 + $0x318] sm:$0xff]
    %v1075 = vld [vmem:[#allocation17 + $0x320] sm:$0xff]
    %v1076 = vld [vmem:[#allocation17 + $0x328] sm:$0xff]
    %v1077 = vld [vmem:[#allocation17 + $0x330] sm:$0xff]
    %v1078 = vld [vmem:[#allocation17 + $0x338] sm:$0xff]
    %v1079 = vld [vmem:[#allocation17 + $0x340] sm:$0xff]
    %v1080 = vld [vmem:[#allocation17 + $0x348] sm:$0xff]
    %v1081 = vld [vmem:[#allocation17 + $0x350] sm:$0xff]
    %v1082 = vld [vmem:[#allocation17 + $0x358] sm:$0xff]
    %v1083 = vld [vmem:[#allocation17 + $0x360] sm:$0xff]
    %v1084 = vld [vmem:[#allocation17 + $0x368] sm:$0xff]
    %v1085 = vld [vmem:[#allocation17 + $0x370] sm:$0xff]
    %v1086 = vld [vmem:[#allocation17 + $0x378] sm:$0xff]
    %v1087 = vld [vmem:[#allocation17 + $0x380] sm:$0xff]
    %v1088 = vld [vmem:[#allocation17 + $0x388] sm:$0xff]
    %v1089 = vld [vmem:[#allocation17 + $0x390] sm:$0xff]
    %v1090 = vld [vmem:[#allocation17 + $0x398] sm:$0xff]
    %v1091 = vld [vmem:[#allocation17 + $0x3a0] sm:$0xff]
    %v1092 = vld [vmem:[#allocation17 + $0x3a8] sm:$0xff]
    %v1093 = vld [vmem:[#allocation17 + $0x3b0] sm:$0xff]
    %v1094 = vld [vmem:[#allocation17 + $0x3b8] sm:$0xff]
    %v1095 = vld [vmem:[#allocation17 + $0x3c0] sm:$0xff]
    %v1096 = vld [vmem:[#allocation17 + $0x3c8] sm:$0xff]
    %v1097 = vld [vmem:[#allocation17 + $0x3d0] sm:$0xff]
    %v1098 = vld [vmem:[#allocation17 + $0x3d8] sm:$0xff]
    %v1099 = vld [vmem:[#allocation17 + $0x3e0] sm:$0xff]
    %v1100 = vld [vmem:[#allocation17 + $0x3e8] sm:$0xff]
    %v1101 = vld [vmem:[#allocation17 + $0x3f0] sm:$0xff]
    %v1102 = vld [vmem:[#allocation17 + $0x3f8] sm:$0xff]
    %v1103 = vld [vmem:[#allocation17 + $0x400] sm:$0xff]
    %v1104 = vld [vmem:[#allocation17 + $0x408] sm:$0xff]
    %v1105 = vld [vmem:[#allocation17 + $0x410] sm:$0xff]
    %v1106 = vld [vmem:[#allocation17 + $0x418] sm:$0xff]
    %v1107 = vld [vmem:[#allocation17 + $0x420] sm:$0xff]
    %v1108 = vld [vmem:[#allocation17 + $0x428] sm:$0xff]
    %v1109 = vld [vmem:[#allocation17 + $0x430] sm:$0xff]
    %v1110 = vld [vmem:[#allocation17 + $0x438] sm:$0xff]
    %v1111 = vld [vmem:[#allocation17 + $0x440] sm:$0xff]
    %v1112 = vld [vmem:[#allocation17 + $0x448] sm:$0xff]
    %v1113 = vld [vmem:[#allocation17 + $0x450] sm:$0xff]
    %v1114 = vld [vmem:[#allocation17 + $0x458] sm:$0xff]
    %v1115 = vld [vmem:[#allocation17 + $0x460] sm:$0xff]
    %v1116 = vld [vmem:[#allocation17 + $0x468] sm:$0xff]
    %v1117 = vld [vmem:[#allocation17 + $0x470] sm:$0xff]
    %v1118 = vld [vmem:[#allocation17 + $0x478] sm:$0xff]
    %v1119 = vld [vmem:[#allocation17 + $0x480] sm:$0xff]
    %v1120 = vld [vmem:[#allocation17 + $0x488] sm:$0xff]
    %v1121 = vld [vmem:[#allocation17 + $0x490] sm:$0xff]
    %v1122 = vld [vmem:[#allocation17 + $0x498] sm:$0xff]
    %v1123 = vld [vmem:[#allocation17 + $0x4a0] sm:$0xff]
    %v1124 = vld [vmem:[#allocation17 + $0x4a8] sm:$0xff]
    %v1125 = vld [vmem:[#allocation17 + $0x4b0] sm:$0xff]
    %v1126 = vld [vmem:[#allocation17 + $0x4b8] sm:$0xff]
    %v1127 = vld [vmem:[#allocation17 + $0x4c0] sm:$0xff]
    %v1128 = vld [vmem:[#allocation17 + $0x4c8] sm:$0xff]
    %v1129 = vld [vmem:[#allocation17 + $0x4d0] sm:$0xff]
    %v1130 = vld [vmem:[#allocation17 + $0x4d8] sm:$0xff]
    %v1131 = vld [vmem:[#allocation17 + $0x4e0] sm:$0xff]
    %v1132 = vld [vmem:[#allocation17 + $0x4e8] sm:$0xff]
    %v1133 = vld [vmem:[#allocation17 + $0x4f0] sm:$0xff]
    %v1134 = vld [vmem:[#allocation17 + $0x4f8] sm:$0xff]
    %v1135 = vld [vmem:[#allocation17 + $0x500] sm:$0xff]
    %v1136 = vld [vmem:[#allocation17 + $0x508] sm:$0xff]
    %v1137 = vld [vmem:[#allocation17 + $0x510] sm:$0xff]
    %v1138 = vld [vmem:[#allocation17 + $0x518] sm:$0xff]
    %v1139 = vld [vmem:[#allocation17 + $0x520] sm:$0xff]
    %v1140 = vld [vmem:[#allocation17 + $0x528] sm:$0xff]
    %v1141 = vld [vmem:[#allocation17 + $0x530] sm:$0xff]
    %v1142 = vld [vmem:[#allocation17 + $0x538] sm:$0xff]
    %v1143 = vld [vmem:[#allocation17 + $0x540] sm:$0xff]
    %v1144 = vld [vmem:[#allocation17 + $0x548] sm:$0xff]
    %v1145 = vld [vmem:[#allocation17 + $0x550] sm:$0xff]
    %v1146 = vld [vmem:[#allocation17 + $0x558] sm:$0xff]
    %v1147 = vld [vmem:[#allocation17 + $0x560] sm:$0xff]
    %v1148 = vld [vmem:[#allocation17 + $0x568] sm:$0xff]
    %v1149 = vld [vmem:[#allocation17 + $0x570] sm:$0xff]
    %v1150 = vld [vmem:[#allocation17 + $0x578] sm:$0xff]
    %v1151 = vld [vmem:[#allocation17 + $0x580] sm:$0xff]
    %v1152 = vld [vmem:[#allocation17 + $0x588] sm:$0xff]
    %v1153 = vld [vmem:[#allocation17 + $0x590] sm:$0xff]
    %v1154 = vld [vmem:[#allocation17 + $0x598] sm:$0xff]
    %v1155 = vld [vmem:[#allocation17 + $0x5a0] sm:$0xff]
    %v1156 = vld [vmem:[#allocation17 + $0x5a8] sm:$0xff]
    %v1157 = vld [vmem:[#allocation17 + $0x5b0] sm:$0xff]
    %v1158 = vld [vmem:[#allocation17 + $0x5b8] sm:$0xff]
    %v1159 = vld [vmem:[#allocation17 + $0x5c0] sm:$0xff]
    %v1160 = vld [vmem:[#allocation17 + $0x5c8] sm:$0xff]
    %v1161 = vld [vmem:[#allocation17 + $0x5d0] sm:$0xff]
    %v1162 = vld [vmem:[#allocation17 + $0x5d8] sm:$0xff]
    %v1163 = vld [vmem:[#allocation17 + $0x5e0] sm:$0xff]
    %v1164 = vld [vmem:[#allocation17 + $0x5e8] sm:$0xff]
    %v1165 = vld [vmem:[#allocation17 + $0x5f0] sm:$0xff]
    %v1166 = vld [vmem:[#allocation17 + $0x5f8] sm:$0xff]
    %v1167 = vld [vmem:[#allocation17 + $0x600] sm:$0xff]
    %v1168 = vld [vmem:[#allocation17 + $0x608] sm:$0xff]
    %v1169 = vld [vmem:[#allocation17 + $0x610] sm:$0xff]
    %v1170 = vld [vmem:[#allocation17 + $0x618] sm:$0xff]
    %v1171 = vld [vmem:[#allocation17 + $0x620] sm:$0xff]
    %v1172 = vld [vmem:[#allocation17 + $0x628] sm:$0xff]
    %v1173 = vld [vmem:[#allocation17 + $0x630] sm:$0xff]
    %v1174 = vld [vmem:[#allocation17 + $0x638] sm:$0xff]
    %v1175 = vld [vmem:[#allocation17 + $0x640] sm:$0xff]
    %v1176 = vld [vmem:[#allocation17 + $0x648] sm:$0xff]
    %v1177 = vld [vmem:[#allocation17 + $0x650] sm:$0xff]
    %v1178 = vld [vmem:[#allocation17 + $0x658] sm:$0xff]
    %v1179 = vld [vmem:[#allocation17 + $0x660] sm:$0xff]
    %v1180 = vld [vmem:[#allocation17 + $0x668] sm:$0xff]
    %v1181 = vld [vmem:[#allocation17 + $0x670] sm:$0xff]
    %v1182 = vld [vmem:[#allocation17 + $0x678] sm:$0xff]
    %v1183 = vld [vmem:[#allocation17 + $0x680] sm:$0xff]
    %v1184 = vld [vmem:[#allocation17 + $0x688] sm:$0xff]
    %v1185 = vld [vmem:[#allocation17 + $0x690] sm:$0xff]
    %v1186 = vld [vmem:[#allocation17 + $0x698] sm:$0xff]
    %v1187 = vld [vmem:[#allocation17 + $0x6a0] sm:$0xff]
    %v1188 = vld [vmem:[#allocation17 + $0x6a8] sm:$0xff]
    %v1189 = vld [vmem:[#allocation17 + $0x6b0] sm:$0xff]
    %v1190 = vld [vmem:[#allocation17 + $0x6b8] sm:$0xff]
    %v1191 = vld [vmem:[#allocation17 + $0x6c0] sm:$0xff]
    %v1192 = vld [vmem:[#allocation17 + $0x6c8] sm:$0xff]
    %v1193 = vld [vmem:[#allocation17 + $0x6d0] sm:$0xff]
    %v1194 = vld [vmem:[#allocation17 + $0x6d8] sm:$0xff]
    %v1195 = vld [vmem:[#allocation17 + $0x6e0] sm:$0xff]
    %v1196 = vld [vmem:[#allocation17 + $0x6e8] sm:$0xff]
    %v1197 = vld [vmem:[#allocation17 + $0x6f0] sm:$0xff]
    %v1198 = vld [vmem:[#allocation17 + $0x6f8] sm:$0xff]
    %v1199 = vld [vmem:[#allocation17 + $0x700] sm:$0xff]
    %v1200 = vld [vmem:[#allocation17 + $0x708] sm:$0xff]
    %v1201 = vld [vmem:[#allocation17 + $0x710] sm:$0xff]
    %v1202 = vld [vmem:[#allocation17 + $0x718] sm:$0xff]
    %v1203 = vld [vmem:[#allocation17 + $0x720] sm:$0xff]
    %v1204 = vld [vmem:[#allocation17 + $0x728] sm:$0xff]
    %v1205 = vld [vmem:[#allocation17 + $0x730] sm:$0xff]
    %v1206 = vld [vmem:[#allocation17 + $0x738] sm:$0xff]
    %v1207 = vld [vmem:[#allocation17 + $0x740] sm:$0xff]
    %v1208 = vld [vmem:[#allocation17 + $0x748] sm:$0xff]
    %v1209 = vld [vmem:[#allocation17 + $0x750] sm:$0xff]
    %v1210 = vld [vmem:[#allocation17 + $0x758] sm:$0xff]
    %v1211 = vld [vmem:[#allocation17 + $0x760] sm:$0xff]
    %v1212 = vld [vmem:[#allocation17 + $0x768] sm:$0xff]
    %v1213 = vld [vmem:[#allocation17 + $0x770] sm:$0xff]
    %v1214 = vld [vmem:[#allocation17 + $0x778] sm:$0xff]
    %v1215 = vld [vmem:[#allocation17 + $0x780] sm:$0xff]
    %v1216 = vld [vmem:[#allocation17 + $0x788] sm:$0xff]
    %v1217 = vld [vmem:[#allocation17 + $0x790] sm:$0xff]
    %v1218 = vld [vmem:[#allocation17 + $0x798] sm:$0xff]
    %v1219 = vld [vmem:[#allocation17 + $0x7a0] sm:$0xff]
    %v1220 = vld [vmem:[#allocation17 + $0x7a8] sm:$0xff]
    %v1221 = vld [vmem:[#allocation17 + $0x7b0] sm:$0xff]
    %v1222 = vld [vmem:[#allocation17 + $0x7b8] sm:$0xff]
    %v1223 = vld [vmem:[#allocation17 + $0x7c0] sm:$0xff]
    %v1224 = vld [vmem:[#allocation17 + $0x7c8] sm:$0xff]
    %v1225 = vld [vmem:[#allocation17 + $0x7d0] sm:$0xff]
    %v1226 = vld [vmem:[#allocation17 + $0x7d8] sm:$0xff]
    %v1227 = vld [vmem:[#allocation17 + $0x7e0] sm:$0xff]
    %v1228 = vld [vmem:[#allocation17 + $0x7e8] sm:$0xff]
    %v1229 = vld [vmem:[#allocation17 + $0x7f0] sm:$0xff]
    %v1230 = vld [vmem:[#allocation17 + $0x7f8] sm:$0xff]
    %v1231 = vld [vmem:[#allocation19] sm:$0xff]
    %v1232 = vld [vmem:[#allocation19 + $0x8] sm:$0xff]
    %v1235 = vlaneseq
    %v1236 = vshrl.u32 %v1235, 7
    %v1237 = vsub.s32 0, %v1236
    %v1238 = vrot.slane %v1231, %v1237
    %v1239 = vlaneseq
    %v1240 = vshrl.u32 %v1239, 7
    %v1241 = vsub.s32 1, %v1240
    %v1242 = vrot.slane %v1231, %v1241
    %v1243 = vlaneseq
    %v1244 = vshrl.u32 %v1243, 7
    %v1245 = vsub.s32 2, %v1244
    %v1246 = vrot.slane %v1231, %v1245
    %v1247 = vlaneseq
    %v1248 = vshrl.u32 %v1247, 7
    %v1249 = vsub.s32 3, %v1248
    %v1250 = vrot.slane %v1231, %v1249
    %v1251 = vlaneseq
    %v1252 = vshrl.u32 %v1251, 7
    %v1253 = vsub.s32 4, %v1252
    %v1254 = vrot.slane %v1231, %v1253
    %v1255 = vlaneseq
    %v1256 = vshrl.u32 %v1255, 7
    %v1257 = vsub.s32 5, %v1256
    %v1258 = vrot.slane %v1231, %v1257
    %v1259 = vlaneseq
    %v1260 = vshrl.u32 %v1259, 7
    %v1261 = vsub.s32 6, %v1260
    %v1262 = vrot.slane %v1231, %v1261
    %v1263 = vlaneseq
    %v1264 = vshrl.u32 %v1263, 7
    %v1265 = vsub.s32 7, %v1264
    %v1266 = vrot.slane %v1231, %v1265
    %v1267 = vlaneseq
    %v1268 = vshrl.u32 %v1267, 7
    %v1269 = vsub.s32 0, %v1268
    %v1270 = vrot.slane %v1232, %v1269
    %v1271 = vlaneseq
    %v1272 = vshrl.u32 %v1271, 7
    %v1273 = vsub.s32 1, %v1272
    %v1274 = vrot.slane %v1232, %v1273
    %v1275 = vlaneseq
    %v1276 = vshrl.u32 %v1275, 7
    %v1277 = vsub.s32 2, %v1276
    %v1278 = vrot.slane %v1232, %v1277
    %v1279 = vlaneseq
    %v1280 = vshrl.u32 %v1279, 7
    %v1281 = vsub.s32 3, %v1280
    %v1282 = vrot.slane %v1232, %v1281
    %v1283 = vlaneseq
    %v1284 = vshrl.u32 %v1283, 7
    %v1285 = vsub.s32 4, %v1284
    %v1286 = vrot.slane %v1232, %v1285
    %v1287 = vlaneseq
    %v1288 = vshrl.u32 %v1287, 7
    %v1289 = vsub.s32 5, %v1288
    %v1290 = vrot.slane %v1232, %v1289
    %v1291 = vlaneseq
    %v1292 = vshrl.u32 %v1291, 7
    %v1293 = vsub.s32 6, %v1292
    %v1294 = vrot.slane %v1232, %v1293
    %v1295 = vlaneseq
    %v1296 = vshrl.u32 %v1295, 7
    %v1297 = vsub.s32 7, %v1296
    %v1298 = vrot.slane %v1232, %v1297
    %v1571 = vunpack.c.l.b16 %v975
    %v1572 = vunpack.c.h.b16 %v975
    %v1573 = vunpack.c.l.b16 %v976
    %v1574 = vunpack.c.h.b16 %v976
    %v1575 = vunpack.c.l.b16 %v977
    %v1576 = vunpack.c.h.b16 %v977
    %v1577 = vunpack.c.l.b16 %v978
    %v1578 = vunpack.c.h.b16 %v978
    %v1579 = vunpack.c.l.b16 %v979
    %v1580 = vunpack.c.h.b16 %v979
    %v1581 = vunpack.c.l.b16 %v980
    %v1582 = vunpack.c.h.b16 %v980
    %v1583 = vunpack.c.l.b16 %v981
    %v1584 = vunpack.c.h.b16 %v981
    %v1585 = vunpack.c.l.b16 %v982
    %v1586 = vunpack.c.h.b16 %v982
    %v1587 = vunpack.c.l.b16 %v983
    %v1588 = vunpack.c.h.b16 %v983
    %v1589 = vunpack.c.l.b16 %v984
    %v1590 = vunpack.c.h.b16 %v984
    %v1591 = vunpack.c.l.b16 %v985
    %v1592 = vunpack.c.h.b16 %v985
    %v1593 = vunpack.c.l.b16 %v986
    %v1594 = vunpack.c.h.b16 %v986
    %v1595 = vunpack.c.l.b16 %v987
    %v1596 = vunpack.c.h.b16 %v987
    %v1597 = vunpack.c.l.b16 %v988
    %v1598 = vunpack.c.h.b16 %v988
    %v1599 = vunpack.c.l.b16 %v989
    %v1600 = vunpack.c.h.b16 %v989
    %v1601 = vunpack.c.l.b16 %v990
    %v1602 = vunpack.c.h.b16 %v990
    %v1603 = vunpack.c.l.b16 %v991
    %v1604 = vunpack.c.h.b16 %v991
    %v1605 = vunpack.c.l.b16 %v992
    %v1606 = vunpack.c.h.b16 %v992
    %v1607 = vunpack.c.l.b16 %v993
    %v1608 = vunpack.c.h.b16 %v993
    %v1609 = vunpack.c.l.b16 %v994
    %v1610 = vunpack.c.h.b16 %v994
    %v1611 = vunpack.c.l.b16 %v995
    %v1612 = vunpack.c.h.b16 %v995
    %v1613 = vunpack.c.l.b16 %v996
    %v1614 = vunpack.c.h.b16 %v996
    %v1615 = vunpack.c.l.b16 %v997
    %v1616 = vunpack.c.h.b16 %v997
    %v1617 = vunpack.c.l.b16 %v998
    %v1618 = vunpack.c.h.b16 %v998
    %v1619 = vunpack.c.l.b16 %v999
    %v1620 = vunpack.c.h.b16 %v999
    %v1621 = vunpack.c.l.b16 %v1000
    %v1622 = vunpack.c.h.b16 %v1000
    %v1623 = vunpack.c.l.b16 %v1001
    %v1624 = vunpack.c.h.b16 %v1001
    %v1625 = vunpack.c.l.b16 %v1002
    %v1626 = vunpack.c.h.b16 %v1002
    %v1627 = vunpack.c.l.b16 %v1003
    %v1628 = vunpack.c.h.b16 %v1003
    %v1629 = vunpack.c.l.b16 %v1004
    %v1630 = vunpack.c.h.b16 %v1004
    %v1631 = vunpack.c.l.b16 %v1005
    %v1632 = vunpack.c.h.b16 %v1005
    %v1633 = vunpack.c.l.b16 %v1006
    %v1634 = vunpack.c.h.b16 %v1006
    %v1635 = vunpack.c.l.b16 %v1007
    %v1636 = vunpack.c.h.b16 %v1007
    %v1637 = vunpack.c.l.b16 %v1008
    %v1638 = vunpack.c.h.b16 %v1008
    %v1639 = vunpack.c.l.b16 %v1009
    %v1640 = vunpack.c.h.b16 %v1009
    %v1641 = vunpack.c.l.b16 %v1010
    %v1642 = vunpack.c.h.b16 %v1010
    %v1643 = vunpack.c.l.b16 %v1011
    %v1644 = vunpack.c.h.b16 %v1011
    %v1645 = vunpack.c.l.b16 %v1012
    %v1646 = vunpack.c.h.b16 %v1012
    %v1647 = vunpack.c.l.b16 %v1013
    %v1648 = vunpack.c.h.b16 %v1013
    %v1649 = vunpack.c.l.b16 %v1014
    %v1650 = vunpack.c.h.b16 %v1014
    %v1651 = vunpack.c.l.b16 %v1015
    %v1652 = vunpack.c.h.b16 %v1015
    %v1653 = vunpack.c.l.b16 %v1016
    %v1654 = vunpack.c.h.b16 %v1016
    %v1655 = vunpack.c.l.b16 %v1017
    %v1656 = vunpack.c.h.b16 %v1017
    %v1657 = vunpack.c.l.b16 %v1018
    %v1658 = vunpack.c.h.b16 %v1018
    %v1659 = vunpack.c.l.b16 %v1019
    %v1660 = vunpack.c.h.b16 %v1019
    %v1661 = vunpack.c.l.b16 %v1020
    %v1662 = vunpack.c.h.b16 %v1020
    %v1663 = vunpack.c.l.b16 %v1021
    %v1664 = vunpack.c.h.b16 %v1021
    %v1665 = vunpack.c.l.b16 %v1022
    %v1666 = vunpack.c.h.b16 %v1022
    %v1667 = vunpack.c.l.b16 %v1023
    %v1668 = vunpack.c.h.b16 %v1023
    %v1669 = vunpack.c.l.b16 %v1024
    %v1670 = vunpack.c.h.b16 %v1024
    %v1671 = vunpack.c.l.b16 %v1025
    %v1672 = vunpack.c.h.b16 %v1025
    %v1673 = vunpack.c.l.b16 %v1026
    %v1674 = vunpack.c.h.b16 %v1026
    %v1675 = vunpack.c.l.b16 %v1027
    %v1676 = vunpack.c.h.b16 %v1027
    %v1677 = vunpack.c.l.b16 %v1028
    %v1678 = vunpack.c.h.b16 %v1028
    %v1679 = vunpack.c.l.b16 %v1029
    %v1680 = vunpack.c.h.b16 %v1029
    %v1681 = vunpack.c.l.b16 %v1030
    %v1682 = vunpack.c.h.b16 %v1030
    %v1683 = vunpack.c.l.b16 %v1031
    %v1684 = vunpack.c.h.b16 %v1031
    %v1685 = vunpack.c.l.b16 %v1032
    %v1686 = vunpack.c.h.b16 %v1032
    %v1687 = vunpack.c.l.b16 %v1033
    %v1688 = vunpack.c.h.b16 %v1033
    %v1689 = vunpack.c.l.b16 %v1034
    %v1690 = vunpack.c.h.b16 %v1034
    %v1691 = vunpack.c.l.b16 %v1035
    %v1692 = vunpack.c.h.b16 %v1035
    %v1693 = vunpack.c.l.b16 %v1036
    %v1694 = vunpack.c.h.b16 %v1036
    %v1695 = vunpack.c.l.b16 %v1037
    %v1696 = vunpack.c.h.b16 %v1037
    %v1697 = vunpack.c.l.b16 %v1038
    %v1698 = vunpack.c.h.b16 %v1038
    %v1699 = vunpack.c.l.b16 %v1039
    %v1700 = vunpack.c.h.b16 %v1039
    %v1701 = vunpack.c.l.b16 %v1040
    %v1702 = vunpack.c.h.b16 %v1040
    %v1703 = vunpack.c.l.b16 %v1041
    %v1704 = vunpack.c.h.b16 %v1041
    %v1705 = vunpack.c.l.b16 %v1042
    %v1706 = vunpack.c.h.b16 %v1042
    %v1707 = vunpack.c.l.b16 %v1043
    %v1708 = vunpack.c.h.b16 %v1043
    %v1709 = vunpack.c.l.b16 %v1044
    %v1710 = vunpack.c.h.b16 %v1044
    %v1711 = vunpack.c.l.b16 %v1045
    %v1712 = vunpack.c.h.b16 %v1045
    %v1713 = vunpack.c.l.b16 %v1046
    %v1714 = vunpack.c.h.b16 %v1046
    %v1715 = vunpack.c.l.b16 %v1047
    %v1716 = vunpack.c.h.b16 %v1047
    %v1717 = vunpack.c.l.b16 %v1048
    %v1718 = vunpack.c.h.b16 %v1048
    %v1719 = vunpack.c.l.b16 %v1049
    %v1720 = vunpack.c.h.b16 %v1049
    %v1721 = vunpack.c.l.b16 %v1050
    %v1722 = vunpack.c.h.b16 %v1050
    %v1723 = vunpack.c.l.b16 %v1051
    %v1724 = vunpack.c.h.b16 %v1051
    %v1725 = vunpack.c.l.b16 %v1052
    %v1726 = vunpack.c.h.b16 %v1052
    %v1727 = vunpack.c.l.b16 %v1053
    %v1728 = vunpack.c.h.b16 %v1053
    %v1729 = vunpack.c.l.b16 %v1054
    %v1730 = vunpack.c.h.b16 %v1054
    %v1731 = vunpack.c.l.b16 %v1055
    %v1732 = vunpack.c.h.b16 %v1055
    %v1733 = vunpack.c.l.b16 %v1056
    %v1734 = vunpack.c.h.b16 %v1056
    %v1735 = vunpack.c.l.b16 %v1057
    %v1736 = vunpack.c.h.b16 %v1057
    %v1737 = vunpack.c.l.b16 %v1058
    %v1738 = vunpack.c.h.b16 %v1058
    %v1739 = vunpack.c.l.b16 %v1059
    %v1740 = vunpack.c.h.b16 %v1059
    %v1741 = vunpack.c.l.b16 %v1060
    %v1742 = vunpack.c.h.b16 %v1060
    %v1743 = vunpack.c.l.b16 %v1061
    %v1744 = vunpack.c.h.b16 %v1061
    %v1745 = vunpack.c.l.b16 %v1062
    %v1746 = vunpack.c.h.b16 %v1062
    %v1747 = vunpack.c.l.b16 %v1063
    %v1748 = vunpack.c.h.b16 %v1063
    %v1749 = vunpack.c.l.b16 %v1064
    %v1750 = vunpack.c.h.b16 %v1064
    %v1751 = vunpack.c.l.b16 %v1065
    %v1752 = vunpack.c.h.b16 %v1065
    %v1753 = vunpack.c.l.b16 %v1066
    %v1754 = vunpack.c.h.b16 %v1066
    %v1755 = vunpack.c.l.b16 %v1067
    %v1756 = vunpack.c.h.b16 %v1067
    %v1757 = vunpack.c.l.b16 %v1068
    %v1758 = vunpack.c.h.b16 %v1068
    %v1759 = vunpack.c.l.b16 %v1069
    %v1760 = vunpack.c.h.b16 %v1069
    %v1761 = vunpack.c.l.b16 %v1070
    %v1762 = vunpack.c.h.b16 %v1070
    %v1763 = vunpack.c.l.b16 %v1071
    %v1764 = vunpack.c.h.b16 %v1071
    %v1765 = vunpack.c.l.b16 %v1072
    %v1766 = vunpack.c.h.b16 %v1072
    %v1767 = vunpack.c.l.b16 %v1073
    %v1768 = vunpack.c.h.b16 %v1073
    %v1769 = vunpack.c.l.b16 %v1074
    %v1770 = vunpack.c.h.b16 %v1074
    %v1771 = vunpack.c.l.b16 %v1075
    %v1772 = vunpack.c.h.b16 %v1075
    %v1773 = vunpack.c.l.b16 %v1076
    %v1774 = vunpack.c.h.b16 %v1076
    %v1775 = vunpack.c.l.b16 %v1077
    %v1776 = vunpack.c.h.b16 %v1077
    %v1777 = vunpack.c.l.b16 %v1078
    %v1778 = vunpack.c.h.b16 %v1078
    %v1779 = vunpack.c.l.b16 %v1079
    %v1780 = vunpack.c.h.b16 %v1079
    %v1781 = vunpack.c.l.b16 %v1080
    %v1782 = vunpack.c.h.b16 %v1080
    %v1783 = vunpack.c.l.b16 %v1081
    %v1784 = vunpack.c.h.b16 %v1081
    %v1785 = vunpack.c.l.b16 %v1082
    %v1786 = vunpack.c.h.b16 %v1082
    %v1787 = vunpack.c.l.b16 %v1083
    %v1788 = vunpack.c.h.b16 %v1083
    %v1789 = vunpack.c.l.b16 %v1084
    %v1790 = vunpack.c.h.b16 %v1084
    %v1791 = vunpack.c.l.b16 %v1085
    %v1792 = vunpack.c.h.b16 %v1085
    %v1793 = vunpack.c.l.b16 %v1086
    %v1794 = vunpack.c.h.b16 %v1086
    %v1795 = vunpack.c.l.b16 %v1087
    %v1796 = vunpack.c.h.b16 %v1087
    %v1797 = vunpack.c.l.b16 %v1088
    %v1798 = vunpack.c.h.b16 %v1088
    %v1799 = vunpack.c.l.b16 %v1089
    %v1800 = vunpack.c.h.b16 %v1089
    %v1801 = vunpack.c.l.b16 %v1090
    %v1802 = vunpack.c.h.b16 %v1090
    %v1803 = vunpack.c.l.b16 %v1091
    %v1804 = vunpack.c.h.b16 %v1091
    %v1805 = vunpack.c.l.b16 %v1092
    %v1806 = vunpack.c.h.b16 %v1092
    %v1807 = vunpack.c.l.b16 %v1093
    %v1808 = vunpack.c.h.b16 %v1093
    %v1809 = vunpack.c.l.b16 %v1094
    %v1810 = vunpack.c.h.b16 %v1094
    %v1811 = vunpack.c.l.b16 %v1095
    %v1812 = vunpack.c.h.b16 %v1095
    %v1813 = vunpack.c.l.b16 %v1096
    %v1814 = vunpack.c.h.b16 %v1096
    %v1815 = vunpack.c.l.b16 %v1097
    %v1816 = vunpack.c.h.b16 %v1097
    %v1817 = vunpack.c.l.b16 %v1098
    %v1818 = vunpack.c.h.b16 %v1098
    %v1819 = vunpack.c.l.b16 %v1099
    %v1820 = vunpack.c.h.b16 %v1099
    %v1821 = vunpack.c.l.b16 %v1100
    %v1822 = vunpack.c.h.b16 %v1100
    %v1823 = vunpack.c.l.b16 %v1101
    %v1824 = vunpack.c.h.b16 %v1101
    %v1825 = vunpack.c.l.b16 %v1102
    %v1826 = vunpack.c.h.b16 %v1102
    %v1827 = vunpack.c.l.b16 %v1103
    %v1828 = vunpack.c.h.b16 %v1103
    %v1829 = vunpack.c.l.b16 %v1104
    %v1830 = vunpack.c.h.b16 %v1104
    %v1831 = vunpack.c.l.b16 %v1105
    %v1832 = vunpack.c.h.b16 %v1105
    %v1833 = vunpack.c.l.b16 %v1106
    %v1834 = vunpack.c.h.b16 %v1106
    %v1835 = vunpack.c.l.b16 %v1107
    %v1836 = vunpack.c.h.b16 %v1107
    %v1837 = vunpack.c.l.b16 %v1108
    %v1838 = vunpack.c.h.b16 %v1108
    %v1839 = vunpack.c.l.b16 %v1109
    %v1840 = vunpack.c.h.b16 %v1109
    %v1841 = vunpack.c.l.b16 %v1110
    %v1842 = vunpack.c.h.b16 %v1110
    %v1843 = vunpack.c.l.b16 %v1111
    %v1844 = vunpack.c.h.b16 %v1111
    %v1845 = vunpack.c.l.b16 %v1112
    %v1846 = vunpack.c.h.b16 %v1112
    %v1847 = vunpack.c.l.b16 %v1113
    %v1848 = vunpack.c.h.b16 %v1113
    %v1849 = vunpack.c.l.b16 %v1114
    %v1850 = vunpack.c.h.b16 %v1114
    %v1851 = vunpack.c.l.b16 %v1115
    %v1852 = vunpack.c.h.b16 %v1115
    %v1853 = vunpack.c.l.b16 %v1116
    %v1854 = vunpack.c.h.b16 %v1116
    %v1855 = vunpack.c.l.b16 %v1117
    %v1856 = vunpack.c.h.b16 %v1117
    %v1857 = vunpack.c.l.b16 %v1118
    %v1858 = vunpack.c.h.b16 %v1118
    %v1859 = vunpack.c.l.b16 %v1119
    %v1860 = vunpack.c.h.b16 %v1119
    %v1861 = vunpack.c.l.b16 %v1120
    %v1862 = vunpack.c.h.b16 %v1120
    %v1863 = vunpack.c.l.b16 %v1121
    %v1864 = vunpack.c.h.b16 %v1121
    %v1865 = vunpack.c.l.b16 %v1122
    %v1866 = vunpack.c.h.b16 %v1122
    %v1867 = vunpack.c.l.b16 %v1123
    %v1868 = vunpack.c.h.b16 %v1123
    %v1869 = vunpack.c.l.b16 %v1124
    %v1870 = vunpack.c.h.b16 %v1124
    %v1871 = vunpack.c.l.b16 %v1125
    %v1872 = vunpack.c.h.b16 %v1125
    %v1873 = vunpack.c.l.b16 %v1126
    %v1874 = vunpack.c.h.b16 %v1126
    %v1875 = vunpack.c.l.b16 %v1127
    %v1876 = vunpack.c.h.b16 %v1127
    %v1877 = vunpack.c.l.b16 %v1128
    %v1878 = vunpack.c.h.b16 %v1128
    %v1879 = vunpack.c.l.b16 %v1129
    %v1880 = vunpack.c.h.b16 %v1129
    %v1881 = vunpack.c.l.b16 %v1130
    %v1882 = vunpack.c.h.b16 %v1130
    %v1883 = vunpack.c.l.b16 %v1131
    %v1884 = vunpack.c.h.b16 %v1131
    %v1885 = vunpack.c.l.b16 %v1132
    %v1886 = vunpack.c.h.b16 %v1132
    %v1887 = vunpack.c.l.b16 %v1133
    %v1888 = vunpack.c.h.b16 %v1133
    %v1889 = vunpack.c.l.b16 %v1134
    %v1890 = vunpack.c.h.b16 %v1134
    %v1891 = vunpack.c.l.b16 %v1135
    %v1892 = vunpack.c.h.b16 %v1135
    %v1893 = vunpack.c.l.b16 %v1136
    %v1894 = vunpack.c.h.b16 %v1136
    %v1895 = vunpack.c.l.b16 %v1137
    %v1896 = vunpack.c.h.b16 %v1137
    %v1897 = vunpack.c.l.b16 %v1138
    %v1898 = vunpack.c.h.b16 %v1138
    %v1899 = vunpack.c.l.b16 %v1139
    %v1900 = vunpack.c.h.b16 %v1139
    %v1901 = vunpack.c.l.b16 %v1140
    %v1902 = vunpack.c.h.b16 %v1140
    %v1903 = vunpack.c.l.b16 %v1141
    %v1904 = vunpack.c.h.b16 %v1141
    %v1905 = vunpack.c.l.b16 %v1142
    %v1906 = vunpack.c.h.b16 %v1142
    %v1907 = vunpack.c.l.b16 %v1143
    %v1908 = vunpack.c.h.b16 %v1143
    %v1909 = vunpack.c.l.b16 %v1144
    %v1910 = vunpack.c.h.b16 %v1144
    %v1911 = vunpack.c.l.b16 %v1145
    %v1912 = vunpack.c.h.b16 %v1145
    %v1913 = vunpack.c.l.b16 %v1146
    %v1914 = vunpack.c.h.b16 %v1146
    %v1915 = vunpack.c.l.b16 %v1147
    %v1916 = vunpack.c.h.b16 %v1147
    %v1917 = vunpack.c.l.b16 %v1148
    %v1918 = vunpack.c.h.b16 %v1148
    %v1919 = vunpack.c.l.b16 %v1149
    %v1920 = vunpack.c.h.b16 %v1149
    %v1921 = vunpack.c.l.b16 %v1150
    %v1922 = vunpack.c.h.b16 %v1150
    %v1923 = vunpack.c.l.b16 %v1151
    %v1924 = vunpack.c.h.b16 %v1151
    %v1925 = vunpack.c.l.b16 %v1152
    %v1926 = vunpack.c.h.b16 %v1152
    %v1927 = vunpack.c.l.b16 %v1153
    %v1928 = vunpack.c.h.b16 %v1153
    %v1929 = vunpack.c.l.b16 %v1154
    %v1930 = vunpack.c.h.b16 %v1154
    %v1931 = vunpack.c.l.b16 %v1155
    %v1932 = vunpack.c.h.b16 %v1155
    %v1933 = vunpack.c.l.b16 %v1156
    %v1934 = vunpack.c.h.b16 %v1156
    %v1935 = vunpack.c.l.b16 %v1157
    %v1936 = vunpack.c.h.b16 %v1157
    %v1937 = vunpack.c.l.b16 %v1158
    %v1938 = vunpack.c.h.b16 %v1158
    %v1939 = vunpack.c.l.b16 %v1159
    %v1940 = vunpack.c.h.b16 %v1159
    %v1941 = vunpack.c.l.b16 %v1160
    %v1942 = vunpack.c.h.b16 %v1160
    %v1943 = vunpack.c.l.b16 %v1161
    %v1944 = vunpack.c.h.b16 %v1161
    %v1945 = vunpack.c.l.b16 %v1162
    %v1946 = vunpack.c.h.b16 %v1162
    %v1947 = vunpack.c.l.b16 %v1163
    %v1948 = vunpack.c.h.b16 %v1163
    %v1949 = vunpack.c.l.b16 %v1164
    %v1950 = vunpack.c.h.b16 %v1164
    %v1951 = vunpack.c.l.b16 %v1165
    %v1952 = vunpack.c.h.b16 %v1165
    %v1953 = vunpack.c.l.b16 %v1166
    %v1954 = vunpack.c.h.b16 %v1166
    %v1955 = vunpack.c.l.b16 %v1167
    %v1956 = vunpack.c.h.b16 %v1167
    %v1957 = vunpack.c.l.b16 %v1168
    %v1958 = vunpack.c.h.b16 %v1168
    %v1959 = vunpack.c.l.b16 %v1169
    %v1960 = vunpack.c.h.b16 %v1169
    %v1961 = vunpack.c.l.b16 %v1170
    %v1962 = vunpack.c.h.b16 %v1170
    %v1963 = vunpack.c.l.b16 %v1171
    %v1964 = vunpack.c.h.b16 %v1171
    %v1965 = vunpack.c.l.b16 %v1172
    %v1966 = vunpack.c.h.b16 %v1172
    %v1967 = vunpack.c.l.b16 %v1173
    %v1968 = vunpack.c.h.b16 %v1173
    %v1969 = vunpack.c.l.b16 %v1174
    %v1970 = vunpack.c.h.b16 %v1174
    %v1971 = vunpack.c.l.b16 %v1175
    %v1972 = vunpack.c.h.b16 %v1175
    %v1973 = vunpack.c.l.b16 %v1176
    %v1974 = vunpack.c.h.b16 %v1176
    %v1975 = vunpack.c.l.b16 %v1177
    %v1976 = vunpack.c.h.b16 %v1177
    %v1977 = vunpack.c.l.b16 %v1178
    %v1978 = vunpack.c.h.b16 %v1178
    %v1979 = vunpack.c.l.b16 %v1179
    %v1980 = vunpack.c.h.b16 %v1179
    %v1981 = vunpack.c.l.b16 %v1180
    %v1982 = vunpack.c.h.b16 %v1180
    %v1983 = vunpack.c.l.b16 %v1181
    %v1984 = vunpack.c.h.b16 %v1181
    %v1985 = vunpack.c.l.b16 %v1182
    %v1986 = vunpack.c.h.b16 %v1182
    %v1987 = vunpack.c.l.b16 %v1183
    %v1988 = vunpack.c.h.b16 %v1183
    %v1989 = vunpack.c.l.b16 %v1184
    %v1990 = vunpack.c.h.b16 %v1184
    %v1991 = vunpack.c.l.b16 %v1185
    %v1992 = vunpack.c.h.b16 %v1185
    %v1993 = vunpack.c.l.b16 %v1186
    %v1994 = vunpack.c.h.b16 %v1186
    %v1995 = vunpack.c.l.b16 %v1187
    %v1996 = vunpack.c.h.b16 %v1187
    %v1997 = vunpack.c.l.b16 %v1188
    %v1998 = vunpack.c.h.b16 %v1188
    %v1999 = vunpack.c.l.b16 %v1189
    %v2000 = vunpack.c.h.b16 %v1189
    %v2001 = vunpack.c.l.b16 %v1190
    %v2002 = vunpack.c.h.b16 %v1190
    %v2003 = vunpack.c.l.b16 %v1191
    %v2004 = vunpack.c.h.b16 %v1191
    %v2005 = vunpack.c.l.b16 %v1192
    %v2006 = vunpack.c.h.b16 %v1192
    %v2007 = vunpack.c.l.b16 %v1193
    %v2008 = vunpack.c.h.b16 %v1193
    %v2009 = vunpack.c.l.b16 %v1194
    %v2010 = vunpack.c.h.b16 %v1194
    %v2011 = vunpack.c.l.b16 %v1195
    %v2012 = vunpack.c.h.b16 %v1195
    %v2013 = vunpack.c.l.b16 %v1196
    %v2014 = vunpack.c.h.b16 %v1196
    %v2015 = vunpack.c.l.b16 %v1197
    %v2016 = vunpack.c.h.b16 %v1197
    %v2017 = vunpack.c.l.b16 %v1198
    %v2018 = vunpack.c.h.b16 %v1198
    %v2019 = vunpack.c.l.b16 %v1199
    %v2020 = vunpack.c.h.b16 %v1199
    %v2021 = vunpack.c.l.b16 %v1200
    %v2022 = vunpack.c.h.b16 %v1200
    %v2023 = vunpack.c.l.b16 %v1201
    %v2024 = vunpack.c.h.b16 %v1201
    %v2025 = vunpack.c.l.b16 %v1202
    %v2026 = vunpack.c.h.b16 %v1202
    %v2027 = vunpack.c.l.b16 %v1203
    %v2028 = vunpack.c.h.b16 %v1203
    %v2029 = vunpack.c.l.b16 %v1204
    %v2030 = vunpack.c.h.b16 %v1204
    %v2031 = vunpack.c.l.b16 %v1205
    %v2032 = vunpack.c.h.b16 %v1205
    %v2033 = vunpack.c.l.b16 %v1206
    %v2034 = vunpack.c.h.b16 %v1206
    %v2035 = vunpack.c.l.b16 %v1207
    %v2036 = vunpack.c.h.b16 %v1207
    %v2037 = vunpack.c.l.b16 %v1208
    %v2038 = vunpack.c.h.b16 %v1208
    %v2039 = vunpack.c.l.b16 %v1209
    %v2040 = vunpack.c.h.b16 %v1209
    %v2041 = vunpack.c.l.b16 %v1210
    %v2042 = vunpack.c.h.b16 %v1210
    %v2043 = vunpack.c.l.b16 %v1211
    %v2044 = vunpack.c.h.b16 %v1211
    %v2045 = vunpack.c.l.b16 %v1212
    %v2046 = vunpack.c.h.b16 %v1212
    %v2047 = vunpack.c.l.b16 %v1213
    %v2048 = vunpack.c.h.b16 %v1213
    %v2049 = vunpack.c.l.b16 %v1214
    %v2050 = vunpack.c.h.b16 %v1214
    %v2051 = vunpack.c.l.b16 %v1215
    %v2052 = vunpack.c.h.b16 %v1215
    %v2053 = vunpack.c.l.b16 %v1216
    %v2054 = vunpack.c.h.b16 %v1216
    %v2055 = vunpack.c.l.b16 %v1217
    %v2056 = vunpack.c.h.b16 %v1217
    %v2057 = vunpack.c.l.b16 %v1218
    %v2058 = vunpack.c.h.b16 %v1218
    %v2059 = vunpack.c.l.b16 %v1219
    %v2060 = vunpack.c.h.b16 %v1219
    %v2061 = vunpack.c.l.b16 %v1220
    %v2062 = vunpack.c.h.b16 %v1220
    %v2063 = vunpack.c.l.b16 %v1221
    %v2064 = vunpack.c.h.b16 %v1221
    %v2065 = vunpack.c.l.b16 %v1222
    %v2066 = vunpack.c.h.b16 %v1222
    %v2067 = vunpack.c.l.b16 %v1223
    %v2068 = vunpack.c.h.b16 %v1223
    %v2069 = vunpack.c.l.b16 %v1224
    %v2070 = vunpack.c.h.b16 %v1224
    %v2071 = vunpack.c.l.b16 %v1225
    %v2072 = vunpack.c.h.b16 %v1225
    %v2073 = vunpack.c.l.b16 %v1226
    %v2074 = vunpack.c.h.b16 %v1226
    %v2075 = vunpack.c.l.b16 %v1227
    %v2076 = vunpack.c.h.b16 %v1227
    %v2077 = vunpack.c.l.b16 %v1228
    %v2078 = vunpack.c.h.b16 %v1228
    %v2079 = vunpack.c.l.b16 %v1229
    %v2080 = vunpack.c.h.b16 %v1229
    %v2081 = vunpack.c.l.b16 %v1230
    %v2082 = vunpack.c.h.b16 %v1230
    %v2083 = vpack.c.b16 %v1587, %v1571
    %v2084 = vpack.c.b16 %v1588, %v1572
    %v2085 = vpack.c.b16 %v1589, %v1573
    %v2086 = vpack.c.b16 %v1590, %v1574
    %v2087 = vpack.c.b16 %v1591, %v1575
    %v2088 = vpack.c.b16 %v1592, %v1576
    %v2089 = vpack.c.b16 %v1593, %v1577
    %v2090 = vpack.c.b16 %v1594, %v1578
    %v2091 = vpack.c.b16 %v1595, %v1579
    %v2092 = vpack.c.b16 %v1596, %v1580
    %v2093 = vpack.c.b16 %v1597, %v1581
    %v2094 = vpack.c.b16 %v1598, %v1582
    %v2095 = vpack.c.b16 %v1599, %v1583
    %v2096 = vpack.c.b16 %v1600, %v1584
    %v2097 = vpack.c.b16 %v1601, %v1585
    %v2098 = vpack.c.b16 %v1602, %v1586
    %v2099 = vpack.c.b16 %v1619, %v1603
    %v2100 = vpack.c.b16 %v1620, %v1604
    %v2101 = vpack.c.b16 %v1621, %v1605
    %v2102 = vpack.c.b16 %v1622, %v1606
    %v2103 = vpack.c.b16 %v1623, %v1607
    %v2104 = vpack.c.b16 %v1624, %v1608
    %v2105 = vpack.c.b16 %v1625, %v1609
    %v2106 = vpack.c.b16 %v1626, %v1610
    %v2107 = vpack.c.b16 %v1627, %v1611
    %v2108 = vpack.c.b16 %v1628, %v1612
    %v2109 = vpack.c.b16 %v1629, %v1613
    %v2110 = vpack.c.b16 %v1630, %v1614
    %v2111 = vpack.c.b16 %v1631, %v1615
    %v2112 = vpack.c.b16 %v1632, %v1616
    %v2113 = vpack.c.b16 %v1633, %v1617
    %v2114 = vpack.c.b16 %v1634, %v1618
    %v2115 = vpack.c.b16 %v1651, %v1635
    %v2116 = vpack.c.b16 %v1652, %v1636
    %v2117 = vpack.c.b16 %v1653, %v1637
    %v2118 = vpack.c.b16 %v1654, %v1638
    %v2119 = vpack.c.b16 %v1655, %v1639
    %v2120 = vpack.c.b16 %v1656, %v1640
    %v2121 = vpack.c.b16 %v1657, %v1641
    %v2122 = vpack.c.b16 %v1658, %v1642
    %v2123 = vpack.c.b16 %v1659, %v1643
    %v2124 = vpack.c.b16 %v1660, %v1644
    %v2125 = vpack.c.b16 %v1661, %v1645
    %v2126 = vpack.c.b16 %v1662, %v1646
    %v2127 = vpack.c.b16 %v1663, %v1647
    %v2128 = vpack.c.b16 %v1664, %v1648
    %v2129 = vpack.c.b16 %v1665, %v1649
    %v2130 = vpack.c.b16 %v1666, %v1650
    %v2131 = vpack.c.b16 %v1683, %v1667
    %v2132 = vpack.c.b16 %v1684, %v1668
    %v2133 = vpack.c.b16 %v1685, %v1669
    %v2134 = vpack.c.b16 %v1686, %v1670
    %v2135 = vpack.c.b16 %v1687, %v1671
    %v2136 = vpack.c.b16 %v1688, %v1672
    %v2137 = vpack.c.b16 %v1689, %v1673
    %v2138 = vpack.c.b16 %v1690, %v1674
    %v2139 = vpack.c.b16 %v1691, %v1675
    %v2140 = vpack.c.b16 %v1692, %v1676
    %v2141 = vpack.c.b16 %v1693, %v1677
    %v2142 = vpack.c.b16 %v1694, %v1678
    %v2143 = vpack.c.b16 %v1695, %v1679
    %v2144 = vpack.c.b16 %v1696, %v1680
    %v2145 = vpack.c.b16 %v1697, %v1681
    %v2146 = vpack.c.b16 %v1698, %v1682
    %v2147 = vpack.c.b16 %v1715, %v1699
    %v2148 = vpack.c.b16 %v1716, %v1700
    %v2149 = vpack.c.b16 %v1717, %v1701
    %v2150 = vpack.c.b16 %v1718, %v1702
    %v2151 = vpack.c.b16 %v1719, %v1703
    %v2152 = vpack.c.b16 %v1720, %v1704
    %v2153 = vpack.c.b16 %v1721, %v1705
    %v2154 = vpack.c.b16 %v1722, %v1706
    %v2155 = vpack.c.b16 %v1723, %v1707
    %v2156 = vpack.c.b16 %v1724, %v1708
    %v2157 = vpack.c.b16 %v1725, %v1709
    %v2158 = vpack.c.b16 %v1726, %v1710
    %v2159 = vpack.c.b16 %v1727, %v1711
    %v2160 = vpack.c.b16 %v1728, %v1712
    %v2161 = vpack.c.b16 %v1729, %v1713
    %v2162 = vpack.c.b16 %v1730, %v1714
    %v2163 = vpack.c.b16 %v1747, %v1731
    %v2164 = vpack.c.b16 %v1748, %v1732
    %v2165 = vpack.c.b16 %v1749, %v1733
    %v2166 = vpack.c.b16 %v1750, %v1734
    %v2167 = vpack.c.b16 %v1751, %v1735
    %v2168 = vpack.c.b16 %v1752, %v1736
    %v2169 = vpack.c.b16 %v1753, %v1737
    %v2170 = vpack.c.b16 %v1754, %v1738
    %v2171 = vpack.c.b16 %v1755, %v1739
    %v2172 = vpack.c.b16 %v1756, %v1740
    %v2173 = vpack.c.b16 %v1757, %v1741
    %v2174 = vpack.c.b16 %v1758, %v1742
    %v2175 = vpack.c.b16 %v1759, %v1743
    %v2176 = vpack.c.b16 %v1760, %v1744
    %v2177 = vpack.c.b16 %v1761, %v1745
    %v2178 = vpack.c.b16 %v1762, %v1746
    %v2179 = vpack.c.b16 %v1779, %v1763
    %v2180 = vpack.c.b16 %v1780, %v1764
    %v2181 = vpack.c.b16 %v1781, %v1765
    %v2182 = vpack.c.b16 %v1782, %v1766
    %v2183 = vpack.c.b16 %v1783, %v1767
    %v2184 = vpack.c.b16 %v1784, %v1768
    %v2185 = vpack.c.b16 %v1785, %v1769
    %v2186 = vpack.c.b16 %v1786, %v1770
    %v2187 = vpack.c.b16 %v1787, %v1771
    %v2188 = vpack.c.b16 %v1788, %v1772
    %v2189 = vpack.c.b16 %v1789, %v1773
    %v2190 = vpack.c.b16 %v1790, %v1774
    %v2191 = vpack.c.b16 %v1791, %v1775
    %v2192 = vpack.c.b16 %v1792, %v1776
    %v2193 = vpack.c.b16 %v1793, %v1777
    %v2194 = vpack.c.b16 %v1794, %v1778
    %v2195 = vpack.c.b16 %v1811, %v1795
    %v2196 = vpack.c.b16 %v1812, %v1796
    %v2197 = vpack.c.b16 %v1813, %v1797
    %v2198 = vpack.c.b16 %v1814, %v1798
    %v2199 = vpack.c.b16 %v1815, %v1799
    %v2200 = vpack.c.b16 %v1816, %v1800
    %v2201 = vpack.c.b16 %v1817, %v1801
    %v2202 = vpack.c.b16 %v1818, %v1802
    %v2203 = vpack.c.b16 %v1819, %v1803
    %v2204 = vpack.c.b16 %v1820, %v1804
    %v2205 = vpack.c.b16 %v1821, %v1805
    %v2206 = vpack.c.b16 %v1822, %v1806
    %v2207 = vpack.c.b16 %v1823, %v1807
    %v2208 = vpack.c.b16 %v1824, %v1808
    %v2209 = vpack.c.b16 %v1825, %v1809
    %v2210 = vpack.c.b16 %v1826, %v1810
    %v2211 = vpack.c.b16 %v1843, %v1827
    %v2212 = vpack.c.b16 %v1844, %v1828
    %v2213 = vpack.c.b16 %v1845, %v1829
    %v2214 = vpack.c.b16 %v1846, %v1830
    %v2215 = vpack.c.b16 %v1847, %v1831
    %v2216 = vpack.c.b16 %v1848, %v1832
    %v2217 = vpack.c.b16 %v1849, %v1833
    %v2218 = vpack.c.b16 %v1850, %v1834
    %v2219 = vpack.c.b16 %v1851, %v1835
    %v2220 = vpack.c.b16 %v1852, %v1836
    %v2221 = vpack.c.b16 %v1853, %v1837
    %v2222 = vpack.c.b16 %v1854, %v1838
    %v2223 = vpack.c.b16 %v1855, %v1839
    %v2224 = vpack.c.b16 %v1856, %v1840
    %v2225 = vpack.c.b16 %v1857, %v1841
    %v2226 = vpack.c.b16 %v1858, %v1842
    %v2227 = vpack.c.b16 %v1875, %v1859
    %v2228 = vpack.c.b16 %v1876, %v1860
    %v2229 = vpack.c.b16 %v1877, %v1861
    %v2230 = vpack.c.b16 %v1878, %v1862
    %v2231 = vpack.c.b16 %v1879, %v1863
    %v2232 = vpack.c.b16 %v1880, %v1864
    %v2233 = vpack.c.b16 %v1881, %v1865
    %v2234 = vpack.c.b16 %v1882, %v1866
    %v2235 = vpack.c.b16 %v1883, %v1867
    %v2236 = vpack.c.b16 %v1884, %v1868
    %v2237 = vpack.c.b16 %v1885, %v1869
    %v2238 = vpack.c.b16 %v1886, %v1870
    %v2239 = vpack.c.b16 %v1887, %v1871
    %v2240 = vpack.c.b16 %v1888, %v1872
    %v2241 = vpack.c.b16 %v1889, %v1873
    %v2242 = vpack.c.b16 %v1890, %v1874
    %v2243 = vpack.c.b16 %v1907, %v1891
    %v2244 = vpack.c.b16 %v1908, %v1892
    %v2245 = vpack.c.b16 %v1909, %v1893
    %v2246 = vpack.c.b16 %v1910, %v1894
    %v2247 = vpack.c.b16 %v1911, %v1895
    %v2248 = vpack.c.b16 %v1912, %v1896
    %v2249 = vpack.c.b16 %v1913, %v1897
    %v2250 = vpack.c.b16 %v1914, %v1898
    %v2251 = vpack.c.b16 %v1915, %v1899
    %v2252 = vpack.c.b16 %v1916, %v1900
    %v2253 = vpack.c.b16 %v1917, %v1901
    %v2254 = vpack.c.b16 %v1918, %v1902
    %v2255 = vpack.c.b16 %v1919, %v1903
    %v2256 = vpack.c.b16 %v1920, %v1904
    %v2257 = vpack.c.b16 %v1921, %v1905
    %v2258 = vpack.c.b16 %v1922, %v1906
    %v2259 = vpack.c.b16 %v1939, %v1923
    %v2260 = vpack.c.b16 %v1940, %v1924
    %v2261 = vpack.c.b16 %v1941, %v1925
    %v2262 = vpack.c.b16 %v1942, %v1926
    %v2263 = vpack.c.b16 %v1943, %v1927
    %v2264 = vpack.c.b16 %v1944, %v1928
    %v2265 = vpack.c.b16 %v1945, %v1929
    %v2266 = vpack.c.b16 %v1946, %v1930
    %v2267 = vpack.c.b16 %v1947, %v1931
    %v2268 = vpack.c.b16 %v1948, %v1932
    %v2269 = vpack.c.b16 %v1949, %v1933
    %v2270 = vpack.c.b16 %v1950, %v1934
    %v2271 = vpack.c.b16 %v1951, %v1935
    %v2272 = vpack.c.b16 %v1952, %v1936
    %v2273 = vpack.c.b16 %v1953, %v1937
    %v2274 = vpack.c.b16 %v1954, %v1938
    %v2275 = vpack.c.b16 %v1971, %v1955
    %v2276 = vpack.c.b16 %v1972, %v1956
    %v2277 = vpack.c.b16 %v1973, %v1957
    %v2278 = vpack.c.b16 %v1974, %v1958
    %v2279 = vpack.c.b16 %v1975, %v1959
    %v2280 = vpack.c.b16 %v1976, %v1960
    %v2281 = vpack.c.b16 %v1977, %v1961
    %v2282 = vpack.c.b16 %v1978, %v1962
    %v2283 = vpack.c.b16 %v1979, %v1963
    %v2284 = vpack.c.b16 %v1980, %v1964
    %v2285 = vpack.c.b16 %v1981, %v1965
    %v2286 = vpack.c.b16 %v1982, %v1966
    %v2287 = vpack.c.b16 %v1983, %v1967
    %v2288 = vpack.c.b16 %v1984, %v1968
    %v2289 = vpack.c.b16 %v1985, %v1969
    %v2290 = vpack.c.b16 %v1986, %v1970
    %v2291 = vpack.c.b16 %v2003, %v1987
    %v2292 = vpack.c.b16 %v2004, %v1988
    %v2293 = vpack.c.b16 %v2005, %v1989
    %v2294 = vpack.c.b16 %v2006, %v1990
    %v2295 = vpack.c.b16 %v2007, %v1991
    %v2296 = vpack.c.b16 %v2008, %v1992
    %v2297 = vpack.c.b16 %v2009, %v1993
    %v2298 = vpack.c.b16 %v2010, %v1994
    %v2299 = vpack.c.b16 %v2011, %v1995
    %v2300 = vpack.c.b16 %v2012, %v1996
    %v2301 = vpack.c.b16 %v2013, %v1997
    %v2302 = vpack.c.b16 %v2014, %v1998
    %v2303 = vpack.c.b16 %v2015, %v1999
    %v2304 = vpack.c.b16 %v2016, %v2000
    %v2305 = vpack.c.b16 %v2017, %v2001
    %v2306 = vpack.c.b16 %v2018, %v2002
    %v2307 = vpack.c.b16 %v2035, %v2019
    %v2308 = vpack.c.b16 %v2036, %v2020
    %v2309 = vpack.c.b16 %v2037, %v2021
    %v2310 = vpack.c.b16 %v2038, %v2022
    %v2311 = vpack.c.b16 %v2039, %v2023
    %v2312 = vpack.c.b16 %v2040, %v2024
    %v2313 = vpack.c.b16 %v2041, %v2025
    %v2314 = vpack.c.b16 %v2042, %v2026
    %v2315 = vpack.c.b16 %v2043, %v2027
    %v2316 = vpack.c.b16 %v2044, %v2028
    %v2317 = vpack.c.b16 %v2045, %v2029
    %v2318 = vpack.c.b16 %v2046, %v2030
    %v2319 = vpack.c.b16 %v2047, %v2031
    %v2320 = vpack.c.b16 %v2048, %v2032
    %v2321 = vpack.c.b16 %v2049, %v2033
    %v2322 = vpack.c.b16 %v2050, %v2034
    %v2323 = vpack.c.b16 %v2067, %v2051
    %v2324 = vpack.c.b16 %v2068, %v2052
    %v2325 = vpack.c.b16 %v2069, %v2053
    %v2326 = vpack.c.b16 %v2070, %v2054
    %v2327 = vpack.c.b16 %v2071, %v2055
    %v2328 = vpack.c.b16 %v2072, %v2056
    %v2329 = vpack.c.b16 %v2073, %v2057
    %v2330 = vpack.c.b16 %v2074, %v2058
    %v2331 = vpack.c.b16 %v2075, %v2059
    %v2332 = vpack.c.b16 %v2076, %v2060
    %v2333 = vpack.c.b16 %v2077, %v2061
    %v2334 = vpack.c.b16 %v2078, %v2062
    %v2335 = vpack.c.b16 %v2079, %v2063
    %v2336 = vpack.c.b16 %v2080, %v2064
    %v2337 = vpack.c.b16 %v2081, %v2065
    %v2338 = vpack.c.b16 %v2082, %v2066
    %2595 = vmatprep.subr.bf16.mxu0 %v2084
    %2596 = vmatpush1.bf16.msra.mxu0 %v2083
    %2597 = vmatprep.subr.bf16.mxu0 %v2100
    %2598 = vmatpush1.bf16.msra.mxu0 %v2099
    %2599 = vmatprep.subr.bf16.mxu0 %v2116
    %2600 = vmatpush1.bf16.msra.mxu0 %v2115
    %2601 = vmatprep.subr.bf16.mxu0 %v2132
    %2602 = vmatpush1.bf16.msra.mxu0 %v2131
    %2603 = vmatprep.subr.bf16.mxu0 %v2148
    %2604 = vmatpush1.bf16.msra.mxu0 %v2147
    %2605 = vmatprep.subr.bf16.mxu0 %v2164
    %2606 = vmatpush1.bf16.msra.mxu0 %v2163
    %2607 = vmatprep.subr.bf16.mxu0 %v2180
    %2608 = vmatpush1.bf16.msra.mxu0 %v2179
    %2609 = vmatprep.subr.bf16.mxu0 %v2196
    %2610 = vmatpush1.bf16.msra.mxu0 %v2195
    %2611 = vmatprep.subr.bf16.mxu0 %v2212
    %2612 = vmatpush1.bf16.msra.mxu0 %v2211
    %2613 = vmatprep.subr.bf16.mxu0 %v2228
    %2614 = vmatpush1.bf16.msra.mxu0 %v2227
    %2615 = vmatprep.subr.bf16.mxu0 %v2244
    %2616 = vmatpush1.bf16.msra.mxu0 %v2243
    %2617 = vmatprep.subr.bf16.mxu0 %v2260
    %2618 = vmatpush1.bf16.msra.mxu0 %v2259
    %2619 = vmatprep.subr.bf16.mxu0 %v2276
    %2620 = vmatpush1.bf16.msra.mxu0 %v2275
    %2621 = vmatprep.subr.bf16.mxu0 %v2292
    %2622 = vmatpush1.bf16.msra.mxu0 %v2291
    %2623 = vmatprep.subr.bf16.mxu0 %v2308
    %2624 = vmatpush1.bf16.msra.mxu0 %v2307
    %2625 = vmatprep.subr.bf16.mxu0 %v2324
    %2626 = vmatpush1.bf16.msra.mxu0 %v2323
    %2627 = vmatprep.mubr.bf16.mxu0 %v974
    %2628 = vmatmul.mubr.bf16.gmra.mrb[0].mxu0 %v973
    %v2629 = vpop.f32.mrb[0].mxu0
    %v2630 = vadd.f32 %v1238, %v2629
    %v2631 = vpop.f32.mrb[0].mxu0
    %v2632 = vadd.f32 %v1242, %v2631
    %v2633 = vpop.f32.mrb[0].mxu0
    %v2634 = vpop.f32.mrb[0].mxu0
    %2635 = vdwg.mxu0
    %2636 = vmatprep.subr.bf16.mxu0 %v2086
    %2637 = vmatpush1.bf16.msra.mxu0 %v2085
    %2638 = vmatprep.subr.bf16.mxu0 %v2102
    %2639 = vmatpush1.bf16.msra.mxu0 %v2101
    %2640 = vmatprep.subr.bf16.mxu0 %v2118
    %2641 = vmatpush1.bf16.msra.mxu0 %v2117
    %2642 = vmatprep.subr.bf16.mxu0 %v2134
    %2643 = vmatpush1.bf16.msra.mxu0 %v2133
    %2644 = vmatprep.subr.bf16.mxu0 %v2150
    %2645 = vmatpush1.bf16.msra.mxu0 %v2149
    %2646 = vmatprep.subr.bf16.mxu0 %v2166
    %2647 = vmatpush1.bf16.msra.mxu0 %v2165
    %2648 = vmatprep.subr.bf16.mxu0 %v2182
    %2649 = vmatpush1.bf16.msra.mxu0 %v2181
    %2650 = vmatprep.subr.bf16.mxu0 %v2198
    %2651 = vmatpush1.bf16.msra.mxu0 %v2197
    %2652 = vmatprep.subr.bf16.mxu0 %v2214
    %2653 = vmatpush1.bf16.msra.mxu0 %v2213
    %2654 = vmatprep.subr.bf16.mxu0 %v2230
    %2655 = vmatpush1.bf16.msra.mxu0 %v2229
    %2656 = vmatprep.subr.bf16.mxu0 %v2246
    %2657 = vmatpush1.bf16.msra.mxu0 %v2245
    %2658 = vmatprep.subr.bf16.mxu0 %v2262
    %2659 = vmatpush1.bf16.msra.mxu0 %v2261
    %2660 = vmatprep.subr.bf16.mxu0 %v2278
    %2661 = vmatpush1.bf16.msra.mxu0 %v2277
    %2662 = vmatprep.subr.bf16.mxu0 %v2294
    %2663 = vmatpush1.bf16.msra.mxu0 %v2293
    %2664 = vmatprep.subr.bf16.mxu0 %v2310
    %2665 = vmatpush1.bf16.msra.mxu0 %v2309
    %2666 = vmatprep.subr.bf16.mxu0 %v2326
    %2667 = vmatpush1.bf16.msra.mxu0 %v2325
    %2668 = vmatprep.mubr.bf16.mxu0 %v974
    %2669 = vmatmul.mubr.bf16.gmra.mrb[0].mxu0 %v973
    %v2670 = vpop.f32.mrb[0].mxu0
    %v2671 = vadd.f32 %v1246, %v2670
    %v2672 = vpop.f32.mrb[0].mxu0
    %v2673 = vadd.f32 %v1250, %v2672
    %v2674 = vpop.f32.mrb[0].mxu0
    %v2675 = vpop.f32.mrb[0].mxu0
    %2676 = vdwg.mxu0
    %2677 = vmatprep.subr.bf16.mxu0 %v2088
    %2678 = vmatpush1.bf16.msra.mxu0 %v2087
    %2679 = vmatprep.subr.bf16.mxu0 %v2104
    %2680 = vmatpush1.bf16.msra.mxu0 %v2103
    %2681 = vmatprep.subr.bf16.mxu0 %v2120
    %2682 = vmatpush1.bf16.msra.mxu0 %v2119
    %2683 = vmatprep.subr.bf16.mxu0 %v2136
    %2684 = vmatpush1.bf16.msra.mxu0 %v2135
    %2685 = vmatprep.subr.bf16.mxu0 %v2152
    %2686 = vmatpush1.bf16.msra.mxu0 %v2151
    %2687 = vmatprep.subr.bf16.mxu0 %v2168
    %2688 = vmatpush1.bf16.msra.mxu0 %v2167
    %2689 = vmatprep.subr.bf16.mxu0 %v2184
    %2690 = vmatpush1.bf16.msra.mxu0 %v2183
    %2691 = vmatprep.subr.bf16.mxu0 %v2200
    %2692 = vmatpush1.bf16.msra.mxu0 %v2199
    %2693 = vmatprep.subr.bf16.mxu0 %v2216
    %2694 = vmatpush1.bf16.msra.mxu0 %v2215
    %2695 = vmatprep.subr.bf16.mxu0 %v2232
    %2696 = vmatpush1.bf16.msra.mxu0 %v2231
    %2697 = vmatprep.subr.bf16.mxu0 %v2248
    %2698 = vmatpush1.bf16.msra.mxu0 %v2247
    %2699 = vmatprep.subr.bf16.mxu0 %v2264
    %2700 = vmatpush1.bf16.msra.mxu0 %v2263
    %2701 = vmatprep.subr.bf16.mxu0 %v2280
    %2702 = vmatpush1.bf16.msra.mxu0 %v2279
    %2703 = vmatprep.subr.bf16.mxu0 %v2296
    %2704 = vmatpush1.bf16.msra.mxu0 %v2295
    %2705 = vmatprep.subr.bf16.mxu0 %v2312
    %2706 = vmatpush1.bf16.msra.mxu0 %v2311
    %2707 = vmatprep.subr.bf16.mxu0 %v2328
    %2708 = vmatpush1.bf16.msra.mxu0 %v2327
    %2709 = vmatprep.mubr.bf16.mxu0 %v974
    %2710 = vmatmul.mubr.bf16.gmra.mrb[0].mxu0 %v973
    %v2711 = vpop.f32.mrb[0].mxu0
    %v2712 = vadd.f32 %v1254, %v2711
    %v2713 = vpop.f32.mrb[0].mxu0
    %v2714 = vadd.f32 %v1258, %v2713
    %v2715 = vpop.f32.mrb[0].mxu0
    %v2716 = vpop.f32.mrb[0].mxu0
    %2717 = vdwg.mxu0
    %2718 = vmatprep.subr.bf16.mxu0 %v2090
    %2719 = vmatpush1.bf16.msra.mxu0 %v2089
    %2720 = vmatprep.subr.bf16.mxu0 %v2106
    %2721 = vmatpush1.bf16.msra.mxu0 %v2105
    %2722 = vmatprep.subr.bf16.mxu0 %v2122
    %2723 = vmatpush1.bf16.msra.mxu0 %v2121
    %2724 = vmatprep.subr.bf16.mxu0 %v2138
    %2725 = vmatpush1.bf16.msra.mxu0 %v2137
    %2726 = vmatprep.subr.bf16.mxu0 %v2154
    %2727 = vmatpush1.bf16.msra.mxu0 %v2153
    %2728 = vmatprep.subr.bf16.mxu0 %v2170
    %2729 = vmatpush1.bf16.msra.mxu0 %v2169
    %2730 = vmatprep.subr.bf16.mxu0 %v2186
    %2731 = vmatpush1.bf16.msra.mxu0 %v2185
    %2732 = vmatprep.subr.bf16.mxu0 %v2202
    %2733 = vmatpush1.bf16.msra.mxu0 %v2201
    %2734 = vmatprep.subr.bf16.mxu0 %v2218
    %2735 = vmatpush1.bf16.msra.mxu0 %v2217
    %2736 = vmatprep.subr.bf16.mxu0 %v2234
    %2737 = vmatpush1.bf16.msra.mxu0 %v2233
    %2738 = vmatprep.subr.bf16.mxu0 %v2250
    %2739 = vmatpush1.bf16.msra.mxu0 %v2249
    %2740 = vmatprep.subr.bf16.mxu0 %v2266
    %2741 = vmatpush1.bf16.msra.mxu0 %v2265
    %2742 = vmatprep.subr.bf16.mxu0 %v2282
    %2743 = vmatpush1.bf16.msra.mxu0 %v2281
    %2744 = vmatprep.subr.bf16.mxu0 %v2298
    %2745 = vmatpush1.bf16.msra.mxu0 %v2297
    %2746 = vmatprep.subr.bf16.mxu0 %v2314
    %2747 = vmatpush1.bf16.msra.mxu0 %v2313
    %2748 = vmatprep.subr.bf16.mxu0 %v2330
    %2749 = vmatpush1.bf16.msra.mxu0 %v2329
    %2750 = vmatprep.mubr.bf16.mxu0 %v974
    %2751 = vmatmul.mubr.bf16.gmra.mrb[0].mxu0 %v973
    %v2752 = vpop.f32.mrb[0].mxu0
    %v2753 = vadd.f32 %v1262, %v2752
    %v2754 = vpop.f32.mrb[0].mxu0
    %v2755 = vadd.f32 %v1266, %v2754
    %v2756 = vpop.f32.mrb[0].mxu0
    %v2757 = vpop.f32.mrb[0].mxu0
    %2758 = vdwg.mxu0
    %2759 = vmatprep.subr.bf16.mxu0 %v2092
    %2760 = vmatpush1.bf16.msra.mxu0 %v2091
    %2761 = vmatprep.subr.bf16.mxu0 %v2108
    %2762 = vmatpush1.bf16.msra.mxu0 %v2107
    %2763 = vmatprep.subr.bf16.mxu0 %v2124
    %2764 = vmatpush1.bf16.msra.mxu0 %v2123
    %2765 = vmatprep.subr.bf16.mxu0 %v2140
    %2766 = vmatpush1.bf16.msra.mxu0 %v2139
    %2767 = vmatprep.subr.bf16.mxu0 %v2156
    %2768 = vmatpush1.bf16.msra.mxu0 %v2155
    %2769 = vmatprep.subr.bf16.mxu0 %v2172
    %2770 = vmatpush1.bf16.msra.mxu0 %v2171
    %2771 = vmatprep.subr.bf16.mxu0 %v2188
    %2772 = vmatpush1.bf16.msra.mxu0 %v2187
    %2773 = vmatprep.subr.bf16.mxu0 %v2204
    %2774 = vmatpush1.bf16.msra.mxu0 %v2203
    %2775 = vmatprep.subr.bf16.mxu0 %v2220
    %2776 = vmatpush1.bf16.msra.mxu0 %v2219
    %2777 = vmatprep.subr.bf16.mxu0 %v2236
    %2778 = vmatpush1.bf16.msra.mxu0 %v2235
    %2779 = vmatprep.subr.bf16.mxu0 %v2252
    %2780 = vmatpush1.bf16.msra.mxu0 %v2251
    %2781 = vmatprep.subr.bf16.mxu0 %v2268
    %2782 = vmatpush1.bf16.msra.mxu0 %v2267
    %2783 = vmatprep.subr.bf16.mxu0 %v2284
    %2784 = vmatpush1.bf16.msra.mxu0 %v2283
    %2785 = vmatprep.subr.bf16.mxu0 %v2300
    %2786 = vmatpush1.bf16.msra.mxu0 %v2299
    %2787 = vmatprep.subr.bf16.mxu0 %v2316
    %2788 = vmatpush1.bf16.msra.mxu0 %v2315
    %2789 = vmatprep.subr.bf16.mxu0 %v2332
    %2790 = vmatpush1.bf16.msra.mxu0 %v2331
    %2791 = vmatprep.mubr.bf16.mxu0 %v974
    %2792 = vmatmul.mubr.bf16.gmra.mrb[0].mxu0 %v973
    %v2793 = vpop.f32.mrb[0].mxu0
    %v2794 = vadd.f32 %v1270, %v2793
    %v2795 = vpop.f32.mrb[0].mxu0
    %v2796 = vadd.f32 %v1274, %v2795
    %v2797 = vpop.f32.mrb[0].mxu0
    %v2798 = vpop.f32.mrb[0].mxu0
    %2799 = vdwg.mxu0
    %2800 = vmatprep.subr.bf16.mxu0 %v2094
    %2801 = vmatpush1.bf16.msra.mxu0 %v2093
    %2802 = vmatprep.subr.bf16.mxu0 %v2110
    %2803 = vmatpush1.bf16.msra.mxu0 %v2109
    %2804 = vmatprep.subr.bf16.mxu0 %v2126
    %2805 = vmatpush1.bf16.msra.mxu0 %v2125
    %2806 = vmatprep.subr.bf16.mxu0 %v2142
    %2807 = vmatpush1.bf16.msra.mxu0 %v2141
    %2808 = vmatprep.subr.bf16.mxu0 %v2158
    %2809 = vmatpush1.bf16.msra.mxu0 %v2157
    %2810 = vmatprep.subr.bf16.mxu0 %v2174
    %2811 = vmatpush1.bf16.msra.mxu0 %v2173
    %2812 = vmatprep.subr.bf16.mxu0 %v2190
    %2813 = vmatpush1.bf16.msra.mxu0 %v2189
    %2814 = vmatprep.subr.bf16.mxu0 %v2206
    %2815 = vmatpush1.bf16.msra.mxu0 %v2205
    %2816 = vmatprep.subr.bf16.mxu0 %v2222
    %2817 = vmatpush1.bf16.msra.mxu0 %v2221
    %2818 = vmatprep.subr.bf16.mxu0 %v2238
    %2819 = vmatpush1.bf16.msra.mxu0 %v2237
    %2820 = vmatprep.subr.bf16.mxu0 %v2254
    %2821 = vmatpush1.bf16.msra.mxu0 %v2253
    %2822 = vmatprep.subr.bf16.mxu0 %v2270
    %2823 = vmatpush1.bf16.msra.mxu0 %v2269
    %2824 = vmatprep.subr.bf16.mxu0 %v2286
    %2825 = vmatpush1.bf16.msra.mxu0 %v2285
    %2826 = vmatprep.subr.bf16.mxu0 %v2302
    %2827 = vmatpush1.bf16.msra.mxu0 %v2301
    %2828 = vmatprep.subr.bf16.mxu0 %v2318
    %2829 = vmatpush1.bf16.msra.mxu0 %v2317
    %2830 = vmatprep.subr.bf16.mxu0 %v2334
    %2831 = vmatpush1.bf16.msra.mxu0 %v2333
    %2832 = vmatprep.mubr.bf16.mxu0 %v974
    %2833 = vmatmul.mubr.bf16.gmra.mrb[0].mxu0 %v973
    %v2834 = vpop.f32.mrb[0].mxu0
    %v2835 = vadd.f32 %v1278, %v2834
    %v2836 = vpop.f32.mrb[0].mxu0
    %v2837 = vadd.f32 %v1282, %v2836
    %v2838 = vpop.f32.mrb[0].mxu0
    %v2839 = vpop.f32.mrb[0].mxu0
    %2840 = vdwg.mxu0
    %2841 = vmatprep.subr.bf16.mxu0 %v2096
    %2842 = vmatpush1.bf16.msra.mxu0 %v2095
    %2843 = vmatprep.subr.bf16.mxu0 %v2112
    %2844 = vmatpush1.bf16.msra.mxu0 %v2111
    %2845 = vmatprep.subr.bf16.mxu0 %v2128
    %2846 = vmatpush1.bf16.msra.mxu0 %v2127
    %2847 = vmatprep.subr.bf16.mxu0 %v2144
    %2848 = vmatpush1.bf16.msra.mxu0 %v2143
    %2849 = vmatprep.subr.bf16.mxu0 %v2160
    %2850 = vmatpush1.bf16.msra.mxu0 %v2159
    %2851 = vmatprep.subr.bf16.mxu0 %v2176
    %2852 = vmatpush1.bf16.msra.mxu0 %v2175
    %2853 = vmatprep.subr.bf16.mxu0 %v2192
    %2854 = vmatpush1.bf16.msra.mxu0 %v2191
    %2855 = vmatprep.subr.bf16.mxu0 %v2208
    %2856 = vmatpush1.bf16.msra.mxu0 %v2207
    %2857 = vmatprep.subr.bf16.mxu0 %v2224
    %2858 = vmatpush1.bf16.msra.mxu0 %v2223
    %2859 = vmatprep.subr.bf16.mxu0 %v2240
    %2860 = vmatpush1.bf16.msra.mxu0 %v2239
    %2861 = vmatprep.subr.bf16.mxu0 %v2256
    %2862 = vmatpush1.bf16.msra.mxu0 %v2255
    %2863 = vmatprep.subr.bf16.mxu0 %v2272
    %2864 = vmatpush1.bf16.msra.mxu0 %v2271
    %2865 = vmatprep.subr.bf16.mxu0 %v2288
    %2866 = vmatpush1.bf16.msra.mxu0 %v2287
    %2867 = vmatprep.subr.bf16.mxu0 %v2304
    %2868 = vmatpush1.bf16.msra.mxu0 %v2303
    %2869 = vmatprep.subr.bf16.mxu0 %v2320
    %2870 = vmatpush1.bf16.msra.mxu0 %v2319
    %2871 = vmatprep.subr.bf16.mxu0 %v2336
    %2872 = vmatpush1.bf16.msra.mxu0 %v2335
    %2873 = vmatprep.mubr.bf16.mxu0 %v974
    %2874 = vmatmul.mubr.bf16.gmra.mrb[0].mxu0 %v973
    %v2875 = vpop.f32.mrb[0].mxu0
    %v2876 = vadd.f32 %v1286, %v2875
    %v2877 = vpop.f32.mrb[0].mxu0
    %v2878 = vadd.f32 %v1290, %v2877
    %v2879 = vpop.f32.mrb[0].mxu0
    %v2880 = vpop.f32.mrb[0].mxu0
    %2881 = vdwg.mxu0
    %2882 = vmatprep.subr.bf16.mxu0 %v2098
    %2883 = vmatpush1.bf16.msra.mxu0 %v2097
    %2884 = vmatprep.subr.bf16.mxu0 %v2114
    %2885 = vmatpush1.bf16.msra.mxu0 %v2113
    %2886 = vmatprep.subr.bf16.mxu0 %v2130
    %2887 = vmatpush1.bf16.msra.mxu0 %v2129
    %2888 = vmatprep.subr.bf16.mxu0 %v2146
    %2889 = vmatpush1.bf16.msra.mxu0 %v2145
    %2890 = vmatprep.subr.bf16.mxu0 %v2162
    %2891 = vmatpush1.bf16.msra.mxu0 %v2161
    %2892 = vmatprep.subr.bf16.mxu0 %v2178
    %2893 = vmatpush1.bf16.msra.mxu0 %v2177
    %2894 = vmatprep.subr.bf16.mxu0 %v2194
    %2895 = vmatpush1.bf16.msra.mxu0 %v2193
    %2896 = vmatprep.subr.bf16.mxu0 %v2210
    %2897 = vmatpush1.bf16.msra.mxu0 %v2209
    %2898 = vmatprep.subr.bf16.mxu0 %v2226
    %2899 = vmatpush1.bf16.msra.mxu0 %v2225
    %2900 = vmatprep.subr.bf16.mxu0 %v2242
    %2901 = vmatpush1.bf16.msra.mxu0 %v2241
    %2902 = vmatprep.subr.bf16.mxu0 %v2258
    %2903 = vmatpush1.bf16.msra.mxu0 %v2257
    %2904 = vmatprep.subr.bf16.mxu0 %v2274
    %2905 = vmatpush1.bf16.msra.mxu0 %v2273
    %2906 = vmatprep.subr.bf16.mxu0 %v2290
    %2907 = vmatpush1.bf16.msra.mxu0 %v2289
    %2908 = vmatprep.subr.bf16.mxu0 %v2306
    %2909 = vmatpush1.bf16.msra.mxu0 %v2305
    %2910 = vmatprep.subr.bf16.mxu0 %v2322
    %2911 = vmatpush1.bf16.msra.mxu0 %v2321
    %2912 = vmatprep.subr.bf16.mxu0 %v2338
    %2913 = vmatpush1.bf16.msra.mxu0 %v2337
    %2914 = vmatprep.mubr.bf16.mxu0 %v974
    %2915 = vmatmul.mubr.bf16.gmra.mrb[0].mxu0 %v973
    %v2916 = vpop.f32.mrb[0].mxu0
    %v2917 = vadd.f32 %v1294, %v2916
    %v2918 = vpop.f32.mrb[0].mxu0
    %v2919 = vadd.f32 %v1298, %v2918
    %v2920 = vpop.f32.mrb[0].mxu0
    %v2921 = vpop.f32.mrb[0].mxu0
    %2922 = vdwg.mxu0
    %v2923 = vmax.f32 %v2630, 0.0
    %v2924 = vmax.f32 %v2632, 0.0
    %v2925 = vmax.f32 %v2671, 0.0
    %v2926 = vmax.f32 %v2673, 0.0
    %v2927 = vmax.f32 %v2712, 0.0
    %v2928 = vmax.f32 %v2714, 0.0
    %v2929 = vmax.f32 %v2753, 0.0
    %v2930 = vmax.f32 %v2755, 0.0
    %v2931 = vmax.f32 %v2794, 0.0
    %v2932 = vmax.f32 %v2796, 0.0
    %v2933 = vmax.f32 %v2835, 0.0
    %v2934 = vmax.f32 %v2837, 0.0
    %v2935 = vmax.f32 %v2876, 0.0
    %v2936 = vmax.f32 %v2878, 0.0
    %v2937 = vmax.f32 %v2917, 0.0
    %v2938 = vmax.f32 %v2919, 0.0
    %v2939 = vpack.c.bf16 %v2923, %v2923
    %v2940 = vpack.c.bf16 %v2924, %v2924
    %v2941 = vpack.c.bf16 %v2925, %v2925
    %v2942 = vpack.c.bf16 %v2926, %v2926
    %v2943 = vpack.c.bf16 %v2927, %v2927
    %v2944 = vpack.c.bf16 %v2928, %v2928
    %v2945 = vpack.c.bf16 %v2929, %v2929
    %v2946 = vpack.c.bf16 %v2930, %v2930
    %v2947 = vpack.c.bf16 %v2931, %v2931
    %v2948 = vpack.c.bf16 %v2932, %v2932
    %v2949 = vpack.c.bf16 %v2933, %v2933
    %v2950 = vpack.c.bf16 %v2934, %v2934
    %v2951 = vpack.c.bf16 %v2935, %v2935
    %v2952 = vpack.c.bf16 %v2936, %v2936
    %v2953 = vpack.c.bf16 %v2937, %v2937
    %v2954 = vpack.c.bf16 %v2938, %v2938
    %v2955 = vld [vmem:[#allocation20] sm:$0xff]
    %v2956 = vld [vmem:[#allocation20 + $0x8] sm:$0xff]
    %v2957 = vld [vmem:[#allocation20 + $0x10] sm:$0xff]
    %v2958 = vld [vmem:[#allocation20 + $0x18] sm:$0xff]
    %v2959 = vld [vmem:[#allocation20 + $0x20] sm:$0xff]
    %v2960 = vld [vmem:[#allocation20 + $0x28] sm:$0xff]
    %v2961 = vld [vmem:[#allocation20 + $0x30] sm:$0xff]
    %v2962 = vld [vmem:[#allocation20 + $0x38] sm:$0xff]
    %v2963 = vld [vmem:[#allocation20 + $0x40] sm:$0xff]
    %v2964 = vld [vmem:[#allocation20 + $0x48] sm:$0xff]
    %v2965 = vld [vmem:[#allocation20 + $0x50] sm:$0xff]
    %v2966 = vld [vmem:[#allocation20 + $0x58] sm:$0xff]
    %v2967 = vld [vmem:[#allocation20 + $0x60] sm:$0xff]
    %v2968 = vld [vmem:[#allocation20 + $0x68] sm:$0xff]
    %v2969 = vld [vmem:[#allocation20 + $0x70] sm:$0xff]
    %v2970 = vld [vmem:[#allocation20 + $0x78] sm:$0xff]
    %v2971 = vld [vmem:[#allocation20 + $0x80] sm:$0xff]
    %v2972 = vld [vmem:[#allocation20 + $0x88] sm:$0xff]
    %v2973 = vld [vmem:[#allocation20 + $0x90] sm:$0xff]
    %v2974 = vld [vmem:[#allocation20 + $0x98] sm:$0xff]
    %v2975 = vld [vmem:[#allocation20 + $0xa0] sm:$0xff]
    %v2976 = vld [vmem:[#allocation20 + $0xa8] sm:$0xff]
    %v2977 = vld [vmem:[#allocation20 + $0xb0] sm:$0xff]
    %v2978 = vld [vmem:[#allocation20 + $0xb8] sm:$0xff]
    %v2979 = vld [vmem:[#allocation20 + $0xc0] sm:$0xff]
    %v2980 = vld [vmem:[#allocation20 + $0xc8] sm:$0xff]
    %v2981 = vld [vmem:[#allocation20 + $0xd0] sm:$0xff]
    %v2982 = vld [vmem:[#allocation20 + $0xd8] sm:$0xff]
    %v2983 = vld [vmem:[#allocation20 + $0xe0] sm:$0xff]
    %v2984 = vld [vmem:[#allocation20 + $0xe8] sm:$0xff]
    %v2985 = vld [vmem:[#allocation20 + $0xf0] sm:$0xff]
    %v2986 = vld [vmem:[#allocation20 + $0xf8] sm:$0xff]
    %v2987 = vld [vmem:[#allocation20 + $0x100] sm:$0xff]
    %v2988 = vld [vmem:[#allocation20 + $0x108] sm:$0xff]
    %v2989 = vld [vmem:[#allocation20 + $0x110] sm:$0xff]
    %v2990 = vld [vmem:[#allocation20 + $0x118] sm:$0xff]
    %v2991 = vld [vmem:[#allocation20 + $0x120] sm:$0xff]
    %v2992 = vld [vmem:[#allocation20 + $0x128] sm:$0xff]
    %v2993 = vld [vmem:[#allocation20 + $0x130] sm:$0xff]
    %v2994 = vld [vmem:[#allocation20 + $0x138] sm:$0xff]
    %v2995 = vld [vmem:[#allocation20 + $0x140] sm:$0xff]
    %v2996 = vld [vmem:[#allocation20 + $0x148] sm:$0xff]
    %v2997 = vld [vmem:[#allocation20 + $0x150] sm:$0xff]
    %v2998 = vld [vmem:[#allocation20 + $0x158] sm:$0xff]
    %v2999 = vld [vmem:[#allocation20 + $0x160] sm:$0xff]
    %v3000 = vld [vmem:[#allocation20 + $0x168] sm:$0xff]
    %v3001 = vld [vmem:[#allocation20 + $0x170] sm:$0xff]
    %v3002 = vld [vmem:[#allocation20 + $0x178] sm:$0xff]
    %v3003 = vld [vmem:[#allocation20 + $0x180] sm:$0xff]
    %v3004 = vld [vmem:[#allocation20 + $0x188] sm:$0xff]
    %v3005 = vld [vmem:[#allocation20 + $0x190] sm:$0xff]
    %v3006 = vld [vmem:[#allocation20 + $0x198] sm:$0xff]
    %v3007 = vld [vmem:[#allocation20 + $0x1a0] sm:$0xff]
    %v3008 = vld [vmem:[#allocation20 + $0x1a8] sm:$0xff]
    %v3009 = vld [vmem:[#allocation20 + $0x1b0] sm:$0xff]
    %v3010 = vld [vmem:[#allocation20 + $0x1b8] sm:$0xff]
    %v3011 = vld [vmem:[#allocation20 + $0x1c0] sm:$0xff]
    %v3012 = vld [vmem:[#allocation20 + $0x1c8] sm:$0xff]
    %v3013 = vld [vmem:[#allocation20 + $0x1d0] sm:$0xff]
    %v3014 = vld [vmem:[#allocation20 + $0x1d8] sm:$0xff]
    %v3015 = vld [vmem:[#allocation20 + $0x1e0] sm:$0xff]
    %v3016 = vld [vmem:[#allocation20 + $0x1e8] sm:$0xff]
    %v3017 = vld [vmem:[#allocation20 + $0x1f0] sm:$0xff]
    %v3018 = vld [vmem:[#allocation20 + $0x1f8] sm:$0xff]
    %v3019 = vld [vmem:[#allocation20 + $0x200] sm:$0xff]
    %v3020 = vld [vmem:[#allocation20 + $0x208] sm:$0xff]
    %v3021 = vld [vmem:[#allocation20 + $0x210] sm:$0xff]
    %v3022 = vld [vmem:[#allocation20 + $0x218] sm:$0xff]
    %v3023 = vld [vmem:[#allocation20 + $0x220] sm:$0xff]
    %v3024 = vld [vmem:[#allocation20 + $0x228] sm:$0xff]
    %v3025 = vld [vmem:[#allocation20 + $0x230] sm:$0xff]
    %v3026 = vld [vmem:[#allocation20 + $0x238] sm:$0xff]
    %v3027 = vld [vmem:[#allocation20 + $0x240] sm:$0xff]
    %v3028 = vld [vmem:[#allocation20 + $0x248] sm:$0xff]
    %v3029 = vld [vmem:[#allocation20 + $0x250] sm:$0xff]
    %v3030 = vld [vmem:[#allocation20 + $0x258] sm:$0xff]
    %v3031 = vld [vmem:[#allocation20 + $0x260] sm:$0xff]
    %v3032 = vld [vmem:[#allocation20 + $0x268] sm:$0xff]
    %v3033 = vld [vmem:[#allocation20 + $0x270] sm:$0xff]
    %v3034 = vld [vmem:[#allocation20 + $0x278] sm:$0xff]
    %v3035 = vld [vmem:[#allocation20 + $0x280] sm:$0xff]
    %v3036 = vld [vmem:[#allocation20 + $0x288] sm:$0xff]
    %v3037 = vld [vmem:[#allocation20 + $0x290] sm:$0xff]
    %v3038 = vld [vmem:[#allocation20 + $0x298] sm:$0xff]
    %v3039 = vld [vmem:[#allocation20 + $0x2a0] sm:$0xff]
    %v3040 = vld [vmem:[#allocation20 + $0x2a8] sm:$0xff]
    %v3041 = vld [vmem:[#allocation20 + $0x2b0] sm:$0xff]
    %v3042 = vld [vmem:[#allocation20 + $0x2b8] sm:$0xff]
    %v3043 = vld [vmem:[#allocation20 + $0x2c0] sm:$0xff]
    %v3044 = vld [vmem:[#allocation20 + $0x2c8] sm:$0xff]
    %v3045 = vld [vmem:[#allocation20 + $0x2d0] sm:$0xff]
    %v3046 = vld [vmem:[#allocation20 + $0x2d8] sm:$0xff]
    %v3047 = vld [vmem:[#allocation20 + $0x2e0] sm:$0xff]
    %v3048 = vld [vmem:[#allocation20 + $0x2e8] sm:$0xff]
    %v3049 = vld [vmem:[#allocation20 + $0x2f0] sm:$0xff]
    %v3050 = vld [vmem:[#allocation20 + $0x2f8] sm:$0xff]
    %v3051 = vld [vmem:[#allocation20 + $0x300] sm:$0xff]
    %v3052 = vld [vmem:[#allocation20 + $0x308] sm:$0xff]
    %v3053 = vld [vmem:[#allocation20 + $0x310] sm:$0xff]
    %v3054 = vld [vmem:[#allocation20 + $0x318] sm:$0xff]
    %v3055 = vld [vmem:[#allocation20 + $0x320] sm:$0xff]
    %v3056 = vld [vmem:[#allocation20 + $0x328] sm:$0xff]
    %v3057 = vld [vmem:[#allocation20 + $0x330] sm:$0xff]
    %v3058 = vld [vmem:[#allocation20 + $0x338] sm:$0xff]
    %v3059 = vld [vmem:[#allocation20 + $0x340] sm:$0xff]
    %v3060 = vld [vmem:[#allocation20 + $0x348] sm:$0xff]
    %v3061 = vld [vmem:[#allocation20 + $0x350] sm:$0xff]
    %v3062 = vld [vmem:[#allocation20 + $0x358] sm:$0xff]
    %v3063 = vld [vmem:[#allocation20 + $0x360] sm:$0xff]
    %v3064 = vld [vmem:[#allocation20 + $0x368] sm:$0xff]
    %v3065 = vld [vmem:[#allocation20 + $0x370] sm:$0xff]
    %v3066 = vld [vmem:[#allocation20 + $0x378] sm:$0xff]
    %v3067 = vld [vmem:[#allocation20 + $0x380] sm:$0xff]
    %v3068 = vld [vmem:[#allocation20 + $0x388] sm:$0xff]
    %v3069 = vld [vmem:[#allocation20 + $0x390] sm:$0xff]
    %v3070 = vld [vmem:[#allocation20 + $0x398] sm:$0xff]
    %v3071 = vld [vmem:[#allocation20 + $0x3a0] sm:$0xff]
    %v3072 = vld [vmem:[#allocation20 + $0x3a8] sm:$0xff]
    %v3073 = vld [vmem:[#allocation20 + $0x3b0] sm:$0xff]
    %v3074 = vld [vmem:[#allocation20 + $0x3b8] sm:$0xff]
    %v3075 = vld [vmem:[#allocation20 + $0x3c0] sm:$0xff]
    %v3076 = vld [vmem:[#allocation20 + $0x3c8] sm:$0xff]
    %v3077 = vld [vmem:[#allocation20 + $0x3d0] sm:$0xff]
    %v3078 = vld [vmem:[#allocation20 + $0x3d8] sm:$0xff]
    %v3079 = vld [vmem:[#allocation20 + $0x3e0] sm:$0xff]
    %v3080 = vld [vmem:[#allocation20 + $0x3e8] sm:$0xff]
    %v3081 = vld [vmem:[#allocation20 + $0x3f0] sm:$0xff]
    %v3082 = vld [vmem:[#allocation20 + $0x3f8] sm:$0xff]
    %v3083 = vld [vmem:[#allocation20 + $0x400] sm:$0xff]
    %v3084 = vld [vmem:[#allocation20 + $0x408] sm:$0xff]
    %v3085 = vld [vmem:[#allocation20 + $0x410] sm:$0xff]
    %v3086 = vld [vmem:[#allocation20 + $0x418] sm:$0xff]
    %v3087 = vld [vmem:[#allocation20 + $0x420] sm:$0xff]
    %v3088 = vld [vmem:[#allocation20 + $0x428] sm:$0xff]
    %v3089 = vld [vmem:[#allocation20 + $0x430] sm:$0xff]
    %v3090 = vld [vmem:[#allocation20 + $0x438] sm:$0xff]
    %v3091 = vld [vmem:[#allocation20 + $0x440] sm:$0xff]
    %v3092 = vld [vmem:[#allocation20 + $0x448] sm:$0xff]
    %v3093 = vld [vmem:[#allocation20 + $0x450] sm:$0xff]
    %v3094 = vld [vmem:[#allocation20 + $0x458] sm:$0xff]
    %v3095 = vld [vmem:[#allocation20 + $0x460] sm:$0xff]
    %v3096 = vld [vmem:[#allocation20 + $0x468] sm:$0xff]
    %v3097 = vld [vmem:[#allocation20 + $0x470] sm:$0xff]
    %v3098 = vld [vmem:[#allocation20 + $0x478] sm:$0xff]
    %v3099 = vld [vmem:[#allocation20 + $0x480] sm:$0xff]
    %v3100 = vld [vmem:[#allocation20 + $0x488] sm:$0xff]
    %v3101 = vld [vmem:[#allocation20 + $0x490] sm:$0xff]
    %v3102 = vld [vmem:[#allocation20 + $0x498] sm:$0xff]
    %v3103 = vld [vmem:[#allocation20 + $0x4a0] sm:$0xff]
    %v3104 = vld [vmem:[#allocation20 + $0x4a8] sm:$0xff]
    %v3105 = vld [vmem:[#allocation20 + $0x4b0] sm:$0xff]
    %v3106 = vld [vmem:[#allocation20 + $0x4b8] sm:$0xff]
    %v3107 = vld [vmem:[#allocation20 + $0x4c0] sm:$0xff]
    %v3108 = vld [vmem:[#allocation20 + $0x4c8] sm:$0xff]
    %v3109 = vld [vmem:[#allocation20 + $0x4d0] sm:$0xff]
    %v3110 = vld [vmem:[#allocation20 + $0x4d8] sm:$0xff]
    %v3111 = vld [vmem:[#allocation20 + $0x4e0] sm:$0xff]
    %v3112 = vld [vmem:[#allocation20 + $0x4e8] sm:$0xff]
    %v3113 = vld [vmem:[#allocation20 + $0x4f0] sm:$0xff]
    %v3114 = vld [vmem:[#allocation20 + $0x4f8] sm:$0xff]
    %v3115 = vld [vmem:[#allocation20 + $0x500] sm:$0xff]
    %v3116 = vld [vmem:[#allocation20 + $0x508] sm:$0xff]
    %v3117 = vld [vmem:[#allocation20 + $0x510] sm:$0xff]
    %v3118 = vld [vmem:[#allocation20 + $0x518] sm:$0xff]
    %v3119 = vld [vmem:[#allocation20 + $0x520] sm:$0xff]
    %v3120 = vld [vmem:[#allocation20 + $0x528] sm:$0xff]
    %v3121 = vld [vmem:[#allocation20 + $0x530] sm:$0xff]
    %v3122 = vld [vmem:[#allocation20 + $0x538] sm:$0xff]
    %v3123 = vld [vmem:[#allocation20 + $0x540] sm:$0xff]
    %v3124 = vld [vmem:[#allocation20 + $0x548] sm:$0xff]
    %v3125 = vld [vmem:[#allocation20 + $0x550] sm:$0xff]
    %v3126 = vld [vmem:[#allocation20 + $0x558] sm:$0xff]
    %v3127 = vld [vmem:[#allocation20 + $0x560] sm:$0xff]
    %v3128 = vld [vmem:[#allocation20 + $0x568] sm:$0xff]
    %v3129 = vld [vmem:[#allocation20 + $0x570] sm:$0xff]
    %v3130 = vld [vmem:[#allocation20 + $0x578] sm:$0xff]
    %v3131 = vld [vmem:[#allocation20 + $0x580] sm:$0xff]
    %v3132 = vld [vmem:[#allocation20 + $0x588] sm:$0xff]
    %v3133 = vld [vmem:[#allocation20 + $0x590] sm:$0xff]
    %v3134 = vld [vmem:[#allocation20 + $0x598] sm:$0xff]
    %v3135 = vld [vmem:[#allocation20 + $0x5a0] sm:$0xff]
    %v3136 = vld [vmem:[#allocation20 + $0x5a8] sm:$0xff]
    %v3137 = vld [vmem:[#allocation20 + $0x5b0] sm:$0xff]
    %v3138 = vld [vmem:[#allocation20 + $0x5b8] sm:$0xff]
    %v3139 = vld [vmem:[#allocation20 + $0x5c0] sm:$0xff]
    %v3140 = vld [vmem:[#allocation20 + $0x5c8] sm:$0xff]
    %v3141 = vld [vmem:[#allocation20 + $0x5d0] sm:$0xff]
    %v3142 = vld [vmem:[#allocation20 + $0x5d8] sm:$0xff]
    %v3143 = vld [vmem:[#allocation20 + $0x5e0] sm:$0xff]
    %v3144 = vld [vmem:[#allocation20 + $0x5e8] sm:$0xff]
    %v3145 = vld [vmem:[#allocation20 + $0x5f0] sm:$0xff]
    %v3146 = vld [vmem:[#allocation20 + $0x5f8] sm:$0xff]
    %v3147 = vld [vmem:[#allocation20 + $0x600] sm:$0xff]
    %v3148 = vld [vmem:[#allocation20 + $0x608] sm:$0xff]
    %v3149 = vld [vmem:[#allocation20 + $0x610] sm:$0xff]
    %v3150 = vld [vmem:[#allocation20 + $0x618] sm:$0xff]
    %v3151 = vld [vmem:[#allocation20 + $0x620] sm:$0xff]
    %v3152 = vld [vmem:[#allocation20 + $0x628] sm:$0xff]
    %v3153 = vld [vmem:[#allocation20 + $0x630] sm:$0xff]
    %v3154 = vld [vmem:[#allocation20 + $0x638] sm:$0xff]
    %v3155 = vld [vmem:[#allocation20 + $0x640] sm:$0xff]
    %v3156 = vld [vmem:[#allocation20 + $0x648] sm:$0xff]
    %v3157 = vld [vmem:[#allocation20 + $0x650] sm:$0xff]
    %v3158 = vld [vmem:[#allocation20 + $0x658] sm:$0xff]
    %v3159 = vld [vmem:[#allocation20 + $0x660] sm:$0xff]
    %v3160 = vld [vmem:[#allocation20 + $0x668] sm:$0xff]
    %v3161 = vld [vmem:[#allocation20 + $0x670] sm:$0xff]
    %v3162 = vld [vmem:[#allocation20 + $0x678] sm:$0xff]
    %v3163 = vld [vmem:[#allocation20 + $0x680] sm:$0xff]
    %v3164 = vld [vmem:[#allocation20 + $0x688] sm:$0xff]
    %v3165 = vld [vmem:[#allocation20 + $0x690] sm:$0xff]
    %v3166 = vld [vmem:[#allocation20 + $0x698] sm:$0xff]
    %v3167 = vld [vmem:[#allocation20 + $0x6a0] sm:$0xff]
    %v3168 = vld [vmem:[#allocation20 + $0x6a8] sm:$0xff]
    %v3169 = vld [vmem:[#allocation20 + $0x6b0] sm:$0xff]
    %v3170 = vld [vmem:[#allocation20 + $0x6b8] sm:$0xff]
    %v3171 = vld [vmem:[#allocation20 + $0x6c0] sm:$0xff]
    %v3172 = vld [vmem:[#allocation20 + $0x6c8] sm:$0xff]
    %v3173 = vld [vmem:[#allocation20 + $0x6d0] sm:$0xff]
    %v3174 = vld [vmem:[#allocation20 + $0x6d8] sm:$0xff]
    %v3175 = vld [vmem:[#allocation20 + $0x6e0] sm:$0xff]
    %v3176 = vld [vmem:[#allocation20 + $0x6e8] sm:$0xff]
    %v3177 = vld [vmem:[#allocation20 + $0x6f0] sm:$0xff]
    %v3178 = vld [vmem:[#allocation20 + $0x6f8] sm:$0xff]
    %v3179 = vld [vmem:[#allocation20 + $0x700] sm:$0xff]
    %v3180 = vld [vmem:[#allocation20 + $0x708] sm:$0xff]
    %v3181 = vld [vmem:[#allocation20 + $0x710] sm:$0xff]
    %v3182 = vld [vmem:[#allocation20 + $0x718] sm:$0xff]
    %v3183 = vld [vmem:[#allocation20 + $0x720] sm:$0xff]
    %v3184 = vld [vmem:[#allocation20 + $0x728] sm:$0xff]
    %v3185 = vld [vmem:[#allocation20 + $0x730] sm:$0xff]
    %v3186 = vld [vmem:[#allocation20 + $0x738] sm:$0xff]
    %v3187 = vld [vmem:[#allocation20 + $0x740] sm:$0xff]
    %v3188 = vld [vmem:[#allocation20 + $0x748] sm:$0xff]
    %v3189 = vld [vmem:[#allocation20 + $0x750] sm:$0xff]
    %v3190 = vld [vmem:[#allocation20 + $0x758] sm:$0xff]
    %v3191 = vld [vmem:[#allocation20 + $0x760] sm:$0xff]
    %v3192 = vld [vmem:[#allocation20 + $0x768] sm:$0xff]
    %v3193 = vld [vmem:[#allocation20 + $0x770] sm:$0xff]
    %v3194 = vld [vmem:[#allocation20 + $0x778] sm:$0xff]
    %v3195 = vld [vmem:[#allocation20 + $0x780] sm:$0xff]
    %v3196 = vld [vmem:[#allocation20 + $0x788] sm:$0xff]
    %v3197 = vld [vmem:[#allocation20 + $0x790] sm:$0xff]
    %v3198 = vld [vmem:[#allocation20 + $0x798] sm:$0xff]
    %v3199 = vld [vmem:[#allocation20 + $0x7a0] sm:$0xff]
    %v3200 = vld [vmem:[#allocation20 + $0x7a8] sm:$0xff]
    %v3201 = vld [vmem:[#allocation20 + $0x7b0] sm:$0xff]
    %v3202 = vld [vmem:[#allocation20 + $0x7b8] sm:$0xff]
    %v3203 = vld [vmem:[#allocation20 + $0x7c0] sm:$0xff]
    %v3204 = vld [vmem:[#allocation20 + $0x7c8] sm:$0xff]
    %v3205 = vld [vmem:[#allocation20 + $0x7d0] sm:$0xff]
    %v3206 = vld [vmem:[#allocation20 + $0x7d8] sm:$0xff]
    %v3207 = vld [vmem:[#allocation20 + $0x7e0] sm:$0xff]
    %v3208 = vld [vmem:[#allocation20 + $0x7e8] sm:$0xff]
    %v3209 = vld [vmem:[#allocation20 + $0x7f0] sm:$0xff]
    %v3210 = vld [vmem:[#allocation20 + $0x7f8] sm:$0xff]
    %v3211 = vld [vmem:[#allocation22] sm:$0x3]
    %v3213 = vlaneseq
    %v3214 = vshrl.u32 %v3213, 7
    %v3215 = vsub.s32 0, %v3214
    %v3216 = vrot.slane %v3211, %v3215
    %v3217 = vlaneseq
    %v3218 = vshrl.u32 %v3217, 7
    %v3219 = vsub.s32 1, %v3218
    %v3220 = vrot.slane %v3211, %v3219
    %v3479 = vunpack.c.l.b16 %v2955
    %v3480 = vunpack.c.h.b16 %v2955
    %v3481 = vunpack.c.l.b16 %v2956
    %v3482 = vunpack.c.h.b16 %v2956
    %v3483 = vunpack.c.l.b16 %v2957
    %v3484 = vunpack.c.h.b16 %v2957
    %v3485 = vunpack.c.l.b16 %v2958
    %v3486 = vunpack.c.h.b16 %v2958
    %v3487 = vunpack.c.l.b16 %v2959
    %v3488 = vunpack.c.h.b16 %v2959
    %v3489 = vunpack.c.l.b16 %v2960
    %v3490 = vunpack.c.h.b16 %v2960
    %v3491 = vunpack.c.l.b16 %v2961
    %v3492 = vunpack.c.h.b16 %v2961
    %v3493 = vunpack.c.l.b16 %v2962
    %v3494 = vunpack.c.h.b16 %v2962
    %v3495 = vunpack.c.l.b16 %v2963
    %v3496 = vunpack.c.h.b16 %v2963
    %v3497 = vunpack.c.l.b16 %v2964
    %v3498 = vunpack.c.h.b16 %v2964
    %v3499 = vunpack.c.l.b16 %v2965
    %v3500 = vunpack.c.h.b16 %v2965
    %v3501 = vunpack.c.l.b16 %v2966
    %v3502 = vunpack.c.h.b16 %v2966
    %v3503 = vunpack.c.l.b16 %v2967
    %v3504 = vunpack.c.h.b16 %v2967
    %v3505 = vunpack.c.l.b16 %v2968
    %v3506 = vunpack.c.h.b16 %v2968
    %v3507 = vunpack.c.l.b16 %v2969
    %v3508 = vunpack.c.h.b16 %v2969
    %v3509 = vunpack.c.l.b16 %v2970
    %v3510 = vunpack.c.h.b16 %v2970
    %v3511 = vunpack.c.l.b16 %v2971
    %v3512 = vunpack.c.h.b16 %v2971
    %v3513 = vunpack.c.l.b16 %v2972
    %v3514 = vunpack.c.h.b16 %v2972
    %v3515 = vunpack.c.l.b16 %v2973
    %v3516 = vunpack.c.h.b16 %v2973
    %v3517 = vunpack.c.l.b16 %v2974
    %v3518 = vunpack.c.h.b16 %v2974
    %v3519 = vunpack.c.l.b16 %v2975
    %v3520 = vunpack.c.h.b16 %v2975
    %v3521 = vunpack.c.l.b16 %v2976
    %v3522 = vunpack.c.h.b16 %v2976
    %v3523 = vunpack.c.l.b16 %v2977
    %v3524 = vunpack.c.h.b16 %v2977
    %v3525 = vunpack.c.l.b16 %v2978
    %v3526 = vunpack.c.h.b16 %v2978
    %v3527 = vunpack.c.l.b16 %v2979
    %v3528 = vunpack.c.h.b16 %v2979
    %v3529 = vunpack.c.l.b16 %v2980
    %v3530 = vunpack.c.h.b16 %v2980
    %v3531 = vunpack.c.l.b16 %v2981
    %v3532 = vunpack.c.h.b16 %v2981
    %v3533 = vunpack.c.l.b16 %v2982
    %v3534 = vunpack.c.h.b16 %v2982
    %v3535 = vunpack.c.l.b16 %v2983
    %v3536 = vunpack.c.h.b16 %v2983
    %v3537 = vunpack.c.l.b16 %v2984
    %v3538 = vunpack.c.h.b16 %v2984
    %v3539 = vunpack.c.l.b16 %v2985
    %v3540 = vunpack.c.h.b16 %v2985
    %v3541 = vunpack.c.l.b16 %v2986
    %v3542 = vunpack.c.h.b16 %v2986
    %v3543 = vunpack.c.l.b16 %v2987
    %v3544 = vunpack.c.h.b16 %v2987
    %v3545 = vunpack.c.l.b16 %v2988
    %v3546 = vunpack.c.h.b16 %v2988
    %v3547 = vunpack.c.l.b16 %v2989
    %v3548 = vunpack.c.h.b16 %v2989
    %v3549 = vunpack.c.l.b16 %v2990
    %v3550 = vunpack.c.h.b16 %v2990
    %v3551 = vunpack.c.l.b16 %v2991
    %v3552 = vunpack.c.h.b16 %v2991
    %v3553 = vunpack.c.l.b16 %v2992
    %v3554 = vunpack.c.h.b16 %v2992
    %v3555 = vunpack.c.l.b16 %v2993
    %v3556 = vunpack.c.h.b16 %v2993
    %v3557 = vunpack.c.l.b16 %v2994
    %v3558 = vunpack.c.h.b16 %v2994
    %v3559 = vunpack.c.l.b16 %v2995
    %v3560 = vunpack.c.h.b16 %v2995
    %v3561 = vunpack.c.l.b16 %v2996
    %v3562 = vunpack.c.h.b16 %v2996
    %v3563 = vunpack.c.l.b16 %v2997
    %v3564 = vunpack.c.h.b16 %v2997
    %v3565 = vunpack.c.l.b16 %v2998
    %v3566 = vunpack.c.h.b16 %v2998
    %v3567 = vunpack.c.l.b16 %v2999
    %v3568 = vunpack.c.h.b16 %v2999
    %v3569 = vunpack.c.l.b16 %v3000
    %v3570 = vunpack.c.h.b16 %v3000
    %v3571 = vunpack.c.l.b16 %v3001
    %v3572 = vunpack.c.h.b16 %v3001
    %v3573 = vunpack.c.l.b16 %v3002
    %v3574 = vunpack.c.h.b16 %v3002
    %v3575 = vunpack.c.l.b16 %v3003
    %v3576 = vunpack.c.h.b16 %v3003
    %v3577 = vunpack.c.l.b16 %v3004
    %v3578 = vunpack.c.h.b16 %v3004
    %v3579 = vunpack.c.l.b16 %v3005
    %v3580 = vunpack.c.h.b16 %v3005
    %v3581 = vunpack.c.l.b16 %v3006
    %v3582 = vunpack.c.h.b16 %v3006
    %v3583 = vunpack.c.l.b16 %v3007
    %v3584 = vunpack.c.h.b16 %v3007
    %v3585 = vunpack.c.l.b16 %v3008
    %v3586 = vunpack.c.h.b16 %v3008
    %v3587 = vunpack.c.l.b16 %v3009
    %v3588 = vunpack.c.h.b16 %v3009
    %v3589 = vunpack.c.l.b16 %v3010
    %v3590 = vunpack.c.h.b16 %v3010
    %v3591 = vunpack.c.l.b16 %v3011
    %v3592 = vunpack.c.h.b16 %v3011
    %v3593 = vunpack.c.l.b16 %v3012
    %v3594 = vunpack.c.h.b16 %v3012
    %v3595 = vunpack.c.l.b16 %v3013
    %v3596 = vunpack.c.h.b16 %v3013
    %v3597 = vunpack.c.l.b16 %v3014
    %v3598 = vunpack.c.h.b16 %v3014
    %v3599 = vunpack.c.l.b16 %v3015
    %v3600 = vunpack.c.h.b16 %v3015
    %v3601 = vunpack.c.l.b16 %v3016
    %v3602 = vunpack.c.h.b16 %v3016
    %v3603 = vunpack.c.l.b16 %v3017
    %v3604 = vunpack.c.h.b16 %v3017
    %v3605 = vunpack.c.l.b16 %v3018
    %v3606 = vunpack.c.h.b16 %v3018
    %v3607 = vunpack.c.l.b16 %v3019
    %v3608 = vunpack.c.h.b16 %v3019
    %v3609 = vunpack.c.l.b16 %v3020
    %v3610 = vunpack.c.h.b16 %v3020
    %v3611 = vunpack.c.l.b16 %v3021
    %v3612 = vunpack.c.h.b16 %v3021
    %v3613 = vunpack.c.l.b16 %v3022
    %v3614 = vunpack.c.h.b16 %v3022
    %v3615 = vunpack.c.l.b16 %v3023
    %v3616 = vunpack.c.h.b16 %v3023
    %v3617 = vunpack.c.l.b16 %v3024
    %v3618 = vunpack.c.h.b16 %v3024
    %v3619 = vunpack.c.l.b16 %v3025
    %v3620 = vunpack.c.h.b16 %v3025
    %v3621 = vunpack.c.l.b16 %v3026
    %v3622 = vunpack.c.h.b16 %v3026
    %v3623 = vunpack.c.l.b16 %v3027
    %v3624 = vunpack.c.h.b16 %v3027
    %v3625 = vunpack.c.l.b16 %v3028
    %v3626 = vunpack.c.h.b16 %v3028
    %v3627 = vunpack.c.l.b16 %v3029
    %v3628 = vunpack.c.h.b16 %v3029
    %v3629 = vunpack.c.l.b16 %v3030
    %v3630 = vunpack.c.h.b16 %v3030
    %v3631 = vunpack.c.l.b16 %v3031
    %v3632 = vunpack.c.h.b16 %v3031
    %v3633 = vunpack.c.l.b16 %v3032
    %v3634 = vunpack.c.h.b16 %v3032
    %v3635 = vunpack.c.l.b16 %v3033
    %v3636 = vunpack.c.h.b16 %v3033
    %v3637 = vunpack.c.l.b16 %v3034
    %v3638 = vunpack.c.h.b16 %v3034
    %v3639 = vunpack.c.l.b16 %v3035
    %v3640 = vunpack.c.h.b16 %v3035
    %v3641 = vunpack.c.l.b16 %v3036
    %v3642 = vunpack.c.h.b16 %v3036
    %v3643 = vunpack.c.l.b16 %v3037
    %v3644 = vunpack.c.h.b16 %v3037
    %v3645 = vunpack.c.l.b16 %v3038
    %v3646 = vunpack.c.h.b16 %v3038
    %v3647 = vunpack.c.l.b16 %v3039
    %v3648 = vunpack.c.h.b16 %v3039
    %v3649 = vunpack.c.l.b16 %v3040
    %v3650 = vunpack.c.h.b16 %v3040
    %v3651 = vunpack.c.l.b16 %v3041
    %v3652 = vunpack.c.h.b16 %v3041
    %v3653 = vunpack.c.l.b16 %v3042
    %v3654 = vunpack.c.h.b16 %v3042
    %v3655 = vunpack.c.l.b16 %v3043
    %v3656 = vunpack.c.h.b16 %v3043
    %v3657 = vunpack.c.l.b16 %v3044
    %v3658 = vunpack.c.h.b16 %v3044
    %v3659 = vunpack.c.l.b16 %v3045
    %v3660 = vunpack.c.h.b16 %v3045
    %v3661 = vunpack.c.l.b16 %v3046
    %v3662 = vunpack.c.h.b16 %v3046
    %v3663 = vunpack.c.l.b16 %v3047
    %v3664 = vunpack.c.h.b16 %v3047
    %v3665 = vunpack.c.l.b16 %v3048
    %v3666 = vunpack.c.h.b16 %v3048
    %v3667 = vunpack.c.l.b16 %v3049
    %v3668 = vunpack.c.h.b16 %v3049
    %v3669 = vunpack.c.l.b16 %v3050
    %v3670 = vunpack.c.h.b16 %v3050
    %v3671 = vunpack.c.l.b16 %v3051
    %v3672 = vunpack.c.h.b16 %v3051
    %v3673 = vunpack.c.l.b16 %v3052
    %v3674 = vunpack.c.h.b16 %v3052
    %v3675 = vunpack.c.l.b16 %v3053
    %v3676 = vunpack.c.h.b16 %v3053
    %v3677 = vunpack.c.l.b16 %v3054
    %v3678 = vunpack.c.h.b16 %v3054
    %v3679 = vunpack.c.l.b16 %v3055
    %v3680 = vunpack.c.h.b16 %v3055
    %v3681 = vunpack.c.l.b16 %v3056
    %v3682 = vunpack.c.h.b16 %v3056
    %v3683 = vunpack.c.l.b16 %v3057
    %v3684 = vunpack.c.h.b16 %v3057
    %v3685 = vunpack.c.l.b16 %v3058
    %v3686 = vunpack.c.h.b16 %v3058
    %v3687 = vunpack.c.l.b16 %v3059
    %v3688 = vunpack.c.h.b16 %v3059
    %v3689 = vunpack.c.l.b16 %v3060
    %v3690 = vunpack.c.h.b16 %v3060
    %v3691 = vunpack.c.l.b16 %v3061
    %v3692 = vunpack.c.h.b16 %v3061
    %v3693 = vunpack.c.l.b16 %v3062
    %v3694 = vunpack.c.h.b16 %v3062
    %v3695 = vunpack.c.l.b16 %v3063
    %v3696 = vunpack.c.h.b16 %v3063
    %v3697 = vunpack.c.l.b16 %v3064
    %v3698 = vunpack.c.h.b16 %v3064
    %v3699 = vunpack.c.l.b16 %v3065
    %v3700 = vunpack.c.h.b16 %v3065
    %v3701 = vunpack.c.l.b16 %v3066
    %v3702 = vunpack.c.h.b16 %v3066
    %v3703 = vunpack.c.l.b16 %v3067
    %v3704 = vunpack.c.h.b16 %v3067
    %v3705 = vunpack.c.l.b16 %v3068
    %v3706 = vunpack.c.h.b16 %v3068
    %v3707 = vunpack.c.l.b16 %v3069
    %v3708 = vunpack.c.h.b16 %v3069
    %v3709 = vunpack.c.l.b16 %v3070
    %v3710 = vunpack.c.h.b16 %v3070
    %v3711 = vunpack.c.l.b16 %v3071
    %v3712 = vunpack.c.h.b16 %v3071
    %v3713 = vunpack.c.l.b16 %v3072
    %v3714 = vunpack.c.h.b16 %v3072
    %v3715 = vunpack.c.l.b16 %v3073
    %v3716 = vunpack.c.h.b16 %v3073
    %v3717 = vunpack.c.l.b16 %v3074
    %v3718 = vunpack.c.h.b16 %v3074
    %v3719 = vunpack.c.l.b16 %v3075
    %v3720 = vunpack.c.h.b16 %v3075
    %v3721 = vunpack.c.l.b16 %v3076
    %v3722 = vunpack.c.h.b16 %v3076
    %v3723 = vunpack.c.l.b16 %v3077
    %v3724 = vunpack.c.h.b16 %v3077
    %v3725 = vunpack.c.l.b16 %v3078
    %v3726 = vunpack.c.h.b16 %v3078
    %v3727 = vunpack.c.l.b16 %v3079
    %v3728 = vunpack.c.h.b16 %v3079
    %v3729 = vunpack.c.l.b16 %v3080
    %v3730 = vunpack.c.h.b16 %v3080
    %v3731 = vunpack.c.l.b16 %v3081
    %v3732 = vunpack.c.h.b16 %v3081
    %v3733 = vunpack.c.l.b16 %v3082
    %v3734 = vunpack.c.h.b16 %v3082
    %v3735 = vunpack.c.l.b16 %v3083
    %v3736 = vunpack.c.h.b16 %v3083
    %v3737 = vunpack.c.l.b16 %v3084
    %v3738 = vunpack.c.h.b16 %v3084
    %v3739 = vunpack.c.l.b16 %v3085
    %v3740 = vunpack.c.h.b16 %v3085
    %v3741 = vunpack.c.l.b16 %v3086
    %v3742 = vunpack.c.h.b16 %v3086
    %v3743 = vunpack.c.l.b16 %v3087
    %v3744 = vunpack.c.h.b16 %v3087
    %v3745 = vunpack.c.l.b16 %v3088
    %v3746 = vunpack.c.h.b16 %v3088
    %v3747 = vunpack.c.l.b16 %v3089
    %v3748 = vunpack.c.h.b16 %v3089
    %v3749 = vunpack.c.l.b16 %v3090
    %v3750 = vunpack.c.h.b16 %v3090
    %v3751 = vunpack.c.l.b16 %v3091
    %v3752 = vunpack.c.h.b16 %v3091
    %v3753 = vunpack.c.l.b16 %v3092
    %v3754 = vunpack.c.h.b16 %v3092
    %v3755 = vunpack.c.l.b16 %v3093
    %v3756 = vunpack.c.h.b16 %v3093
    %v3757 = vunpack.c.l.b16 %v3094
    %v3758 = vunpack.c.h.b16 %v3094
    %v3759 = vunpack.c.l.b16 %v3095
    %v3760 = vunpack.c.h.b16 %v3095
    %v3761 = vunpack.c.l.b16 %v3096
    %v3762 = vunpack.c.h.b16 %v3096
    %v3763 = vunpack.c.l.b16 %v3097
    %v3764 = vunpack.c.h.b16 %v3097
    %v3765 = vunpack.c.l.b16 %v3098
    %v3766 = vunpack.c.h.b16 %v3098
    %v3767 = vunpack.c.l.b16 %v3099
    %v3768 = vunpack.c.h.b16 %v3099
    %v3769 = vunpack.c.l.b16 %v3100
    %v3770 = vunpack.c.h.b16 %v3100
    %v3771 = vunpack.c.l.b16 %v3101
    %v3772 = vunpack.c.h.b16 %v3101
    %v3773 = vunpack.c.l.b16 %v3102
    %v3774 = vunpack.c.h.b16 %v3102
    %v3775 = vunpack.c.l.b16 %v3103
    %v3776 = vunpack.c.h.b16 %v3103
    %v3777 = vunpack.c.l.b16 %v3104
    %v3778 = vunpack.c.h.b16 %v3104
    %v3779 = vunpack.c.l.b16 %v3105
    %v3780 = vunpack.c.h.b16 %v3105
    %v3781 = vunpack.c.l.b16 %v3106
    %v3782 = vunpack.c.h.b16 %v3106
    %v3783 = vunpack.c.l.b16 %v3107
    %v3784 = vunpack.c.h.b16 %v3107
    %v3785 = vunpack.c.l.b16 %v3108
    %v3786 = vunpack.c.h.b16 %v3108
    %v3787 = vunpack.c.l.b16 %v3109
    %v3788 = vunpack.c.h.b16 %v3109
    %v3789 = vunpack.c.l.b16 %v3110
    %v3790 = vunpack.c.h.b16 %v3110
    %v3791 = vunpack.c.l.b16 %v3111
    %v3792 = vunpack.c.h.b16 %v3111
    %v3793 = vunpack.c.l.b16 %v3112
    %v3794 = vunpack.c.h.b16 %v3112
    %v3795 = vunpack.c.l.b16 %v3113
    %v3796 = vunpack.c.h.b16 %v3113
    %v3797 = vunpack.c.l.b16 %v3114
    %v3798 = vunpack.c.h.b16 %v3114
    %v3799 = vunpack.c.l.b16 %v3115
    %v3800 = vunpack.c.h.b16 %v3115
    %v3801 = vunpack.c.l.b16 %v3116
    %v3802 = vunpack.c.h.b16 %v3116
    %v3803 = vunpack.c.l.b16 %v3117
    %v3804 = vunpack.c.h.b16 %v3117
    %v3805 = vunpack.c.l.b16 %v3118
    %v3806 = vunpack.c.h.b16 %v3118
    %v3807 = vunpack.c.l.b16 %v3119
    %v3808 = vunpack.c.h.b16 %v3119
    %v3809 = vunpack.c.l.b16 %v3120
    %v3810 = vunpack.c.h.b16 %v3120
    %v3811 = vunpack.c.l.b16 %v3121
    %v3812 = vunpack.c.h.b16 %v3121
    %v3813 = vunpack.c.l.b16 %v3122
    %v3814 = vunpack.c.h.b16 %v3122
    %v3815 = vunpack.c.l.b16 %v3123
    %v3816 = vunpack.c.h.b16 %v3123
    %v3817 = vunpack.c.l.b16 %v3124
    %v3818 = vunpack.c.h.b16 %v3124
    %v3819 = vunpack.c.l.b16 %v3125
    %v3820 = vunpack.c.h.b16 %v3125
    %v3821 = vunpack.c.l.b16 %v3126
    %v3822 = vunpack.c.h.b16 %v3126
    %v3823 = vunpack.c.l.b16 %v3127
    %v3824 = vunpack.c.h.b16 %v3127
    %v3825 = vunpack.c.l.b16 %v3128
    %v3826 = vunpack.c.h.b16 %v3128
    %v3827 = vunpack.c.l.b16 %v3129
    %v3828 = vunpack.c.h.b16 %v3129
    %v3829 = vunpack.c.l.b16 %v3130
    %v3830 = vunpack.c.h.b16 %v3130
    %v3831 = vunpack.c.l.b16 %v3131
    %v3832 = vunpack.c.h.b16 %v3131
    %v3833 = vunpack.c.l.b16 %v3132
    %v3834 = vunpack.c.h.b16 %v3132
    %v3835 = vunpack.c.l.b16 %v3133
    %v3836 = vunpack.c.h.b16 %v3133
    %v3837 = vunpack.c.l.b16 %v3134
    %v3838 = vunpack.c.h.b16 %v3134
    %v3839 = vunpack.c.l.b16 %v3135
    %v3840 = vunpack.c.h.b16 %v3135
    %v3841 = vunpack.c.l.b16 %v3136
    %v3842 = vunpack.c.h.b16 %v3136
    %v3843 = vunpack.c.l.b16 %v3137
    %v3844 = vunpack.c.h.b16 %v3137
    %v3845 = vunpack.c.l.b16 %v3138
    %v3846 = vunpack.c.h.b16 %v3138
    %v3847 = vunpack.c.l.b16 %v3139
    %v3848 = vunpack.c.h.b16 %v3139
    %v3849 = vunpack.c.l.b16 %v3140
    %v3850 = vunpack.c.h.b16 %v3140
    %v3851 = vunpack.c.l.b16 %v3141
    %v3852 = vunpack.c.h.b16 %v3141
    %v3853 = vunpack.c.l.b16 %v3142
    %v3854 = vunpack.c.h.b16 %v3142
    %v3855 = vunpack.c.l.b16 %v3143
    %v3856 = vunpack.c.h.b16 %v3143
    %v3857 = vunpack.c.l.b16 %v3144
    %v3858 = vunpack.c.h.b16 %v3144
    %v3859 = vunpack.c.l.b16 %v3145
    %v3860 = vunpack.c.h.b16 %v3145
    %v3861 = vunpack.c.l.b16 %v3146
    %v3862 = vunpack.c.h.b16 %v3146
    %v3863 = vunpack.c.l.b16 %v3147
    %v3864 = vunpack.c.h.b16 %v3147
    %v3865 = vunpack.c.l.b16 %v3148
    %v3866 = vunpack.c.h.b16 %v3148
    %v3867 = vunpack.c.l.b16 %v3149
    %v3868 = vunpack.c.h.b16 %v3149
    %v3869 = vunpack.c.l.b16 %v3150
    %v3870 = vunpack.c.h.b16 %v3150
    %v3871 = vunpack.c.l.b16 %v3151
    %v3872 = vunpack.c.h.b16 %v3151
    %v3873 = vunpack.c.l.b16 %v3152
    %v3874 = vunpack.c.h.b16 %v3152
    %v3875 = vunpack.c.l.b16 %v3153
    %v3876 = vunpack.c.h.b16 %v3153
    %v3877 = vunpack.c.l.b16 %v3154
    %v3878 = vunpack.c.h.b16 %v3154
    %v3879 = vunpack.c.l.b16 %v3155
    %v3880 = vunpack.c.h.b16 %v3155
    %v3881 = vunpack.c.l.b16 %v3156
    %v3882 = vunpack.c.h.b16 %v3156
    %v3883 = vunpack.c.l.b16 %v3157
    %v3884 = vunpack.c.h.b16 %v3157
    %v3885 = vunpack.c.l.b16 %v3158
    %v3886 = vunpack.c.h.b16 %v3158
    %v3887 = vunpack.c.l.b16 %v3159
    %v3888 = vunpack.c.h.b16 %v3159
    %v3889 = vunpack.c.l.b16 %v3160
    %v3890 = vunpack.c.h.b16 %v3160
    %v3891 = vunpack.c.l.b16 %v3161
    %v3892 = vunpack.c.h.b16 %v3161
    %v3893 = vunpack.c.l.b16 %v3162
    %v3894 = vunpack.c.h.b16 %v3162
    %v3895 = vunpack.c.l.b16 %v3163
    %v3896 = vunpack.c.h.b16 %v3163
    %v3897 = vunpack.c.l.b16 %v3164
    %v3898 = vunpack.c.h.b16 %v3164
    %v3899 = vunpack.c.l.b16 %v3165
    %v3900 = vunpack.c.h.b16 %v3165
    %v3901 = vunpack.c.l.b16 %v3166
    %v3902 = vunpack.c.h.b16 %v3166
    %v3903 = vunpack.c.l.b16 %v3167
    %v3904 = vunpack.c.h.b16 %v3167
    %v3905 = vunpack.c.l.b16 %v3168
    %v3906 = vunpack.c.h.b16 %v3168
    %v3907 = vunpack.c.l.b16 %v3169
    %v3908 = vunpack.c.h.b16 %v3169
    %v3909 = vunpack.c.l.b16 %v3170
    %v3910 = vunpack.c.h.b16 %v3170
    %v3911 = vunpack.c.l.b16 %v3171
    %v3912 = vunpack.c.h.b16 %v3171
    %v3913 = vunpack.c.l.b16 %v3172
    %v3914 = vunpack.c.h.b16 %v3172
    %v3915 = vunpack.c.l.b16 %v3173
    %v3916 = vunpack.c.h.b16 %v3173
    %v3917 = vunpack.c.l.b16 %v3174
    %v3918 = vunpack.c.h.b16 %v3174
    %v3919 = vunpack.c.l.b16 %v3175
    %v3920 = vunpack.c.h.b16 %v3175
    %v3921 = vunpack.c.l.b16 %v3176
    %v3922 = vunpack.c.h.b16 %v3176
    %v3923 = vunpack.c.l.b16 %v3177
    %v3924 = vunpack.c.h.b16 %v3177
    %v3925 = vunpack.c.l.b16 %v3178
    %v3926 = vunpack.c.h.b16 %v3178
    %v3927 = vunpack.c.l.b16 %v3179
    %v3928 = vunpack.c.h.b16 %v3179
    %v3929 = vunpack.c.l.b16 %v3180
    %v3930 = vunpack.c.h.b16 %v3180
    %v3931 = vunpack.c.l.b16 %v3181
    %v3932 = vunpack.c.h.b16 %v3181
    %v3933 = vunpack.c.l.b16 %v3182
    %v3934 = vunpack.c.h.b16 %v3182
    %v3935 = vunpack.c.l.b16 %v3183
    %v3936 = vunpack.c.h.b16 %v3183
    %v3937 = vunpack.c.l.b16 %v3184
    %v3938 = vunpack.c.h.b16 %v3184
    %v3939 = vunpack.c.l.b16 %v3185
    %v3940 = vunpack.c.h.b16 %v3185
    %v3941 = vunpack.c.l.b16 %v3186
    %v3942 = vunpack.c.h.b16 %v3186
    %v3943 = vunpack.c.l.b16 %v3187
    %v3944 = vunpack.c.h.b16 %v3187
    %v3945 = vunpack.c.l.b16 %v3188
    %v3946 = vunpack.c.h.b16 %v3188
    %v3947 = vunpack.c.l.b16 %v3189
    %v3948 = vunpack.c.h.b16 %v3189
    %v3949 = vunpack.c.l.b16 %v3190
    %v3950 = vunpack.c.h.b16 %v3190
    %v3951 = vunpack.c.l.b16 %v3191
    %v3952 = vunpack.c.h.b16 %v3191
    %v3953 = vunpack.c.l.b16 %v3192
    %v3954 = vunpack.c.h.b16 %v3192
    %v3955 = vunpack.c.l.b16 %v3193
    %v3956 = vunpack.c.h.b16 %v3193
    %v3957 = vunpack.c.l.b16 %v3194
    %v3958 = vunpack.c.h.b16 %v3194
    %v3959 = vunpack.c.l.b16 %v3195
    %v3960 = vunpack.c.h.b16 %v3195
    %v3961 = vunpack.c.l.b16 %v3196
    %v3962 = vunpack.c.h.b16 %v3196
    %v3963 = vunpack.c.l.b16 %v3197
    %v3964 = vunpack.c.h.b16 %v3197
    %v3965 = vunpack.c.l.b16 %v3198
    %v3966 = vunpack.c.h.b16 %v3198
    %v3967 = vunpack.c.l.b16 %v3199
    %v3968 = vunpack.c.h.b16 %v3199
    %v3969 = vunpack.c.l.b16 %v3200
    %v3970 = vunpack.c.h.b16 %v3200
    %v3971 = vunpack.c.l.b16 %v3201
    %v3972 = vunpack.c.h.b16 %v3201
    %v3973 = vunpack.c.l.b16 %v3202
    %v3974 = vunpack.c.h.b16 %v3202
    %v3975 = vunpack.c.l.b16 %v3203
    %v3976 = vunpack.c.h.b16 %v3203
    %v3977 = vunpack.c.l.b16 %v3204
    %v3978 = vunpack.c.h.b16 %v3204
    %v3979 = vunpack.c.l.b16 %v3205
    %v3980 = vunpack.c.h.b16 %v3205
    %v3981 = vunpack.c.l.b16 %v3206
    %v3982 = vunpack.c.h.b16 %v3206
    %v3983 = vunpack.c.l.b16 %v3207
    %v3984 = vunpack.c.h.b16 %v3207
    %v3985 = vunpack.c.l.b16 %v3208
    %v3986 = vunpack.c.h.b16 %v3208
    %v3987 = vunpack.c.l.b16 %v3209
    %v3988 = vunpack.c.h.b16 %v3209
    %v3989 = vunpack.c.l.b16 %v3210
    %v3990 = vunpack.c.h.b16 %v3210
    %v3991 = vpack.c.b16 %v3481, %v3479
    %v3992 = vpack.c.b16 %v3482, %v3480
    %v3993 = vpack.c.b16 %v3485, %v3483
    %v3994 = vpack.c.b16 %v3486, %v3484
    %v3995 = vpack.c.b16 %v3489, %v3487
    %v3996 = vpack.c.b16 %v3490, %v3488
    %v3997 = vpack.c.b16 %v3493, %v3491
    %v3998 = vpack.c.b16 %v3494, %v3492
    %v3999 = vpack.c.b16 %v3497, %v3495
    %v4000 = vpack.c.b16 %v3498, %v3496
    %v4001 = vpack.c.b16 %v3501, %v3499
    %v4002 = vpack.c.b16 %v3502, %v3500
    %v4003 = vpack.c.b16 %v3505, %v3503
    %v4004 = vpack.c.b16 %v3506, %v3504
    %v4005 = vpack.c.b16 %v3509, %v3507
    %v4006 = vpack.c.b16 %v3510, %v3508
    %v4007 = vpack.c.b16 %v3513, %v3511
    %v4008 = vpack.c.b16 %v3514, %v3512
    %v4009 = vpack.c.b16 %v3517, %v3515
    %v4010 = vpack.c.b16 %v3518, %v3516
    %v4011 = vpack.c.b16 %v3521, %v3519
    %v4012 = vpack.c.b16 %v3522, %v3520
    %v4013 = vpack.c.b16 %v3525, %v3523
    %v4014 = vpack.c.b16 %v3526, %v3524
    %v4015 = vpack.c.b16 %v3529, %v3527
    %v4016 = vpack.c.b16 %v3530, %v3528
    %v4017 = vpack.c.b16 %v3533, %v3531
    %v4018 = vpack.c.b16 %v3534, %v3532
    %v4019 = vpack.c.b16 %v3537, %v3535
    %v4020 = vpack.c.b16 %v3538, %v3536
    %v4021 = vpack.c.b16 %v3541, %v3539
    %v4022 = vpack.c.b16 %v3542, %v3540
    %v4023 = vpack.c.b16 %v3545, %v3543
    %v4024 = vpack.c.b16 %v3546, %v3544
    %v4025 = vpack.c.b16 %v3549, %v3547
    %v4026 = vpack.c.b16 %v3550, %v3548
    %v4027 = vpack.c.b16 %v3553, %v3551
    %v4028 = vpack.c.b16 %v3554, %v3552
    %v4029 = vpack.c.b16 %v3557, %v3555
    %v4030 = vpack.c.b16 %v3558, %v3556
    %v4031 = vpack.c.b16 %v3561, %v3559
    %v4032 = vpack.c.b16 %v3562, %v3560
    %v4033 = vpack.c.b16 %v3565, %v3563
    %v4034 = vpack.c.b16 %v3566, %v3564
    %v4035 = vpack.c.b16 %v3569, %v3567
    %v4036 = vpack.c.b16 %v3570, %v3568
    %v4037 = vpack.c.b16 %v3573, %v3571
    %v4038 = vpack.c.b16 %v3574, %v3572
    %v4039 = vpack.c.b16 %v3577, %v3575
    %v4040 = vpack.c.b16 %v3578, %v3576
    %v4041 = vpack.c.b16 %v3581, %v3579
    %v4042 = vpack.c.b16 %v3582, %v3580
    %v4043 = vpack.c.b16 %v3585, %v3583
    %v4044 = vpack.c.b16 %v3586, %v3584
    %v4045 = vpack.c.b16 %v3589, %v3587
    %v4046 = vpack.c.b16 %v3590, %v3588
    %v4047 = vpack.c.b16 %v3593, %v3591
    %v4048 = vpack.c.b16 %v3594, %v3592
    %v4049 = vpack.c.b16 %v3597, %v3595
    %v4050 = vpack.c.b16 %v3598, %v3596
    %v4051 = vpack.c.b16 %v3601, %v3599
    %v4052 = vpack.c.b16 %v3602, %v3600
    %v4053 = vpack.c.b16 %v3605, %v3603
    %v4054 = vpack.c.b16 %v3606, %v3604
    %v4055 = vpack.c.b16 %v3609, %v3607
    %v4056 = vpack.c.b16 %v3610, %v3608
    %v4057 = vpack.c.b16 %v3613, %v3611
    %v4058 = vpack.c.b16 %v3614, %v3612
    %v4059 = vpack.c.b16 %v3617, %v3615
    %v4060 = vpack.c.b16 %v3618, %v3616
    %v4061 = vpack.c.b16 %v3621, %v3619
    %v4062 = vpack.c.b16 %v3622, %v3620
    %v4063 = vpack.c.b16 %v3625, %v3623
    %v4064 = vpack.c.b16 %v3626, %v3624
    %v4065 = vpack.c.b16 %v3629, %v3627
    %v4066 = vpack.c.b16 %v3630, %v3628
    %v4067 = vpack.c.b16 %v3633, %v3631
    %v4068 = vpack.c.b16 %v3634, %v3632
    %v4069 = vpack.c.b16 %v3637, %v3635
    %v4070 = vpack.c.b16 %v3638, %v3636
    %v4071 = vpack.c.b16 %v3641, %v3639
    %v4072 = vpack.c.b16 %v3642, %v3640
    %v4073 = vpack.c.b16 %v3645, %v3643
    %v4074 = vpack.c.b16 %v3646, %v3644
    %v4075 = vpack.c.b16 %v3649, %v3647
    %v4076 = vpack.c.b16 %v3650, %v3648
    %v4077 = vpack.c.b16 %v3653, %v3651
    %v4078 = vpack.c.b16 %v3654, %v3652
    %v4079 = vpack.c.b16 %v3657, %v3655
    %v4080 = vpack.c.b16 %v3658, %v3656
    %v4081 = vpack.c.b16 %v3661, %v3659
    %v4082 = vpack.c.b16 %v3662, %v3660
    %v4083 = vpack.c.b16 %v3665, %v3663
    %v4084 = vpack.c.b16 %v3666, %v3664
    %v4085 = vpack.c.b16 %v3669, %v3667
    %v4086 = vpack.c.b16 %v3670, %v3668
    %v4087 = vpack.c.b16 %v3673, %v3671
    %v4088 = vpack.c.b16 %v3674, %v3672
    %v4089 = vpack.c.b16 %v3677, %v3675
    %v4090 = vpack.c.b16 %v3678, %v3676
    %v4091 = vpack.c.b16 %v3681, %v3679
    %v4092 = vpack.c.b16 %v3682, %v3680
    %v4093 = vpack.c.b16 %v3685, %v3683
    %v4094 = vpack.c.b16 %v3686, %v3684
    %v4095 = vpack.c.b16 %v3689, %v3687
    %v4096 = vpack.c.b16 %v3690, %v3688
    %v4097 = vpack.c.b16 %v3693, %v3691
    %v4098 = vpack.c.b16 %v3694, %v3692
    %v4099 = vpack.c.b16 %v3697, %v3695
    %v4100 = vpack.c.b16 %v3698, %v3696
    %v4101 = vpack.c.b16 %v3701, %v3699
    %v4102 = vpack.c.b16 %v3702, %v3700
    %v4103 = vpack.c.b16 %v3705, %v3703
    %v4104 = vpack.c.b16 %v3706, %v3704
    %v4105 = vpack.c.b16 %v3709, %v3707
    %v4106 = vpack.c.b16 %v3710, %v3708
    %v4107 = vpack.c.b16 %v3713, %v3711
    %v4108 = vpack.c.b16 %v3714, %v3712
    %v4109 = vpack.c.b16 %v3717, %v3715
    %v4110 = vpack.c.b16 %v3718, %v3716
    %v4111 = vpack.c.b16 %v3721, %v3719
    %v4112 = vpack.c.b16 %v3722, %v3720
    %v4113 = vpack.c.b16 %v3725, %v3723
    %v4114 = vpack.c.b16 %v3726, %v3724
    %v4115 = vpack.c.b16 %v3729, %v3727
    %v4116 = vpack.c.b16 %v3730, %v3728
    %v4117 = vpack.c.b16 %v3733, %v3731
    %v4118 = vpack.c.b16 %v3734, %v3732
    %v4119 = vpack.c.b16 %v3737, %v3735
    %v4120 = vpack.c.b16 %v3738, %v3736
    %v4121 = vpack.c.b16 %v3741, %v3739
    %v4122 = vpack.c.b16 %v3742, %v3740
    %v4123 = vpack.c.b16 %v3745, %v3743
    %v4124 = vpack.c.b16 %v3746, %v3744
    %v4125 = vpack.c.b16 %v3749, %v3747
    %v4126 = vpack.c.b16 %v3750, %v3748
    %v4127 = vpack.c.b16 %v3753, %v3751
    %v4128 = vpack.c.b16 %v3754, %v3752
    %v4129 = vpack.c.b16 %v3757, %v3755
    %v4130 = vpack.c.b16 %v3758, %v3756
    %v4131 = vpack.c.b16 %v3761, %v3759
    %v4132 = vpack.c.b16 %v3762, %v3760
    %v4133 = vpack.c.b16 %v3765, %v3763
    %v4134 = vpack.c.b16 %v3766, %v3764
    %v4135 = vpack.c.b16 %v3769, %v3767
    %v4136 = vpack.c.b16 %v3770, %v3768
    %v4137 = vpack.c.b16 %v3773, %v3771
    %v4138 = vpack.c.b16 %v3774, %v3772
    %v4139 = vpack.c.b16 %v3777, %v3775
    %v4140 = vpack.c.b16 %v3778, %v3776
    %v4141 = vpack.c.b16 %v3781, %v3779
    %v4142 = vpack.c.b16 %v3782, %v3780
    %v4143 = vpack.c.b16 %v3785, %v3783
    %v4144 = vpack.c.b16 %v3786, %v3784
    %v4145 = vpack.c.b16 %v3789, %v3787
    %v4146 = vpack.c.b16 %v3790, %v3788
    %v4147 = vpack.c.b16 %v3793, %v3791
    %v4148 = vpack.c.b16 %v3794, %v3792
    %v4149 = vpack.c.b16 %v3797, %v3795
    %v4150 = vpack.c.b16 %v3798, %v3796
    %v4151 = vpack.c.b16 %v3801, %v3799
    %v4152 = vpack.c.b16 %v3802, %v3800
    %v4153 = vpack.c.b16 %v3805, %v3803
    %v4154 = vpack.c.b16 %v3806, %v3804
    %v4155 = vpack.c.b16 %v3809, %v3807
    %v4156 = vpack.c.b16 %v3810, %v3808
    %v4157 = vpack.c.b16 %v3813, %v3811
    %v4158 = vpack.c.b16 %v3814, %v3812
    %v4159 = vpack.c.b16 %v3817, %v3815
    %v4160 = vpack.c.b16 %v3818, %v3816
    %v4161 = vpack.c.b16 %v3821, %v3819
    %v4162 = vpack.c.b16 %v3822, %v3820
    %v4163 = vpack.c.b16 %v3825, %v3823
    %v4164 = vpack.c.b16 %v3826, %v3824
    %v4165 = vpack.c.b16 %v3829, %v3827
    %v4166 = vpack.c.b16 %v3830, %v3828
    %v4167 = vpack.c.b16 %v3833, %v3831
    %v4168 = vpack.c.b16 %v3834, %v3832
    %v4169 = vpack.c.b16 %v3837, %v3835
    %v4170 = vpack.c.b16 %v3838, %v3836
    %v4171 = vpack.c.b16 %v3841, %v3839
    %v4172 = vpack.c.b16 %v3842, %v3840
    %v4173 = vpack.c.b16 %v3845, %v3843
    %v4174 = vpack.c.b16 %v3846, %v3844
    %v4175 = vpack.c.b16 %v3849, %v3847
    %v4176 = vpack.c.b16 %v3850, %v3848
    %v4177 = vpack.c.b16 %v3853, %v3851
    %v4178 = vpack.c.b16 %v3854, %v3852
    %v4179 = vpack.c.b16 %v3857, %v3855
    %v4180 = vpack.c.b16 %v3858, %v3856
    %v4181 = vpack.c.b16 %v3861, %v3859
    %v4182 = vpack.c.b16 %v3862, %v3860
    %v4183 = vpack.c.b16 %v3865, %v3863
    %v4184 = vpack.c.b16 %v3866, %v3864
    %v4185 = vpack.c.b16 %v3869, %v3867
    %v4186 = vpack.c.b16 %v3870, %v3868
    %v4187 = vpack.c.b16 %v3873, %v3871
    %v4188 = vpack.c.b16 %v3874, %v3872
    %v4189 = vpack.c.b16 %v3877, %v3875
    %v4190 = vpack.c.b16 %v3878, %v3876
    %v4191 = vpack.c.b16 %v3881, %v3879
    %v4192 = vpack.c.b16 %v3882, %v3880
    %v4193 = vpack.c.b16 %v3885, %v3883
    %v4194 = vpack.c.b16 %v3886, %v3884
    %v4195 = vpack.c.b16 %v3889, %v3887
    %v4196 = vpack.c.b16 %v3890, %v3888
    %v4197 = vpack.c.b16 %v3893, %v3891
    %v4198 = vpack.c.b16 %v3894, %v3892
    %v4199 = vpack.c.b16 %v3897, %v3895
    %v4200 = vpack.c.b16 %v3898, %v3896
    %v4201 = vpack.c.b16 %v3901, %v3899
    %v4202 = vpack.c.b16 %v3902, %v3900
    %v4203 = vpack.c.b16 %v3905, %v3903
    %v4204 = vpack.c.b16 %v3906, %v3904
    %v4205 = vpack.c.b16 %v3909, %v3907
    %v4206 = vpack.c.b16 %v3910, %v3908
    %v4207 = vpack.c.b16 %v3913, %v3911
    %v4208 = vpack.c.b16 %v3914, %v3912
    %v4209 = vpack.c.b16 %v3917, %v3915
    %v4210 = vpack.c.b16 %v3918, %v3916
    %v4211 = vpack.c.b16 %v3921, %v3919
    %v4212 = vpack.c.b16 %v3922, %v3920
    %v4213 = vpack.c.b16 %v3925, %v3923
    %v4214 = vpack.c.b16 %v3926, %v3924
    %v4215 = vpack.c.b16 %v3929, %v3927
    %v4216 = vpack.c.b16 %v3930, %v3928
    %v4217 = vpack.c.b16 %v3933, %v3931
    %v4218 = vpack.c.b16 %v3934, %v3932
    %v4219 = vpack.c.b16 %v3937, %v3935
    %v4220 = vpack.c.b16 %v3938, %v3936
    %v4221 = vpack.c.b16 %v3941, %v3939
    %v4222 = vpack.c.b16 %v3942, %v3940
    %v4223 = vpack.c.b16 %v3945, %v3943
    %v4224 = vpack.c.b16 %v3946, %v3944
    %v4225 = vpack.c.b16 %v3949, %v3947
    %v4226 = vpack.c.b16 %v3950, %v3948
    %v4227 = vpack.c.b16 %v3953, %v3951
    %v4228 = vpack.c.b16 %v3954, %v3952
    %v4229 = vpack.c.b16 %v3957, %v3955
    %v4230 = vpack.c.b16 %v3958, %v3956
    %v4231 = vpack.c.b16 %v3961, %v3959
    %v4232 = vpack.c.b16 %v3962, %v3960
    %v4233 = vpack.c.b16 %v3965, %v3963
    %v4234 = vpack.c.b16 %v3966, %v3964
    %v4235 = vpack.c.b16 %v3969, %v3967
    %v4236 = vpack.c.b16 %v3970, %v3968
    %v4237 = vpack.c.b16 %v3973, %v3971
    %v4238 = vpack.c.b16 %v3974, %v3972
    %v4239 = vpack.c.b16 %v3977, %v3975
    %v4240 = vpack.c.b16 %v3978, %v3976
    %v4241 = vpack.c.b16 %v3981, %v3979
    %v4242 = vpack.c.b16 %v3982, %v3980
    %v4243 = vpack.c.b16 %v3985, %v3983
    %v4244 = vpack.c.b16 %v3986, %v3984
    %v4245 = vpack.c.b16 %v3989, %v3987
    %v4246 = vpack.c.b16 %v3990, %v3988
    %4503 = vmatprep.subr.bf16.mxu0 %v3992
    %4504 = vmatpush1.bf16.msra.mxu0 %v3991
    %4505 = vmatprep.subr.bf16.mxu0 %v3994
    %4506 = vmatpush1.bf16.msra.mxu0 %v3993
    %4507 = vmatprep.subr.bf16.mxu0 %v3996
    %4508 = vmatpush1.bf16.msra.mxu0 %v3995
    %4509 = vmatprep.subr.bf16.mxu0 %v3998
    %4510 = vmatpush1.bf16.msra.mxu0 %v3997
    %4511 = vmatprep.subr.bf16.mxu0 %v4000
    %4512 = vmatpush1.bf16.msra.mxu0 %v3999
    %4513 = vmatprep.subr.bf16.mxu0 %v4002
    %4514 = vmatpush1.bf16.msra.mxu0 %v4001
    %4515 = vmatprep.subr.bf16.mxu0 %v4004
    %4516 = vmatpush1.bf16.msra.mxu0 %v4003
    %4517 = vmatprep.subr.bf16.mxu0 %v4006
    %4518 = vmatpush1.bf16.msra.mxu0 %v4005
    %4519 = vmatprep.subr.bf16.mxu0 %v4008
    %4520 = vmatpush1.bf16.msra.mxu0 %v4007
    %4521 = vmatprep.subr.bf16.mxu0 %v4010
    %4522 = vmatpush1.bf16.msra.mxu0 %v4009
    %4523 = vmatprep.subr.bf16.mxu0 %v4012
    %4524 = vmatpush1.bf16.msra.mxu0 %v4011
    %4525 = vmatprep.subr.bf16.mxu0 %v4014
    %4526 = vmatpush1.bf16.msra.mxu0 %v4013
    %4527 = vmatprep.subr.bf16.mxu0 %v4016
    %4528 = vmatpush1.bf16.msra.mxu0 %v4015
    %4529 = vmatprep.subr.bf16.mxu0 %v4018
    %4530 = vmatpush1.bf16.msra.mxu0 %v4017
    %4531 = vmatprep.subr.bf16.mxu0 %v4020
    %4532 = vmatpush1.bf16.msra.mxu0 %v4019
    %4533 = vmatprep.subr.bf16.mxu0 %v4022
    %4534 = vmatpush1.bf16.msra.mxu0 %v4021
    %4535 = vmatprep.mubr.bf16.mxu0 %v2940
    %4536 = vmatmul.mubr.bf16.gmra.mrb[0].mxu0 %v2939
    %v4537 = vpop.f32.mrb[0].mxu0
    %v4538 = vadd.f32 %v3216, %v4537
    %v4539 = vpop.f32.mrb[0].mxu0
    %v4540 = vadd.f32 %v3220, %v4539
    %v4541 = vpop.f32.mrb[0].mxu0
    %v4542 = vpop.f32.mrb[0].mxu0
    %4543 = vdwg.mxu0
    %4544 = vmatprep.subr.bf16.mxu0 %v4024
    %4545 = vmatpush1.bf16.msra.mxu0 %v4023
    %4546 = vmatprep.subr.bf16.mxu0 %v4026
    %4547 = vmatpush1.bf16.msra.mxu0 %v4025
    %4548 = vmatprep.subr.bf16.mxu0 %v4028
    %4549 = vmatpush1.bf16.msra.mxu0 %v4027
    %4550 = vmatprep.subr.bf16.mxu0 %v4030
    %4551 = vmatpush1.bf16.msra.mxu0 %v4029
    %4552 = vmatprep.subr.bf16.mxu0 %v4032
    %4553 = vmatpush1.bf16.msra.mxu0 %v4031
    %4554 = vmatprep.subr.bf16.mxu0 %v4034
    %4555 = vmatpush1.bf16.msra.mxu0 %v4033
    %4556 = vmatprep.subr.bf16.mxu0 %v4036
    %4557 = vmatpush1.bf16.msra.mxu0 %v4035
    %4558 = vmatprep.subr.bf16.mxu0 %v4038
    %4559 = vmatpush1.bf16.msra.mxu0 %v4037
    %4560 = vmatprep.subr.bf16.mxu0 %v4040
    %4561 = vmatpush1.bf16.msra.mxu0 %v4039
    %4562 = vmatprep.subr.bf16.mxu0 %v4042
    %4563 = vmatpush1.bf16.msra.mxu0 %v4041
    %4564 = vmatprep.subr.bf16.mxu0 %v4044
    %4565 = vmatpush1.bf16.msra.mxu0 %v4043
    %4566 = vmatprep.subr.bf16.mxu0 %v4046
    %4567 = vmatpush1.bf16.msra.mxu0 %v4045
    %4568 = vmatprep.subr.bf16.mxu0 %v4048
    %4569 = vmatpush1.bf16.msra.mxu0 %v4047
    %4570 = vmatprep.subr.bf16.mxu0 %v4050
    %4571 = vmatpush1.bf16.msra.mxu0 %v4049
    %4572 = vmatprep.subr.bf16.mxu0 %v4052
    %4573 = vmatpush1.bf16.msra.mxu0 %v4051
    %4574 = vmatprep.subr.bf16.mxu0 %v4054
    %4575 = vmatpush1.bf16.msra.mxu0 %v4053
    %4576 = vmatprep.mubr.bf16.mxu0 %v2942
    %4577 = vmatmul.mubr.bf16.gmra.mrb[0].mxu0 %v2941
    %v4578 = vpop.f32.mrb[0].mxu0
    %v4579 = vadd.f32 %v4538, %v4578
    %v4580 = vpop.f32.mrb[0].mxu0
    %v4581 = vadd.f32 %v4540, %v4580
    %v4582 = vpop.f32.mrb[0].mxu0
    %v4583 = vpop.f32.mrb[0].mxu0
    %4584 = vdwg.mxu0
    %4585 = vmatprep.subr.bf16.mxu0 %v4056
    %4586 = vmatpush1.bf16.msra.mxu0 %v4055
    %4587 = vmatprep.subr.bf16.mxu0 %v4058
    %4588 = vmatpush1.bf16.msra.mxu0 %v4057
    %4589 = vmatprep.subr.bf16.mxu0 %v4060
    %4590 = vmatpush1.bf16.msra.mxu0 %v4059
    %4591 = vmatprep.subr.bf16.mxu0 %v4062
    %4592 = vmatpush1.bf16.msra.mxu0 %v4061
    %4593 = vmatprep.subr.bf16.mxu0 %v4064
    %4594 = vmatpush1.bf16.msra.mxu0 %v4063
    %4595 = vmatprep.subr.bf16.mxu0 %v4066
    %4596 = vmatpush1.bf16.msra.mxu0 %v4065
    %4597 = vmatprep.subr.bf16.mxu0 %v4068
    %4598 = vmatpush1.bf16.msra.mxu0 %v4067
    %4599 = vmatprep.subr.bf16.mxu0 %v4070
    %4600 = vmatpush1.bf16.msra.mxu0 %v4069
    %4601 = vmatprep.subr.bf16.mxu0 %v4072
    %4602 = vmatpush1.bf16.msra.mxu0 %v4071
    %4603 = vmatprep.subr.bf16.mxu0 %v4074
    %4604 = vmatpush1.bf16.msra.mxu0 %v4073
    %4605 = vmatprep.subr.bf16.mxu0 %v4076
    %4606 = vmatpush1.bf16.msra.mxu0 %v4075
    %4607 = vmatprep.subr.bf16.mxu0 %v4078
    %4608 = vmatpush1.bf16.msra.mxu0 %v4077
    %4609 = vmatprep.subr.bf16.mxu0 %v4080
    %4610 = vmatpush1.bf16.msra.mxu0 %v4079
    %4611 = vmatprep.subr.bf16.mxu0 %v4082
    %4612 = vmatpush1.bf16.msra.mxu0 %v4081
    %4613 = vmatprep.subr.bf16.mxu0 %v4084
    %4614 = vmatpush1.bf16.msra.mxu0 %v4083
    %4615 = vmatprep.subr.bf16.mxu0 %v4086
    %4616 = vmatpush1.bf16.msra.mxu0 %v4085
    %4617 = vmatprep.mubr.bf16.mxu0 %v2944
    %4618 = vmatmul.mubr.bf16.gmra.mrb[0].mxu0 %v2943
    %v4619 = vpop.f32.mrb[0].mxu0
    %v4620 = vadd.f32 %v4579, %v4619
    %v4621 = vpop.f32.mrb[0].mxu0
    %v4622 = vadd.f32 %v4581, %v4621
    %v4623 = vpop.f32.mrb[0].mxu0
    %v4624 = vpop.f32.mrb[0].mxu0
    %4625 = vdwg.mxu0
    %4626 = vmatprep.subr.bf16.mxu0 %v4088
    %4627 = vmatpush1.bf16.msra.mxu0 %v4087
    %4628 = vmatprep.subr.bf16.mxu0 %v4090
    %4629 = vmatpush1.bf16.msra.mxu0 %v4089
    %4630 = vmatprep.subr.bf16.mxu0 %v4092
    %4631 = vmatpush1.bf16.msra.mxu0 %v4091
    %4632 = vmatprep.subr.bf16.mxu0 %v4094
    %4633 = vmatpush1.bf16.msra.mxu0 %v4093
    %4634 = vmatprep.subr.bf16.mxu0 %v4096
    %4635 = vmatpush1.bf16.msra.mxu0 %v4095
    %4636 = vmatprep.subr.bf16.mxu0 %v4098
    %4637 = vmatpush1.bf16.msra.mxu0 %v4097
    %4638 = vmatprep.subr.bf16.mxu0 %v4100
    %4639 = vmatpush1.bf16.msra.mxu0 %v4099
    %4640 = vmatprep.subr.bf16.mxu0 %v4102
    %4641 = vmatpush1.bf16.msra.mxu0 %v4101
    %4642 = vmatprep.subr.bf16.mxu0 %v4104
    %4643 = vmatpush1.bf16.msra.mxu0 %v4103
    %4644 = vmatprep.subr.bf16.mxu0 %v4106
    %4645 = vmatpush1.bf16.msra.mxu0 %v4105
    %4646 = vmatprep.subr.bf16.mxu0 %v4108
    %4647 = vmatpush1.bf16.msra.mxu0 %v4107
    %4648 = vmatprep.subr.bf16.mxu0 %v4110
    %4649 = vmatpush1.bf16.msra.mxu0 %v4109
    %4650 = vmatprep.subr.bf16.mxu0 %v4112
    %4651 = vmatpush1.bf16.msra.mxu0 %v4111
    %4652 = vmatprep.subr.bf16.mxu0 %v4114
    %4653 = vmatpush1.bf16.msra.mxu0 %v4113
    %4654 = vmatprep.subr.bf16.mxu0 %v4116
    %4655 = vmatpush1.bf16.msra.mxu0 %v4115
    %4656 = vmatprep.subr.bf16.mxu0 %v4118
    %4657 = vmatpush1.bf16.msra.mxu0 %v4117
    %4658 = vmatprep.mubr.bf16.mxu0 %v2946
    %4659 = vmatmul.mubr.bf16.gmra.mrb[0].mxu0 %v2945
    %v4660 = vpop.f32.mrb[0].mxu0
    %v4661 = vadd.f32 %v4620, %v4660
    %v4662 = vpop.f32.mrb[0].mxu0
    %v4663 = vadd.f32 %v4622, %v4662
    %v4664 = vpop.f32.mrb[0].mxu0
    %v4665 = vpop.f32.mrb[0].mxu0
    %4666 = vdwg.mxu0
    %4667 = vmatprep.subr.bf16.mxu0 %v4120
    %4668 = vmatpush1.bf16.msra.mxu0 %v4119
    %4669 = vmatprep.subr.bf16.mxu0 %v4122
    %4670 = vmatpush1.bf16.msra.mxu0 %v4121
    %4671 = vmatprep.subr.bf16.mxu0 %v4124
    %4672 = vmatpush1.bf16.msra.mxu0 %v4123
    %4673 = vmatprep.subr.bf16.mxu0 %v4126
    %4674 = vmatpush1.bf16.msra.mxu0 %v4125
    %4675 = vmatprep.subr.bf16.mxu0 %v4128
    %4676 = vmatpush1.bf16.msra.mxu0 %v4127
    %4677 = vmatprep.subr.bf16.mxu0 %v4130
    %4678 = vmatpush1.bf16.msra.mxu0 %v4129
    %4679 = vmatprep.subr.bf16.mxu0 %v4132
    %4680 = vmatpush1.bf16.msra.mxu0 %v4131
    %4681 = vmatprep.subr.bf16.mxu0 %v4134
    %4682 = vmatpush1.bf16.msra.mxu0 %v4133
    %4683 = vmatprep.subr.bf16.mxu0 %v4136
    %4684 = vmatpush1.bf16.msra.mxu0 %v4135
    %4685 = vmatprep.subr.bf16.mxu0 %v4138
    %4686 = vmatpush1.bf16.msra.mxu0 %v4137
    %4687 = vmatprep.subr.bf16.mxu0 %v4140
    %4688 = vmatpush1.bf16.msra.mxu0 %v4139
    %4689 = vmatprep.subr.bf16.mxu0 %v4142
    %4690 = vmatpush1.bf16.msra.mxu0 %v4141
    %4691 = vmatprep.subr.bf16.mxu0 %v4144
    %4692 = vmatpush1.bf16.msra.mxu0 %v4143
    %4693 = vmatprep.subr.bf16.mxu0 %v4146
    %4694 = vmatpush1.bf16.msra.mxu0 %v4145
    %4695 = vmatprep.subr.bf16.mxu0 %v4148
    %4696 = vmatpush1.bf16.msra.mxu0 %v4147
    %4697 = vmatprep.subr.bf16.mxu0 %v4150
    %4698 = vmatpush1.bf16.msra.mxu0 %v4149
    %4699 = vmatprep.mubr.bf16.mxu0 %v2948
    %4700 = vmatmul.mubr.bf16.gmra.mrb[0].mxu0 %v2947
    %v4701 = vpop.f32.mrb[0].mxu0
    %v4702 = vadd.f32 %v4661, %v4701
    %v4703 = vpop.f32.mrb[0].mxu0
    %v4704 = vadd.f32 %v4663, %v4703
    %v4705 = vpop.f32.mrb[0].mxu0
    %v4706 = vpop.f32.mrb[0].mxu0
    %4707 = vdwg.mxu0
    %4708 = vmatprep.subr.bf16.mxu0 %v4152
    %4709 = vmatpush1.bf16.msra.mxu0 %v4151
    %4710 = vmatprep.subr.bf16.mxu0 %v4154
    %4711 = vmatpush1.bf16.msra.mxu0 %v4153
    %4712 = vmatprep.subr.bf16.mxu0 %v4156
    %4713 = vmatpush1.bf16.msra.mxu0 %v4155
    %4714 = vmatprep.subr.bf16.mxu0 %v4158
    %4715 = vmatpush1.bf16.msra.mxu0 %v4157
    %4716 = vmatprep.subr.bf16.mxu0 %v4160
    %4717 = vmatpush1.bf16.msra.mxu0 %v4159
    %4718 = vmatprep.subr.bf16.mxu0 %v4162
    %4719 = vmatpush1.bf16.msra.mxu0 %v4161
    %4720 = vmatprep.subr.bf16.mxu0 %v4164
    %4721 = vmatpush1.bf16.msra.mxu0 %v4163
    %4722 = vmatprep.subr.bf16.mxu0 %v4166
    %4723 = vmatpush1.bf16.msra.mxu0 %v4165
    %4724 = vmatprep.subr.bf16.mxu0 %v4168
    %4725 = vmatpush1.bf16.msra.mxu0 %v4167
    %4726 = vmatprep.subr.bf16.mxu0 %v4170
    %4727 = vmatpush1.bf16.msra.mxu0 %v4169
    %4728 = vmatprep.subr.bf16.mxu0 %v4172
    %4729 = vmatpush1.bf16.msra.mxu0 %v4171
    %4730 = vmatprep.subr.bf16.mxu0 %v4174
    %4731 = vmatpush1.bf16.msra.mxu0 %v4173
    %4732 = vmatprep.subr.bf16.mxu0 %v4176
    %4733 = vmatpush1.bf16.msra.mxu0 %v4175
    %4734 = vmatprep.subr.bf16.mxu0 %v4178
    %4735 = vmatpush1.bf16.msra.mxu0 %v4177
    %4736 = vmatprep.subr.bf16.mxu0 %v4180
    %4737 = vmatpush1.bf16.msra.mxu0 %v4179
    %4738 = vmatprep.subr.bf16.mxu0 %v4182
    %4739 = vmatpush1.bf16.msra.mxu0 %v4181
    %4740 = vmatprep.mubr.bf16.mxu0 %v2950
    %4741 = vmatmul.mubr.bf16.gmra.mrb[0].mxu0 %v2949
    %v4742 = vpop.f32.mrb[0].mxu0
    %v4743 = vadd.f32 %v4702, %v4742
    %v4744 = vpop.f32.mrb[0].mxu0
    %v4745 = vadd.f32 %v4704, %v4744
    %v4746 = vpop.f32.mrb[0].mxu0
    %v4747 = vpop.f32.mrb[0].mxu0
    %4748 = vdwg.mxu0
    %4749 = vmatprep.subr.bf16.mxu0 %v4184
    %4750 = vmatpush1.bf16.msra.mxu0 %v4183
    %4751 = vmatprep.subr.bf16.mxu0 %v4186
    %4752 = vmatpush1.bf16.msra.mxu0 %v4185
    %4753 = vmatprep.subr.bf16.mxu0 %v4188
    %4754 = vmatpush1.bf16.msra.mxu0 %v4187
    %4755 = vmatprep.subr.bf16.mxu0 %v4190
    %4756 = vmatpush1.bf16.msra.mxu0 %v4189
    %4757 = vmatprep.subr.bf16.mxu0 %v4192
    %4758 = vmatpush1.bf16.msra.mxu0 %v4191
    %4759 = vmatprep.subr.bf16.mxu0 %v4194
    %4760 = vmatpush1.bf16.msra.mxu0 %v4193
    %4761 = vmatprep.subr.bf16.mxu0 %v4196
    %4762 = vmatpush1.bf16.msra.mxu0 %v4195
    %4763 = vmatprep.subr.bf16.mxu0 %v4198
    %4764 = vmatpush1.bf16.msra.mxu0 %v4197
    %4765 = vmatprep.subr.bf16.mxu0 %v4200
    %4766 = vmatpush1.bf16.msra.mxu0 %v4199
    %4767 = vmatprep.subr.bf16.mxu0 %v4202
    %4768 = vmatpush1.bf16.msra.mxu0 %v4201
    %4769 = vmatprep.subr.bf16.mxu0 %v4204
    %4770 = vmatpush1.bf16.msra.mxu0 %v4203
    %4771 = vmatprep.subr.bf16.mxu0 %v4206
    %4772 = vmatpush1.bf16.msra.mxu0 %v4205
    %4773 = vmatprep.subr.bf16.mxu0 %v4208
    %4774 = vmatpush1.bf16.msra.mxu0 %v4207
    %4775 = vmatprep.subr.bf16.mxu0 %v4210
    %4776 = vmatpush1.bf16.msra.mxu0 %v4209
    %4777 = vmatprep.subr.bf16.mxu0 %v4212
    %4778 = vmatpush1.bf16.msra.mxu0 %v4211
    %4779 = vmatprep.subr.bf16.mxu0 %v4214
    %4780 = vmatpush1.bf16.msra.mxu0 %v4213
    %4781 = vmatprep.mubr.bf16.mxu0 %v2952
    %4782 = vmatmul.mubr.bf16.gmra.mrb[0].mxu0 %v2951
    %v4783 = vpop.f32.mrb[0].mxu0
    %v4784 = vadd.f32 %v4743, %v4783
    %v4785 = vpop.f32.mrb[0].mxu0
    %v4786 = vadd.f32 %v4745, %v4785
    %v4787 = vpop.f32.mrb[0].mxu0
    %v4788 = vpop.f32.mrb[0].mxu0
    %4789 = vdwg.mxu0
    %4790 = vmatprep.subr.bf16.mxu0 %v4216
    %4791 = vmatpush1.bf16.msra.mxu0 %v4215
    %4792 = vmatprep.subr.bf16.mxu0 %v4218
    %4793 = vmatpush1.bf16.msra.mxu0 %v4217
    %4794 = vmatprep.subr.bf16.mxu0 %v4220
    %4795 = vmatpush1.bf16.msra.mxu0 %v4219
    %4796 = vmatprep.subr.bf16.mxu0 %v4222
    %4797 = vmatpush1.bf16.msra.mxu0 %v4221
    %4798 = vmatprep.subr.bf16.mxu0 %v4224
    %4799 = vmatpush1.bf16.msra.mxu0 %v4223
    %4800 = vmatprep.subr.bf16.mxu0 %v4226
    %4801 = vmatpush1.bf16.msra.mxu0 %v4225
    %4802 = vmatprep.subr.bf16.mxu0 %v4228
    %4803 = vmatpush1.bf16.msra.mxu0 %v4227
    %4804 = vmatprep.subr.bf16.mxu0 %v4230
    %4805 = vmatpush1.bf16.msra.mxu0 %v4229
    %4806 = vmatprep.subr.bf16.mxu0 %v4232
    %4807 = vmatpush1.bf16.msra.mxu0 %v4231
    %4808 = vmatprep.subr.bf16.mxu0 %v4234
    %4809 = vmatpush1.bf16.msra.mxu0 %v4233
    %4810 = vmatprep.subr.bf16.mxu0 %v4236
    %4811 = vmatpush1.bf16.msra.mxu0 %v4235
    %4812 = vmatprep.subr.bf16.mxu0 %v4238
    %4813 = vmatpush1.bf16.msra.mxu0 %v4237
    %4814 = vmatprep.subr.bf16.mxu0 %v4240
    %4815 = vmatpush1.bf16.msra.mxu0 %v4239
    %4816 = vmatprep.subr.bf16.mxu0 %v4242
    %4817 = vmatpush1.bf16.msra.mxu0 %v4241
    %4818 = vmatprep.subr.bf16.mxu0 %v4244
    %4819 = vmatpush1.bf16.msra.mxu0 %v4243
    %4820 = vmatprep.subr.bf16.mxu0 %v4246
    %4821 = vmatpush1.bf16.msra.mxu0 %v4245
    %4822 = vmatprep.mubr.bf16.mxu0 %v2954
    %4823 = vmatmul.mubr.bf16.gmra.mrb[0].mxu0 %v2953
    %v4824 = vpop.f32.mrb[0].mxu0
    %v4825 = vadd.f32 %v4784, %v4824
    %v4826 = vpop.f32.mrb[0].mxu0
    %v4827 = vadd.f32 %v4786, %v4826
    %v4828 = vpop.f32.mrb[0].mxu0
    %v4829 = vpop.f32.mrb[0].mxu0
    %4830 = vdwg.mxu0
    %v4831 = vadd.f32 %v971, %v4825
    %v4832 = vadd.f32 %v972, %v4827
    %v4833 = vld [vmem:[#allocation23] sm:$0x3]
    %v4834 = vld [vmem:[#allocation25] sm:$0x3]
    %v4835 = vadd.f32 %v4831, %v4832
    %4836 = vadd.xlane.f32.xlu0 %v4835
    %v4837 = vpop.xlane.xlu0 %4836
    %v4838 = vmul.f32 %v4837, %v933
    %v4839 = vsub.f32 %v4831, %v4838
    %v4840 = vsub.f32 %v4832, %v4838
    %v4841 = vmul.f32 %v4839, %v4839
    %v4842 = vmul.f32 %v4840, %v4840
    %v4843 = vadd.f32 %v4841, %v4842
    %4844 = vadd.xlane.f32.xlu0 %v4843
    %v4845 = vpop.xlane.xlu0 %4844
    %v4846 = vmul.f32 %v4845, %v933
    %v4847 = vadd.f32 %v4846, 1e-05
    %v4848 = vrsqrt.pop %v4847
    %v4849 = vmul.f32 %v4839, %v4848
    %v4850 = vmul.f32 %v4840, %v4848
    %v4852 = vlaneseq
    %v4853 = vshrl.u32 %v4852, 7
    %v4854 = vsub.s32 0, %v4853
    %v4855 = vrot.slane %v4833, %v4854
    %v4856 = vlaneseq
    %v4857 = vshrl.u32 %v4856, 7
    %v4858 = vsub.s32 1, %v4857
    %v4859 = vrot.slane %v4833, %v4858
    %v4862 = vmul.f32 %v4849, %v4855
    %v4863 = vmul.f32 %v4850, %v4859
    %v4865 = vlaneseq
    %v4866 = vshrl.u32 %v4865, 7
    %v4867 = vsub.s32 0, %v4866
    %v4868 = vrot.slane %v4834, %v4867
    %v4869 = vlaneseq
    %v4870 = vshrl.u32 %v4869, 7
    %v4871 = vsub.s32 1, %v4870
    %v4872 = vrot.slane %v4834, %v4871
    %v4875 = vadd.f32 %v4862, %v4868
    %v4876 = vadd.f32 %v4863, %v4872
    %v4877 = vpack.c.bf16 %v4875, %v4875
    %v4878 = vpack.c.bf16 %v4876, %v4876
    %s4879 = scalar_lea.vmem [#allocation8], 256
    %v4880 = vld [vmem:[%s4879] sm:$0xff]
    %v4881 = vld [vmem:[%s4879 + $0x8] sm:$0xff]
    %v4882 = vld [vmem:[%s4879 + $0x10] sm:$0xff]
    %v4883 = vld [vmem:[%s4879 + $0x18] sm:$0xff]
    %v4884 = vld [vmem:[%s4879 + $0x20] sm:$0xff]
    %v4885 = vld [vmem:[%s4879 + $0x28] sm:$0xff]
    %v4886 = vld [vmem:[%s4879 + $0x30] sm:$0xff]
    %v4887 = vld [vmem:[%s4879 + $0x38] sm:$0xff]
    %v4888 = vld [vmem:[%s4879 + $0x40] sm:$0xff]
    %v4889 = vld [vmem:[%s4879 + $0x48] sm:$0xff]
    %v4890 = vld [vmem:[%s4879 + $0x50] sm:$0xff]
    %v4891 = vld [vmem:[%s4879 + $0x58] sm:$0xff]
    %v4892 = vld [vmem:[%s4879 + $0x60] sm:$0xff]
    %v4893 = vld [vmem:[%s4879 + $0x68] sm:$0xff]
    %v4894 = vld [vmem:[%s4879 + $0x70] sm:$0xff]
    %v4895 = vld [vmem:[%s4879 + $0x78] sm:$0xff]
    %v4896 = vld [vmem:[%s4879 + $0x80] sm:$0xff]
    %v4897 = vld [vmem:[%s4879 + $0x88] sm:$0xff]
    %v4898 = vld [vmem:[%s4879 + $0x90] sm:$0xff]
    %v4899 = vld [vmem:[%s4879 + $0x98] sm:$0xff]
    %v4900 = vld [vmem:[%s4879 + $0xa0] sm:$0xff]
    %v4901 = vld [vmem:[%s4879 + $0xa8] sm:$0xff]
    %v4902 = vld [vmem:[%s4879 + $0xb0] sm:$0xff]
    %v4903 = vld [vmem:[%s4879 + $0xb8] sm:$0xff]
    %v4904 = vld [vmem:[%s4879 + $0xc0] sm:$0xff]
    %v4905 = vld [vmem:[%s4879 + $0xc8] sm:$0xff]
    %v4906 = vld [vmem:[%s4879 + $0xd0] sm:$0xff]
    %v4907 = vld [vmem:[%s4879 + $0xd8] sm:$0xff]
    %v4908 = vld [vmem:[%s4879 + $0xe0] sm:$0xff]
    %v4909 = vld [vmem:[%s4879 + $0xe8] sm:$0xff]
    %v4910 = vld [vmem:[%s4879 + $0xf0] sm:$0xff]
    %v4911 = vld [vmem:[%s4879 + $0xf8] sm:$0xff]
    %s4912 = scalar_lea.vmem [#allocation10], 2
    %v4913 = vld [vmem:[%s4912] sm:$0x3]
    %v4915 = vlaneseq
    %v4916 = vshrl.u32 %v4915, 7
    %v4917 = vsub.s32 0, %v4916
    %v4918 = vrot.slane %v4913, %v4917
    %v4919 = vlaneseq
    %v4920 = vshrl.u32 %v4919, 7
    %v4921 = vsub.s32 1, %v4920
    %v4922 = vrot.slane %v4913, %v4921
    %v4957 = vunpack.c.l.b16 %v4880
    %v4958 = vunpack.c.h.b16 %v4880
    %v4959 = vunpack.c.l.b16 %v4881
    %v4960 = vunpack.c.h.b16 %v4881
    %v4961 = vunpack.c.l.b16 %v4882
    %v4962 = vunpack.c.h.b16 %v4882
    %v4963 = vunpack.c.l.b16 %v4883
    %v4964 = vunpack.c.h.b16 %v4883
    %v4965 = vunpack.c.l.b16 %v4884
    %v4966 = vunpack.c.h.b16 %v4884
    %v4967 = vunpack.c.l.b16 %v4885
    %v4968 = vunpack.c.h.b16 %v4885
    %v4969 = vunpack.c.l.b16 %v4886
    %v4970 = vunpack.c.h.b16 %v4886
    %v4971 = vunpack.c.l.b16 %v4887
    %v4972 = vunpack.c.h.b16 %v4887
    %v4973 = vunpack.c.l.b16 %v4888
    %v4974 = vunpack.c.h.b16 %v4888
    %v4975 = vunpack.c.l.b16 %v4889
    %v4976 = vunpack.c.h.b16 %v4889
    %v4977 = vunpack.c.l.b16 %v4890
    %v4978 = vunpack.c.h.b16 %v4890
    %v4979 = vunpack.c.l.b16 %v4891
    %v4980 = vunpack.c.h.b16 %v4891
    %v4981 = vunpack.c.l.b16 %v4892
    %v4982 = vunpack.c.h.b16 %v4892
    %v4983 = vunpack.c.l.b16 %v4893
    %v4984 = vunpack.c.h.b16 %v4893
    %v4985 = vunpack.c.l.b16 %v4894
    %v4986 = vunpack.c.h.b16 %v4894
    %v4987 = vunpack.c.l.b16 %v4895
    %v4988 = vunpack.c.h.b16 %v4895
    %v4989 = vunpack.c.l.b16 %v4896
    %v4990 = vunpack.c.h.b16 %v4896
    %v4991 = vunpack.c.l.b16 %v4897
    %v4992 = vunpack.c.h.b16 %v4897
    %v4993 = vunpack.c.l.b16 %v4898
    %v4994 = vunpack.c.h.b16 %v4898
    %v4995 = vunpack.c.l.b16 %v4899
    %v4996 = vunpack.c.h.b16 %v4899
    %v4997 = vunpack.c.l.b16 %v4900
    %v4998 = vunpack.c.h.b16 %v4900
    %v4999 = vunpack.c.l.b16 %v4901
    %v5000 = vunpack.c.h.b16 %v4901
    %v5001 = vunpack.c.l.b16 %v4902
    %v5002 = vunpack.c.h.b16 %v4902
    %v5003 = vunpack.c.l.b16 %v4903
    %v5004 = vunpack.c.h.b16 %v4903
    %v5005 = vunpack.c.l.b16 %v4904
    %v5006 = vunpack.c.h.b16 %v4904
    %v5007 = vunpack.c.l.b16 %v4905
    %v5008 = vunpack.c.h.b16 %v4905
    %v5009 = vunpack.c.l.b16 %v4906
    %v5010 = vunpack.c.h.b16 %v4906
    %v5011 = vunpack.c.l.b16 %v4907
    %v5012 = vunpack.c.h.b16 %v4907
    %v5013 = vunpack.c.l.b16 %v4908
    %v5014 = vunpack.c.h.b16 %v4908
    %v5015 = vunpack.c.l.b16 %v4909
    %v5016 = vunpack.c.h.b16 %v4909
    %v5017 = vunpack.c.l.b16 %v4910
    %v5018 = vunpack.c.h.b16 %v4910
    %v5019 = vunpack.c.l.b16 %v4911
    %v5020 = vunpack.c.h.b16 %v4911
    %v5021 = vpack.c.b16 %v4959, %v4957
    %v5022 = vpack.c.b16 %v4960, %v4958
    %v5023 = vpack.c.b16 %v4963, %v4961
    %v5024 = vpack.c.b16 %v4964, %v4962
    %v5025 = vpack.c.b16 %v4967, %v4965
    %v5026 = vpack.c.b16 %v4968, %v4966
    %v5027 = vpack.c.b16 %v4971, %v4969
    %v5028 = vpack.c.b16 %v4972, %v4970
    %v5029 = vpack.c.b16 %v4975, %v4973
    %v5030 = vpack.c.b16 %v4976, %v4974
    %v5031 = vpack.c.b16 %v4979, %v4977
    %v5032 = vpack.c.b16 %v4980, %v4978
    %v5033 = vpack.c.b16 %v4983, %v4981
    %v5034 = vpack.c.b16 %v4984, %v4982
    %v5035 = vpack.c.b16 %v4987, %v4985
    %v5036 = vpack.c.b16 %v4988, %v4986
    %v5037 = vpack.c.b16 %v4991, %v4989
    %v5038 = vpack.c.b16 %v4992, %v4990
    %v5039 = vpack.c.b16 %v4995, %v4993
    %v5040 = vpack.c.b16 %v4996, %v4994
    %v5041 = vpack.c.b16 %v4999, %v4997
    %v5042 = vpack.c.b16 %v5000, %v4998
    %v5043 = vpack.c.b16 %v5003, %v5001
    %v5044 = vpack.c.b16 %v5004, %v5002
    %v5045 = vpack.c.b16 %v5007, %v5005
    %v5046 = vpack.c.b16 %v5008, %v5006
    %v5047 = vpack.c.b16 %v5011, %v5009
    %v5048 = vpack.c.b16 %v5012, %v5010
    %v5049 = vpack.c.b16 %v5015, %v5013
    %v5050 = vpack.c.b16 %v5016, %v5014
    %v5051 = vpack.c.b16 %v5019, %v5017
    %v5052 = vpack.c.b16 %v5020, %v5018
    %5085 = vmatprep.subr.bf16.mxu0 %v5022
    %5086 = vmatpush1.bf16.msra.mxu0 %v5021
    %5087 = vmatprep.subr.bf16.mxu0 %v5024
    %5088 = vmatpush1.bf16.msra.mxu0 %v5023
    %5089 = vmatprep.subr.bf16.mxu0 %v5026
    %5090 = vmatpush1.bf16.msra.mxu0 %v5025
    %5091 = vmatprep.subr.bf16.mxu0 %v5028
    %5092 = vmatpush1.bf16.msra.mxu0 %v5027
    %5093 = vmatprep.subr.bf16.mxu0 %v5030
    %5094 = vmatpush1.bf16.msra.mxu0 %v5029
    %5095 = vmatprep.subr.bf16.mxu0 %v5032
    %5096 = vmatpush1.bf16.msra.mxu0 %v5031
    %5097 = vmatprep.subr.bf16.mxu0 %v5034
    %5098 = vmatpush1.bf16.msra.mxu0 %v5033
    %5099 = vmatprep.subr.bf16.mxu0 %v5036
    %5100 = vmatpush1.bf16.msra.mxu0 %v5035
    %5101 = vmatprep.subr.bf16.mxu0 %v5038
    %5102 = vmatpush1.bf16.msra.mxu0 %v5037
    %5103 = vmatprep.subr.bf16.mxu0 %v5040
    %5104 = vmatpush1.bf16.msra.mxu0 %v5039
    %5105 = vmatprep.subr.bf16.mxu0 %v5042
    %5106 = vmatpush1.bf16.msra.mxu0 %v5041
    %5107 = vmatprep.subr.bf16.mxu0 %v5044
    %5108 = vmatpush1.bf16.msra.mxu0 %v5043
    %5109 = vmatprep.subr.bf16.mxu0 %v5046
    %5110 = vmatpush1.bf16.msra.mxu0 %v5045
    %5111 = vmatprep.subr.bf16.mxu0 %v5048
    %5112 = vmatpush1.bf16.msra.mxu0 %v5047
    %5113 = vmatprep.subr.bf16.mxu0 %v5050
    %5114 = vmatpush1.bf16.msra.mxu0 %v5049
    %5115 = vmatprep.subr.bf16.mxu0 %v5052
    %5116 = vmatpush1.bf16.msra.mxu0 %v5051
    %5117 = vmatprep.mubr.bf16.mxu0 %v4878
    %5118 = vmatmul.mubr.bf16.gmra.mrb[0].mxu0 %v4877
    %v5119 = vpop.f32.mrb[0].mxu0
    %v5120 = vadd.f32 %v4918, %v5119
    %v5121 = vpop.f32.mrb[0].mxu0
    %v5122 = vadd.f32 %v4922, %v5121
    %v5123 = vpop.f32.mrb[0].mxu0
    %v5124 = vpop.f32.mrb[0].mxu0
    %5125 = vdwg.mxu0
    %v5126 = vpack.c.bf16 %v5120, %v5120
    %v5127 = vpack.c.bf16 %v5122, %v5122
    %s5128 = scalar_lea.vmem [#allocation11], 256
    %v5129 = vld [vmem:[%s5128] sm:$0xff]
    %v5130 = vld [vmem:[%s5128 + $0x8] sm:$0xff]
    %v5131 = vld [vmem:[%s5128 + $0x10] sm:$0xff]
    %v5132 = vld [vmem:[%s5128 + $0x18] sm:$0xff]
    %v5133 = vld [vmem:[%s5128 + $0x20] sm:$0xff]
    %v5134 = vld [vmem:[%s5128 + $0x28] sm:$0xff]
    %v5135 = vld [vmem:[%s5128 + $0x30] sm:$0xff]
    %v5136 = vld [vmem:[%s5128 + $0x38] sm:$0xff]
    %v5137 = vld [vmem:[%s5128 + $0x40] sm:$0xff]
    %v5138 = vld [vmem:[%s5128 + $0x48] sm:$0xff]
    %v5139 = vld [vmem:[%s5128 + $0x50] sm:$0xff]
    %v5140 = vld [vmem:[%s5128 + $0x58] sm:$0xff]
    %v5141 = vld [vmem:[%s5128 + $0x60] sm:$0xff]
    %v5142 = vld [vmem:[%s5128 + $0x68] sm:$0xff]
    %v5143 = vld [vmem:[%s5128 + $0x70] sm:$0xff]
    %v5144 = vld [vmem:[%s5128 + $0x78] sm:$0xff]
    %v5145 = vld [vmem:[%s5128 + $0x80] sm:$0xff]
    %v5146 = vld [vmem:[%s5128 + $0x88] sm:$0xff]
    %v5147 = vld [vmem:[%s5128 + $0x90] sm:$0xff]
    %v5148 = vld [vmem:[%s5128 + $0x98] sm:$0xff]
    %v5149 = vld [vmem:[%s5128 + $0xa0] sm:$0xff]
    %v5150 = vld [vmem:[%s5128 + $0xa8] sm:$0xff]
    %v5151 = vld [vmem:[%s5128 + $0xb0] sm:$0xff]
    %v5152 = vld [vmem:[%s5128 + $0xb8] sm:$0xff]
    %v5153 = vld [vmem:[%s5128 + $0xc0] sm:$0xff]
    %v5154 = vld [vmem:[%s5128 + $0xc8] sm:$0xff]
    %v5155 = vld [vmem:[%s5128 + $0xd0] sm:$0xff]
    %v5156 = vld [vmem:[%s5128 + $0xd8] sm:$0xff]
    %v5157 = vld [vmem:[%s5128 + $0xe0] sm:$0xff]
    %v5158 = vld [vmem:[%s5128 + $0xe8] sm:$0xff]
    %v5159 = vld [vmem:[%s5128 + $0xf0] sm:$0xff]
    %v5160 = vld [vmem:[%s5128 + $0xf8] sm:$0xff]
    %s5161 = scalar_lea.vmem [#allocation13], 2
    %v5162 = vld [vmem:[%s5161] sm:$0x3]
    %v5164 = vlaneseq
    %v5165 = vshrl.u32 %v5164, 7
    %v5166 = vsub.s32 0, %v5165
    %v5167 = vrot.slane %v5162, %v5166
    %v5168 = vlaneseq
    %v5169 = vshrl.u32 %v5168, 7
    %v5170 = vsub.s32 1, %v5169
    %v5171 = vrot.slane %v5162, %v5170
    %v5206 = vunpack.c.l.b16 %v5129
    %v5207 = vunpack.c.h.b16 %v5129
    %v5208 = vunpack.c.l.b16 %v5130
    %v5209 = vunpack.c.h.b16 %v5130
    %v5210 = vunpack.c.l.b16 %v5131
    %v5211 = vunpack.c.h.b16 %v5131
    %v5212 = vunpack.c.l.b16 %v5132
    %v5213 = vunpack.c.h.b16 %v5132
    %v5214 = vunpack.c.l.b16 %v5133
    %v5215 = vunpack.c.h.b16 %v5133
    %v5216 = vunpack.c.l.b16 %v5134
    %v5217 = vunpack.c.h.b16 %v5134
    %v5218 = vunpack.c.l.b16 %v5135
    %v5219 = vunpack.c.h.b16 %v5135
    %v5220 = vunpack.c.l.b16 %v5136
    %v5221 = vunpack.c.h.b16 %v5136
    %v5222 = vunpack.c.l.b16 %v5137
    %v5223 = vunpack.c.h.b16 %v5137
    %v5224 = vunpack.c.l.b16 %v5138
    %v5225 = vunpack.c.h.b16 %v5138
    %v5226 = vunpack.c.l.b16 %v5139
    %v5227 = vunpack.c.h.b16 %v5139
    %v5228 = vunpack.c.l.b16 %v5140
    %v5229 = vunpack.c.h.b16 %v5140
    %v5230 = vunpack.c.l.b16 %v5141
    %v5231 = vunpack.c.h.b16 %v5141
    %v5232 = vunpack.c.l.b16 %v5142
    %v5233 = vunpack.c.h.b16 %v5142
    %v5234 = vunpack.c.l.b16 %v5143
    %v5235 = vunpack.c.h.b16 %v5143
    %v5236 = vunpack.c.l.b16 %v5144
    %v5237 = vunpack.c.h.b16 %v5144
    %v5238 = vunpack.c.l.b16 %v5145
    %v5239 = vunpack.c.h.b16 %v5145
    %v5240 = vunpack.c.l.b16 %v5146
    %v5241 = vunpack.c.h.b16 %v5146
    %v5242 = vunpack.c.l.b16 %v5147
    %v5243 = vunpack.c.h.b16 %v5147
    %v5244 = vunpack.c.l.b16 %v5148
    %v5245 = vunpack.c.h.b16 %v5148
    %v5246 = vunpack.c.l.b16 %v5149
    %v5247 = vunpack.c.h.b16 %v5149
    %v5248 = vunpack.c.l.b16 %v5150
    %v5249 = vunpack.c.h.b16 %v5150
    %v5250 = vunpack.c.l.b16 %v5151
    %v5251 = vunpack.c.h.b16 %v5151
    %v5252 = vunpack.c.l.b16 %v5152
    %v5253 = vunpack.c.h.b16 %v5152
    %v5254 = vunpack.c.l.b16 %v5153
    %v5255 = vunpack.c.h.b16 %v5153
    %v5256 = vunpack.c.l.b16 %v5154
    %v5257 = vunpack.c.h.b16 %v5154
    %v5258 = vunpack.c.l.b16 %v5155
    %v5259 = vunpack.c.h.b16 %v5155
    %v5260 = vunpack.c.l.b16 %v5156
    %v5261 = vunpack.c.h.b16 %v5156
    %v5262 = vunpack.c.l.b16 %v5157
    %v5263 = vunpack.c.h.b16 %v5157
    %v5264 = vunpack.c.l.b16 %v5158
    %v5265 = vunpack.c.h.b16 %v5158
    %v5266 = vunpack.c.l.b16 %v5159
    %v5267 = vunpack.c.h.b16 %v5159
    %v5268 = vunpack.c.l.b16 %v5160
    %v5269 = vunpack.c.h.b16 %v5160
    %v5270 = vpack.c.b16 %v5208, %v5206
    %v5271 = vpack.c.b16 %v5209, %v5207
    %v5272 = vpack.c.b16 %v5212, %v5210
    %v5273 = vpack.c.b16 %v5213, %v5211
    %v5274 = vpack.c.b16 %v5216, %v5214
    %v5275 = vpack.c.b16 %v5217, %v5215
    %v5276 = vpack.c.b16 %v5220, %v5218
    %v5277 = vpack.c.b16 %v5221, %v5219
    %v5278 = vpack.c.b16 %v5224, %v5222
    %v5279 = vpack.c.b16 %v5225, %v5223
    %v5280 = vpack.c.b16 %v5228, %v5226
    %v5281 = vpack.c.b16 %v5229, %v5227
    %v5282 = vpack.c.b16 %v5232, %v5230
    %v5283 = vpack.c.b16 %v5233, %v5231
    %v5284 = vpack.c.b16 %v5236, %v5234
    %v5285 = vpack.c.b16 %v5237, %v5235
    %v5286 = vpack.c.b16 %v5240, %v5238
    %v5287 = vpack.c.b16 %v5241, %v5239
    %v5288 = vpack.c.b16 %v5244, %v5242
    %v5289 = vpack.c.b16 %v5245, %v5243
    %v5290 = vpack.c.b16 %v5248, %v5246
    %v5291 = vpack.c.b16 %v5249, %v5247
    %v5292 = vpack.c.b16 %v5252, %v5250
    %v5293 = vpack.c.b16 %v5253, %v5251
    %v5294 = vpack.c.b16 %v5256, %v5254
    %v5295 = vpack.c.b16 %v5257, %v5255
    %v5296 = vpack.c.b16 %v5260, %v5258
    %v5297 = vpack.c.b16 %v5261, %v5259
    %v5298 = vpack.c.b16 %v5264, %v5262
    %v5299 = vpack.c.b16 %v5265, %v5263
    %v5300 = vpack.c.b16 %v5268, %v5266
    %v5301 = vpack.c.b16 %v5269, %v5267
    %5334 = vmatprep.subr.bf16.mxu0 %v5271
    %5335 = vmatpush1.bf16.msra.mxu0 %v5270
    %5336 = vmatprep.subr.bf16.mxu0 %v5273
    %5337 = vmatpush1.bf16.msra.mxu0 %v5272
    %5338 = vmatprep.subr.bf16.mxu0 %v5275
    %5339 = vmatpush1.bf16.msra.mxu0 %v5274
    %5340 = vmatprep.subr.bf16.mxu0 %v5277
    %5341 = vmatpush1.bf16.msra.mxu0 %v5276
    %5342 = vmatprep.subr.bf16.mxu0 %v5279
    %5343 = vmatpush1.bf16.msra.mxu0 %v5278
    %5344 = vmatprep.subr.bf16.mxu0 %v5281
    %5345 = vmatpush1.bf16.msra.mxu0 %v5280
    %5346 = vmatprep.subr.bf16.mxu0 %v5283
    %5347 = vmatpush1.bf16.msra.mxu0 %v5282
    %5348 = vmatprep.subr.bf16.mxu0 %v5285
    %5349 = vmatpush1.bf16.msra.mxu0 %v5284
    %5350 = vmatprep.subr.bf16.mxu0 %v5287
    %5351 = vmatpush1.bf16.msra.mxu0 %v5286
    %5352 = vmatprep.subr.bf16.mxu0 %v5289
    %5353 = vmatpush1.bf16.msra.mxu0 %v5288
    %5354 = vmatprep.subr.bf16.mxu0 %v5291
    %5355 = vmatpush1.bf16.msra.mxu0 %v5290
    %5356 = vmatprep.subr.bf16.mxu0 %v5293
    %5357 = vmatpush1.bf16.msra.mxu0 %v5292
    %5358 = vmatprep.subr.bf16.mxu0 %v5295
    %5359 = vmatpush1.bf16.msra.mxu0 %v5294
    %5360 = vmatprep.subr.bf16.mxu0 %v5297
    %5361 = vmatpush1.bf16.msra.mxu0 %v5296
    %5362 = vmatprep.subr.bf16.mxu0 %v5299
    %5363 = vmatpush1.bf16.msra.mxu0 %v5298
    %5364 = vmatprep.subr.bf16.mxu0 %v5301
    %5365 = vmatpush1.bf16.msra.mxu0 %v5300
    %5366 = vmatprep.mubr.bf16.mxu0 %v5127
    %5367 = vmatmul.mubr.bf16.gmra.mrb[0].mxu0 %v5126
    %v5368 = vpop.f32.mrb[0].mxu0
    %v5369 = vadd.f32 %v5167, %v5368
    %v5370 = vpop.f32.mrb[0].mxu0
    %v5371 = vadd.f32 %v5171, %v5370
    %v5372 = vpop.f32.mrb[0].mxu0
    %v5373 = vpop.f32.mrb[0].mxu0
    %5374 = vdwg.mxu0
    %v5375 = vadd.f32 %v4875, %v5369
    %v5376 = vadd.f32 %v4876, %v5371
    %s5377 = scalar_lea.vmem [#allocation14], 2
    %v5378 = vld [vmem:[%s5377] sm:$0x3]
    %s5379 = scalar_lea.vmem [#allocation16], 2
    %v5380 = vld [vmem:[%s5379] sm:$0x3]
    %v5381 = vadd.f32 %v5375, %v5376
    %5382 = vadd.xlane.f32.xlu0 %v5381
    %v5383 = vpop.xlane.xlu0 %5382
    %v5384 = vmul.f32 %v5383, %v933
    %v5385 = vsub.f32 %v5375, %v5384
    %v5386 = vsub.f32 %v5376, %v5384
    %v5387 = vmul.f32 %v5385, %v5385
    %v5388 = vmul.f32 %v5386, %v5386
    %v5389 = vadd.f32 %v5387, %v5388
    %5390 = vadd.xlane.f32.xlu0 %v5389
    %v5391 = vpop.xlane.xlu0 %5390
    %v5392 = vmul.f32 %v5391, %v933
    %v5393 = vadd.f32 %v5392, 1e-05
    %v5394 = vrsqrt.pop %v5393
    %v5395 = vmul.f32 %v5385, %v5394
    %v5396 = vmul.f32 %v5386, %v5394
    %v5398 = vlaneseq
    %v5399 = vshrl.u32 %v5398, 7
    %v5400 = vsub.s32 0, %v5399
    %v5401 = vrot.slane %v5378, %v5400
    %v5402 = vlaneseq
    %v5403 = vshrl.u32 %v5402, 7
    %v5404 = vsub.s32 1, %v5403
    %v5405 = vrot.slane %v5378, %v5404
    %v5408 = vmul.f32 %v5395, %v5401
    %v5409 = vmul.f32 %v5396, %v5405
    %v5411 = vlaneseq
    %v5412 = vshrl.u32 %v5411, 7
    %v5413 = vsub.s32 0, %v5412
    %v5414 = vrot.slane %v5380, %v5413
    %v5415 = vlaneseq
    %v5416 = vshrl.u32 %v5415, 7
    %v5417 = vsub.s32 1, %v5416
    %v5418 = vrot.slane %v5380, %v5417
    %v5421 = vadd.f32 %v5408, %v5414
    %v5422 = vadd.f32 %v5409, %v5418
    %v5423 = vpack.c.bf16 %v5421, %v5421
    %v5424 = vpack.c.bf16 %v5422, %v5422
    %s5425 = scalar_lea.vmem [#allocation17], 2048
    %v5426 = vld [vmem:[%s5425] sm:$0xff]
    %v5427 = vld [vmem:[%s5425 + $0x8] sm:$0xff]
    %v5428 = vld [vmem:[%s5425 + $0x10] sm:$0xff]
    %v5429 = vld [vmem:[%s5425 + $0x18] sm:$0xff]
    %v5430 = vld [vmem:[%s5425 + $0x20] sm:$0xff]
    %v5431 = vld [vmem:[%s5425 + $0x28] sm:$0xff]
    %v5432 = vld [vmem:[%s5425 + $0x30] sm:$0xff]
    %v5433 = vld [vmem:[%s5425 + $0x38] sm:$0xff]
    %v5434 = vld [vmem:[%s5425 + $0x40] sm:$0xff]
    %v5435 = vld [vmem:[%s5425 + $0x48] sm:$0xff]
    %v5436 = vld [vmem:[%s5425 + $0x50] sm:$0xff]
    %v5437 = vld [vmem:[%s5425 + $0x58] sm:$0xff]
    %v5438 = vld [vmem:[%s5425 + $0x60] sm:$0xff]
    %v5439 = vld [vmem:[%s5425 + $0x68] sm:$0xff]
    %v5440 = vld [vmem:[%s5425 + $0x70] sm:$0xff]
    %v5441 = vld [vmem:[%s5425 + $0x78] sm:$0xff]
    %v5442 = vld [vmem:[%s5425 + $0x80] sm:$0xff]
    %v5443 = vld [vmem:[%s5425 + $0x88] sm:$0xff]
    %v5444 = vld [vmem:[%s5425 + $0x90] sm:$0xff]
    %v5445 = vld [vmem:[%s5425 + $0x98] sm:$0xff]
    %v5446 = vld [vmem:[%s5425 + $0xa0] sm:$0xff]
    %v5447 = vld [vmem:[%s5425 + $0xa8] sm:$0xff]
    %v5448 = vld [vmem:[%s5425 + $0xb0] sm:$0xff]
    %v5449 = vld [vmem:[%s5425 + $0xb8] sm:$0xff]
    %v5450 = vld [vmem:[%s5425 + $0xc0] sm:$0xff]
    %v5451 = vld [vmem:[%s5425 + $0xc8] sm:$0xff]
    %v5452 = vld [vmem:[%s5425 + $0xd0] sm:$0xff]
    %v5453 = vld [vmem:[%s5425 + $0xd8] sm:$0xff]
    %v5454 = vld [vmem:[%s5425 + $0xe0] sm:$0xff]
    %v5455 = vld [vmem:[%s5425 + $0xe8] sm:$0xff]
    %v5456 = vld [vmem:[%s5425 + $0xf0] sm:$0xff]
    %v5457 = vld [vmem:[%s5425 + $0xf8] sm:$0xff]
    %v5458 = vld [vmem:[%s5425 + $0x100] sm:$0xff]
    %v5459 = vld [vmem:[%s5425 + $0x108] sm:$0xff]
    %v5460 = vld [vmem:[%s5425 + $0x110] sm:$0xff]
    %v5461 = vld [vmem:[%s5425 + $0x118] sm:$0xff]
    %v5462 = vld [vmem:[%s5425 + $0x120] sm:$0xff]
    %v5463 = vld [vmem:[%s5425 + $0x128] sm:$0xff]
    %v5464 = vld [vmem:[%s5425 + $0x130] sm:$0xff]
    %v5465 = vld [vmem:[%s5425 + $0x138] sm:$0xff]
    %v5466 = vld [vmem:[%s5425 + $0x140] sm:$0xff]
    %v5467 = vld [vmem:[%s5425 + $0x148] sm:$0xff]
    %v5468 = vld [vmem:[%s5425 + $0x150] sm:$0xff]
    %v5469 = vld [vmem:[%s5425 + $0x158] sm:$0xff]
    %v5470 = vld [vmem:[%s5425 + $0x160] sm:$0xff]
    %v5471 = vld [vmem:[%s5425 + $0x168] sm:$0xff]
    %v5472 = vld [vmem:[%s5425 + $0x170] sm:$0xff]
    %v5473 = vld [vmem:[%s5425 + $0x178] sm:$0xff]
    %v5474 = vld [vmem:[%s5425 + $0x180] sm:$0xff]
    %v5475 = vld [vmem:[%s5425 + $0x188] sm:$0xff]
    %v5476 = vld [vmem:[%s5425 + $0x190] sm:$0xff]
    %v5477 = vld [vmem:[%s5425 + $0x198] sm:$0xff]
    %v5478 = vld [vmem:[%s5425 + $0x1a0] sm:$0xff]
    %v5479 = vld [vmem:[%s5425 + $0x1a8] sm:$0xff]
    %v5480 = vld [vmem:[%s5425 + $0x1b0] sm:$0xff]
    %v5481 = vld [vmem:[%s5425 + $0x1b8] sm:$0xff]
    %v5482 = vld [vmem:[%s5425 + $0x1c0] sm:$0xff]
    %v5483 = vld [vmem:[%s5425 + $0x1c8] sm:$0xff]
    %v5484 = vld [vmem:[%s5425 + $0x1d0] sm:$0xff]
    %v5485 = vld [vmem:[%s5425 + $0x1d8] sm:$0xff]
    %v5486 = vld [vmem:[%s5425 + $0x1e0] sm:$0xff]
    %v5487 = vld [vmem:[%s5425 + $0x1e8] sm:$0xff]
    %v5488 = vld [vmem:[%s5425 + $0x1f0] sm:$0xff]
    %v5489 = vld [vmem:[%s5425 + $0x1f8] sm:$0xff]
    %v5490 = vld [vmem:[%s5425 + $0x200] sm:$0xff]
    %v5491 = vld [vmem:[%s5425 + $0x208] sm:$0xff]
    %v5492 = vld [vmem:[%s5425 + $0x210] sm:$0xff]
    %v5493 = vld [vmem:[%s5425 + $0x218] sm:$0xff]
    %v5494 = vld [vmem:[%s5425 + $0x220] sm:$0xff]
    %v5495 = vld [vmem:[%s5425 + $0x228] sm:$0xff]
    %v5496 = vld [vmem:[%s5425 + $0x230] sm:$0xff]
    %v5497 = vld [vmem:[%s5425 + $0x238] sm:$0xff]
    %v5498 = vld [vmem:[%s5425 + $0x240] sm:$0xff]
    %v5499 = vld [vmem:[%s5425 + $0x248] sm:$0xff]
    %v5500 = vld [vmem:[%s5425 + $0x250] sm:$0xff]
    %v5501 = vld [vmem:[%s5425 + $0x258] sm:$0xff]
    %v5502 = vld [vmem:[%s5425 + $0x260] sm:$0xff]
    %v5503 = vld [vmem:[%s5425 + $0x268] sm:$0xff]
    %v5504 = vld [vmem:[%s5425 + $0x270] sm:$0xff]
    %v5505 = vld [vmem:[%s5425 + $0x278] sm:$0xff]
    %v5506 = vld [vmem:[%s5425 + $0x280] sm:$0xff]
    %v5507 = vld [vmem:[%s5425 + $0x288] sm:$0xff]
    %v5508 = vld [vmem:[%s5425 + $0x290] sm:$0xff]
    %v5509 = vld [vmem:[%s5425 + $0x298] sm:$0xff]
    %v5510 = vld [vmem:[%s5425 + $0x2a0] sm:$0xff]
    %v5511 = vld [vmem:[%s5425 + $0x2a8] sm:$0xff]
    %v5512 = vld [vmem:[%s5425 + $0x2b0] sm:$0xff]
    %v5513 = vld [vmem:[%s5425 + $0x2b8] sm:$0xff]
    %v5514 = vld [vmem:[%s5425 + $0x2c0] sm:$0xff]
    %v5515 = vld [vmem:[%s5425 + $0x2c8] sm:$0xff]
    %v5516 = vld [vmem:[%s5425 + $0x2d0] sm:$0xff]
    %v5517 = vld [vmem:[%s5425 + $0x2d8] sm:$0xff]
    %v5518 = vld [vmem:[%s5425 + $0x2e0] sm:$0xff]
    %v5519 = vld [vmem:[%s5425 + $0x2e8] sm:$0xff]
    %v5520 = vld [vmem:[%s5425 + $0x2f0] sm:$0xff]
    %v5521 = vld [vmem:[%s5425 + $0x2f8] sm:$0xff]
    %v5522 = vld [vmem:[%s5425 + $0x300] sm:$0xff]
    %v5523 = vld [vmem:[%s5425 + $0x308] sm:$0xff]
    %v5524 = vld [vmem:[%s5425 + $0x310] sm:$0xff]
    %v5525 = vld [vmem:[%s5425 + $0x318] sm:$0xff]
    %v5526 = vld [vmem:[%s5425 + $0x320] sm:$0xff]
    %v5527 = vld [vmem:[%s5425 + $0x328] sm:$0xff]
    %v5528 = vld [vmem:[%s5425 + $0x330] sm:$0xff]
    %v5529 = vld [vmem:[%s5425 + $0x338] sm:$0xff]
    %v5530 = vld [vmem:[%s5425 + $0x340] sm:$0xff]
    %v5531 = vld [vmem:[%s5425 + $0x348] sm:$0xff]
    %v5532 = vld [vmem:[%s5425 + $0x350] sm:$0xff]
    %v5533 = vld [vmem:[%s5425 + $0x358] sm:$0xff]
    %v5534 = vld [vmem:[%s5425 + $0x360] sm:$0xff]
    %v5535 = vld [vmem:[%s5425 + $0x368] sm:$0xff]
    %v5536 = vld [vmem:[%s5425 + $0x370] sm:$0xff]
    %v5537 = vld [vmem:[%s5425 + $0x378] sm:$0xff]
    %v5538 = vld [vmem:[%s5425 + $0x380] sm:$0xff]
    %v5539 = vld [vmem:[%s5425 + $0x388] sm:$0xff]
    %v5540 = vld [vmem:[%s5425 + $0x390] sm:$0xff]
    %v5541 = vld [vmem:[%s5425 + $0x398] sm:$0xff]
    %v5542 = vld [vmem:[%s5425 + $0x3a0] sm:$0xff]
    %v5543 = vld [vmem:[%s5425 + $0x3a8] sm:$0xff]
    %v5544 = vld [vmem:[%s5425 + $0x3b0] sm:$0xff]
    %v5545 = vld [vmem:[%s5425 + $0x3b8] sm:$0xff]
    %v5546 = vld [vmem:[%s5425 + $0x3c0] sm:$0xff]
    %v5547 = vld [vmem:[%s5425 + $0x3c8] sm:$0xff]
    %v5548 = vld [vmem:[%s5425 + $0x3d0] sm:$0xff]
    %v5549 = vld [vmem:[%s5425 + $0x3d8] sm:$0xff]
    %v5550 = vld [vmem:[%s5425 + $0x3e0] sm:$0xff]
    %v5551 = vld [vmem:[%s5425 + $0x3e8] sm:$0xff]
    %v5552 = vld [vmem:[%s5425 + $0x3f0] sm:$0xff]
    %v5553 = vld [vmem:[%s5425 + $0x3f8] sm:$0xff]
    %v5554 = vld [vmem:[%s5425 + $0x400] sm:$0xff]
    %v5555 = vld [vmem:[%s5425 + $0x408] sm:$0xff]
    %v5556 = vld [vmem:[%s5425 + $0x410] sm:$0xff]
    %v5557 = vld [vmem:[%s5425 + $0x418] sm:$0xff]
    %v5558 = vld [vmem:[%s5425 + $0x420] sm:$0xff]
    %v5559 = vld [vmem:[%s5425 + $0x428] sm:$0xff]
    %v5560 = vld [vmem:[%s5425 + $0x430] sm:$0xff]
    %v5561 = vld [vmem:[%s5425 + $0x438] sm:$0xff]
    %v5562 = vld [vmem:[%s5425 + $0x440] sm:$0xff]
    %v5563 = vld [vmem:[%s5425 + $0x448] sm:$0xff]
    %v5564 = vld [vmem:[%s5425 + $0x450] sm:$0xff]
    %v5565 = vld [vmem:[%s5425 + $0x458] sm:$0xff]
    %v5566 = vld [vmem:[%s5425 + $0x460] sm:$0xff]
    %v5567 = vld [vmem:[%s5425 + $0x468] sm:$0xff]
    %v5568 = vld [vmem:[%s5425 + $0x470] sm:$0xff]
    %v5569 = vld [vmem:[%s5425 + $0x478] sm:$0xff]
    %v5570 = vld [vmem:[%s5425 + $0x480] sm:$0xff]
    %v5571 = vld [vmem:[%s5425 + $0x488] sm:$0xff]
    %v5572 = vld [vmem:[%s5425 + $0x490] sm:$0xff]
    %v5573 = vld [vmem:[%s5425 + $0x498] sm:$0xff]
    %v5574 = vld [vmem:[%s5425 + $0x4a0] sm:$0xff]
    %v5575 = vld [vmem:[%s5425 + $0x4a8] sm:$0xff]
    %v5576 = vld [vmem:[%s5425 + $0x4b0] sm:$0xff]
    %v5577 = vld [vmem:[%s5425 + $0x4b8] sm:$0xff]
    %v5578 = vld [vmem:[%s5425 + $0x4c0] sm:$0xff]
    %v5579 = vld [vmem:[%s5425 + $0x4c8] sm:$0xff]
    %v5580 = vld [vmem:[%s5425 + $0x4d0] sm:$0xff]
    %v5581 = vld [vmem:[%s5425 + $0x4d8] sm:$0xff]
    %v5582 = vld [vmem:[%s5425 + $0x4e0] sm:$0xff]
    %v5583 = vld [vmem:[%s5425 + $0x4e8] sm:$0xff]
    %v5584 = vld [vmem:[%s5425 + $0x4f0] sm:$0xff]
    %v5585 = vld [vmem:[%s5425 + $0x4f8] sm:$0xff]
    %v5586 = vld [vmem:[%s5425 + $0x500] sm:$0xff]
    %v5587 = vld [vmem:[%s5425 + $0x508] sm:$0xff]
    %v5588 = vld [vmem:[%s5425 + $0x510] sm:$0xff]
    %v5589 = vld [vmem:[%s5425 + $0x518] sm:$0xff]
    %v5590 = vld [vmem:[%s5425 + $0x520] sm:$0xff]
    %v5591 = vld [vmem:[%s5425 + $0x528] sm:$0xff]
    %v5592 = vld [vmem:[%s5425 + $0x530] sm:$0xff]
    %v5593 = vld [vmem:[%s5425 + $0x538] sm:$0xff]
    %v5594 = vld [vmem:[%s5425 + $0x540] sm:$0xff]
    %v5595 = vld [vmem:[%s5425 + $0x548] sm:$0xff]
    %v5596 = vld [vmem:[%s5425 + $0x550] sm:$0xff]
    %v5597 = vld [vmem:[%s5425 + $0x558] sm:$0xff]
    %v5598 = vld [vmem:[%s5425 + $0x560] sm:$0xff]
    %v5599 = vld [vmem:[%s5425 + $0x568] sm:$0xff]
    %v5600 = vld [vmem:[%s5425 + $0x570] sm:$0xff]
    %v5601 = vld [vmem:[%s5425 + $0x578] sm:$0xff]
    %v5602 = vld [vmem:[%s5425 + $0x580] sm:$0xff]
    %v5603 = vld [vmem:[%s5425 + $0x588] sm:$0xff]
    %v5604 = vld [vmem:[%s5425 + $0x590] sm:$0xff]
    %v5605 = vld [vmem:[%s5425 + $0x598] sm:$0xff]
    %v5606 = vld [vmem:[%s5425 + $0x5a0] sm:$0xff]
    %v5607 = vld [vmem:[%s5425 + $0x5a8] sm:$0xff]
    %v5608 = vld [vmem:[%s5425 + $0x5b0] sm:$0xff]
    %v5609 = vld [vmem:[%s5425 + $0x5b8] sm:$0xff]
    %v5610 = vld [vmem:[%s5425 + $0x5c0] sm:$0xff]
    %v5611 = vld [vmem:[%s5425 + $0x5c8] sm:$0xff]
    %v5612 = vld [vmem:[%s5425 + $0x5d0] sm:$0xff]
    %v5613 = vld [vmem:[%s5425 + $0x5d8] sm:$0xff]
    %v5614 = vld [vmem:[%s5425 + $0x5e0] sm:$0xff]
    %v5615 = vld [vmem:[%s5425 + $0x5e8] sm:$0xff]
    %v5616 = vld [vmem:[%s5425 + $0x5f0] sm:$0xff]
    %v5617 = vld [vmem:[%s5425 + $0x5f8] sm:$0xff]
    %v5618 = vld [vmem:[%s5425 + $0x600] sm:$0xff]
    %v5619 = vld [vmem:[%s5425 + $0x608] sm:$0xff]
    %v5620 = vld [vmem:[%s5425 + $0x610] sm:$0xff]
    %v5621 = vld [vmem:[%s5425 + $0x618] sm:$0xff]
    %v5622 = vld [vmem:[%s5425 + $0x620] sm:$0xff]
    %v5623 = vld [vmem:[%s5425 + $0x628] sm:$0xff]
    %v5624 = vld [vmem:[%s5425 + $0x630] sm:$0xff]
    %v5625 = vld [vmem:[%s5425 + $0x638] sm:$0xff]
    %v5626 = vld [vmem:[%s5425 + $0x640] sm:$0xff]
    %v5627 = vld [vmem:[%s5425 + $0x648] sm:$0xff]
    %v5628 = vld [vmem:[%s5425 + $0x650] sm:$0xff]
    %v5629 = vld [vmem:[%s5425 + $0x658] sm:$0xff]
    %v5630 = vld [vmem:[%s5425 + $0x660] sm:$0xff]
    %v5631 = vld [vmem:[%s5425 + $0x668] sm:$0xff]
    %v5632 = vld [vmem:[%s5425 + $0x670] sm:$0xff]
    %v5633 = vld [vmem:[%s5425 + $0x678] sm:$0xff]
    %v5634 = vld [vmem:[%s5425 + $0x680] sm:$0xff]
    %v5635 = vld [vmem:[%s5425 + $0x688] sm:$0xff]
    %v5636 = vld [vmem:[%s5425 + $0x690] sm:$0xff]
    %v5637 = vld [vmem:[%s5425 + $0x698] sm:$0xff]
    %v5638 = vld [vmem:[%s5425 + $0x6a0] sm:$0xff]
    %v5639 = vld [vmem:[%s5425 + $0x6a8] sm:$0xff]
    %v5640 = vld [vmem:[%s5425 + $0x6b0] sm:$0xff]
    %v5641 = vld [vmem:[%s5425 + $0x6b8] sm:$0xff]
    %v5642 = vld [vmem:[%s5425 + $0x6c0] sm:$0xff]
    %v5643 = vld [vmem:[%s5425 + $0x6c8] sm:$0xff]
    %v5644 = vld [vmem:[%s5425 + $0x6d0] sm:$0xff]
    %v5645 = vld [vmem:[%s5425 + $0x6d8] sm:$0xff]
    %v5646 = vld [vmem:[%s5425 + $0x6e0] sm:$0xff]
    %v5647 = vld [vmem:[%s5425 + $0x6e8] sm:$0xff]
    %v5648 = vld [vmem:[%s5425 + $0x6f0] sm:$0xff]
    %v5649 = vld [vmem:[%s5425 + $0x6f8] sm:$0xff]
    %v5650 = vld [vmem:[%s5425 + $0x700] sm:$0xff]
    %v5651 = vld [vmem:[%s5425 + $0x708] sm:$0xff]
    %v5652 = vld [vmem:[%s5425 + $0x710] sm:$0xff]
    %v5653 = vld [vmem:[%s5425 + $0x718] sm:$0xff]
    %v5654 = vld [vmem:[%s5425 + $0x720] sm:$0xff]
    %v5655 = vld [vmem:[%s5425 + $0x728] sm:$0xff]
    %v5656 = vld [vmem:[%s5425 + $0x730] sm:$0xff]
    %v5657 = vld [vmem:[%s5425 + $0x738] sm:$0xff]
    %v5658 = vld [vmem:[%s5425 + $0x740] sm:$0xff]
    %v5659 = vld [vmem:[%s5425 + $0x748] sm:$0xff]
    %v5660 = vld [vmem:[%s5425 + $0x750] sm:$0xff]
    %v5661 = vld [vmem:[%s5425 + $0x758] sm:$0xff]
    %v5662 = vld [vmem:[%s5425 + $0x760] sm:$0xff]
    %v5663 = vld [vmem:[%s5425 + $0x768] sm:$0xff]
    %v5664 = vld [vmem:[%s5425 + $0x770] sm:$0xff]
    %v5665 = vld [vmem:[%s5425 + $0x778] sm:$0xff]
    %v5666 = vld [vmem:[%s5425 + $0x780] sm:$0xff]
    %v5667 = vld [vmem:[%s5425 + $0x788] sm:$0xff]
    %v5668 = vld [vmem:[%s5425 + $0x790] sm:$0xff]
    %v5669 = vld [vmem:[%s5425 + $0x798] sm:$0xff]
    %v5670 = vld [vmem:[%s5425 + $0x7a0] sm:$0xff]
    %v5671 = vld [vmem:[%s5425 + $0x7a8] sm:$0xff]
    %v5672 = vld [vmem:[%s5425 + $0x7b0] sm:$0xff]
    %v5673 = vld [vmem:[%s5425 + $0x7b8] sm:$0xff]
    %v5674 = vld [vmem:[%s5425 + $0x7c0] sm:$0xff]
    %v5675 = vld [vmem:[%s5425 + $0x7c8] sm:$0xff]
    %v5676 = vld [vmem:[%s5425 + $0x7d0] sm:$0xff]
    %v5677 = vld [vmem:[%s5425 + $0x7d8] sm:$0xff]
    %v5678 = vld [vmem:[%s5425 + $0x7e0] sm:$0xff]
    %v5679 = vld [vmem:[%s5425 + $0x7e8] sm:$0xff]
    %v5680 = vld [vmem:[%s5425 + $0x7f0] sm:$0xff]
    %v5681 = vld [vmem:[%s5425 + $0x7f8] sm:$0xff]
    %s5682 = scalar_lea.vmem [#allocation19], 16
    %v5683 = vld [vmem:[%s5682] sm:$0xff]
    %v5684 = vld [vmem:[%s5682 + $0x8] sm:$0xff]
    %v5687 = vlaneseq
    %v5688 = vshrl.u32 %v5687, 7
    %v5689 = vsub.s32 0, %v5688
    %v5690 = vrot.slane %v5683, %v5689
    %v5691 = vlaneseq
    %v5692 = vshrl.u32 %v5691, 7
    %v5693 = vsub.s32 1, %v5692
    %v5694 = vrot.slane %v5683, %v5693
    %v5695 = vlaneseq
    %v5696 = vshrl.u32 %v5695, 7
    %v5697 = vsub.s32 2, %v5696
    %v5698 = vrot.slane %v5683, %v5697
    %v5699 = vlaneseq
    %v5700 = vshrl.u32 %v5699, 7
    %v5701 = vsub.s32 3, %v5700
    %v5702 = vrot.slane %v5683, %v5701
    %v5703 = vlaneseq
    %v5704 = vshrl.u32 %v5703, 7
    %v5705 = vsub.s32 4, %v5704
    %v5706 = vrot.slane %v5683, %v5705
    %v5707 = vlaneseq
    %v5708 = vshrl.u32 %v5707, 7
    %v5709 = vsub.s32 5, %v5708
    %v5710 = vrot.slane %v5683, %v5709
    %v5711 = vlaneseq
    %v5712 = vshrl.u32 %v5711, 7
    %v5713 = vsub.s32 6, %v5712
    %v5714 = vrot.slane %v5683, %v5713
    %v5715 = vlaneseq
    %v5716 = vshrl.u32 %v5715, 7
    %v5717 = vsub.s32 7, %v5716
    %v5718 = vrot.slane %v5683, %v5717
    %v5719 = vlaneseq
    %v5720 = vshrl.u32 %v5719, 7
    %v5721 = vsub.s32 0, %v5720
    %v5722 = vrot.slane %v5684, %v5721
    %v5723 = vlaneseq
    %v5724 = vshrl.u32 %v5723, 7
    %v5725 = vsub.s32 1, %v5724
    %v5726 = vrot.slane %v5684, %v5725
    %v5727 = vlaneseq
    %v5728 = vshrl.u32 %v5727, 7
    %v5729 = vsub.s32 2, %v5728
    %v5730 = vrot.slane %v5684, %v5729
    %v5731 = vlaneseq
    %v5732 = vshrl.u32 %v5731, 7
    %v5733 = vsub.s32 3, %v5732
    %v5734 = vrot.slane %v5684, %v5733
    %v5735 = vlaneseq
    %v5736 = vshrl.u32 %v5735, 7
    %v5737 = vsub.s32 4, %v5736
    %v5738 = vrot.slane %v5684, %v5737
    %v5739 = vlaneseq
    %v5740 = vshrl.u32 %v5739, 7
    %v5741 = vsub.s32 5, %v5740
    %v5742 = vrot.slane %v5684, %v5741
    %v5743 = vlaneseq
    %v5744 = vshrl.u32 %v5743, 7
    %v5745 = vsub.s32 6, %v5744
    %v5746 = vrot.slane %v5684, %v5745
    %v5747 = vlaneseq
    %v5748 = vshrl.u32 %v5747, 7
    %v5749 = vsub.s32 7, %v5748
    %v5750 = vrot.slane %v5684, %v5749
    %v6023 = vunpack.c.l.b16 %v5426
    %v6024 = vunpack.c.h.b16 %v5426
    %v6025 = vunpack.c.l.b16 %v5427
    %v6026 = vunpack.c.h.b16 %v5427
    %v6027 = vunpack.c.l.b16 %v5428
    %v6028 = vunpack.c.h.b16 %v5428
    %v6029 = vunpack.c.l.b16 %v5429
    %v6030 = vunpack.c.h.b16 %v5429
    %v6031 = vunpack.c.l.b16 %v5430
    %v6032 = vunpack.c.h.b16 %v5430
    %v6033 = vunpack.c.l.b16 %v5431
    %v6034 = vunpack.c.h.b16 %v5431
    %v6035 = vunpack.c.l.b16 %v5432
    %v6036 = vunpack.c.h.b16 %v5432
    %v6037 = vunpack.c.l.b16 %v5433
    %v6038 = vunpack.c.h.b16 %v5433
    %v6039 = vunpack.c.l.b16 %v5434
    %v6040 = vunpack.c.h.b16 %v5434
    %v6041 = vunpack.c.l.b16 %v5435
    %v6042 = vunpack.c.h.b16 %v5435
    %v6043 = vunpack.c.l.b16 %v5436
    %v6044 = vunpack.c.h.b16 %v5436
    %v6045 = vunpack.c.l.b16 %v5437
    %v6046 = vunpack.c.h.b16 %v5437
    %v6047 = vunpack.c.l.b16 %v5438
    %v6048 = vunpack.c.h.b16 %v5438
    %v6049 = vunpack.c.l.b16 %v5439
    %v6050 = vunpack.c.h.b16 %v5439
    %v6051 = vunpack.c.l.b16 %v5440
    %v6052 = vunpack.c.h.b16 %v5440
    %v6053 = vunpack.c.l.b16 %v5441
    %v6054 = vunpack.c.h.b16 %v5441
    %v6055 = vunpack.c.l.b16 %v5442
    %v6056 = vunpack.c.h.b16 %v5442
    %v6057 = vunpack.c.l.b16 %v5443
    %v6058 = vunpack.c.h.b16 %v5443
    %v6059 = vunpack.c.l.b16 %v5444
    %v6060 = vunpack.c.h.b16 %v5444
    %v6061 = vunpack.c.l.b16 %v5445
    %v6062 = vunpack.c.h.b16 %v5445
    %v6063 = vunpack.c.l.b16 %v5446
    %v6064 = vunpack.c.h.b16 %v5446
    %v6065 = vunpack.c.l.b16 %v5447
    %v6066 = vunpack.c.h.b16 %v5447
    %v6067 = vunpack.c.l.b16 %v5448
    %v6068 = vunpack.c.h.b16 %v5448
    %v6069 = vunpack.c.l.b16 %v5449
    %v6070 = vunpack.c.h.b16 %v5449
    %v6071 = vunpack.c.l.b16 %v5450
    %v6072 = vunpack.c.h.b16 %v5450
    %v6073 = vunpack.c.l.b16 %v5451
    %v6074 = vunpack.c.h.b16 %v5451
    %v6075 = vunpack.c.l.b16 %v5452
    %v6076 = vunpack.c.h.b16 %v5452
    %v6077 = vunpack.c.l.b16 %v5453
    %v6078 = vunpack.c.h.b16 %v5453
    %v6079 = vunpack.c.l.b16 %v5454
    %v6080 = vunpack.c.h.b16 %v5454
    %v6081 = vunpack.c.l.b16 %v5455
    %v6082 = vunpack.c.h.b16 %v5455
    %v6083 = vunpack.c.l.b16 %v5456
    %v6084 = vunpack.c.h.b16 %v5456
    %v6085 = vunpack.c.l.b16 %v5457
    %v6086 = vunpack.c.h.b16 %v5457
    %v6087 = vunpack.c.l.b16 %v5458
    %v6088 = vunpack.c.h.b16 %v5458
    %v6089 = vunpack.c.l.b16 %v5459
    %v6090 = vunpack.c.h.b16 %v5459
    %v6091 = vunpack.c.l.b16 %v5460
    %v6092 = vunpack.c.h.b16 %v5460
    %v6093 = vunpack.c.l.b16 %v5461
    %v6094 = vunpack.c.h.b16 %v5461
    %v6095 = vunpack.c.l.b16 %v5462
    %v6096 = vunpack.c.h.b16 %v5462
    %v6097 = vunpack.c.l.b16 %v5463
    %v6098 = vunpack.c.h.b16 %v5463
    %v6099 = vunpack.c.l.b16 %v5464
    %v6100 = vunpack.c.h.b16 %v5464
    %v6101 = vunpack.c.l.b16 %v5465
    %v6102 = vunpack.c.h.b16 %v5465
    %v6103 = vunpack.c.l.b16 %v5466
    %v6104 = vunpack.c.h.b16 %v5466
    %v6105 = vunpack.c.l.b16 %v5467
    %v6106 = vunpack.c.h.b16 %v5467
    %v6107 = vunpack.c.l.b16 %v5468
    %v6108 = vunpack.c.h.b16 %v5468
    %v6109 = vunpack.c.l.b16 %v5469
    %v6110 = vunpack.c.h.b16 %v5469
    %v6111 = vunpack.c.l.b16 %v5470
    %v6112 = vunpack.c.h.b16 %v5470
    %v6113 = vunpack.c.l.b16 %v5471
    %v6114 = vunpack.c.h.b16 %v5471
    %v6115 = vunpack.c.l.b16 %v5472
    %v6116 = vunpack.c.h.b16 %v5472
    %v6117 = vunpack.c.l.b16 %v5473
    %v6118 = vunpack.c.h.b16 %v5473
    %v6119 = vunpack.c.l.b16 %v5474
    %v6120 = vunpack.c.h.b16 %v5474
    %v6121 = vunpack.c.l.b16 %v5475
    %v6122 = vunpack.c.h.b16 %v5475
    %v6123 = vunpack.c.l.b16 %v5476
    %v6124 = vunpack.c.h.b16 %v5476
    %v6125 = vunpack.c.l.b16 %v5477
    %v6126 = vunpack.c.h.b16 %v5477
    %v6127 = vunpack.c.l.b16 %v5478
    %v6128 = vunpack.c.h.b16 %v5478
    %v6129 = vunpack.c.l.b16 %v5479
    %v6130 = vunpack.c.h.b16 %v5479
    %v6131 = vunpack.c.l.b16 %v5480
    %v6132 = vunpack.c.h.b16 %v5480
    %v6133 = vunpack.c.l.b16 %v5481
    %v6134 = vunpack.c.h.b16 %v5481
    %v6135 = vunpack.c.l.b16 %v5482
    %v6136 = vunpack.c.h.b16 %v5482
    %v6137 = vunpack.c.l.b16 %v5483
    %v6138 = vunpack.c.h.b16 %v5483
    %v6139 = vunpack.c.l.b16 %v5484
    %v6140 = vunpack.c.h.b16 %v5484
    %v6141 = vunpack.c.l.b16 %v5485
    %v6142 = vunpack.c.h.b16 %v5485
    %v6143 = vunpack.c.l.b16 %v5486
    %v6144 = vunpack.c.h.b16 %v5486
    %v6145 = vunpack.c.l.b16 %v5487
    %v6146 = vunpack.c.h.b16 %v5487
    %v6147 = vunpack.c.l.b16 %v5488
    %v6148 = vunpack.c.h.b16 %v5488
    %v6149 = vunpack.c.l.b16 %v5489
    %v6150 = vunpack.c.h.b16 %v5489
    %v6151 = vunpack.c.l.b16 %v5490
    %v6152 = vunpack.c.h.b16 %v5490
    %v6153 = vunpack.c.l.b16 %v5491
    %v6154 = vunpack.c.h.b16 %v5491
    %v6155 = vunpack.c.l.b16 %v5492
    %v6156 = vunpack.c.h.b16 %v5492
    %v6157 = vunpack.c.l.b16 %v5493
    %v6158 = vunpack.c.h.b16 %v5493
    %v6159 = vunpack.c.l.b16 %v5494
    %v6160 = vunpack.c.h.b16 %v5494
    %v6161 = vunpack.c.l.b16 %v5495
    %v6162 = vunpack.c.h.b16 %v5495
    %v6163 = vunpack.c.l.b16 %v5496
    %v6164 = vunpack.c.h.b16 %v5496
    %v6165 = vunpack.c.l.b16 %v5497
    %v6166 = vunpack.c.h.b16 %v5497
    %v6167 = vunpack.c.l.b16 %v5498
    %v6168 = vunpack.c.h.b16 %v5498
    %v6169 = vunpack.c.l.b16 %v5499
    %v6170 = vunpack.c.h.b16 %v5499
    %v6171 = vunpack.c.l.b16 %v5500
    %v6172 = vunpack.c.h.b16 %v5500
    %v6173 = vunpack.c.l.b16 %v5501
    %v6174 = vunpack.c.h.b16 %v5501
    %v6175 = vunpack.c.l.b16 %v5502
    %v6176 = vunpack.c.h.b16 %v5502
    %v6177 = vunpack.c.l.b16 %v5503
    %v6178 = vunpack.c.h.b16 %v5503
    %v6179 = vunpack.c.l.b16 %v5504
    %v6180 = vunpack.c.h.b16 %v5504
    %v6181 = vunpack.c.l.b16 %v5505
    %v6182 = vunpack.c.h.b16 %v5505
    %v6183 = vunpack.c.l.b16 %v5506
    %v6184 = vunpack.c.h.b16 %v5506
    %v6185 = vunpack.c.l.b16 %v5507
    %v6186 = vunpack.c.h.b16 %v5507
    %v6187 = vunpack.c.l.b16 %v5508
    %v6188 = vunpack.c.h.b16 %v5508
    %v6189 = vunpack.c.l.b16 %v5509
    %v6190 = vunpack.c.h.b16 %v5509
    %v6191 = vunpack.c.l.b16 %v5510
    %v6192 = vunpack.c.h.b16 %v5510
    %v6193 = vunpack.c.l.b16 %v5511
    %v6194 = vunpack.c.h.b16 %v5511
    %v6195 = vunpack.c.l.b16 %v5512
    %v6196 = vunpack.c.h.b16 %v5512
    %v6197 = vunpack.c.l.b16 %v5513
    %v6198 = vunpack.c.h.b16 %v5513
    %v6199 = vunpack.c.l.b16 %v5514
    %v6200 = vunpack.c.h.b16 %v5514
    %v6201 = vunpack.c.l.b16 %v5515
    %v6202 = vunpack.c.h.b16 %v5515
    %v6203 = vunpack.c.l.b16 %v5516
    %v6204 = vunpack.c.h.b16 %v5516
    %v6205 = vunpack.c.l.b16 %v5517
    %v6206 = vunpack.c.h.b16 %v5517
    %v6207 = vunpack.c.l.b16 %v5518
    %v6208 = vunpack.c.h.b16 %v5518
    %v6209 = vunpack.c.l.b16 %v5519
    %v6210 = vunpack.c.h.b16 %v5519
    %v6211 = vunpack.c.l.b16 %v5520
    %v6212 = vunpack.c.h.b16 %v5520
    %v6213 = vunpack.c.l.b16 %v5521
    %v6214 = vunpack.c.h.b16 %v5521
    %v6215 = vunpack.c.l.b16 %v5522
    %v6216 = vunpack.c.h.b16 %v5522
    %v6217 = vunpack.c.l.b16 %v5523
    %v6218 = vunpack.c.h.b16 %v5523
    %v6219 = vunpack.c.l.b16 %v5524
    %v6220 = vunpack.c.h.b16 %v5524
    %v6221 = vunpack.c.l.b16 %v5525
    %v6222 = vunpack.c.h.b16 %v5525
    %v6223 = vunpack.c.l.b16 %v5526
    %v6224 = vunpack.c.h.b16 %v5526
    %v6225 = vunpack.c.l.b16 %v5527
    %v6226 = vunpack.c.h.b16 %v5527
    %v6227 = vunpack.c.l.b16 %v5528
    %v6228 = vunpack.c.h.b16 %v5528
    %v6229 = vunpack.c.l.b16 %v5529
    %v6230 = vunpack.c.h.b16 %v5529
    %v6231 = vunpack.c.l.b16 %v5530
    %v6232 = vunpack.c.h.b16 %v5530
    %v6233 = vunpack.c.l.b16 %v5531
    %v6234 = vunpack.c.h.b16 %v5531
    %v6235 = vunpack.c.l.b16 %v5532
    %v6236 = vunpack.c.h.b16 %v5532
    %v6237 = vunpack.c.l.b16 %v5533
    %v6238 = vunpack.c.h.b16 %v5533
    %v6239 = vunpack.c.l.b16 %v5534
    %v6240 = vunpack.c.h.b16 %v5534
    %v6241 = vunpack.c.l.b16 %v5535
    %v6242 = vunpack.c.h.b16 %v5535
    %v6243 = vunpack.c.l.b16 %v5536
    %v6244 = vunpack.c.h.b16 %v5536
    %v6245 = vunpack.c.l.b16 %v5537
    %v6246 = vunpack.c.h.b16 %v5537
    %v6247 = vunpack.c.l.b16 %v5538
    %v6248 = vunpack.c.h.b16 %v5538
    %v6249 = vunpack.c.l.b16 %v5539
    %v6250 = vunpack.c.h.b16 %v5539
    %v6251 = vunpack.c.l.b16 %v5540
    %v6252 = vunpack.c.h.b16 %v5540
    %v6253 = vunpack.c.l.b16 %v5541
    %v6254 = vunpack.c.h.b16 %v5541
    %v6255 = vunpack.c.l.b16 %v5542
    %v6256 = vunpack.c.h.b16 %v5542
    %v6257 = vunpack.c.l.b16 %v5543
    %v6258 = vunpack.c.h.b16 %v5543
    %v6259 = vunpack.c.l.b16 %v5544
    %v6260 = vunpack.c.h.b16 %v5544
    %v6261 = vunpack.c.l.b16 %v5545
    %v6262 = vunpack.c.h.b16 %v5545
    %v6263 = vunpack.c.l.b16 %v5546
    %v6264 = vunpack.c.h.b16 %v5546
    %v6265 = vunpack.c.l.b16 %v5547
    %v6266 = vunpack.c.h.b16 %v5547
    %v6267 = vunpack.c.l.b16 %v5548
    %v6268 = vunpack.c.h.b16 %v5548
    %v6269 = vunpack.c.l.b16 %v5549
    %v6270 = vunpack.c.h.b16 %v5549
    %v6271 = vunpack.c.l.b16 %v5550
    %v6272 = vunpack.c.h.b16 %v5550
    %v6273 = vunpack.c.l.b16 %v5551
    %v6274 = vunpack.c.h.b16 %v5551
    %v6275 = vunpack.c.l.b16 %v5552
    %v6276 = vunpack.c.h.b16 %v5552
    %v6277 = vunpack.c.l.b16 %v5553
    %v6278 = vunpack.c.h.b16 %v5553
    %v6279 = vunpack.c.l.b16 %v5554
    %v6280 = vunpack.c.h.b16 %v5554
    %v6281 = vunpack.c.l.b16 %v5555
    %v6282 = vunpack.c.h.b16 %v5555
    %v6283 = vunpack.c.l.b16 %v5556
    %v6284 = vunpack.c.h.b16 %v5556
    %v6285 = vunpack.c.l.b16 %v5557
    %v6286 = vunpack.c.h.b16 %v5557
    %v6287 = vunpack.c.l.b16 %v5558
    %v6288 = vunpack.c.h.b16 %v5558
    %v6289 = vunpack.c.l.b16 %v5559
    %v6290 = vunpack.c.h.b16 %v5559
    %v6291 = vunpack.c.l.b16 %v5560
    %v6292 = vunpack.c.h.b16 %v5560
    %v6293 = vunpack.c.l.b16 %v5561
    %v6294 = vunpack.c.h.b16 %v5561
    %v6295 = vunpack.c.l.b16 %v5562
    %v6296 = vunpack.c.h.b16 %v5562
    %v6297 = vunpack.c.l.b16 %v5563
    %v6298 = vunpack.c.h.b16 %v5563
    %v6299 = vunpack.c.l.b16 %v5564
    %v6300 = vunpack.c.h.b16 %v5564
    %v6301 = vunpack.c.l.b16 %v5565
    %v6302 = vunpack.c.h.b16 %v5565
    %v6303 = vunpack.c.l.b16 %v5566
    %v6304 = vunpack.c.h.b16 %v5566
    %v6305 = vunpack.c.l.b16 %v5567
    %v6306 = vunpack.c.h.b16 %v5567
    %v6307 = vunpack.c.l.b16 %v5568
    %v6308 = vunpack.c.h.b16 %v5568
    %v6309 = vunpack.c.l.b16 %v5569
    %v6310 = vunpack.c.h.b16 %v5569
    %v6311 = vunpack.c.l.b16 %v5570
    %v6312 = vunpack.c.h.b16 %v5570
    %v6313 = vunpack.c.l.b16 %v5571
    %v6314 = vunpack.c.h.b16 %v5571
    %v6315 = vunpack.c.l.b16 %v5572
    %v6316 = vunpack.c.h.b16 %v5572
    %v6317 = vunpack.c.l.b16 %v5573
    %v6318 = vunpack.c.h.b16 %v5573
    %v6319 = vunpack.c.l.b16 %v5574
    %v6320 = vunpack.c.h.b16 %v5574
    %v6321 = vunpack.c.l.b16 %v5575
    %v6322 = vunpack.c.h.b16 %v5575
    %v6323 = vunpack.c.l.b16 %v5576
    %v6324 = vunpack.c.h.b16 %v5576
    %v6325 = vunpack.c.l.b16 %v5577
    %v6326 = vunpack.c.h.b16 %v5577
    %v6327 = vunpack.c.l.b16 %v5578
    %v6328 = vunpack.c.h.b16 %v5578
    %v6329 = vunpack.c.l.b16 %v5579
    %v6330 = vunpack.c.h.b16 %v5579
    %v6331 = vunpack.c.l.b16 %v5580
    %v6332 = vunpack.c.h.b16 %v5580
    %v6333 = vunpack.c.l.b16 %v5581
    %v6334 = vunpack.c.h.b16 %v5581
    %v6335 = vunpack.c.l.b16 %v5582
    %v6336 = vunpack.c.h.b16 %v5582
    %v6337 = vunpack.c.l.b16 %v5583
    %v6338 = vunpack.c.h.b16 %v5583
    %v6339 = vunpack.c.l.b16 %v5584
    %v6340 = vunpack.c.h.b16 %v5584
    %v6341 = vunpack.c.l.b16 %v5585
    %v6342 = vunpack.c.h.b16 %v5585
    %v6343 = vunpack.c.l.b16 %v5586
    %v6344 = vunpack.c.h.b16 %v5586
    %v6345 = vunpack.c.l.b16 %v5587
    %v6346 = vunpack.c.h.b16 %v5587
    %v6347 = vunpack.c.l.b16 %v5588
    %v6348 = vunpack.c.h.b16 %v5588
    %v6349 = vunpack.c.l.b16 %v5589
    %v6350 = vunpack.c.h.b16 %v5589
    %v6351 = vunpack.c.l.b16 %v5590
    %v6352 = vunpack.c.h.b16 %v5590
    %v6353 = vunpack.c.l.b16 %v5591
    %v6354 = vunpack.c.h.b16 %v5591
    %v6355 = vunpack.c.l.b16 %v5592
    %v6356 = vunpack.c.h.b16 %v5592
    %v6357 = vunpack.c.l.b16 %v5593
    %v6358 = vunpack.c.h.b16 %v5593
    %v6359 = vunpack.c.l.b16 %v5594
    %v6360 = vunpack.c.h.b16 %v5594
    %v6361 = vunpack.c.l.b16 %v5595
    %v6362 = vunpack.c.h.b16 %v5595
    %v6363 = vunpack.c.l.b16 %v5596
    %v6364 = vunpack.c.h.b16 %v5596
    %v6365 = vunpack.c.l.b16 %v5597
    %v6366 = vunpack.c.h.b16 %v5597
    %v6367 = vunpack.c.l.b16 %v5598
    %v6368 = vunpack.c.h.b16 %v5598
    %v6369 = vunpack.c.l.b16 %v5599
    %v6370 = vunpack.c.h.b16 %v5599
    %v6371 = vunpack.c.l.b16 %v5600
    %v6372 = vunpack.c.h.b16 %v5600
    %v6373 = vunpack.c.l.b16 %v5601
    %v6374 = vunpack.c.h.b16 %v5601
    %v6375 = vunpack.c.l.b16 %v5602
    %v6376 = vunpack.c.h.b16 %v5602
    %v6377 = vunpack.c.l.b16 %v5603
    %v6378 = vunpack.c.h.b16 %v5603
    %v6379 = vunpack.c.l.b16 %v5604
    %v6380 = vunpack.c.h.b16 %v5604
    %v6381 = vunpack.c.l.b16 %v5605
    %v6382 = vunpack.c.h.b16 %v5605
    %v6383 = vunpack.c.l.b16 %v5606
    %v6384 = vunpack.c.h.b16 %v5606
    %v6385 = vunpack.c.l.b16 %v5607
    %v6386 = vunpack.c.h.b16 %v5607
    %v6387 = vunpack.c.l.b16 %v5608
    %v6388 = vunpack.c.h.b16 %v5608
    %v6389 = vunpack.c.l.b16 %v5609
    %v6390 = vunpack.c.h.b16 %v5609
    %v6391 = vunpack.c.l.b16 %v5610
    %v6392 = vunpack.c.h.b16 %v5610
    %v6393 = vunpack.c.l.b16 %v5611
    %v6394 = vunpack.c.h.b16 %v5611
    %v6395 = vunpack.c.l.b16 %v5612
    %v6396 = vunpack.c.h.b16 %v5612
    %v6397 = vunpack.c.l.b16 %v5613
    %v6398 = vunpack.c.h.b16 %v5613
    %v6399 = vunpack.c.l.b16 %v5614
    %v6400 = vunpack.c.h.b16 %v5614
    %v6401 = vunpack.c.l.b16 %v5615
    %v6402 = vunpack.c.h.b16 %v5615
    %v6403 = vunpack.c.l.b16 %v5616
    %v6404 = vunpack.c.h.b16 %v5616
    %v6405 = vunpack.c.l.b16 %v5617
    %v6406 = vunpack.c.h.b16 %v5617
    %v6407 = vunpack.c.l.b16 %v5618
    %v6408 = vunpack.c.h.b16 %v5618
    %v6409 = vunpack.c.l.b16 %v5619
    %v6410 = vunpack.c.h.b16 %v5619
    %v6411 = vunpack.c.l.b16 %v5620
    %v6412 = vunpack.c.h.b16 %v5620
    %v6413 = vunpack.c.l.b16 %v5621
    %v6414 = vunpack.c.h.b16 %v5621
    %v6415 = vunpack.c.l.b16 %v5622
    %v6416 = vunpack.c.h.b16 %v5622
    %v6417 = vunpack.c.l.b16 %v5623
    %v6418 = vunpack.c.h.b16 %v5623
    %v6419 = vunpack.c.l.b16 %v5624
    %v6420 = vunpack.c.h.b16 %v5624
    %v6421 = vunpack.c.l.b16 %v5625
    %v6422 = vunpack.c.h.b16 %v5625
    %v6423 = vunpack.c.l.b16 %v5626
    %v6424 = vunpack.c.h.b16 %v5626
    %v6425 = vunpack.c.l.b16 %v5627
    %v6426 = vunpack.c.h.b16 %v5627
    %v6427 = vunpack.c.l.b16 %v5628
    %v6428 = vunpack.c.h.b16 %v5628
    %v6429 = vunpack.c.l.b16 %v5629
    %v6430 = vunpack.c.h.b16 %v5629
    %v6431 = vunpack.c.l.b16 %v5630
    %v6432 = vunpack.c.h.b16 %v5630
    %v6433 = vunpack.c.l.b16 %v5631
    %v6434 = vunpack.c.h.b16 %v5631
    %v6435 = vunpack.c.l.b16 %v5632
    %v6436 = vunpack.c.h.b16 %v5632
    %v6437 = vunpack.c.l.b16 %v5633
    %v6438 = vunpack.c.h.b16 %v5633
    %v6439 = vunpack.c.l.b16 %v5634
    %v6440 = vunpack.c.h.b16 %v5634
    %v6441 = vunpack.c.l.b16 %v5635
    %v6442 = vunpack.c.h.b16 %v5635
    %v6443 = vunpack.c.l.b16 %v5636
    %v6444 = vunpack.c.h.b16 %v5636
    %v6445 = vunpack.c.l.b16 %v5637
    %v6446 = vunpack.c.h.b16 %v5637
    %v6447 = vunpack.c.l.b16 %v5638
    %v6448 = vunpack.c.h.b16 %v5638
    %v6449 = vunpack.c.l.b16 %v5639
    %v6450 = vunpack.c.h.b16 %v5639
    %v6451 = vunpack.c.l.b16 %v5640
    %v6452 = vunpack.c.h.b16 %v5640
    %v6453 = vunpack.c.l.b16 %v5641
    %v6454 = vunpack.c.h.b16 %v5641
    %v6455 = vunpack.c.l.b16 %v5642
    %v6456 = vunpack.c.h.b16 %v5642
    %v6457 = vunpack.c.l.b16 %v5643
    %v6458 = vunpack.c.h.b16 %v5643
    %v6459 = vunpack.c.l.b16 %v5644
    %v6460 = vunpack.c.h.b16 %v5644
    %v6461 = vunpack.c.l.b16 %v5645
    %v6462 = vunpack.c.h.b16 %v5645
    %v6463 = vunpack.c.l.b16 %v5646
    %v6464 = vunpack.c.h.b16 %v5646
    %v6465 = vunpack.c.l.b16 %v5647
    %v6466 = vunpack.c.h.b16 %v5647
    %v6467 = vunpack.c.l.b16 %v5648
    %v6468 = vunpack.c.h.b16 %v5648
    %v6469 = vunpack.c.l.b16 %v5649
    %v6470 = vunpack.c.h.b16 %v5649
    %v6471 = vunpack.c.l.b16 %v5650
    %v6472 = vunpack.c.h.b16 %v5650
    %v6473 = vunpack.c.l.b16 %v5651
    %v6474 = vunpack.c.h.b16 %v5651
    %v6475 = vunpack.c.l.b16 %v5652
    %v6476 = vunpack.c.h.b16 %v5652
    %v6477 = vunpack.c.l.b16 %v5653
    %v6478 = vunpack.c.h.b16 %v5653
    %v6479 = vunpack.c.l.b16 %v5654
    %v6480 = vunpack.c.h.b16 %v5654
    %v6481 = vunpack.c.l.b16 %v5655
    %v6482 = vunpack.c.h.b16 %v5655
    %v6483 = vunpack.c.l.b16 %v5656
    %v6484 = vunpack.c.h.b16 %v5656
    %v6485 = vunpack.c.l.b16 %v5657
    %v6486 = vunpack.c.h.b16 %v5657
    %v6487 = vunpack.c.l.b16 %v5658
    %v6488 = vunpack.c.h.b16 %v5658
    %v6489 = vunpack.c.l.b16 %v5659
    %v6490 = vunpack.c.h.b16 %v5659
    %v6491 = vunpack.c.l.b16 %v5660
    %v6492 = vunpack.c.h.b16 %v5660
    %v6493 = vunpack.c.l.b16 %v5661
    %v6494 = vunpack.c.h.b16 %v5661
    %v6495 = vunpack.c.l.b16 %v5662
    %v6496 = vunpack.c.h.b16 %v5662
    %v6497 = vunpack.c.l.b16 %v5663
    %v6498 = vunpack.c.h.b16 %v5663
    %v6499 = vunpack.c.l.b16 %v5664
    %v6500 = vunpack.c.h.b16 %v5664
    %v6501 = vunpack.c.l.b16 %v5665
    %v6502 = vunpack.c.h.b16 %v5665
    %v6503 = vunpack.c.l.b16 %v5666
    %v6504 = vunpack.c.h.b16 %v5666
    %v6505 = vunpack.c.l.b16 %v5667
    %v6506 = vunpack.c.h.b16 %v5667
    %v6507 = vunpack.c.l.b16 %v5668
    %v6508 = vunpack.c.h.b16 %v5668
    %v6509 = vunpack.c.l.b16 %v5669
    %v6510 = vunpack.c.h.b16 %v5669
    %v6511 = vunpack.c.l.b16 %v5670
    %v6512 = vunpack.c.h.b16 %v5670
    %v6513 = vunpack.c.l.b16 %v5671
    %v6514 = vunpack.c.h.b16 %v5671
    %v6515 = vunpack.c.l.b16 %v5672
    %v6516 = vunpack.c.h.b16 %v5672
    %v6517 = vunpack.c.l.b16 %v5673
    %v6518 = vunpack.c.h.b16 %v5673
    %v6519 = vunpack.c.l.b16 %v5674
    %v6520 = vunpack.c.h.b16 %v5674
    %v6521 = vunpack.c.l.b16 %v5675
    %v6522 = vunpack.c.h.b16 %v5675
    %v6523 = vunpack.c.l.b16 %v5676
    %v6524 = vunpack.c.h.b16 %v5676
    %v6525 = vunpack.c.l.b16 %v5677
    %v6526 = vunpack.c.h.b16 %v5677
    %v6527 = vunpack.c.l.b16 %v5678
    %v6528 = vunpack.c.h.b16 %v5678
    %v6529 = vunpack.c.l.b16 %v5679
    %v6530 = vunpack.c.h.b16 %v5679
    %v6531 = vunpack.c.l.b16 %v5680
    %v6532 = vunpack.c.h.b16 %v5680
    %v6533 = vunpack.c.l.b16 %v5681
    %v6534 = vunpack.c.h.b16 %v5681
    %v6535 = vpack.c.b16 %v6039, %v6023
    %v6536 = vpack.c.b16 %v6040, %v6024
    %v6537 = vpack.c.b16 %v6041, %v6025
    %v6538 = vpack.c.b16 %v6042, %v6026
    %v6539 = vpack.c.b16 %v6043, %v6027
    %v6540 = vpack.c.b16 %v6044, %v6028
    %v6541 = vpack.c.b16 %v6045, %v6029
    %v6542 = vpack.c.b16 %v6046, %v6030
    %v6543 = vpack.c.b16 %v6047, %v6031
    %v6544 = vpack.c.b16 %v6048, %v6032
    %v6545 = vpack.c.b16 %v6049, %v6033
    %v6546 = vpack.c.b16 %v6050, %v6034
    %v6547 = vpack.c.b16 %v6051, %v6035
    %v6548 = vpack.c.b16 %v6052, %v6036
    %v6549 = vpack.c.b16 %v6053, %v6037
    %v6550 = vpack.c.b16 %v6054, %v6038
    %v6551 = vpack.c.b16 %v6071, %v6055
    %v6552 = vpack.c.b16 %v6072, %v6056
    %v6553 = vpack.c.b16 %v6073, %v6057
    %v6554 = vpack.c.b16 %v6074, %v6058
    %v6555 = vpack.c.b16 %v6075, %v6059
    %v6556 = vpack.c.b16 %v6076, %v6060
    %v6557 = vpack.c.b16 %v6077, %v6061
    %v6558 = vpack.c.b16 %v6078, %v6062
    %v6559 = vpack.c.b16 %v6079, %v6063
    %v6560 = vpack.c.b16 %v6080, %v6064
    %v6561 = vpack.c.b16 %v6081, %v6065
    %v6562 = vpack.c.b16 %v6082, %v6066
    %v6563 = vpack.c.b16 %v6083, %v6067
    %v6564 = vpack.c.b16 %v6084, %v6068
    %v6565 = vpack.c.b16 %v6085, %v6069
    %v6566 = vpack.c.b16 %v6086, %v6070
    %v6567 = vpack.c.b16 %v6103, %v6087
    %v6568 = vpack.c.b16 %v6104, %v6088
    %v6569 = vpack.c.b16 %v6105, %v6089
    %v6570 = vpack.c.b16 %v6106, %v6090
    %v6571 = vpack.c.b16 %v6107, %v6091
    %v6572 = vpack.c.b16 %v6108, %v6092
    %v6573 = vpack.c.b16 %v6109, %v6093
    %v6574 = vpack.c.b16 %v6110, %v6094
    %v6575 = vpack.c.b16 %v6111, %v6095
    %v6576 = vpack.c.b16 %v6112, %v6096
    %v6577 = vpack.c.b16 %v6113, %v6097
    %v6578 = vpack.c.b16 %v6114, %v6098
    %v6579 = vpack.c.b16 %v6115, %v6099
    %v6580 = vpack.c.b16 %v6116, %v6100
    %v6581 = vpack.c.b16 %v6117, %v6101
    %v6582 = vpack.c.b16 %v6118, %v6102
    %v6583 = vpack.c.b16 %v6135, %v6119
    %v6584 = vpack.c.b16 %v6136, %v6120
    %v6585 = vpack.c.b16 %v6137, %v6121
    %v6586 = vpack.c.b16 %v6138, %v6122
    %v6587 = vpack.c.b16 %v6139, %v6123
    %v6588 = vpack.c.b16 %v6140, %v6124
    %v6589 = vpack.c.b16 %v6141, %v6125
    %v6590 = vpack.c.b16 %v6142, %v6126
    %v6591 = vpack.c.b16 %v6143, %v6127
    %v6592 = vpack.c.b16 %v6144, %v6128
    %v6593 = vpack.c.b16 %v6145, %v6129
    %v6594 = vpack.c.b16 %v6146, %v6130
    %v6595 = vpack.c.b16 %v6147, %v6131
    %v6596 = vpack.c.b16 %v6148, %v6132
    %v6597 = vpack.c.b16 %v6149, %v6133
    %v6598 = vpack.c.b16 %v6150, %v6134
    %v6599 = vpack.c.b16 %v6167, %v6151
    %v6600 = vpack.c.b16 %v6168, %v6152
    %v6601 = vpack.c.b16 %v6169, %v6153
    %v6602 = vpack.c.b16 %v6170, %v6154
    %v6603 = vpack.c.b16 %v6171, %v6155
    %v6604 = vpack.c.b16 %v6172, %v6156
    %v6605 = vpack.c.b16 %v6173, %v6157
    %v6606 = vpack.c.b16 %v6174, %v6158
    %v6607 = vpack.c.b16 %v6175, %v6159
    %v6608 = vpack.c.b16 %v6176, %v6160
    %v6609 = vpack.c.b16 %v6177, %v6161
    %v6610 = vpack.c.b16 %v6178, %v6162
    %v6611 = vpack.c.b16 %v6179, %v6163
    %v6612 = vpack.c.b16 %v6180, %v6164
    %v6613 = vpack.c.b16 %v6181, %v6165
    %v6614 = vpack.c.b16 %v6182, %v6166
    %v6615 = vpack.c.b16 %v6199, %v6183
    %v6616 = vpack.c.b16 %v6200, %v6184
    %v6617 = vpack.c.b16 %v6201, %v6185
    %v6618 = vpack.c.b16 %v6202, %v6186
    %v6619 = vpack.c.b16 %v6203, %v6187
    %v6620 = vpack.c.b16 %v6204, %v6188
    %v6621 = vpack.c.b16 %v6205, %v6189
    %v6622 = vpack.c.b16 %v6206, %v6190
    %v6623 = vpack.c.b16 %v6207, %v6191
    %v6624 = vpack.c.b16 %v6208, %v6192
    %v6625 = vpack.c.b16 %v6209, %v6193
    %v6626 = vpack.c.b16 %v6210, %v6194
    %v6627 = vpack.c.b16 %v6211, %v6195
    %v6628 = vpack.c.b16 %v6212, %v6196
    %v6629 = vpack.c.b16 %v6213, %v6197
    %v6630 = vpack.c.b16 %v6214, %v6198
    %v6631 = vpack.c.b16 %v6231, %v6215
    %v6632 = vpack.c.b16 %v6232, %v6216
    %v6633 = vpack.c.b16 %v6233, %v6217
    %v6634 = vpack.c.b16 %v6234, %v6218
    %v6635 = vpack.c.b16 %v6235, %v6219
    %v6636 = vpack.c.b16 %v6236, %v6220
    %v6637 = vpack.c.b16 %v6237, %v6221
    %v6638 = vpack.c.b16 %v6238, %v6222
    %v6639 = vpack.c.b16 %v6239, %v6223
    %v6640 = vpack.c.b16 %v6240, %v6224
    %v6641 = vpack.c.b16 %v6241, %v6225
    %v6642 = vpack.c.b16 %v6242, %v6226
    %v6643 = vpack.c.b16 %v6243, %v6227
    %v6644 = vpack.c.b16 %v6244, %v6228
    %v6645 = vpack.c.b16 %v6245, %v6229
    %v6646 = vpack.c.b16 %v6246, %v6230
    %v6647 = vpack.c.b16 %v6263, %v6247
    %v6648 = vpack.c.b16 %v6264, %v6248
    %v6649 = vpack.c.b16 %v6265, %v6249
    %v6650 = vpack.c.b16 %v6266, %v6250
    %v6651 = vpack.c.b16 %v6267, %v6251
    %v6652 = vpack.c.b16 %v6268, %v6252
    %v6653 = vpack.c.b16 %v6269, %v6253
    %v6654 = vpack.c.b16 %v6270, %v6254
    %v6655 = vpack.c.b16 %v6271, %v6255
    %v6656 = vpack.c.b16 %v6272, %v6256
    %v6657 = vpack.c.b16 %v6273, %v6257
    %v6658 = vpack.c.b16 %v6274, %v6258
    %v6659 = vpack.c.b16 %v6275, %v6259
    %v6660 = vpack.c.b16 %v6276, %v6260
    %v6661 = vpack.c.b16 %v6277, %v6261
    %v6662 = vpack.c.b16 %v6278, %v6262
    %v6663 = vpack.c.b16 %v6295, %v6279
    %v6664 = vpack.c.b16 %v6296, %v6280
    %v6665 = vpack.c.b16 %v6297, %v6281
    %v6666 = vpack.c.b16 %v6298, %v6282
    %v6667 = vpack.c.b16 %v6299, %v6283
    %v6668 = vpack.c.b16 %v6300, %v6284
    %v6669 = vpack.c.b16 %v6301, %v6285
    %v6670 = vpack.c.b16 %v6302, %v6286
    %v6671 = vpack.c.b16 %v6303, %v6287
    %v6672 = vpack.c.b16 %v6304, %v6288
    %v6673 = vpack.c.b16 %v6305, %v6289
    %v6674 = vpack.c.b16 %v6306, %v6290
    %v6675 = vpack.c.b16 %v6307, %v6291
    %v6676 = vpack.c.b16 %v6308, %v6292
    %v6677 = vpack.c.b16 %v6309, %v6293
    %v6678 = vpack.c.b16 %v6310, %v6294
    %v6679 = vpack.c.b16 %v6327, %v6311
    %v6680 = vpack.c.b16 %v6328, %v6312
    %v6681 = vpack.c.b16 %v6329, %v6313
    %v6682 = vpack.c.b16 %v6330, %v6314
    %v6683 = vpack.c.b16 %v6331, %v6315
    %v6684 = vpack.c.b16 %v6332, %v6316
    %v6685 = vpack.c.b16 %v6333, %v6317
    %v6686 = vpack.c.b16 %v6334, %v6318
    %v6687 = vpack.c.b16 %v6335, %v6319
    %v6688 = vpack.c.b16 %v6336, %v6320
    %v6689 = vpack.c.b16 %v6337, %v6321
    %v6690 = vpack.c.b16 %v6338, %v6322
    %v6691 = vpack.c.b16 %v6339, %v6323
    %v6692 = vpack.c.b16 %v6340, %v6324
    %v6693 = vpack.c.b16 %v6341, %v6325
    %v6694 = vpack.c.b16 %v6342, %v6326
    %v6695 = vpack.c.b16 %v6359, %v6343
    %v6696 = vpack.c.b16 %v6360, %v6344
    %v6697 = vpack.c.b16 %v6361, %v6345
    %v6698 = vpack.c.b16 %v6362, %v6346
    %v6699 = vpack.c.b16 %v6363, %v6347
    %v6700 = vpack.c.b16 %v6364, %v6348
    %v6701 = vpack.c.b16 %v6365, %v6349
    %v6702 = vpack.c.b16 %v6366, %v6350
    %v6703 = vpack.c.b16 %v6367, %v6351
    %v6704 = vpack.c.b16 %v6368, %v6352
    %v6705 = vpack.c.b16 %v6369, %v6353
    %v6706 = vpack.c.b16 %v6370, %v6354
    %v6707 = vpack.c.b16 %v6371, %v6355
    %v6708 = vpack.c.b16 %v6372, %v6356
    %v6709 = vpack.c.b16 %v6373, %v6357
    %v6710 = vpack.c.b16 %v6374, %v6358
    %v6711 = vpack.c.b16 %v6391, %v6375
    %v6712 = vpack.c.b16 %v6392, %v6376
    %v6713 = vpack.c.b16 %v6393, %v6377
    %v6714 = vpack.c.b16 %v6394, %v6378
    %v6715 = vpack.c.b16 %v6395, %v6379
    %v6716 = vpack.c.b16 %v6396, %v6380
    %v6717 = vpack.c.b16 %v6397, %v6381
    %v6718 = vpack.c.b16 %v6398, %v6382
    %v6719 = vpack.c.b16 %v6399, %v6383
    %v6720 = vpack.c.b16 %v6400, %v6384
    %v6721 = vpack.c.b16 %v6401, %v6385
    %v6722 = vpack.c.b16 %v6402, %v6386
    %v6723 = vpack.c.b16 %v6403, %v6387
    %v6724 = vpack.c.b16 %v6404, %v6388
    %v6725 = vpack.c.b16 %v6405, %v6389
    %v6726 = vpack.c.b16 %v6406, %v6390
    %v6727 = vpack.c.b16 %v6423, %v6407
    %v6728 = vpack.c.b16 %v6424, %v6408
    %v6729 = vpack.c.b16 %v6425, %v6409
    %v6730 = vpack.c.b16 %v6426, %v6410
    %v6731 = vpack.c.b16 %v6427, %v6411
    %v6732 = vpack.c.b16 %v6428, %v6412
    %v6733 = vpack.c.b16 %v6429, %v6413
    %v6734 = vpack.c.b16 %v6430, %v6414
    %v6735 = vpack.c.b16 %v6431, %v6415
    %v6736 = vpack.c.b16 %v6432, %v6416
    %v6737 = vpack.c.b16 %v6433, %v6417
    %v6738 = vpack.c.b16 %v6434, %v6418
    %v6739 = vpack.c.b16 %v6435, %v6419
    %v6740 = vpack.c.b16 %v6436, %v6420
    %v6741 = vpack.c.b16 %v6437, %v6421
    %v6742 = vpack.c.b16 %v6438, %v6422
    %v6743 = vpack.c.b16 %v6455, %v6439
    %v6744 = vpack.c.b16 %v6456, %v6440
    %v6745 = vpack.c.b16 %v6457, %v6441
    %v6746 = vpack.c.b16 %v6458, %v6442
    %v6747 = vpack.c.b16 %v6459, %v6443
    %v6748 = vpack.c.b16 %v6460, %v6444
    %v6749 = vpack.c.b16 %v6461, %v6445
    %v6750 = vpack.c.b16 %v6462, %v6446
    %v6751 = vpack.c.b16 %v6463, %v6447
    %v6752 = vpack.c.b16 %v6464, %v6448
    %v6753 = vpack.c.b16 %v6465, %v6449
    %v6754 = vpack.c.b16 %v6466, %v6450
    %v6755 = vpack.c.b16 %v6467, %v6451
    %v6756 = vpack.c.b16 %v6468, %v6452
    %v6757 = vpack.c.b16 %v6469, %v6453
    %v6758 = vpack.c.b16 %v6470, %v6454
    %v6759 = vpack.c.b16 %v6487, %v6471
    %v6760 = vpack.c.b16 %v6488, %v6472
    %v6761 = vpack.c.b16 %v6489, %v6473
    %v6762 = vpack.c.b16 %v6490, %v6474
    %v6763 = vpack.c.b16 %v6491, %v6475
    %v6764 = vpack.c.b16 %v6492, %v6476
    %v6765 = vpack.c.b16 %v6493, %v6477
    %v6766 = vpack.c.b16 %v6494, %v6478
    %v6767 = vpack.c.b16 %v6495, %v6479
    %v6768 = vpack.c.b16 %v6496, %v6480
    %v6769 = vpack.c.b16 %v6497, %v6481
    %v6770 = vpack.c.b16 %v6498, %v6482
    %v6771 = vpack.c.b16 %v6499, %v6483
    %v6772 = vpack.c.b16 %v6500, %v6484
    %v6773 = vpack.c.b16 %v6501, %v6485
    %v6774 = vpack.c.b16 %v6502, %v6486
    %v6775 = vpack.c.b16 %v6519, %v6503
    %v6776 = vpack.c.b16 %v6520, %v6504
    %v6777 = vpack.c.b16 %v6521, %v6505
    %v6778 = vpack.c.b16 %v6522, %v6506
    %v6779 = vpack.c.b16 %v6523, %v6507
    %v6780 = vpack.c.b16 %v6524, %v6508
    %v6781 = vpack.c.b16 %v6525, %v6509
    %v6782 = vpack.c.b16 %v6526, %v6510
    %v6783 = vpack.c.b16 %v6527, %v6511
    %v6784 = vpack.c.b16 %v6528, %v6512
    %v6785 = vpack.c.b16 %v6529, %v6513
    %v6786 = vpack.c.b16 %v6530, %v6514
    %v6787 = vpack.c.b16 %v6531, %v6515
    %v6788 = vpack.c.b16 %v6532, %v6516
    %v6789 = vpack.c.b16 %v6533, %v6517
    %v6790 = vpack.c.b16 %v6534, %v6518
    %7047 = vmatprep.subr.bf16.mxu0 %v6536
    %7048 = vmatpush1.bf16.msra.mxu0 %v6535
    %7049 = vmatprep.subr.bf16.mxu0 %v6552
    %7050 = vmatpush1.bf16.msra.mxu0 %v6551
    %7051 = vmatprep.subr.bf16.mxu0 %v6568
    %7052 = vmatpush1.bf16.msra.mxu0 %v6567
    %7053 = vmatprep.subr.bf16.mxu0 %v6584
    %7054 = vmatpush1.bf16.msra.mxu0 %v6583
    %7055 = vmatprep.subr.bf16.mxu0 %v6600
    %7056 = vmatpush1.bf16.msra.mxu0 %v6599
    %7057 = vmatprep.subr.bf16.mxu0 %v6616
    %7058 = vmatpush1.bf16.msra.mxu0 %v6615
    %7059 = vmatprep.subr.bf16.mxu0 %v6632
    %7060 = vmatpush1.bf16.msra.mxu0 %v6631
    %7061 = vmatprep.subr.bf16.mxu0 %v6648
    %7062 = vmatpush1.bf16.msra.mxu0 %v6647
    %7063 = vmatprep.subr.bf16.mxu0 %v6664
    %7064 = vmatpush1.bf16.msra.mxu0 %v6663
    %7065 = vmatprep.subr.bf16.mxu0 %v6680
    %7066 = vmatpush1.bf16.msra.mxu0 %v6679
    %7067 = vmatprep.subr.bf16.mxu0 %v6696
    %7068 = vmatpush1.bf16.msra.mxu0 %v6695
    %7069 = vmatprep.subr.bf16.mxu0 %v6712
    %7070 = vmatpush1.bf16.msra.mxu0 %v6711
    %7071 = vmatprep.subr.bf16.mxu0 %v6728
    %7072 = vmatpush1.bf16.msra.mxu0 %v6727
    %7073 = vmatprep.subr.bf16.mxu0 %v6744
    %7074 = vmatpush1.bf16.msra.mxu0 %v6743
    %7075 = vmatprep.subr.bf16.mxu0 %v6760
    %7076 = vmatpush1.bf16.msra.mxu0 %v6759
    %7077 = vmatprep.subr.bf16.mxu0 %v6776
    %7078 = vmatpush1.bf16.msra.mxu0 %v6775
    %7079 = vmatprep.mubr.bf16.mxu0 %v5424
    %7080 = vmatmul.mubr.bf16.gmra.mrb[0].mxu0 %v5423
    %v7081 = vpop.f32.mrb[0].mxu0
    %v7082 = vadd.f32 %v5690, %v7081
    %v7083 = vpop.f32.mrb[0].mxu0
    %v7084 = vadd.f32 %v5694, %v7083
    %v7085 = vpop.f32.mrb[0].mxu0
    %v7086 = vpop.f32.mrb[0].mxu0
    %7087 = vdwg.mxu0
    %7088 = vmatprep.subr.bf16.mxu0 %v6538
    %7089 = vmatpush1.bf16.msra.mxu0 %v6537
    %7090 = vmatprep.subr.bf16.mxu0 %v6554
    %7091 = vmatpush1.bf16.msra.mxu0 %v6553
    %7092 = vmatprep.subr.bf16.mxu0 %v6570
    %7093 = vmatpush1.bf16.msra.mxu0 %v6569
    %7094 = vmatprep.subr.bf16.mxu0 %v6586
    %7095 = vmatpush1.bf16.msra.mxu0 %v6585
    %7096 = vmatprep.subr.bf16.mxu0 %v6602
    %7097 = vmatpush1.bf16.msra.mxu0 %v6601
    %7098 = vmatprep.subr.bf16.mxu0 %v6618
    %7099 = vmatpush1.bf16.msra.mxu0 %v6617
    %7100 = vmatprep.subr.bf16.mxu0 %v6634
    %7101 = vmatpush1.bf16.msra.mxu0 %v6633
    %7102 = vmatprep.subr.bf16.mxu0 %v6650
    %7103 = vmatpush1.bf16.msra.mxu0 %v6649
    %7104 = vmatprep.subr.bf16.mxu0 %v6666
    %7105 = vmatpush1.bf16.msra.mxu0 %v6665
    %7106 = vmatprep.subr.bf16.mxu0 %v6682
    %7107 = vmatpush1.bf16.msra.mxu0 %v6681
    %7108 = vmatprep.subr.bf16.mxu0 %v6698
    %7109 = vmatpush1.bf16.msra.mxu0 %v6697
    %7110 = vmatprep.subr.bf16.mxu0 %v6714
    %7111 = vmatpush1.bf16.msra.mxu0 %v6713
    %7112 = vmatprep.subr.bf16.mxu0 %v6730
    %7113 = vmatpush1.bf16.msra.mxu0 %v6729
    %7114 = vmatprep.subr.bf16.mxu0 %v6746
    %7115 = vmatpush1.bf16.msra.mxu0 %v6745
    %7116 = vmatprep.subr.bf16.mxu0 %v6762
    %7117 = vmatpush1.bf16.msra.mxu0 %v6761
    %7118 = vmatprep.subr.bf16.mxu0 %v6778
    %7119 = vmatpush1.bf16.msra.mxu0 %v6777
    %7120 = vmatprep.mubr.bf16.mxu0 %v5424
    %7121 = vmatmul.mubr.bf16.gmra.mrb[0].mxu0 %v5423
    %v7122 = vpop.f32.mrb[0].mxu0
    %v7123 = vadd.f32 %v5698, %v7122
    %v7124 = vpop.f32.mrb[0].mxu0
    %v7125 = vadd.f32 %v5702, %v7124
    %v7126 = vpop.f32.mrb[0].mxu0
    %v7127 = vpop.f32.mrb[0].mxu0
    %7128 = vdwg.mxu0
    %7129 = vmatprep.subr.bf16.mxu0 %v6540
    %7130 = vmatpush1.bf16.msra.mxu0 %v6539
    %7131 = vmatprep.subr.bf16.mxu0 %v6556
    %7132 = vmatpush1.bf16.msra.mxu0 %v6555
    %7133 = vmatprep.subr.bf16.mxu0 %v6572
    %7134 = vmatpush1.bf16.msra.mxu0 %v6571
    %7135 = vmatprep.subr.bf16.mxu0 %v6588
    %7136 = vmatpush1.bf16.msra.mxu0 %v6587
    %7137 = vmatprep.subr.bf16.mxu0 %v6604
    %7138 = vmatpush1.bf16.msra.mxu0 %v6603
    %7139 = vmatprep.subr.bf16.mxu0 %v6620
    %7140 = vmatpush1.bf16.msra.mxu0 %v6619
    %7141 = vmatprep.subr.bf16.mxu0 %v6636
    %7142 = vmatpush1.bf16.msra.mxu0 %v6635
    %7143 = vmatprep.subr.bf16.mxu0 %v6652
    %7144 = vmatpush1.bf16.msra.mxu0 %v6651
    %7145 = vmatprep.subr.bf16.mxu0 %v6668
    %7146 = vmatpush1.bf16.msra.mxu0 %v6667
    %7147 = vmatprep.subr.bf16.mxu0 %v6684
    %7148 = vmatpush1.bf16.msra.mxu0 %v6683
    %7149 = vmatprep.subr.bf16.mxu0 %v6700
    %7150 = vmatpush1.bf16.msra.mxu0 %v6699
    %7151 = vmatprep.subr.bf16.mxu0 %v6716
    %7152 = vmatpush1.bf16.msra.mxu0 %v6715
    %7153 = vmatprep.subr.bf16.mxu0 %v6732
    %7154 = vmatpush1.bf16.msra.mxu0 %v6731
    %7155 = vmatprep.subr.bf16.mxu0 %v6748
    %7156 = vmatpush1.bf16.msra.mxu0 %v6747
    %7157 = vmatprep.subr.bf16.mxu0 %v6764
    %7158 = vmatpush1.bf16.msra.mxu0 %v6763
    %7159 = vmatprep.subr.bf16.mxu0 %v6780
    %7160 = vmatpush1.bf16.msra.mxu0 %v6779
    %7161 = vmatprep.mubr.bf16.mxu0 %v5424
    %7162 = vmatmul.mubr.bf16.gmra.mrb[0].mxu0 %v5423
    %v7163 = vpop.f32.mrb[0].mxu0
    %v7164 = vadd.f32 %v5706, %v7163
    %v7165 = vpop.f32.mrb[0].mxu0
    %v7166 = vadd.f32 %v5710, %v7165
    %v7167 = vpop.f32.mrb[0].mxu0
    %v7168 = vpop.f32.mrb[0].mxu0
    %7169 = vdwg.mxu0
    %7170 = vmatprep.subr.bf16.mxu0 %v6542
    %7171 = vmatpush1.bf16.msra.mxu0 %v6541
    %7172 = vmatprep.subr.bf16.mxu0 %v6558
    %7173 = vmatpush1.bf16.msra.mxu0 %v6557
    %7174 = vmatprep.subr.bf16.mxu0 %v6574
    %7175 = vmatpush1.bf16.msra.mxu0 %v6573
    %7176 = vmatprep.subr.bf16.mxu0 %v6590
    %7177 = vmatpush1.bf16.msra.mxu0 %v6589
    %7178 = vmatprep.subr.bf16.mxu0 %v6606
    %7179 = vmatpush1.bf16.msra.mxu0 %v6605
    %7180 = vmatprep.subr.bf16.mxu0 %v6622
    %7181 = vmatpush1.bf16.msra.mxu0 %v6621
    %7182 = vmatprep.subr.bf16.mxu0 %v6638
    %7183 = vmatpush1.bf16.msra.mxu0 %v6637
    %7184 = vmatprep.subr.bf16.mxu0 %v6654
    %7185 = vmatpush1.bf16.msra.mxu0 %v6653
    %7186 = vmatprep.subr.bf16.mxu0 %v6670
    %7187 = vmatpush1.bf16.msra.mxu0 %v6669
    %7188 = vmatprep.subr.bf16.mxu0 %v6686
    %7189 = vmatpush1.bf16.msra.mxu0 %v6685
    %7190 = vmatprep.subr.bf16.mxu0 %v6702
    %7191 = vmatpush1.bf16.msra.mxu0 %v6701
    %7192 = vmatprep.subr.bf16.mxu0 %v6718
    %7193 = vmatpush1.bf16.msra.mxu0 %v6717
    %7194 = vmatprep.subr.bf16.mxu0 %v6734
    %7195 = vmatpush1.bf16.msra.mxu0 %v6733
    %7196 = vmatprep.subr.bf16.mxu0 %v6750
    %7197 = vmatpush1.bf16.msra.mxu0 %v6749
    %7198 = vmatprep.subr.bf16.mxu0 %v6766
    %7199 = vmatpush1.bf16.msra.mxu0 %v6765
    %7200 = vmatprep.subr.bf16.mxu0 %v6782
    %7201 = vmatpush1.bf16.msra.mxu0 %v6781
    %7202 = vmatprep.mubr.bf16.mxu0 %v5424
    %7203 = vmatmul.mubr.bf16.gmra.mrb[0].mxu0 %v5423
    %v7204 = vpop.f32.mrb[0].mxu0
    %v7205 = vadd.f32 %v5714, %v7204
    %v7206 = vpop.f32.mrb[0].mxu0
    %v7207 = vadd.f32 %v5718, %v7206
    %v7208 = vpop.f32.mrb[0].mxu0
    %v7209 = vpop.f32.mrb[0].mxu0
    %7210 = vdwg.mxu0
    %7211 = vmatprep.subr.bf16.mxu0 %v6544
    %7212 = vmatpush1.bf16.msra.mxu0 %v6543
    %7213 = vmatprep.subr.bf16.mxu0 %v6560
    %7214 = vmatpush1.bf16.msra.mxu0 %v6559
    %7215 = vmatprep.subr.bf16.mxu0 %v6576
    %7216 = vmatpush1.bf16.msra.mxu0 %v6575
    %7217 = vmatprep.subr.bf16.mxu0 %v6592
    %7218 = vmatpush1.bf16.msra.mxu0 %v6591
    %7219 = vmatprep.subr.bf16.mxu0 %v6608
    %7220 = vmatpush1.bf16.msra.mxu0 %v6607
    %7221 = vmatprep.subr.bf16.mxu0 %v6624
    %7222 = vmatpush1.bf16.msra.mxu0 %v6623
    %7223 = vmatprep.subr.bf16.mxu0 %v6640
    %7224 = vmatpush1.bf16.msra.mxu0 %v6639
    %7225 = vmatprep.subr.bf16.mxu0 %v6656
    %7226 = vmatpush1.bf16.msra.mxu0 %v6655
    %7227 = vmatprep.subr.bf16.mxu0 %v6672
    %7228 = vmatpush1.bf16.msra.mxu0 %v6671
    %7229 = vmatprep.subr.bf16.mxu0 %v6688
    %7230 = vmatpush1.bf16.msra.mxu0 %v6687
    %7231 = vmatprep.subr.bf16.mxu0 %v6704
    %7232 = vmatpush1.bf16.msra.mxu0 %v6703
    %7233 = vmatprep.subr.bf16.mxu0 %v6720
    %7234 = vmatpush1.bf16.msra.mxu0 %v6719
    %7235 = vmatprep.subr.bf16.mxu0 %v6736
    %7236 = vmatpush1.bf16.msra.mxu0 %v6735
    %7237 = vmatprep.subr.bf16.mxu0 %v6752
    %7238 = vmatpush1.bf16.msra.mxu0 %v6751
    %7239 = vmatprep.subr.bf16.mxu0 %v6768
    %7240 = vmatpush1.bf16.msra.mxu0 %v6767
    %7241 = vmatprep.subr.bf16.mxu0 %v6784
    %7242 = vmatpush1.bf16.msra.mxu0 %v6783
    %7243 = vmatprep.mubr.bf16.mxu0 %v5424
    %7244 = vmatmul.mubr.bf16.gmra.mrb[0].mxu0 %v5423
    %v7245 = vpop.f32.mrb[0].mxu0
    %v7246 = vadd.f32 %v5722, %v7245
    %v7247 = vpop.f32.mrb[0].mxu0
    %v7248 = vadd.f32 %v5726, %v7247
    %v7249 = vpop.f32.mrb[0].mxu0
    %v7250 = vpop.f32.mrb[0].mxu0
    %7251 = vdwg.mxu0
    %7252 = vmatprep.subr.bf16.mxu0 %v6546
    %7253 = vmatpush1.bf16.msra.mxu0 %v6545
    %7254 = vmatprep.subr.bf16.mxu0 %v6562
    %7255 = vmatpush1.bf16.msra.mxu0 %v6561
    %7256 = vmatprep.subr.bf16.mxu0 %v6578
    %7257 = vmatpush1.bf16.msra.mxu0 %v6577
    %7258 = vmatprep.subr.bf16.mxu0 %v6594
    %7259 = vmatpush1.bf16.msra.mxu0 %v6593
    %7260 = vmatprep.subr.bf16.mxu0 %v6610
    %7261 = vmatpush1.bf16.msra.mxu0 %v6609
    %7262 = vmatprep.subr.bf16.mxu0 %v6626
    %7263 = vmatpush1.bf16.msra.mxu0 %v6625
    %7264 = vmatprep.subr.bf16.mxu0 %v6642
    %7265 = vmatpush1.bf16.msra.mxu0 %v6641
    %7266 = vmatprep.subr.bf16.mxu0 %v6658
    %7267 = vmatpush1.bf16.msra.mxu0 %v6657
    %7268 = vmatprep.subr.bf16.mxu0 %v6674
    %7269 = vmatpush1.bf16.msra.mxu0 %v6673
    %7270 = vmatprep.subr.bf16.mxu0 %v6690
    %7271 = vmatpush1.bf16.msra.mxu0 %v6689
    %7272 = vmatprep.subr.bf16.mxu0 %v6706
    %7273 = vmatpush1.bf16.msra.mxu0 %v6705
    %7274 = vmatprep.subr.bf16.mxu0 %v6722
    %7275 = vmatpush1.bf16.msra.mxu0 %v6721
    %7276 = vmatprep.subr.bf16.mxu0 %v6738
    %7277 = vmatpush1.bf16.msra.mxu0 %v6737
    %7278 = vmatprep.subr.bf16.mxu0 %v6754
    %7279 = vmatpush1.bf16.msra.mxu0 %v6753
    %7280 = vmatprep.subr.bf16.mxu0 %v6770
    %7281 = vmatpush1.bf16.msra.mxu0 %v6769
    %7282 = vmatprep.subr.bf16.mxu0 %v6786
    %7283 = vmatpush1.bf16.msra.mxu0 %v6785
    %7284 = vmatprep.mubr.bf16.mxu0 %v5424
    %7285 = vmatmul.mubr.bf16.gmra.mrb[0].mxu0 %v5423
    %v7286 = vpop.f32.mrb[0].mxu0
    %v7287 = vadd.f32 %v5730, %v7286
    %v7288 = vpop.f32.mrb[0].mxu0
    %v7289 = vadd.f32 %v5734, %v7288
    %v7290 = vpop.f32.mrb[0].mxu0
    %v7291 = vpop.f32.mrb[0].mxu0
    %7292 = vdwg.mxu0
    %7293 = vmatprep.subr.bf16.mxu0 %v6548
    %7294 = vmatpush1.bf16.msra.mxu0 %v6547
    %7295 = vmatprep.subr.bf16.mxu0 %v6564
    %7296 = vmatpush1.bf16.msra.mxu0 %v6563
    %7297 = vmatprep.subr.bf16.mxu0 %v6580
    %7298 = vmatpush1.bf16.msra.mxu0 %v6579
    %7299 = vmatprep.subr.bf16.mxu0 %v6596
    %7300 = vmatpush1.bf16.msra.mxu0 %v6595
    %7301 = vmatprep.subr.bf16.mxu0 %v6612
    %7302 = vmatpush1.bf16.msra.mxu0 %v6611
    %7303 = vmatprep.subr.bf16.mxu0 %v6628
    %7304 = vmatpush1.bf16.msra.mxu0 %v6627
    %7305 = vmatprep.subr.bf16.mxu0 %v6644
    %7306 = vmatpush1.bf16.msra.mxu0 %v6643
    %7307 = vmatprep.subr.bf16.mxu0 %v6660
    %7308 = vmatpush1.bf16.msra.mxu0 %v6659
    %7309 = vmatprep.subr.bf16.mxu0 %v6676
    %7310 = vmatpush1.bf16.msra.mxu0 %v6675
    %7311 = vmatprep.subr.bf16.mxu0 %v6692
    %7312 = vmatpush1.bf16.msra.mxu0 %v6691
    %7313 = vmatprep.subr.bf16.mxu0 %v6708
    %7314 = vmatpush1.bf16.msra.mxu0 %v6707
    %7315 = vmatprep.subr.bf16.mxu0 %v6724
    %7316 = vmatpush1.bf16.msra.mxu0 %v6723
    %7317 = vmatprep.subr.bf16.mxu0 %v6740
    %7318 = vmatpush1.bf16.msra.mxu0 %v6739
    %7319 = vmatprep.subr.bf16.mxu0 %v6756
    %7320 = vmatpush1.bf16.msra.mxu0 %v6755
    %7321 = vmatprep.subr.bf16.mxu0 %v6772
    %7322 = vmatpush1.bf16.msra.mxu0 %v6771
    %7323 = vmatprep.subr.bf16.mxu0 %v6788
    %7324 = vmatpush1.bf16.msra.mxu0 %v6787
    %7325 = vmatprep.mubr.bf16.mxu0 %v5424
    %7326 = vmatmul.mubr.bf16.gmra.mrb[0].mxu0 %v5423
    %v7327 = vpop.f32.mrb[0].mxu0
    %v7328 = vadd.f32 %v5738, %v7327
    %v7329 = vpop.f32.mrb[0].mxu0
    %v7330 = vadd.f32 %v5742, %v7329
    %v7331 = vpop.f32.mrb[0].mxu0
    %v7332 = vpop.f32.mrb[0].mxu0
    %7333 = vdwg.mxu0
    %7334 = vmatprep.subr.bf16.mxu0 %v6550
    %7335 = vmatpush1.bf16.msra.mxu0 %v6549
    %7336 = vmatprep.subr.bf16.mxu0 %v6566
    %7337 = vmatpush1.bf16.msra.mxu0 %v6565
    %7338 = vmatprep.subr.bf16.mxu0 %v6582
    %7339 = vmatpush1.bf16.msra.mxu0 %v6581
    %7340 = vmatprep.subr.bf16.mxu0 %v6598
    %7341 = vmatpush1.bf16.msra.mxu0 %v6597
    %7342 = vmatprep.subr.bf16.mxu0 %v6614
    %7343 = vmatpush1.bf16.msra.mxu0 %v6613
    %7344 = vmatprep.subr.bf16.mxu0 %v6630
    %7345 = vmatpush1.bf16.msra.mxu0 %v6629
    %7346 = vmatprep.subr.bf16.mxu0 %v6646
    %7347 = vmatpush1.bf16.msra.mxu0 %v6645
    %7348 = vmatprep.subr.bf16.mxu0 %v6662
    %7349 = vmatpush1.bf16.msra.mxu0 %v6661
    %7350 = vmatprep.subr.bf16.mxu0 %v6678
    %7351 = vmatpush1.bf16.msra.mxu0 %v6677
    %7352 = vmatprep.subr.bf16.mxu0 %v6694
    %7353 = vmatpush1.bf16.msra.mxu0 %v6693
    %7354 = vmatprep.subr.bf16.mxu0 %v6710
    %7355 = vmatpush1.bf16.msra.mxu0 %v6709
    %7356 = vmatprep.subr.bf16.mxu0 %v6726
    %7357 = vmatpush1.bf16.msra.mxu0 %v6725
    %7358 = vmatprep.subr.bf16.mxu0 %v6742
    %7359 = vmatpush1.bf16.msra.mxu0 %v6741
    %7360 = vmatprep.subr.bf16.mxu0 %v6758
    %7361 = vmatpush1.bf16.msra.mxu0 %v6757
    %7362 = vmatprep.subr.bf16.mxu0 %v6774
    %7363 = vmatpush1.bf16.msra.mxu0 %v6773
    %7364 = vmatprep.subr.bf16.mxu0 %v6790
    %7365 = vmatpush1.bf16.msra.mxu0 %v6789
    %7366 = vmatprep.mubr.bf16.mxu0 %v5424
    %7367 = vmatmul.mubr.bf16.gmra.mrb[0].mxu0 %v5423
    %v7368 = vpop.f32.mrb[0].mxu0
    %v7369 = vadd.f32 %v5746, %v7368
    %v7370 = vpop.f32.mrb[0].mxu0
    %v7371 = vadd.f32 %v5750, %v7370
    %v7372 = vpop.f32.mrb[0].mxu0
    %v7373 = vpop.f32.mrb[0].mxu0
    %7374 = vdwg.mxu0
    %v7375 = vmax.f32 %v7082, 0.0
    %v7376 = vmax.f32 %v7084, 0.0
    %v7377 = vmax.f32 %v7123, 0.0
    %v7378 = vmax.f32 %v7125, 0.0
    %v7379 = vmax.f32 %v7164, 0.0
    %v7380 = vmax.f32 %v7166, 0.0
    %v7381 = vmax.f32 %v7205, 0.0
    %v7382 = vmax.f32 %v7207, 0.0
    %v7383 = vmax.f32 %v7246, 0.0
    %v7384 = vmax.f32 %v7248, 0.0
    %v7385 = vmax.f32 %v7287, 0.0
    %v7386 = vmax.f32 %v7289, 0.0
    %v7387 = vmax.f32 %v7328, 0.0
    %v7388 = vmax.f32 %v7330, 0.0
    %v7389 = vmax.f32 %v7369, 0.0
    %v7390 = vmax.f32 %v7371, 0.0
    %v7391 = vpack.c.bf16 %v7375, %v7375
    %v7392 = vpack.c.bf16 %v7376, %v7376
    %v7393 = vpack.c.bf16 %v7377, %v7377
    %v7394 = vpack.c.bf16 %v7378, %v7378
    %v7395 = vpack.c.bf16 %v7379, %v7379
    %v7396 = vpack.c.bf16 %v7380, %v7380
    %v7397 = vpack.c.bf16 %v7381, %v7381
    %v7398 = vpack.c.bf16 %v7382, %v7382
    %v7399 = vpack.c.bf16 %v7383, %v7383
    %v7400 = vpack.c.bf16 %v7384, %v7384
    %v7401 = vpack.c.bf16 %v7385, %v7385
    %v7402 = vpack.c.bf16 %v7386, %v7386
    %v7403 = vpack.c.bf16 %v7387, %v7387
    %v7404 = vpack.c.bf16 %v7388, %v7388
    %v7405 = vpack.c.bf16 %v7389, %v7389
    %v7406 = vpack.c.bf16 %v7390, %v7390
    %s7407 = scalar_lea.vmem [#allocation20], 2048
    %v7408 = vld [vmem:[%s7407] sm:$0xff]
    %v7409 = vld [vmem:[%s7407 + $0x8] sm:$0xff]
    %v7410 = vld [vmem:[%s7407 + $0x10] sm:$0xff]
    %v7411 = vld [vmem:[%s7407 + $0x18] sm:$0xff]
    %v7412 = vld [vmem:[%s7407 + $0x20] sm:$0xff]
    %v7413 = vld [vmem:[%s7407 + $0x28] sm:$0xff]
    %v7414 = vld [vmem:[%s7407 + $0x30] sm:$0xff]
    %v7415 = vld [vmem:[%s7407 + $0x38] sm:$0xff]
    %v7416 = vld [vmem:[%s7407 + $0x40] sm:$0xff]
    %v7417 = vld [vmem:[%s7407 + $0x48] sm:$0xff]
    %v7418 = vld [vmem:[%s7407 + $0x50] sm:$0xff]
    %v7419 = vld [vmem:[%s7407 + $0x58] sm:$0xff]
    %v7420 = vld [vmem:[%s7407 + $0x60] sm:$0xff]
    %v7421 = vld [vmem:[%s7407 + $0x68] sm:$0xff]
    %v7422 = vld [vmem:[%s7407 + $0x70] sm:$0xff]
    %v7423 = vld [vmem:[%s7407 + $0x78] sm:$0xff]
    %v7424 = vld [vmem:[%s7407 + $0x80] sm:$0xff]
    %v7425 = vld [vmem:[%s7407 + $0x88] sm:$0xff]
    %v7426 = vld [vmem:[%s7407 + $0x90] sm:$0xff]
    %v7427 = vld [vmem:[%s7407 + $0x98] sm:$0xff]
    %v7428 = vld [vmem:[%s7407 + $0xa0] sm:$0xff]
    %v7429 = vld [vmem:[%s7407 + $0xa8] sm:$0xff]
    %v7430 = vld [vmem:[%s7407 + $0xb0] sm:$0xff]
    %v7431 = vld [vmem:[%s7407 + $0xb8] sm:$0xff]
    %v7432 = vld [vmem:[%s7407 + $0xc0] sm:$0xff]
    %v7433 = vld [vmem:[%s7407 + $0xc8] sm:$0xff]
    %v7434 = vld [vmem:[%s7407 + $0xd0] sm:$0xff]
    %v7435 = vld [vmem:[%s7407 + $0xd8] sm:$0xff]
    %v7436 = vld [vmem:[%s7407 + $0xe0] sm:$0xff]
    %v7437 = vld [vmem:[%s7407 + $0xe8] sm:$0xff]
    %v7438 = vld [vmem:[%s7407 + $0xf0] sm:$0xff]
    %v7439 = vld [vmem:[%s7407 + $0xf8] sm:$0xff]
    %v7440 = vld [vmem:[%s7407 + $0x100] sm:$0xff]
    %v7441 = vld [vmem:[%s7407 + $0x108] sm:$0xff]
    %v7442 = vld [vmem:[%s7407 + $0x110] sm:$0xff]
    %v7443 = vld [vmem:[%s7407 + $0x118] sm:$0xff]
    %v7444 = vld [vmem:[%s7407 + $0x120] sm:$0xff]
    %v7445 = vld [vmem:[%s7407 + $0x128] sm:$0xff]
    %v7446 = vld [vmem:[%s7407 + $0x130] sm:$0xff]
    %v7447 = vld [vmem:[%s7407 + $0x138] sm:$0xff]
    %v7448 = vld [vmem:[%s7407 + $0x140] sm:$0xff]
    %v7449 = vld [vmem:[%s7407 + $0x148] sm:$0xff]
    %v7450 = vld [vmem:[%s7407 + $0x150] sm:$0xff]
    %v7451 = vld [vmem:[%s7407 + $0x158] sm:$0xff]
    %v7452 = vld [vmem:[%s7407 + $0x160] sm:$0xff]
    %v7453 = vld [vmem:[%s7407 + $0x168] sm:$0xff]
    %v7454 = vld [vmem:[%s7407 + $0x170] sm:$0xff]
    %v7455 = vld [vmem:[%s7407 + $0x178] sm:$0xff]
    %v7456 = vld [vmem:[%s7407 + $0x180] sm:$0xff]
    %v7457 = vld [vmem:[%s7407 + $0x188] sm:$0xff]
    %v7458 = vld [vmem:[%s7407 + $0x190] sm:$0xff]
    %v7459 = vld [vmem:[%s7407 + $0x198] sm:$0xff]
    %v7460 = vld [vmem:[%s7407 + $0x1a0] sm:$0xff]
    %v7461 = vld [vmem:[%s7407 + $0x1a8] sm:$0xff]
    %v7462 = vld [vmem:[%s7407 + $0x1b0] sm:$0xff]
    %v7463 = vld [vmem:[%s7407 + $0x1b8] sm:$0xff]
    %v7464 = vld [vmem:[%s7407 + $0x1c0] sm:$0xff]
    %v7465 = vld [vmem:[%s7407 + $0x1c8] sm:$0xff]
    %v7466 = vld [vmem:[%s7407 + $0x1d0] sm:$0xff]
    %v7467 = vld [vmem:[%s7407 + $0x1d8] sm:$0xff]
    %v7468 = vld [vmem:[%s7407 + $0x1e0] sm:$0xff]
    %v7469 = vld [vmem:[%s7407 + $0x1e8] sm:$0xff]
    %v7470 = vld [vmem:[%s7407 + $0x1f0] sm:$0xff]
    %v7471 = vld [vmem:[%s7407 + $0x1f8] sm:$0xff]
    %v7472 = vld [vmem:[%s7407 + $0x200] sm:$0xff]
    %v7473 = vld [vmem:[%s7407 + $0x208] sm:$0xff]
    %v7474 = vld [vmem:[%s7407 + $0x210] sm:$0xff]
    %v7475 = vld [vmem:[%s7407 + $0x218] sm:$0xff]
    %v7476 = vld [vmem:[%s7407 + $0x220] sm:$0xff]
    %v7477 = vld [vmem:[%s7407 + $0x228] sm:$0xff]
    %v7478 = vld [vmem:[%s7407 + $0x230] sm:$0xff]
    %v7479 = vld [vmem:[%s7407 + $0x238] sm:$0xff]
    %v7480 = vld [vmem:[%s7407 + $0x240] sm:$0xff]
    %v7481 = vld [vmem:[%s7407 + $0x248] sm:$0xff]
    %v7482 = vld [vmem:[%s7407 + $0x250] sm:$0xff]
    %v7483 = vld [vmem:[%s7407 + $0x258] sm:$0xff]
    %v7484 = vld [vmem:[%s7407 + $0x260] sm:$0xff]
    %v7485 = vld [vmem:[%s7407 + $0x268] sm:$0xff]
    %v7486 = vld [vmem:[%s7407 + $0x270] sm:$0xff]
    %v7487 = vld [vmem:[%s7407 + $0x278] sm:$0xff]
    %v7488 = vld [vmem:[%s7407 + $0x280] sm:$0xff]
    %v7489 = vld [vmem:[%s7407 + $0x288] sm:$0xff]
    %v7490 = vld [vmem:[%s7407 + $0x290] sm:$0xff]
    %v7491 = vld [vmem:[%s7407 + $0x298] sm:$0xff]
    %v7492 = vld [vmem:[%s7407 + $0x2a0] sm:$0xff]
    %v7493 = vld [vmem:[%s7407 + $0x2a8] sm:$0xff]
    %v7494 = vld [vmem:[%s7407 + $0x2b0] sm:$0xff]
    %v7495 = vld [vmem:[%s7407 + $0x2b8] sm:$0xff]
    %v7496 = vld [vmem:[%s7407 + $0x2c0] sm:$0xff]
    %v7497 = vld [vmem:[%s7407 + $0x2c8] sm:$0xff]
    %v7498 = vld [vmem:[%s7407 + $0x2d0] sm:$0xff]
    %v7499 = vld [vmem:[%s7407 + $0x2d8] sm:$0xff]
    %v7500 = vld [vmem:[%s7407 + $0x2e0] sm:$0xff]
    %v7501 = vld [vmem:[%s7407 + $0x2e8] sm:$0xff]
    %v7502 = vld [vmem:[%s7407 + $0x2f0] sm:$0xff]
    %v7503 = vld [vmem:[%s7407 + $0x2f8] sm:$0xff]
    %v7504 = vld [vmem:[%s7407 + $0x300] sm:$0xff]
    %v7505 = vld [vmem:[%s7407 + $0x308] sm:$0xff]
    %v7506 = vld [vmem:[%s7407 + $0x310] sm:$0xff]
    %v7507 = vld [vmem:[%s7407 + $0x318] sm:$0xff]
    %v7508 = vld [vmem:[%s7407 + $0x320] sm:$0xff]
    %v7509 = vld [vmem:[%s7407 + $0x328] sm:$0xff]
    %v7510 = vld [vmem:[%s7407 + $0x330] sm:$0xff]
    %v7511 = vld [vmem:[%s7407 + $0x338] sm:$0xff]
    %v7512 = vld [vmem:[%s7407 + $0x340] sm:$0xff]
    %v7513 = vld [vmem:[%s7407 + $0x348] sm:$0xff]
    %v7514 = vld [vmem:[%s7407 + $0x350] sm:$0xff]
    %v7515 = vld [vmem:[%s7407 + $0x358] sm:$0xff]
    %v7516 = vld [vmem:[%s7407 + $0x360] sm:$0xff]
    %v7517 = vld [vmem:[%s7407 + $0x368] sm:$0xff]
    %v7518 = vld [vmem:[%s7407 + $0x370] sm:$0xff]
    %v7519 = vld [vmem:[%s7407 + $0x378] sm:$0xff]
    %v7520 = vld [vmem:[%s7407 + $0x380] sm:$0xff]
    %v7521 = vld [vmem:[%s7407 + $0x388] sm:$0xff]
    %v7522 = vld [vmem:[%s7407 + $0x390] sm:$0xff]
    %v7523 = vld [vmem:[%s7407 + $0x398] sm:$0xff]
    %v7524 = vld [vmem:[%s7407 + $0x3a0] sm:$0xff]
    %v7525 = vld [vmem:[%s7407 + $0x3a8] sm:$0xff]
    %v7526 = vld [vmem:[%s7407 + $0x3b0] sm:$0xff]
    %v7527 = vld [vmem:[%s7407 + $0x3b8] sm:$0xff]
    %v7528 = vld [vmem:[%s7407 + $0x3c0] sm:$0xff]
    %v7529 = vld [vmem:[%s7407 + $0x3c8] sm:$0xff]
    %v7530 = vld [vmem:[%s7407 + $0x3d0] sm:$0xff]
    %v7531 = vld [vmem:[%s7407 + $0x3d8] sm:$0xff]
    %v7532 = vld [vmem:[%s7407 + $0x3e0] sm:$0xff]
    %v7533 = vld [vmem:[%s7407 + $0x3e8] sm:$0xff]
    %v7534 = vld [vmem:[%s7407 + $0x3f0] sm:$0xff]
    %v7535 = vld [vmem:[%s7407 + $0x3f8] sm:$0xff]
    %v7536 = vld [vmem:[%s7407 + $0x400] sm:$0xff]
    %v7537 = vld [vmem:[%s7407 + $0x408] sm:$0xff]
    %v7538 = vld [vmem:[%s7407 + $0x410] sm:$0xff]
    %v7539 = vld [vmem:[%s7407 + $0x418] sm:$0xff]
    %v7540 = vld [vmem:[%s7407 + $0x420] sm:$0xff]
    %v7541 = vld [vmem:[%s7407 + $0x428] sm:$0xff]
    %v7542 = vld [vmem:[%s7407 + $0x430] sm:$0xff]
    %v7543 = vld [vmem:[%s7407 + $0x438] sm:$0xff]
    %v7544 = vld [vmem:[%s7407 + $0x440] sm:$0xff]
    %v7545 = vld [vmem:[%s7407 + $0x448] sm:$0xff]
    %v7546 = vld [vmem:[%s7407 + $0x450] sm:$0xff]
    %v7547 = vld [vmem:[%s7407 + $0x458] sm:$0xff]
    %v7548 = vld [vmem:[%s7407 + $0x460] sm:$0xff]
    %v7549 = vld [vmem:[%s7407 + $0x468] sm:$0xff]
    %v7550 = vld [vmem:[%s7407 + $0x470] sm:$0xff]
    %v7551 = vld [vmem:[%s7407 + $0x478] sm:$0xff]
    %v7552 = vld [vmem:[%s7407 + $0x480] sm:$0xff]
    %v7553 = vld [vmem:[%s7407 + $0x488] sm:$0xff]
    %v7554 = vld [vmem:[%s7407 + $0x490] sm:$0xff]
    %v7555 = vld [vmem:[%s7407 + $0x498] sm:$0xff]
    %v7556 = vld [vmem:[%s7407 + $0x4a0] sm:$0xff]
    %v7557 = vld [vmem:[%s7407 + $0x4a8] sm:$0xff]
    %v7558 = vld [vmem:[%s7407 + $0x4b0] sm:$0xff]
    %v7559 = vld [vmem:[%s7407 + $0x4b8] sm:$0xff]
    %v7560 = vld [vmem:[%s7407 + $0x4c0] sm:$0xff]
    %v7561 = vld [vmem:[%s7407 + $0x4c8] sm:$0xff]
    %v7562 = vld [vmem:[%s7407 + $0x4d0] sm:$0xff]
    %v7563 = vld [vmem:[%s7407 + $0x4d8] sm:$0xff]
    %v7564 = vld [vmem:[%s7407 + $0x4e0] sm:$0xff]
    %v7565 = vld [vmem:[%s7407 + $0x4e8] sm:$0xff]
    %v7566 = vld [vmem:[%s7407 + $0x4f0] sm:$0xff]
    %v7567 = vld [vmem:[%s7407 + $0x4f8] sm:$0xff]
    %v7568 = vld [vmem:[%s7407 + $0x500] sm:$0xff]
    %v7569 = vld [vmem:[%s7407 + $0x508] sm:$0xff]
    %v7570 = vld [vmem:[%s7407 + $0x510] sm:$0xff]
    %v7571 = vld [vmem:[%s7407 + $0x518] sm:$0xff]
    %v7572 = vld [vmem:[%s7407 + $0x520] sm:$0xff]
    %v7573 = vld [vmem:[%s7407 + $0x528] sm:$0xff]
    %v7574 = vld [vmem:[%s7407 + $0x530] sm:$0xff]
    %v7575 = vld [vmem:[%s7407 + $0x538] sm:$0xff]
    %v7576 = vld [vmem:[%s7407 + $0x540] sm:$0xff]
    %v7577 = vld [vmem:[%s7407 + $0x548] sm:$0xff]
    %v7578 = vld [vmem:[%s7407 + $0x550] sm:$0xff]
    %v7579 = vld [vmem:[%s7407 + $0x558] sm:$0xff]
    %v7580 = vld [vmem:[%s7407 + $0x560] sm:$0xff]
    %v7581 = vld [vmem:[%s7407 + $0x568] sm:$0xff]
    %v7582 = vld [vmem:[%s7407 + $0x570] sm:$0xff]
    %v7583 = vld [vmem:[%s7407 + $0x578] sm:$0xff]
    %v7584 = vld [vmem:[%s7407 + $0x580] sm:$0xff]
    %v7585 = vld [vmem:[%s7407 + $0x588] sm:$0xff]
    %v7586 = vld [vmem:[%s7407 + $0x590] sm:$0xff]
    %v7587 = vld [vmem:[%s7407 + $0x598] sm:$0xff]
    %v7588 = vld [vmem:[%s7407 + $0x5a0] sm:$0xff]
    %v7589 = vld [vmem:[%s7407 + $0x5a8] sm:$0xff]
    %v7590 = vld [vmem:[%s7407 + $0x5b0] sm:$0xff]
    %v7591 = vld [vmem:[%s7407 + $0x5b8] sm:$0xff]
    %v7592 = vld [vmem:[%s7407 + $0x5c0] sm:$0xff]
    %v7593 = vld [vmem:[%s7407 + $0x5c8] sm:$0xff]
    %v7594 = vld [vmem:[%s7407 + $0x5d0] sm:$0xff]
    %v7595 = vld [vmem:[%s7407 + $0x5d8] sm:$0xff]
    %v7596 = vld [vmem:[%s7407 + $0x5e0] sm:$0xff]
    %v7597 = vld [vmem:[%s7407 + $0x5e8] sm:$0xff]
    %v7598 = vld [vmem:[%s7407 + $0x5f0] sm:$0xff]
    %v7599 = vld [vmem:[%s7407 + $0x5f8] sm:$0xff]
    %v7600 = vld [vmem:[%s7407 + $0x600] sm:$0xff]
    %v7601 = vld [vmem:[%s7407 + $0x608] sm:$0xff]
    %v7602 = vld [vmem:[%s7407 + $0x610] sm:$0xff]
    %v7603 = vld [vmem:[%s7407 + $0x618] sm:$0xff]
    %v7604 = vld [vmem:[%s7407 + $0x620] sm:$0xff]
    %v7605 = vld [vmem:[%s7407 + $0x628] sm:$0xff]
    %v7606 = vld [vmem:[%s7407 + $0x630] sm:$0xff]
    %v7607 = vld [vmem:[%s7407 + $0x638] sm:$0xff]
    %v7608 = vld [vmem:[%s7407 + $0x640] sm:$0xff]
    %v7609 = vld [vmem:[%s7407 + $0x648] sm:$0xff]
    %v7610 = vld [vmem:[%s7407 + $0x650] sm:$0xff]
    %v7611 = vld [vmem:[%s7407 + $0x658] sm:$0xff]
    %v7612 = vld [vmem:[%s7407 + $0x660] sm:$0xff]
    %v7613 = vld [vmem:[%s7407 + $0x668] sm:$0xff]
    %v7614 = vld [vmem:[%s7407 + $0x670] sm:$0xff]
    %v7615 = vld [vmem:[%s7407 + $0x678] sm:$0xff]
    %v7616 = vld [vmem:[%s7407 + $0x680] sm:$0xff]
    %v7617 = vld [vmem:[%s7407 + $0x688] sm:$0xff]
    %v7618 = vld [vmem:[%s7407 + $0x690] sm:$0xff]
    %v7619 = vld [vmem:[%s7407 + $0x698] sm:$0xff]
    %v7620 = vld [vmem:[%s7407 + $0x6a0] sm:$0xff]
    %v7621 = vld [vmem:[%s7407 + $0x6a8] sm:$0xff]
    %v7622 = vld [vmem:[%s7407 + $0x6b0] sm:$0xff]
    %v7623 = vld [vmem:[%s7407 + $0x6b8] sm:$0xff]
    %v7624 = vld [vmem:[%s7407 + $0x6c0] sm:$0xff]
    %v7625 = vld [vmem:[%s7407 + $0x6c8] sm:$0xff]
    %v7626 = vld [vmem:[%s7407 + $0x6d0] sm:$0xff]
    %v7627 = vld [vmem:[%s7407 + $0x6d8] sm:$0xff]
    %v7628 = vld [vmem:[%s7407 + $0x6e0] sm:$0xff]
    %v7629 = vld [vmem:[%s7407 + $0x6e8] sm:$0xff]
    %v7630 = vld [vmem:[%s7407 + $0x6f0] sm:$0xff]
    %v7631 = vld [vmem:[%s7407 + $0x6f8] sm:$0xff]
    %v7632 = vld [vmem:[%s7407 + $0x700] sm:$0xff]
    %v7633 = vld [vmem:[%s7407 + $0x708] sm:$0xff]
    %v7634 = vld [vmem:[%s7407 + $0x710] sm:$0xff]
    %v7635 = vld [vmem:[%s7407 + $0x718] sm:$0xff]
    %v7636 = vld [vmem:[%s7407 + $0x720] sm:$0xff]
    %v7637 = vld [vmem:[%s7407 + $0x728] sm:$0xff]
    %v7638 = vld [vmem:[%s7407 + $0x730] sm:$0xff]
    %v7639 = vld [vmem:[%s7407 + $0x738] sm:$0xff]
    %v7640 = vld [vmem:[%s7407 + $0x740] sm:$0xff]
    %v7641 = vld [vmem:[%s7407 + $0x748] sm:$0xff]
    %v7642 = vld [vmem:[%s7407 + $0x750] sm:$0xff]
    %v7643 = vld [vmem:[%s7407 + $0x758] sm:$0xff]
    %v7644 = vld [vmem:[%s7407 + $0x760] sm:$0xff]
    %v7645 = vld [vmem:[%s7407 + $0x768] sm:$0xff]
    %v7646 = vld [vmem:[%s7407 + $0x770] sm:$0xff]
    %v7647 = vld [vmem:[%s7407 + $0x778] sm:$0xff]
    %v7648 = vld [vmem:[%s7407 + $0x780] sm:$0xff]
    %v7649 = vld [vmem:[%s7407 + $0x788] sm:$0xff]
    %v7650 = vld [vmem:[%s7407 + $0x790] sm:$0xff]
    %v7651 = vld [vmem:[%s7407 + $0x798] sm:$0xff]
    %v7652 = vld [vmem:[%s7407 + $0x7a0] sm:$0xff]
    %v7653 = vld [vmem:[%s7407 + $0x7a8] sm:$0xff]
    %v7654 = vld [vmem:[%s7407 + $0x7b0] sm:$0xff]
    %v7655 = vld [vmem:[%s7407 + $0x7b8] sm:$0xff]
    %v7656 = vld [vmem:[%s7407 + $0x7c0] sm:$0xff]
    %v7657 = vld [vmem:[%s7407 + $0x7c8] sm:$0xff]
    %v7658 = vld [vmem:[%s7407 + $0x7d0] sm:$0xff]
    %v7659 = vld [vmem:[%s7407 + $0x7d8] sm:$0xff]
    %v7660 = vld [vmem:[%s7407 + $0x7e0] sm:$0xff]
    %v7661 = vld [vmem:[%s7407 + $0x7e8] sm:$0xff]
    %v7662 = vld [vmem:[%s7407 + $0x7f0] sm:$0xff]
    %v7663 = vld [vmem:[%s7407 + $0x7f8] sm:$0xff]
    %s7664 = scalar_lea.vmem [#allocation22], 2
    %v7665 = vld [vmem:[%s7664] sm:$0x3]
    %v7667 = vlaneseq
    %v7668 = vshrl.u32 %v7667, 7
    %v7669 = vsub.s32 0, %v7668
    %v7670 = vrot.slane %v7665, %v7669
    %v7671 = vlaneseq
    %v7672 = vshrl.u32 %v7671, 7
    %v7673 = vsub.s32 1, %v7672
    %v7674 = vrot.slane %v7665, %v7673
    %v7933 = vunpack.c.l.b16 %v7408
    %v7934 = vunpack.c.h.b16 %v7408
    %v7935 = vunpack.c.l.b16 %v7409
    %v7936 = vunpack.c.h.b16 %v7409
    %v7937 = vunpack.c.l.b16 %v7410
    %v7938 = vunpack.c.h.b16 %v7410
    %v7939 = vunpack.c.l.b16 %v7411
    %v7940 = vunpack.c.h.b16 %v7411
    %v7941 = vunpack.c.l.b16 %v7412
    %v7942 = vunpack.c.h.b16 %v7412
    %v7943 = vunpack.c.l.b16 %v7413
    %v7944 = vunpack.c.h.b16 %v7413
    %v7945 = vunpack.c.l.b16 %v7414
    %v7946 = vunpack.c.h.b16 %v7414
    %v7947 = vunpack.c.l.b16 %v7415
    %v7948 = vunpack.c.h.b16 %v7415
    %v7949 = vunpack.c.l.b16 %v7416
    %v7950 = vunpack.c.h.b16 %v7416
    %v7951 = vunpack.c.l.b16 %v7417
    %v7952 = vunpack.c.h.b16 %v7417
    %v7953 = vunpack.c.l.b16 %v7418
    %v7954 = vunpack.c.h.b16 %v7418
    %v7955 = vunpack.c.l.b16 %v7419
    %v7956 = vunpack.c.h.b16 %v7419
    %v7957 = vunpack.c.l.b16 %v7420
    %v7958 = vunpack.c.h.b16 %v7420
    %v7959 = vunpack.c.l.b16 %v7421
    %v7960 = vunpack.c.h.b16 %v7421
    %v7961 = vunpack.c.l.b16 %v7422
    %v7962 = vunpack.c.h.b16 %v7422
    %v7963 = vunpack.c.l.b16 %v7423
    %v7964 = vunpack.c.h.b16 %v7423
    %v7965 = vunpack.c.l.b16 %v7424
    %v7966 = vunpack.c.h.b16 %v7424
    %v7967 = vunpack.c.l.b16 %v7425
    %v7968 = vunpack.c.h.b16 %v7425
    %v7969 = vunpack.c.l.b16 %v7426
    %v7970 = vunpack.c.h.b16 %v7426
    %v7971 = vunpack.c.l.b16 %v7427
    %v7972 = vunpack.c.h.b16 %v7427
    %v7973 = vunpack.c.l.b16 %v7428
    %v7974 = vunpack.c.h.b16 %v7428
    %v7975 = vunpack.c.l.b16 %v7429
    %v7976 = vunpack.c.h.b16 %v7429
    %v7977 = vunpack.c.l.b16 %v7430
    %v7978 = vunpack.c.h.b16 %v7430
    %v7979 = vunpack.c.l.b16 %v7431
    %v7980 = vunpack.c.h.b16 %v7431
    %v7981 = vunpack.c.l.b16 %v7432
    %v7982 = vunpack.c.h.b16 %v7432
    %v7983 = vunpack.c.l.b16 %v7433
    %v7984 = vunpack.c.h.b16 %v7433
    %v7985 = vunpack.c.l.b16 %v7434
    %v7986 = vunpack.c.h.b16 %v7434
    %v7987 = vunpack.c.l.b16 %v7435
    %v7988 = vunpack.c.h.b16 %v7435
    %v7989 = vunpack.c.l.b16 %v7436
    %v7990 = vunpack.c.h.b16 %v7436
    %v7991 = vunpack.c.l.b16 %v7437
    %v7992 = vunpack.c.h.b16 %v7437
    %v7993 = vunpack.c.l.b16 %v7438
    %v7994 = vunpack.c.h.b16 %v7438
    %v7995 = vunpack.c.l.b16 %v7439
    %v7996 = vunpack.c.h.b16 %v7439
    %v7997 = vunpack.c.l.b16 %v7440
    %v7998 = vunpack.c.h.b16 %v7440
    %v7999 = vunpack.c.l.b16 %v7441
    %v8000 = vunpack.c.h.b16 %v7441
    %v8001 = vunpack.c.l.b16 %v7442
    %v8002 = vunpack.c.h.b16 %v7442
    %v8003 = vunpack.c.l.b16 %v7443
    %v8004 = vunpack.c.h.b16 %v7443
    %v8005 = vunpack.c.l.b16 %v7444
    %v8006 = vunpack.c.h.b16 %v7444
    %v8007 = vunpack.c.l.b16 %v7445
    %v8008 = vunpack.c.h.b16 %v7445
    %v8009 = vunpack.c.l.b16 %v7446
    %v8010 = vunpack.c.h.b16 %v7446
    %v8011 = vunpack.c.l.b16 %v7447
    %v8012 = vunpack.c.h.b16 %v7447
    %v8013 = vunpack.c.l.b16 %v7448
    %v8014 = vunpack.c.h.b16 %v7448
    %v8015 = vunpack.c.l.b16 %v7449
    %v8016 = vunpack.c.h.b16 %v7449
    %v8017 = vunpack.c.l.b16 %v7450
    %v8018 = vunpack.c.h.b16 %v7450
    %v8019 = vunpack.c.l.b16 %v7451
    %v8020 = vunpack.c.h.b16 %v7451
    %v8021 = vunpack.c.l.b16 %v7452
    %v8022 = vunpack.c.h.b16 %v7452
    %v8023 = vunpack.c.l.b16 %v7453
    %v8024 = vunpack.c.h.b16 %v7453
    %v8025 = vunpack.c.l.b16 %v7454
    %v8026 = vunpack.c.h.b16 %v7454
    %v8027 = vunpack.c.l.b16 %v7455
    %v8028 = vunpack.c.h.b16 %v7455
    %v8029 = vunpack.c.l.b16 %v7456
    %v8030 = vunpack.c.h.b16 %v7456
    %v8031 = vunpack.c.l.b16 %v7457
    %v8032 = vunpack.c.h.b16 %v7457
    %v8033 = vunpack.c.l.b16 %v7458
    %v8034 = vunpack.c.h.b16 %v7458
    %v8035 = vunpack.c.l.b16 %v7459
    %v8036 = vunpack.c.h.b16 %v7459
    %v8037 = vunpack.c.l.b16 %v7460
    %v8038 = vunpack.c.h.b16 %v7460
    %v8039 = vunpack.c.l.b16 %v7461
    %v8040 = vunpack.c.h.b16 %v7461
    %v8041 = vunpack.c.l.b16 %v7462
    %v8042 = vunpack.c.h.b16 %v7462
    %v8043 = vunpack.c.l.b16 %v7463
    %v8044 = vunpack.c.h.b16 %v7463
    %v8045 = vunpack.c.l.b16 %v7464
    %v8046 = vunpack.c.h.b16 %v7464
    %v8047 = vunpack.c.l.b16 %v7465
    %v8048 = vunpack.c.h.b16 %v7465
    %v8049 = vunpack.c.l.b16 %v7466
    %v8050 = vunpack.c.h.b16 %v7466
    %v8051 = vunpack.c.l.b16 %v7467
    %v8052 = vunpack.c.h.b16 %v7467
    %v8053 = vunpack.c.l.b16 %v7468
    %v8054 = vunpack.c.h.b16 %v7468
    %v8055 = vunpack.c.l.b16 %v7469
    %v8056 = vunpack.c.h.b16 %v7469
    %v8057 = vunpack.c.l.b16 %v7470
    %v8058 = vunpack.c.h.b16 %v7470
    %v8059 = vunpack.c.l.b16 %v7471
    %v8060 = vunpack.c.h.b16 %v7471
    %v8061 = vunpack.c.l.b16 %v7472
    %v8062 = vunpack.c.h.b16 %v7472
    %v8063 = vunpack.c.l.b16 %v7473
    %v8064 = vunpack.c.h.b16 %v7473
    %v8065 = vunpack.c.l.b16 %v7474
    %v8066 = vunpack.c.h.b16 %v7474
    %v8067 = vunpack.c.l.b16 %v7475
    %v8068 = vunpack.c.h.b16 %v7475
    %v8069 = vunpack.c.l.b16 %v7476
    %v8070 = vunpack.c.h.b16 %v7476
    %v8071 = vunpack.c.l.b16 %v7477
    %v8072 = vunpack.c.h.b16 %v7477
    %v8073 = vunpack.c.l.b16 %v7478
    %v8074 = vunpack.c.h.b16 %v7478
    %v8075 = vunpack.c.l.b16 %v7479
    %v8076 = vunpack.c.h.b16 %v7479
    %v8077 = vunpack.c.l.b16 %v7480
    %v8078 = vunpack.c.h.b16 %v7480
    %v8079 = vunpack.c.l.b16 %v7481
    %v8080 = vunpack.c.h.b16 %v7481
    %v8081 = vunpack.c.l.b16 %v7482
    %v8082 = vunpack.c.h.b16 %v7482
    %v8083 = vunpack.c.l.b16 %v7483
    %v8084 = vunpack.c.h.b16 %v7483
    %v8085 = vunpack.c.l.b16 %v7484
    %v8086 = vunpack.c.h.b16 %v7484
    %v8087 = vunpack.c.l.b16 %v7485
    %v8088 = vunpack.c.h.b16 %v7485
    %v8089 = vunpack.c.l.b16 %v7486
    %v8090 = vunpack.c.h.b16 %v7486
    %v8091 = vunpack.c.l.b16 %v7487
    %v8092 = vunpack.c.h.b16 %v7487
    %v8093 = vunpack.c.l.b16 %v7488
    %v8094 = vunpack.c.h.b16 %v7488
    %v8095 = vunpack.c.l.b16 %v7489
    %v8096 = vunpack.c.h.b16 %v7489
    %v8097 = vunpack.c.l.b16 %v7490
    %v8098 = vunpack.c.h.b16 %v7490
    %v8099 = vunpack.c.l.b16 %v7491
    %v8100 = vunpack.c.h.b16 %v7491
    %v8101 = vunpack.c.l.b16 %v7492
    %v8102 = vunpack.c.h.b16 %v7492
    %v8103 = vunpack.c.l.b16 %v7493
    %v8104 = vunpack.c.h.b16 %v7493
    %v8105 = vunpack.c.l.b16 %v7494
    %v8106 = vunpack.c.h.b16 %v7494
    %v8107 = vunpack.c.l.b16 %v7495
    %v8108 = vunpack.c.h.b16 %v7495
    %v8109 = vunpack.c.l.b16 %v7496
    %v8110 = vunpack.c.h.b16 %v7496
    %v8111 = vunpack.c.l.b16 %v7497
    %v8112 = vunpack.c.h.b16 %v7497
    %v8113 = vunpack.c.l.b16 %v7498
    %v8114 = vunpack.c.h.b16 %v7498
    %v8115 = vunpack.c.l.b16 %v7499
    %v8116 = vunpack.c.h.b16 %v7499
    %v8117 = vunpack.c.l.b16 %v7500
    %v8118 = vunpack.c.h.b16 %v7500
    %v8119 = vunpack.c.l.b16 %v7501
    %v8120 = vunpack.c.h.b16 %v7501
    %v8121 = vunpack.c.l.b16 %v7502
    %v8122 = vunpack.c.h.b16 %v7502
    %v8123 = vunpack.c.l.b16 %v7503
    %v8124 = vunpack.c.h.b16 %v7503
    %v8125 = vunpack.c.l.b16 %v7504
    %v8126 = vunpack.c.h.b16 %v7504
    %v8127 = vunpack.c.l.b16 %v7505
    %v8128 = vunpack.c.h.b16 %v7505
    %v8129 = vunpack.c.l.b16 %v7506
    %v8130 = vunpack.c.h.b16 %v7506
    %v8131 = vunpack.c.l.b16 %v7507
    %v8132 = vunpack.c.h.b16 %v7507
    %v8133 = vunpack.c.l.b16 %v7508
    %v8134 = vunpack.c.h.b16 %v7508
    %v8135 = vunpack.c.l.b16 %v7509
    %v8136 = vunpack.c.h.b16 %v7509
    %v8137 = vunpack.c.l.b16 %v7510
    %v8138 = vunpack.c.h.b16 %v7510
    %v8139 = vunpack.c.l.b16 %v7511
    %v8140 = vunpack.c.h.b16 %v7511
    %v8141 = vunpack.c.l.b16 %v7512
    %v8142 = vunpack.c.h.b16 %v7512
    %v8143 = vunpack.c.l.b16 %v7513
    %v8144 = vunpack.c.h.b16 %v7513
    %v8145 = vunpack.c.l.b16 %v7514
    %v8146 = vunpack.c.h.b16 %v7514
    %v8147 = vunpack.c.l.b16 %v7515
    %v8148 = vunpack.c.h.b16 %v7515
    %v8149 = vunpack.c.l.b16 %v7516
    %v8150 = vunpack.c.h.b16 %v7516
    %v8151 = vunpack.c.l.b16 %v7517
    %v8152 = vunpack.c.h.b16 %v7517
    %v8153 = vunpack.c.l.b16 %v7518
    %v8154 = vunpack.c.h.b16 %v7518
    %v8155 = vunpack.c.l.b16 %v7519
    %v8156 = vunpack.c.h.b16 %v7519
    %v8157 = vunpack.c.l.b16 %v7520
    %v8158 = vunpack.c.h.b16 %v7520
    %v8159 = vunpack.c.l.b16 %v7521
    %v8160 = vunpack.c.h.b16 %v7521
    %v8161 = vunpack.c.l.b16 %v7522
    %v8162 = vunpack.c.h.b16 %v7522
    %v8163 = vunpack.c.l.b16 %v7523
    %v8164 = vunpack.c.h.b16 %v7523
    %v8165 = vunpack.c.l.b16 %v7524
    %v8166 = vunpack.c.h.b16 %v7524
    %v8167 = vunpack.c.l.b16 %v7525
    %v8168 = vunpack.c.h.b16 %v7525
    %v8169 = vunpack.c.l.b16 %v7526
    %v8170 = vunpack.c.h.b16 %v7526
    %v8171 = vunpack.c.l.b16 %v7527
    %v8172 = vunpack.c.h.b16 %v7527
    %v8173 = vunpack.c.l.b16 %v7528
    %v8174 = vunpack.c.h.b16 %v7528
    %v8175 = vunpack.c.l.b16 %v7529
    %v8176 = vunpack.c.h.b16 %v7529
    %v8177 = vunpack.c.l.b16 %v7530
    %v8178 = vunpack.c.h.b16 %v7530
    %v8179 = vunpack.c.l.b16 %v7531
    %v8180 = vunpack.c.h.b16 %v7531
    %v8181 = vunpack.c.l.b16 %v7532
    %v8182 = vunpack.c.h.b16 %v7532
    %v8183 = vunpack.c.l.b16 %v7533
    %v8184 = vunpack.c.h.b16 %v7533
    %v8185 = vunpack.c.l.b16 %v7534
    %v8186 = vunpack.c.h.b16 %v7534
    %v8187 = vunpack.c.l.b16 %v7535
    %v8188 = vunpack.c.h.b16 %v7535
    %v8189 = vunpack.c.l.b16 %v7536
    %v8190 = vunpack.c.h.b16 %v7536
    %v8191 = vunpack.c.l.b16 %v7537
    %v8192 = vunpack.c.h.b16 %v7537
    %v8193 = vunpack.c.l.b16 %v7538
    %v8194 = vunpack.c.h.b16 %v7538
    %v8195 = vunpack.c.l.b16 %v7539
    %v8196 = vunpack.c.h.b16 %v7539
    %v8197 = vunpack.c.l.b16 %v7540
    %v8198 = vunpack.c.h.b16 %v7540
    %v8199 = vunpack.c.l.b16 %v7541
    %v8200 = vunpack.c.h.b16 %v7541
    %v8201 = vunpack.c.l.b16 %v7542
    %v8202 = vunpack.c.h.b16 %v7542
    %v8203 = vunpack.c.l.b16 %v7543
    %v8204 = vunpack.c.h.b16 %v7543
    %v8205 = vunpack.c.l.b16 %v7544
    %v8206 = vunpack.c.h.b16 %v7544
    %v8207 = vunpack.c.l.b16 %v7545
    %v8208 = vunpack.c.h.b16 %v7545
    %v8209 = vunpack.c.l.b16 %v7546
    %v8210 = vunpack.c.h.b16 %v7546
    %v8211 = vunpack.c.l.b16 %v7547
    %v8212 = vunpack.c.h.b16 %v7547
    %v8213 = vunpack.c.l.b16 %v7548
    %v8214 = vunpack.c.h.b16 %v7548
    %v8215 = vunpack.c.l.b16 %v7549
    %v8216 = vunpack.c.h.b16 %v7549
    %v8217 = vunpack.c.l.b16 %v7550
    %v8218 = vunpack.c.h.b16 %v7550
    %v8219 = vunpack.c.l.b16 %v7551
    %v8220 = vunpack.c.h.b16 %v7551
    %v8221 = vunpack.c.l.b16 %v7552
    %v8222 = vunpack.c.h.b16 %v7552
    %v8223 = vunpack.c.l.b16 %v7553
    %v8224 = vunpack.c.h.b16 %v7553
    %v8225 = vunpack.c.l.b16 %v7554
    %v8226 = vunpack.c.h.b16 %v7554
    %v8227 = vunpack.c.l.b16 %v7555
    %v8228 = vunpack.c.h.b16 %v7555
    %v8229 = vunpack.c.l.b16 %v7556
    %v8230 = vunpack.c.h.b16 %v7556
    %v8231 = vunpack.c.l.b16 %v7557
    %v8232 = vunpack.c.h.b16 %v7557
    %v8233 = vunpack.c.l.b16 %v7558
    %v8234 = vunpack.c.h.b16 %v7558
    %v8235 = vunpack.c.l.b16 %v7559
    %v8236 = vunpack.c.h.b16 %v7559
    %v8237 = vunpack.c.l.b16 %v7560
    %v8238 = vunpack.c.h.b16 %v7560
    %v8239 = vunpack.c.l.b16 %v7561
    %v8240 = vunpack.c.h.b16 %v7561
    %v8241 = vunpack.c.l.b16 %v7562
    %v8242 = vunpack.c.h.b16 %v7562
    %v8243 = vunpack.c.l.b16 %v7563
    %v8244 = vunpack.c.h.b16 %v7563
    %v8245 = vunpack.c.l.b16 %v7564
    %v8246 = vunpack.c.h.b16 %v7564
    %v8247 = vunpack.c.l.b16 %v7565
    %v8248 = vunpack.c.h.b16 %v7565
    %v8249 = vunpack.c.l.b16 %v7566
    %v8250 = vunpack.c.h.b16 %v7566
    %v8251 = vunpack.c.l.b16 %v7567
    %v8252 = vunpack.c.h.b16 %v7567
    %v8253 = vunpack.c.l.b16 %v7568
    %v8254 = vunpack.c.h.b16 %v7568
    %v8255 = vunpack.c.l.b16 %v7569
    %v8256 = vunpack.c.h.b16 %v7569
    %v8257 = vunpack.c.l.b16 %v7570
    %v8258 = vunpack.c.h.b16 %v7570
    %v8259 = vunpack.c.l.b16 %v7571
    %v8260 = vunpack.c.h.b16 %v7571
    %v8261 = vunpack.c.l.b16 %v7572
    %v8262 = vunpack.c.h.b16 %v7572
    %v8263 = vunpack.c.l.b16 %v7573
    %v8264 = vunpack.c.h.b16 %v7573
    %v8265 = vunpack.c.l.b16 %v7574
    %v8266 = vunpack.c.h.b16 %v7574
    %v8267 = vunpack.c.l.b16 %v7575
    %v8268 = vunpack.c.h.b16 %v7575
    %v8269 = vunpack.c.l.b16 %v7576
    %v8270 = vunpack.c.h.b16 %v7576
    %v8271 = vunpack.c.l.b16 %v7577
    %v8272 = vunpack.c.h.b16 %v7577
    %v8273 = vunpack.c.l.b16 %v7578
    %v8274 = vunpack.c.h.b16 %v7578
    %v8275 = vunpack.c.l.b16 %v7579
    %v8276 = vunpack.c.h.b16 %v7579
    %v8277 = vunpack.c.l.b16 %v7580
    %v8278 = vunpack.c.h.b16 %v7580
    %v8279 = vunpack.c.l.b16 %v7581
    %v8280 = vunpack.c.h.b16 %v7581
    %v8281 = vunpack.c.l.b16 %v7582
    %v8282 = vunpack.c.h.b16 %v7582
    %v8283 = vunpack.c.l.b16 %v7583
    %v8284 = vunpack.c.h.b16 %v7583
    %v8285 = vunpack.c.l.b16 %v7584
    %v8286 = vunpack.c.h.b16 %v7584
    %v8287 = vunpack.c.l.b16 %v7585
    %v8288 = vunpack.c.h.b16 %v7585
    %v8289 = vunpack.c.l.b16 %v7586
    %v8290 = vunpack.c.h.b16 %v7586
    %v8291 = vunpack.c.l.b16 %v7587
    %v8292 = vunpack.c.h.b16 %v7587
    %v8293 = vunpack.c.l.b16 %v7588
    %v8294 = vunpack.c.h.b16 %v7588
    %v8295 = vunpack.c.l.b16 %v7589
    %v8296 = vunpack.c.h.b16 %v7589
    %v8297 = vunpack.c.l.b16 %v7590
    %v8298 = vunpack.c.h.b16 %v7590
    %v8299 = vunpack.c.l.b16 %v7591
    %v8300 = vunpack.c.h.b16 %v7591
    %v8301 = vunpack.c.l.b16 %v7592
    %v8302 = vunpack.c.h.b16 %v7592
    %v8303 = vunpack.c.l.b16 %v7593
    %v8304 = vunpack.c.h.b16 %v7593
    %v8305 = vunpack.c.l.b16 %v7594
    %v8306 = vunpack.c.h.b16 %v7594
    %v8307 = vunpack.c.l.b16 %v7595
    %v8308 = vunpack.c.h.b16 %v7595
    %v8309 = vunpack.c.l.b16 %v7596
    %v8310 = vunpack.c.h.b16 %v7596
    %v8311 = vunpack.c.l.b16 %v7597
    %v8312 = vunpack.c.h.b16 %v7597
    %v8313 = vunpack.c.l.b16 %v7598
    %v8314 = vunpack.c.h.b16 %v7598
    %v8315 = vunpack.c.l.b16 %v7599
    %v8316 = vunpack.c.h.b16 %v7599
    %v8317 = vunpack.c.l.b16 %v7600
    %v8318 = vunpack.c.h.b16 %v7600
    %v8319 = vunpack.c.l.b16 %v7601
    %v8320 = vunpack.c.h.b16 %v7601
    %v8321 = vunpack.c.l.b16 %v7602
    %v8322 = vunpack.c.h.b16 %v7602
    %v8323 = vunpack.c.l.b16 %v7603
    %v8324 = vunpack.c.h.b16 %v7603
    %v8325 = vunpack.c.l.b16 %v7604
    %v8326 = vunpack.c.h.b16 %v7604
    %v8327 = vunpack.c.l.b16 %v7605
    %v8328 = vunpack.c.h.b16 %v7605
    %v8329 = vunpack.c.l.b16 %v7606
    %v8330 = vunpack.c.h.b16 %v7606
    %v8331 = vunpack.c.l.b16 %v7607
    %v8332 = vunpack.c.h.b16 %v7607
    %v8333 = vunpack.c.l.b16 %v7608
    %v8334 = vunpack.c.h.b16 %v7608
    %v8335 = vunpack.c.l.b16 %v7609
    %v8336 = vunpack.c.h.b16 %v7609
    %v8337 = vunpack.c.l.b16 %v7610
    %v8338 = vunpack.c.h.b16 %v7610
    %v8339 = vunpack.c.l.b16 %v7611
    %v8340 = vunpack.c.h.b16 %v7611
    %v8341 = vunpack.c.l.b16 %v7612
    %v8342 = vunpack.c.h.b16 %v7612
    %v8343 = vunpack.c.l.b16 %v7613
    %v8344 = vunpack.c.h.b16 %v7613
    %v8345 = vunpack.c.l.b16 %v7614
    %v8346 = vunpack.c.h.b16 %v7614
    %v8347 = vunpack.c.l.b16 %v7615
    %v8348 = vunpack.c.h.b16 %v7615
    %v8349 = vunpack.c.l.b16 %v7616
    %v8350 = vunpack.c.h.b16 %v7616
    %v8351 = vunpack.c.l.b16 %v7617
    %v8352 = vunpack.c.h.b16 %v7617
    %v8353 = vunpack.c.l.b16 %v7618
    %v8354 = vunpack.c.h.b16 %v7618
    %v8355 = vunpack.c.l.b16 %v7619
    %v8356 = vunpack.c.h.b16 %v7619
    %v8357 = vunpack.c.l.b16 %v7620
    %v8358 = vunpack.c.h.b16 %v7620
    %v8359 = vunpack.c.l.b16 %v7621
    %v8360 = vunpack.c.h.b16 %v7621
    %v8361 = vunpack.c.l.b16 %v7622
    %v8362 = vunpack.c.h.b16 %v7622
    %v8363 = vunpack.c.l.b16 %v7623
    %v8364 = vunpack.c.h.b16 %v7623
    %v8365 = vunpack.c.l.b16 %v7624
    %v8366 = vunpack.c.h.b16 %v7624
    %v8367 = vunpack.c.l.b16 %v7625
    %v8368 = vunpack.c.h.b16 %v7625
    %v8369 = vunpack.c.l.b16 %v7626
    %v8370 = vunpack.c.h.b16 %v7626
    %v8371 = vunpack.c.l.b16 %v7627
    %v8372 = vunpack.c.h.b16 %v7627
    %v8373 = vunpack.c.l.b16 %v7628
    %v8374 = vunpack.c.h.b16 %v7628
    %v8375 = vunpack.c.l.b16 %v7629
    %v8376 = vunpack.c.h.b16 %v7629
    %v8377 = vunpack.c.l.b16 %v7630
    %v8378 = vunpack.c.h.b16 %v7630
    %v8379 = vunpack.c.l.b16 %v7631
    %v8380 = vunpack.c.h.b16 %v7631
    %v8381 = vunpack.c.l.b16 %v7632
    %v8382 = vunpack.c.h.b16 %v7632
    %v8383 = vunpack.c.l.b16 %v7633
    %v8384 = vunpack.c.h.b16 %v7633
    %v8385 = vunpack.c.l.b16 %v7634
    %v8386 = vunpack.c.h.b16 %v7634
    %v8387 = vunpack.c.l.b16 %v7635
    %v8388 = vunpack.c.h.b16 %v7635
    %v8389 = vunpack.c.l.b16 %v7636
    %v8390 = vunpack.c.h.b16 %v7636
    %v8391 = vunpack.c.l.b16 %v7637
    %v8392 = vunpack.c.h.b16 %v7637
    %v8393 = vunpack.c.l.b16 %v7638
    %v8394 = vunpack.c.h.b16 %v7638
    %v8395 = vunpack.c.l.b16 %v7639
    %v8396 = vunpack.c.h.b16 %v7639
    %v8397 = vunpack.c.l.b16 %v7640
    %v8398 = vunpack.c.h.b16 %v7640
    %v8399 = vunpack.c.l.b16 %v7641
    %v8400 = vunpack.c.h.b16 %v7641
    %v8401 = vunpack.c.l.b16 %v7642
    %v8402 = vunpack.c.h.b16 %v7642
    %v8403 = vunpack.c.l.b16 %v7643
    %v8404 = vunpack.c.h.b16 %v7643
    %v8405 = vunpack.c.l.b16 %v7644
    %v8406 = vunpack.c.h.b16 %v7644
    %v8407 = vunpack.c.l.b16 %v7645
    %v8408 = vunpack.c.h.b16 %v7645
    %v8409 = vunpack.c.l.b16 %v7646
    %v8410 = vunpack.c.h.b16 %v7646
    %v8411 = vunpack.c.l.b16 %v7647
    %v8412 = vunpack.c.h.b16 %v7647
    %v8413 = vunpack.c.l.b16 %v7648
    %v8414 = vunpack.c.h.b16 %v7648
    %v8415 = vunpack.c.l.b16 %v7649
    %v8416 = vunpack.c.h.b16 %v7649
    %v8417 = vunpack.c.l.b16 %v7650
    %v8418 = vunpack.c.h.b16 %v7650
    %v8419 = vunpack.c.l.b16 %v7651
    %v8420 = vunpack.c.h.b16 %v7651
    %v8421 = vunpack.c.l.b16 %v7652
    %v8422 = vunpack.c.h.b16 %v7652
    %v8423 = vunpack.c.l.b16 %v7653
    %v8424 = vunpack.c.h.b16 %v7653
    %v8425 = vunpack.c.l.b16 %v7654
    %v8426 = vunpack.c.h.b16 %v7654
    %v8427 = vunpack.c.l.b16 %v7655
    %v8428 = vunpack.c.h.b16 %v7655
    %v8429 = vunpack.c.l.b16 %v7656
    %v8430 = vunpack.c.h.b16 %v7656
    %v8431 = vunpack.c.l.b16 %v7657
    %v8432 = vunpack.c.h.b16 %v7657
    %v8433 = vunpack.c.l.b16 %v7658
    %v8434 = vunpack.c.h.b16 %v7658
    %v8435 = vunpack.c.l.b16 %v7659
    %v8436 = vunpack.c.h.b16 %v7659
    %v8437 = vunpack.c.l.b16 %v7660
    %v8438 = vunpack.c.h.b16 %v7660
    %v8439 = vunpack.c.l.b16 %v7661
    %v8440 = vunpack.c.h.b16 %v7661
    %v8441 = vunpack.c.l.b16 %v7662
    %v8442 = vunpack.c.h.b16 %v7662
    %v8443 = vunpack.c.l.b16 %v7663
    %v8444 = vunpack.c.h.b16 %v7663
    %v8445 = vpack.c.b16 %v7935, %v7933
    %v8446 = vpack.c.b16 %v7936, %v7934
    %v8447 = vpack.c.b16 %v7939, %v7937
    %v8448 = vpack.c.b16 %v7940, %v7938
    %v8449 = vpack.c.b16 %v7943, %v7941
    %v8450 = vpack.c.b16 %v7944, %v7942
    %v8451 = vpack.c.b16 %v7947, %v7945
    %v8452 = vpack.c.b16 %v7948, %v7946
    %v8453 = vpack.c.b16 %v7951, %v7949
    %v8454 = vpack.c.b16 %v7952, %v7950
    %v8455 = vpack.c.b16 %v7955, %v7953
    %v8456 = vpack.c.b16 %v7956, %v7954
    %v8457 = vpack.c.b16 %v7959, %v7957
    %v8458 = vpack.c.b16 %v7960, %v7958
    %v8459 = vpack.c.b16 %v7963, %v7961
    %v8460 = vpack.c.b16 %v7964, %v7962
    %v8461 = vpack.c.b16 %v7967, %v7965
    %v8462 = vpack.c.b16 %v7968, %v7966
    %v8463 = vpack.c.b16 %v7971, %v7969
    %v8464 = vpack.c.b16 %v7972, %v7970
    %v8465 = vpack.c.b16 %v7975, %v7973
    %v8466 = vpack.c.b16 %v7976, %v7974
    %v8467 = vpack.c.b16 %v7979, %v7977
    %v8468 = vpack.c.b16 %v7980, %v7978
    %v8469 = vpack.c.b16 %v7983, %v7981
    %v8470 = vpack.c.b16 %v7984, %v7982
    %v8471 = vpack.c.b16 %v7987, %v7985
    %v8472 = vpack.c.b16 %v7988, %v7986
    %v8473 = vpack.c.b16 %v7991, %v7989
    %v8474 = vpack.c.b16 %v7992, %v7990
    %v8475 = vpack.c.b16 %v7995, %v7993
    %v8476 = vpack.c.b16 %v7996, %v7994
    %v8477 = vpack.c.b16 %v7999, %v7997
    %v8478 = vpack.c.b16 %v8000, %v7998
    %v8479 = vpack.c.b16 %v8003, %v8001
    %v8480 = vpack.c.b16 %v8004, %v8002
    %v8481 = vpack.c.b16 %v8007, %v8005
    %v8482 = vpack.c.b16 %v8008, %v8006
    %v8483 = vpack.c.b16 %v8011, %v8009
    %v8484 = vpack.c.b16 %v8012, %v8010
    %v8485 = vpack.c.b16 %v8015, %v8013
    %v8486 = vpack.c.b16 %v8016, %v8014
    %v8487 = vpack.c.b16 %v8019, %v8017
    %v8488 = vpack.c.b16 %v8020, %v8018
    %v8489 = vpack.c.b16 %v8023, %v8021
    %v8490 = vpack.c.b16 %v8024, %v8022
    %v8491 = vpack.c.b16 %v8027, %v8025
    %v8492 = vpack.c.b16 %v8028, %v8026
    %v8493 = vpack.c.b16 %v8031, %v8029
    %v8494 = vpack.c.b16 %v8032, %v8030
    %v8495 = vpack.c.b16 %v8035, %v8033
    %v8496 = vpack.c.b16 %v8036, %v8034
    %v8497 = vpack.c.b16 %v8039, %v8037
    %v8498 = vpack.c.b16 %v8040, %v8038
    %v8499 = vpack.c.b16 %v8043, %v8041
    %v8500 = vpack.c.b16 %v8044, %v8042
    %v8501 = vpack.c.b16 %v8047, %v8045
    %v8502 = vpack.c.b16 %v8048, %v8046
    %v8503 = vpack.c.b16 %v8051, %v8049
    %v8504 = vpack.c.b16 %v8052, %v8050
    %v8505 = vpack.c.b16 %v8055, %v8053
    %v8506 = vpack.c.b16 %v8056, %v8054
    %v8507 = vpack.c.b16 %v8059, %v8057
    %v8508 = vpack.c.b16 %v8060, %v8058
    %v8509 = vpack.c.b16 %v8063, %v8061
    %v8510 = vpack.c.b16 %v8064, %v8062
    %v8511 = vpack.c.b16 %v8067, %v8065
    %v8512 = vpack.c.b16 %v8068, %v8066
    %v8513 = vpack.c.b16 %v8071, %v8069
    %v8514 = vpack.c.b16 %v8072, %v8070
    %v8515 = vpack.c.b16 %v8075, %v8073
    %v8516 = vpack.c.b16 %v8076, %v8074
    %v8517 = vpack.c.b16 %v8079, %v8077
    %v8518 = vpack.c.b16 %v8080, %v8078
    %v8519 = vpack.c.b16 %v8083, %v8081
    %v8520 = vpack.c.b16 %v8084, %v8082
    %v8521 = vpack.c.b16 %v8087, %v8085
    %v8522 = vpack.c.b16 %v8088, %v8086
    %v8523 = vpack.c.b16 %v8091, %v8089
    %v8524 = vpack.c.b16 %v8092, %v8090
    %v8525 = vpack.c.b16 %v8095, %v8093
    %v8526 = vpack.c.b16 %v8096, %v8094
    %v8527 = vpack.c.b16 %v8099, %v8097
    %v8528 = vpack.c.b16 %v8100, %v8098
    %v8529 = vpack.c.b16 %v8103, %v8101
    %v8530 = vpack.c.b16 %v8104, %v8102
    %v8531 = vpack.c.b16 %v8107, %v8105
    %v8532 = vpack.c.b16 %v8108, %v8106
    %v8533 = vpack.c.b16 %v8111, %v8109
    %v8534 = vpack.c.b16 %v8112, %v8110
    %v8535 = vpack.c.b16 %v8115, %v8113
    %v8536 = vpack.c.b16 %v8116, %v8114
    %v8537 = vpack.c.b16 %v8119, %v8117
    %v8538 = vpack.c.b16 %v8120, %v8118
    %v8539 = vpack.c.b16 %v8123, %v8121
    %v8540 = vpack.c.b16 %v8124, %v8122
    %v8541 = vpack.c.b16 %v8127, %v8125
    %v8542 = vpack.c.b16 %v8128, %v8126
    %v8543 = vpack.c.b16 %v8131, %v8129
    %v8544 = vpack.c.b16 %v8132, %v8130
    %v8545 = vpack.c.b16 %v8135, %v8133
    %v8546 = vpack.c.b16 %v8136, %v8134
    %v8547 = vpack.c.b16 %v8139, %v8137
    %v8548 = vpack.c.b16 %v8140, %v8138
    %v8549 = vpack.c.b16 %v8143, %v8141
    %v8550 = vpack.c.b16 %v8144, %v8142
    %v8551 = vpack.c.b16 %v8147, %v8145
    %v8552 = vpack.c.b16 %v8148, %v8146
    %v8553 = vpack.c.b16 %v8151, %v8149
    %v8554 = vpack.c.b16 %v8152, %v8150
    %v8555 = vpack.c.b16 %v8155, %v8153
    %v8556 = vpack.c.b16 %v8156, %v8154
    %v8557 = vpack.c.b16 %v8159, %v8157
    %v8558 = vpack.c.b16 %v8160, %v8158
    %v8559 = vpack.c.b16 %v8163, %v8161
    %v8560 = vpack.c.b16 %v8164, %v8162
    %v8561 = vpack.c.b16 %v8167, %v8165
    %v8562 = vpack.c.b16 %v8168, %v8166
    %v8563 = vpack.c.b16 %v8171, %v8169
    %v8564 = vpack.c.b16 %v8172, %v8170
    %v8565 = vpack.c.b16 %v8175, %v8173
    %v8566 = vpack.c.b16 %v8176, %v8174
    %v8567 = vpack.c.b16 %v8179, %v8177
    %v8568 = vpack.c.b16 %v8180, %v8178
    %v8569 = vpack.c.b16 %v8183, %v8181
    %v8570 = vpack.c.b16 %v8184, %v8182
    %v8571 = vpack.c.b16 %v8187, %v8185
    %v8572 = vpack.c.b16 %v8188, %v8186
    %v8573 = vpack.c.b16 %v8191, %v8189
    %v8574 = vpack.c.b16 %v8192, %v8190
    %v8575 = vpack.c.b16 %v8195, %v8193
    %v8576 = vpack.c.b16 %v8196, %v8194
    %v8577 = vpack.c.b16 %v8199, %v8197
    %v8578 = vpack.c.b16 %v8200, %v8198
    %v8579 = vpack.c.b16 %v8203, %v8201
    %v8580 = vpack.c.b16 %v8204, %v8202
    %v8581 = vpack.c.b16 %v8207, %v8205
    %v8582 = vpack.c.b16 %v8208, %v8206
    %v8583 = vpack.c.b16 %v8211, %v8209
    %v8584 = vpack.c.b16 %v8212, %v8210
    %v8585 = vpack.c.b16 %v8215, %v8213
    %v8586 = vpack.c.b16 %v8216, %v8214
    %v8587 = vpack.c.b16 %v8219, %v8217
    %v8588 = vpack.c.b16 %v8220, %v8218
    %v8589 = vpack.c.b16 %v8223, %v8221
    %v8590 = vpack.c.b16 %v8224, %v8222
    %v8591 = vpack.c.b16 %v8227, %v8225
    %v8592 = vpack.c.b16 %v8228, %v8226
    %v8593 = vpack.c.b16 %v8231, %v8229
    %v8594 = vpack.c.b16 %v8232, %v8230
    %v8595 = vpack.c.b16 %v8235, %v8233
    %v8596 = vpack.c.b16 %v8236, %v8234
    %v8597 = vpack.c.b16 %v8239, %v8237
    %v8598 = vpack.c.b16 %v8240, %v8238
    %v8599 = vpack.c.b16 %v8243, %v8241
    %v8600 = vpack.c.b16 %v8244, %v8242
    %v8601 = vpack.c.b16 %v8247, %v8245
    %v8602 = vpack.c.b16 %v8248, %v8246
    %v8603 = vpack.c.b16 %v8251, %v8249
    %v8604 = vpack.c.b16 %v8252, %v8250
    %v8605 = vpack.c.b16 %v8255, %v8253
    %v8606 = vpack.c.b16 %v8256, %v8254
    %v8607 = vpack.c.b16 %v8259, %v8257
    %v8608 = vpack.c.b16 %v8260, %v8258
    %v8609 = vpack.c.b16 %v8263, %v8261
    %v8610 = vpack.c.b16 %v8264, %v8262
    %v8611 = vpack.c.b16 %v8267, %v8265
    %v8612 = vpack.c.b16 %v8268, %v8266
    %v8613 = vpack.c.b16 %v8271, %v8269
    %v8614 = vpack.c.b16 %v8272, %v8270
    %v8615 = vpack.c.b16 %v8275, %v8273
    %v8616 = vpack.c.b16 %v8276, %v8274
    %v8617 = vpack.c.b16 %v8279, %v8277
    %v8618 = vpack.c.b16 %v8280, %v8278
    %v8619 = vpack.c.b16 %v8283, %v8281
    %v8620 = vpack.c.b16 %v8284, %v8282
    %v8621 = vpack.c.b16 %v8287, %v8285
    %v8622 = vpack.c.b16 %v8288, %v8286
    %v8623 = vpack.c.b16 %v8291, %v8289
    %v8624 = vpack.c.b16 %v8292, %v8290
    %v8625 = vpack.c.b16 %v8295, %v8293
    %v8626 = vpack.c.b16 %v8296, %v8294
    %v8627 = vpack.c.b16 %v8299, %v8297
    %v8628 = vpack.c.b16 %v8300, %v8298
    %v8629 = vpack.c.b16 %v8303, %v8301
    %v8630 = vpack.c.b16 %v8304, %v8302
    %v8631 = vpack.c.b16 %v8307, %v8305
    %v8632 = vpack.c.b16 %v8308, %v8306
    %v8633 = vpack.c.b16 %v8311, %v8309
    %v8634 = vpack.c.b16 %v8312, %v8310
    %v8635 = vpack.c.b16 %v8315, %v8313
    %v8636 = vpack.c.b16 %v8316, %v8314
    %v8637 = vpack.c.b16 %v8319, %v8317
    %v8638 = vpack.c.b16 %v8320, %v8318
    %v8639 = vpack.c.b16 %v8323, %v8321
    %v8640 = vpack.c.b16 %v8324, %v8322
    %v8641 = vpack.c.b16 %v8327, %v8325
    %v8642 = vpack.c.b16 %v8328, %v8326
    %v8643 = vpack.c.b16 %v8331, %v8329
    %v8644 = vpack.c.b16 %v8332, %v8330
    %v8645 = vpack.c.b16 %v8335, %v8333
    %v8646 = vpack.c.b16 %v8336, %v8334
    %v8647 = vpack.c.b16 %v8339, %v8337
    %v8648 = vpack.c.b16 %v8340, %v8338
    %v8649 = vpack.c.b16 %v8343, %v8341
    %v8650 = vpack.c.b16 %v8344, %v8342
    %v8651 = vpack.c.b16 %v8347, %v8345
    %v8652 = vpack.c.b16 %v8348, %v8346
    %v8653 = vpack.c.b16 %v8351, %v8349
    %v8654 = vpack.c.b16 %v8352, %v8350
    %v8655 = vpack.c.b16 %v8355, %v8353
    %v8656 = vpack.c.b16 %v8356, %v8354
    %v8657 = vpack.c.b16 %v8359, %v8357
    %v8658 = vpack.c.b16 %v8360, %v8358
    %v8659 = vpack.c.b16 %v8363, %v8361
    %v8660 = vpack.c.b16 %v8364, %v8362
    %v8661 = vpack.c.b16 %v8367, %v8365
    %v8662 = vpack.c.b16 %v8368, %v8366
    %v8663 = vpack.c.b16 %v8371, %v8369
    %v8664 = vpack.c.b16 %v8372, %v8370
    %v8665 = vpack.c.b16 %v8375, %v8373
    %v8666 = vpack.c.b16 %v8376, %v8374
    %v8667 = vpack.c.b16 %v8379, %v8377
    %v8668 = vpack.c.b16 %v8380, %v8378
    %v8669 = vpack.c.b16 %v8383, %v8381
    %v8670 = vpack.c.b16 %v8384, %v8382
    %v8671 = vpack.c.b16 %v8387, %v8385
    %v8672 = vpack.c.b16 %v8388, %v8386
    %v8673 = vpack.c.b16 %v8391, %v8389
    %v8674 = vpack.c.b16 %v8392, %v8390
    %v8675 = vpack.c.b16 %v8395, %v8393
    %v8676 = vpack.c.b16 %v8396, %v8394
    %v8677 = vpack.c.b16 %v8399, %v8397
    %v8678 = vpack.c.b16 %v8400, %v8398
    %v8679 = vpack.c.b16 %v8403, %v8401
    %v8680 = vpack.c.b16 %v8404, %v8402
    %v8681 = vpack.c.b16 %v8407, %v8405
    %v8682 = vpack.c.b16 %v8408, %v8406
    %v8683 = vpack.c.b16 %v8411, %v8409
    %v8684 = vpack.c.b16 %v8412, %v8410
    %v8685 = vpack.c.b16 %v8415, %v8413
    %v8686 = vpack.c.b16 %v8416, %v8414
    %v8687 = vpack.c.b16 %v8419, %v8417
    %v8688 = vpack.c.b16 %v8420, %v8418
    %v8689 = vpack.c.b16 %v8423, %v8421
    %v8690 = vpack.c.b16 %v8424, %v8422
    %v8691 = vpack.c.b16 %v8427, %v8425
    %v8692 = vpack.c.b16 %v8428, %v8426
    %v8693 = vpack.c.b16 %v8431, %v8429
    %v8694 = vpack.c.b16 %v8432, %v8430
    %v8695 = vpack.c.b16 %v8435, %v8433
    %v8696 = vpack.c.b16 %v8436, %v8434
    %v8697 = vpack.c.b16 %v8439, %v8437
    %v8698 = vpack.c.b16 %v8440, %v8438
    %v8699 = vpack.c.b16 %v8443, %v8441
    %v8700 = vpack.c.b16 %v8444, %v8442
    %8957 = vmatprep.subr.bf16.mxu0 %v8446
    %8958 = vmatpush1.bf16.msra.mxu0 %v8445
    %8959 = vmatprep.subr.bf16.mxu0 %v8448
    %8960 = vmatpush1.bf16.msra.mxu0 %v8447
    %8961 = vmatprep.subr.bf16.mxu0 %v8450
    %8962 = vmatpush1.bf16.msra.mxu0 %v8449
    %8963 = vmatprep.subr.bf16.mxu0 %v8452
    %8964 = vmatpush1.bf16.msra.mxu0 %v8451
    %8965 = vmatprep.subr.bf16.mxu0 %v8454
    %8966 = vmatpush1.bf16.msra.mxu0 %v8453
    %8967 = vmatprep.subr.bf16.mxu0 %v8456
    %8968 = vmatpush1.bf16.msra.mxu0 %v8455
    %8969 = vmatprep.subr.bf16.mxu0 %v8458
    %8970 = vmatpush1.bf16.msra.mxu0 %v8457
    %8971 = vmatprep.subr.bf16.mxu0 %v8460
    %8972 = vmatpush1.bf16.msra.mxu0 %v8459
    %8973 = vmatprep.subr.bf16.mxu0 %v8462
    %8974 = vmatpush1.bf16.msra.mxu0 %v8461
    %8975 = vmatprep.subr.bf16.mxu0 %v8464
    %8976 = vmatpush1.bf16.msra.mxu0 %v8463
    %8977 = vmatprep.subr.bf16.mxu0 %v8466
    %8978 = vmatpush1.bf16.msra.mxu0 %v8465
    %8979 = vmatprep.subr.bf16.mxu0 %v8468
    %8980 = vmatpush1.bf16.msra.mxu0 %v8467
    %8981 = vmatprep.subr.bf16.mxu0 %v8470
    %8982 = vmatpush1.bf16.msra.mxu0 %v8469
    %8983 = vmatprep.subr.bf16.mxu0 %v8472
    %8984 = vmatpush1.bf16.msra.mxu0 %v8471
    %8985 = vmatprep.subr.bf16.mxu0 %v8474
    %8986 = vmatpush1.bf16.msra.mxu0 %v8473
    %8987 = vmatprep.subr.bf16.mxu0 %v8476
    %8988 = vmatpush1.bf16.msra.mxu0 %v8475
    %8989 = vmatprep.mubr.bf16.mxu0 %v7392
    %8990 = vmatmul.mubr.bf16.gmra.mrb[0].mxu0 %v7391
    %v8991 = vpop.f32.mrb[0].mxu0
    %v8992 = vadd.f32 %v7670, %v8991
    %v8993 = vpop.f32.mrb[0].mxu0
    %v8994 = vadd.f32 %v7674, %v8993
    %v8995 = vpop.f32.mrb[0].mxu0
    %v8996 = vpop.f32.mrb[0].mxu0
    %8997 = vdwg.mxu0
    %8998 = vmatprep.subr.bf16.mxu0 %v8478
    %8999 = vmatpush1.bf16.msra.mxu0 %v8477
    %9000 = vmatprep.subr.bf16.mxu0 %v8480
    %9001 = vmatpush1.bf16.msra.mxu0 %v8479
    %9002 = vmatprep.subr.bf16.mxu0 %v8482
    %9003 = vmatpush1.bf16.msra.mxu0 %v8481
    %9004 = vmatprep.subr.bf16.mxu0 %v8484
    %9005 = vmatpush1.bf16.msra.mxu0 %v8483
    %9006 = vmatprep.subr.bf16.mxu0 %v8486
    %9007 = vmatpush1.bf16.msra.mxu0 %v8485
    %9008 = vmatprep.subr.bf16.mxu0 %v8488
    %9009 = vmatpush1.bf16.msra.mxu0 %v8487
    %9010 = vmatprep.subr.bf16.mxu0 %v8490
    %9011 = vmatpush1.bf16.msra.mxu0 %v8489
    %9012 = vmatprep.subr.bf16.mxu0 %v8492
    %9013 = vmatpush1.bf16.msra.mxu0 %v8491
    %9014 = vmatprep.subr.bf16.mxu0 %v8494
    %9015 = vmatpush1.bf16.msra.mxu0 %v8493
    %9016 = vmatprep.subr.bf16.mxu0 %v8496
    %9017 = vmatpush1.bf16.msra.mxu0 %v8495
    %9018 = vmatprep.subr.bf16.mxu0 %v8498
    %9019 = vmatpush1.bf16.msra.mxu0 %v8497
    %9020 = vmatprep.subr.bf16.mxu0 %v8500
    %9021 = vmatpush1.bf16.msra.mxu0 %v8499
    %9022 = vmatprep.subr.bf16.mxu0 %v8502
    %9023 = vmatpush1.bf16.msra.mxu0 %v8501
    %9024 = vmatprep.subr.bf16.mxu0 %v8504
    %9025 = vmatpush1.bf16.msra.mxu0 %v8503
    %9026 = vmatprep.subr.bf16.mxu0 %v8506
    %9027 = vmatpush1.bf16.msra.mxu0 %v8505
    %9028 = vmatprep.subr.bf16.mxu0 %v8508
    %9029 = vmatpush1.bf16.msra.mxu0 %v8507
    %9030 = vmatprep.mubr.bf16.mxu0 %v7394
    %9031 = vmatmul.mubr.bf16.gmra.mrb[0].mxu0 %v7393
    %v9032 = vpop.f32.mrb[0].mxu0
    %v9033 = vadd.f32 %v8992, %v9032
    %v9034 = vpop.f32.mrb[0].mxu0
    %v9035 = vadd.f32 %v8994, %v9034
    %v9036 = vpop.f32.mrb[0].mxu0
    %v9037 = vpop.f32.mrb[0].mxu0
    %9038 = vdwg.mxu0
    %9039 = vmatprep.subr.bf16.mxu0 %v8510
    %9040 = vmatpush1.bf16.msra.mxu0 %v8509
    %9041 = vmatprep.subr.bf16.mxu0 %v8512
    %9042 = vmatpush1.bf16.msra.mxu0 %v8511
    %9043 = vmatprep.subr.bf16.mxu0 %v8514
    %9044 = vmatpush1.bf16.msra.mxu0 %v8513
    %9045 = vmatprep.subr.bf16.mxu0 %v8516
    %9046 = vmatpush1.bf16.msra.mxu0 %v8515
    %9047 = vmatprep.subr.bf16.mxu0 %v8518
    %9048 = vmatpush1.bf16.msra.mxu0 %v8517
    %9049 = vmatprep.subr.bf16.mxu0 %v8520
    %9050 = vmatpush1.bf16.msra.mxu0 %v8519
    %9051 = vmatprep.subr.bf16.mxu0 %v8522
    %9052 = vmatpush1.bf16.msra.mxu0 %v8521
    %9053 = vmatprep.subr.bf16.mxu0 %v8524
    %9054 = vmatpush1.bf16.msra.mxu0 %v8523
    %9055 = vmatprep.subr.bf16.mxu0 %v8526
    %9056 = vmatpush1.bf16.msra.mxu0 %v8525
    %9057 = vmatprep.subr.bf16.mxu0 %v8528
    %9058 = vmatpush1.bf16.msra.mxu0 %v8527
    %9059 = vmatprep.subr.bf16.mxu0 %v8530
    %9060 = vmatpush1.bf16.msra.mxu0 %v8529
    %9061 = vmatprep.subr.bf16.mxu0 %v8532
    %9062 = vmatpush1.bf16.msra.mxu0 %v8531
    %9063 = vmatprep.subr.bf16.mxu0 %v8534
    %9064 = vmatpush1.bf16.msra.mxu0 %v8533
    %9065 = vmatprep.subr.bf16.mxu0 %v8536
    %9066 = vmatpush1.bf16.msra.mxu0 %v8535
    %9067 = vmatprep.subr.bf16.mxu0 %v8538
    %9068 = vmatpush1.bf16.msra.mxu0 %v8537
    %9069 = vmatprep.subr.bf16.mxu0 %v8540
    %9070 = vmatpush1.bf16.msra.mxu0 %v8539
    %9071 = vmatprep.mubr.bf16.mxu0 %v7396
    %9072 = vmatmul.mubr.bf16.gmra.mrb[0].mxu0 %v7395
    %v9073 = vpop.f32.mrb[0].mxu0
    %v9074 = vadd.f32 %v9033, %v9073
    %v9075 = vpop.f32.mrb[0].mxu0
    %v9076 = vadd.f32 %v9035, %v9075
    %v9077 = vpop.f32.mrb[0].mxu0
    %v9078 = vpop.f32.mrb[0].mxu0
    %9079 = vdwg.mxu0
    %9080 = vmatprep.subr.bf16.mxu0 %v8542
    %9081 = vmatpush1.bf16.msra.mxu0 %v8541
    %9082 = vmatprep.subr.bf16.mxu0 %v8544
    %9083 = vmatpush1.bf16.msra.mxu0 %v8543
    %9084 = vmatprep.subr.bf16.mxu0 %v8546
    %9085 = vmatpush1.bf16.msra.mxu0 %v8545
    %9086 = vmatprep.subr.bf16.mxu0 %v8548
    %9087 = vmatpush1.bf16.msra.mxu0 %v8547
    %9088 = vmatprep.subr.bf16.mxu0 %v8550
    %9089 = vmatpush1.bf16.msra.mxu0 %v8549
    %9090 = vmatprep.subr.bf16.mxu0 %v8552
    %9091 = vmatpush1.bf16.msra.mxu0 %v8551
    %9092 = vmatprep.subr.bf16.mxu0 %v8554
    %9093 = vmatpush1.bf16.msra.mxu0 %v8553
    %9094 = vmatprep.subr.bf16.mxu0 %v8556
    %9095 = vmatpush1.bf16.msra.mxu0 %v8555
    %9096 = vmatprep.subr.bf16.mxu0 %v8558
    %9097 = vmatpush1.bf16.msra.mxu0 %v8557
    %9098 = vmatprep.subr.bf16.mxu0 %v8560
    %9099 = vmatpush1.bf16.msra.mxu0 %v8559
    %9100 = vmatprep.subr.bf16.mxu0 %v8562
    %9101 = vmatpush1.bf16.msra.mxu0 %v8561
    %9102 = vmatprep.subr.bf16.mxu0 %v8564
    %9103 = vmatpush1.bf16.msra.mxu0 %v8563
    %9104 = vmatprep.subr.bf16.mxu0 %v8566
    %9105 = vmatpush1.bf16.msra.mxu0 %v8565
    %9106 = vmatprep.subr.bf16.mxu0 %v8568
    %9107 = vmatpush1.bf16.msra.mxu0 %v8567
    %9108 = vmatprep.subr.bf16.mxu0 %v8570
    %9109 = vmatpush1.bf16.msra.mxu0 %v8569
    %9110 = vmatprep.subr.bf16.mxu0 %v8572
    %9111 = vmatpush1.bf16.msra.mxu0 %v8571
    %9112 = vmatprep.mubr.bf16.mxu0 %v7398
    %9113 = vmatmul.mubr.bf16.gmra.mrb[0].mxu0 %v7397
    %v9114 = vpop.f32.mrb[0].mxu0
    %v9115 = vadd.f32 %v9074, %v9114
    %v9116 = vpop.f32.mrb[0].mxu0
    %v9117 = vadd.f32 %v9076, %v9116
    %v9118 = vpop.f32.mrb[0].mxu0
    %v9119 = vpop.f32.mrb[0].mxu0
    %9120 = vdwg.mxu0
    %9121 = vmatprep.subr.bf16.mxu0 %v8574
    %9122 = vmatpush1.bf16.msra.mxu0 %v8573
    %9123 = vmatprep.subr.bf16.mxu0 %v8576
    %9124 = vmatpush1.bf16.msra.mxu0 %v8575
    %9125 = vmatprep.subr.bf16.mxu0 %v8578
    %9126 = vmatpush1.bf16.msra.mxu0 %v8577
    %9127 = vmatprep.subr.bf16.mxu0 %v8580
    %9128 = vmatpush1.bf16.msra.mxu0 %v8579
    %9129 = vmatprep.subr.bf16.mxu0 %v8582
    %9130 = vmatpush1.bf16.msra.mxu0 %v8581
    %9131 = vmatprep.subr.bf16.mxu0 %v8584
    %9132 = vmatpush1.bf16.msra.mxu0 %v8583
    %9133 = vmatprep.subr.bf16.mxu0 %v8586
    %9134 = vmatpush1.bf16.msra.mxu0 %v8585
    %9135 = vmatprep.subr.bf16.mxu0 %v8588
    %9136 = vmatpush1.bf16.msra.mxu0 %v8587
    %9137 = vmatprep.subr.bf16.mxu0 %v8590
    %9138 = vmatpush1.bf16.msra.mxu0 %v8589
    %9139 = vmatprep.subr.bf16.mxu0 %v8592
    %9140 = vmatpush1.bf16.msra.mxu0 %v8591
    %9141 = vmatprep.subr.bf16.mxu0 %v8594
    %9142 = vmatpush1.bf16.msra.mxu0 %v8593
    %9143 = vmatprep.subr.bf16.mxu0 %v8596
    %9144 = vmatpush1.bf16.msra.mxu0 %v8595
    %9145 = vmatprep.subr.bf16.mxu0 %v8598
    %9146 = vmatpush1.bf16.msra.mxu0 %v8597
    %9147 = vmatprep.subr.bf16.mxu0 %v8600
    %9148 = vmatpush1.bf16.msra.mxu0 %v8599
    %9149 = vmatprep.subr.bf16.mxu0 %v8602
    %9150 = vmatpush1.bf16.msra.mxu0 %v8601
    %9151 = vmatprep.subr.bf16.mxu0 %v8604
    %9152 = vmatpush1.bf16.msra.mxu0 %v8603
    %9153 = vmatprep.mubr.bf16.mxu0 %v7400
    %9154 = vmatmul.mubr.bf16.gmra.mrb[0].mxu0 %v7399
    %v9155 = vpop.f32.mrb[0].mxu0
    %v9156 = vadd.f32 %v9115, %v9155
    %v9157 = vpop.f32.mrb[0].mxu0
    %v9158 = vadd.f32 %v9117, %v9157
    %v9159 = vpop.f32.mrb[0].mxu0
    %v9160 = vpop.f32.mrb[0].mxu0
    %9161 = vdwg.mxu0
    %9162 = vmatprep.subr.bf16.mxu0 %v8606
    %9163 = vmatpush1.bf16.msra.mxu0 %v8605
    %9164 = vmatprep.subr.bf16.mxu0 %v8608
    %9165 = vmatpush1.bf16.msra.mxu0 %v8607
    %9166 = vmatprep.subr.bf16.mxu0 %v8610
    %9167 = vmatpush1.bf16.msra.mxu0 %v8609
    %9168 = vmatprep.subr.bf16.mxu0 %v8612
    %9169 = vmatpush1.bf16.msra.mxu0 %v8611
    %9170 = vmatprep.subr.bf16.mxu0 %v8614
    %9171 = vmatpush1.bf16.msra.mxu0 %v8613
    %9172 = vmatprep.subr.bf16.mxu0 %v8616
    %9173 = vmatpush1.bf16.msra.mxu0 %v8615
    %9174 = vmatprep.subr.bf16.mxu0 %v8618
    %9175 = vmatpush1.bf16.msra.mxu0 %v8617
    %9176 = vmatprep.subr.bf16.mxu0 %v8620
    %9177 = vmatpush1.bf16.msra.mxu0 %v8619
    %9178 = vmatprep.subr.bf16.mxu0 %v8622
    %9179 = vmatpush1.bf16.msra.mxu0 %v8621
    %9180 = vmatprep.subr.bf16.mxu0 %v8624
    %9181 = vmatpush1.bf16.msra.mxu0 %v8623
    %9182 = vmatprep.subr.bf16.mxu0 %v8626
    %9183 = vmatpush1.bf16.msra.mxu0 %v8625
    %9184 = vmatprep.subr.bf16.mxu0 %v8628
    %9185 = vmatpush1.bf16.msra.mxu0 %v8627
    %9186 = vmatprep.subr.bf16.mxu0 %v8630
    %9187 = vmatpush1.bf16.msra.mxu0 %v8629
    %9188 = vmatprep.subr.bf16.mxu0 %v8632
    %9189 = vmatpush1.bf16.msra.mxu0 %v8631
    %9190 = vmatprep.subr.bf16.mxu0 %v8634
    %9191 = vmatpush1.bf16.msra.mxu0 %v8633
    %9192 = vmatprep.subr.bf16.mxu0 %v8636
    %9193 = vmatpush1.bf16.msra.mxu0 %v8635
    %9194 = vmatprep.mubr.bf16.mxu0 %v7402
    %9195 = vmatmul.mubr.bf16.gmra.mrb[0].mxu0 %v7401
    %v9196 = vpop.f32.mrb[0].mxu0
    %v9197 = vadd.f32 %v9156, %v9196
    %v9198 = vpop.f32.mrb[0].mxu0
    %v9199 = vadd.f32 %v9158, %v9198
    %v9200 = vpop.f32.mrb[0].mxu0
    %v9201 = vpop.f32.mrb[0].mxu0
    %9202 = vdwg.mxu0
    %9203 = vmatprep.subr.bf16.mxu0 %v8638
    %9204 = vmatpush1.bf16.msra.mxu0 %v8637
    %9205 = vmatprep.subr.bf16.mxu0 %v8640
    %9206 = vmatpush1.bf16.msra.mxu0 %v8639
    %9207 = vmatprep.subr.bf16.mxu0 %v8642
    %9208 = vmatpush1.bf16.msra.mxu0 %v8641
    %9209 = vmatprep.subr.bf16.mxu0 %v8644
    %9210 = vmatpush1.bf16.msra.mxu0 %v8643
    %9211 = vmatprep.subr.bf16.mxu0 %v8646
    %9212 = vmatpush1.bf16.msra.mxu0 %v8645
    %9213 = vmatprep.subr.bf16.mxu0 %v8648
    %9214 = vmatpush1.bf16.msra.mxu0 %v8647
    %9215 = vmatprep.subr.bf16.mxu0 %v8650
    %9216 = vmatpush1.bf16.msra.mxu0 %v8649
    %9217 = vmatprep.subr.bf16.mxu0 %v8652
    %9218 = vmatpush1.bf16.msra.mxu0 %v8651
    %9219 = vmatprep.subr.bf16.mxu0 %v8654
    %9220 = vmatpush1.bf16.msra.mxu0 %v8653
    %9221 = vmatprep.subr.bf16.mxu0 %v8656
    %9222 = vmatpush1.bf16.msra.mxu0 %v8655
    %9223 = vmatprep.subr.bf16.mxu0 %v8658
    %9224 = vmatpush1.bf16.msra.mxu0 %v8657
    %9225 = vmatprep.subr.bf16.mxu0 %v8660
    %9226 = vmatpush1.bf16.msra.mxu0 %v8659
    %9227 = vmatprep.subr.bf16.mxu0 %v8662
    %9228 = vmatpush1.bf16.msra.mxu0 %v8661
    %9229 = vmatprep.subr.bf16.mxu0 %v8664
    %9230 = vmatpush1.bf16.msra.mxu0 %v8663
    %9231 = vmatprep.subr.bf16.mxu0 %v8666
    %9232 = vmatpush1.bf16.msra.mxu0 %v8665
    %9233 = vmatprep.subr.bf16.mxu0 %v8668
    %9234 = vmatpush1.bf16.msra.mxu0 %v8667
    %9235 = vmatprep.mubr.bf16.mxu0 %v7404
    %9236 = vmatmul.mubr.bf16.gmra.mrb[0].mxu0 %v7403
    %v9237 = vpop.f32.mrb[0].mxu0
    %v9238 = vadd.f32 %v9197, %v9237
    %v9239 = vpop.f32.mrb[0].mxu0
    %v9240 = vadd.f32 %v9199, %v9239
    %v9241 = vpop.f32.mrb[0].mxu0
    %v9242 = vpop.f32.mrb[0].mxu0
    %9243 = vdwg.mxu0
    %9244 = vmatprep.subr.bf16.mxu0 %v8670
    %9245 = vmatpush1.bf16.msra.mxu0 %v8669
    %9246 = vmatprep.subr.bf16.mxu0 %v8672
    %9247 = vmatpush1.bf16.msra.mxu0 %v8671
    %9248 = vmatprep.subr.bf16.mxu0 %v8674
    %9249 = vmatpush1.bf16.msra.mxu0 %v8673
    %9250 = vmatprep.subr.bf16.mxu0 %v8676
    %9251 = vmatpush1.bf16.msra.mxu0 %v8675
    %9252 = vmatprep.subr.bf16.mxu0 %v8678
    %9253 = vmatpush1.bf16.msra.mxu0 %v8677
    %9254 = vmatprep.subr.bf16.mxu0 %v8680
    %9255 = vmatpush1.bf16.msra.mxu0 %v8679
    %9256 = vmatprep.subr.bf16.mxu0 %v8682
    %9257 = vmatpush1.bf16.msra.mxu0 %v8681
    %9258 = vmatprep.subr.bf16.mxu0 %v8684
    %9259 = vmatpush1.bf16.msra.mxu0 %v8683
    %9260 = vmatprep.subr.bf16.mxu0 %v8686
    %9261 = vmatpush1.bf16.msra.mxu0 %v8685
    %9262 = vmatprep.subr.bf16.mxu0 %v8688
    %9263 = vmatpush1.bf16.msra.mxu0 %v8687
    %9264 = vmatprep.subr.bf16.mxu0 %v8690
    %9265 = vmatpush1.bf16.msra.mxu0 %v8689
    %9266 = vmatprep.subr.bf16.mxu0 %v8692
    %9267 = vmatpush1.bf16.msra.mxu0 %v8691
    %9268 = vmatprep.subr.bf16.mxu0 %v8694
    %9269 = vmatpush1.bf16.msra.mxu0 %v8693
    %9270 = vmatprep.subr.bf16.mxu0 %v8696
    %9271 = vmatpush1.bf16.msra.mxu0 %v8695
    %9272 = vmatprep.subr.bf16.mxu0 %v8698
    %9273 = vmatpush1.bf16.msra.mxu0 %v8697
    %9274 = vmatprep.subr.bf16.mxu0 %v8700
    %9275 = vmatpush1.bf16.msra.mxu0 %v8699
    %9276 = vmatprep.mubr.bf16.mxu0 %v7406
    %9277 = vmatmul.mubr.bf16.gmra.mrb[0].mxu0 %v7405
    %v9278 = vpop.f32.mrb[0].mxu0
    %v9279 = vadd.f32 %v9238, %v9278
    %v9280 = vpop.f32.mrb[0].mxu0
    %v9281 = vadd.f32 %v9240, %v9280
    %v9282 = vpop.f32.mrb[0].mxu0
    %v9283 = vpop.f32.mrb[0].mxu0
    %9284 = vdwg.mxu0
    %v9285 = vadd.f32 %v5421, %v9279
    %v9286 = vadd.f32 %v5422, %v9281
    %s9287 = scalar_lea.vmem [#allocation23], 2
    %v9288 = vld [vmem:[%s9287] sm:$0x3]
    %s9289 = scalar_lea.vmem [#allocation25], 2
    %v9290 = vld [vmem:[%s9289] sm:$0x3]
    %v9291 = vadd.f32 %v9285, %v9286
    %9292 = vadd.xlane.f32.xlu0 %v9291
    %v9293 = vpop.xlane.xlu0 %9292
    %v9294 = vmul.f32 %v9293, %v933
    %v9295 = vsub.f32 %v9285, %v9294
    %v9296 = vsub.f32 %v9286, %v9294
    %v9297 = vmul.f32 %v9295, %v9295
    %v9298 = vmul.f32 %v9296, %v9296
    %v9299 = vadd.f32 %v9297, %v9298
    %9300 = vadd.xlane.f32.xlu0 %v9299
    %v9301 = vpop.xlane.xlu0 %9300
    %v9302 = vmul.f32 %v9301, %v933
    %v9303 = vadd.f32 %v9302, 1e-05
    %v9304 = vrsqrt.pop %v9303
    %v9305 = vmul.f32 %v9295, %v9304
    %v9306 = vmul.f32 %v9296, %v9304
    %v9308 = vlaneseq
    %v9309 = vshrl.u32 %v9308, 7
    %v9310 = vsub.s32 0, %v9309
    %v9311 = vrot.slane %v9288, %v9310
    %v9312 = vlaneseq
    %v9313 = vshrl.u32 %v9312, 7
    %v9314 = vsub.s32 1, %v9313
    %v9315 = vrot.slane %v9288, %v9314
    %v9318 = vmul.f32 %v9305, %v9311
    %v9319 = vmul.f32 %v9306, %v9315
    %v9321 = vlaneseq
    %v9322 = vshrl.u32 %v9321, 7
    %v9323 = vsub.s32 0, %v9322
    %v9324 = vrot.slane %v9290, %v9323
    %v9325 = vlaneseq
    %v9326 = vshrl.u32 %v9325, 7
    %v9327 = vsub.s32 1, %v9326
    %v9328 = vrot.slane %v9290, %v9327
    %v9331 = vadd.f32 %v9318, %v9324
    %v9332 = vadd.f32 %v9319, %v9328
    %v9333 = vpack.c.bf16 %v9331, %v9331
    %v9334 = vpack.c.bf16 %v9332, %v9332
    %s9335 = scalar_lea.vmem [#allocation8], 512
    %v9336 = vld [vmem:[%s9335] sm:$0xff]
    %v9337 = vld [vmem:[%s9335 + $0x8] sm:$0xff]
    %v9338 = vld [vmem:[%s9335 + $0x10] sm:$0xff]
    %v9339 = vld [vmem:[%s9335 + $0x18] sm:$0xff]
    %v9340 = vld [vmem:[%s9335 + $0x20] sm:$0xff]
    %v9341 = vld [vmem:[%s9335 + $0x28] sm:$0xff]
    %v9342 = vld [vmem:[%s9335 + $0x30] sm:$0xff]
    %v9343 = vld [vmem:[%s9335 + $0x38] sm:$0xff]
    %v9344 = vld [vmem:[%s9335 + $0x40] sm:$0xff]
    %v9345 = vld [vmem:[%s9335 + $0x48] sm:$0xff]
    %v9346 = vld [vmem:[%s9335 + $0x50] sm:$0xff]
    %v9347 = vld [vmem:[%s9335 + $0x58] sm:$0xff]
    %v9348 = vld [vmem:[%s9335 + $0x60] sm:$0xff]
    %v9349 = vld [vmem:[%s9335 + $0x68] sm:$0xff]
    %v9350 = vld [vmem:[%s9335 + $0x70] sm:$0xff]
    %v9351 = vld [vmem:[%s9335 + $0x78] sm:$0xff]
    %v9352 = vld [vmem:[%s9335 + $0x80] sm:$0xff]
    %v9353 = vld [vmem:[%s9335 + $0x88] sm:$0xff]
    %v9354 = vld [vmem:[%s9335 + $0x90] sm:$0xff]
    %v9355 = vld [vmem:[%s9335 + $0x98] sm:$0xff]
    %v9356 = vld [vmem:[%s9335 + $0xa0] sm:$0xff]
    %v9357 = vld [vmem:[%s9335 + $0xa8] sm:$0xff]
    %v9358 = vld [vmem:[%s9335 + $0xb0] sm:$0xff]
    %v9359 = vld [vmem:[%s9335 + $0xb8] sm:$0xff]
    %v9360 = vld [vmem:[%s9335 + $0xc0] sm:$0xff]
    %v9361 = vld [vmem:[%s9335 + $0xc8] sm:$0xff]
    %v9362 = vld [vmem:[%s9335 + $0xd0] sm:$0xff]
    %v9363 = vld [vmem:[%s9335 + $0xd8] sm:$0xff]
    %v9364 = vld [vmem:[%s9335 + $0xe0] sm:$0xff]
    %v9365 = vld [vmem:[%s9335 + $0xe8] sm:$0xff]
    %v9366 = vld [vmem:[%s9335 + $0xf0] sm:$0xff]
    %v9367 = vld [vmem:[%s9335 + $0xf8] sm:$0xff]
    %s9368 = scalar_lea.vmem [#allocation10], 4
    %v9369 = vld [vmem:[%s9368] sm:$0x3]
    %v9371 = vlaneseq
    %v9372 = vshrl.u32 %v9371, 7
    %v9373 = vsub.s32 0, %v9372
    %v9374 = vrot.slane %v9369, %v9373
    %v9375 = vlaneseq
    %v9376 = vshrl.u32 %v9375, 7
    %v9377 = vsub.s32 1, %v9376
    %v9378 = vrot.slane %v9369, %v9377
    %v9413 = vunpack.c.l.b16 %v9336
    %v9414 = vunpack.c.h.b16 %v9336
    %v9415 = vunpack.c.l.b16 %v9337
    %v9416 = vunpack.c.h.b16 %v9337
    %v9417 = vunpack.c.l.b16 %v9338
    %v9418 = vunpack.c.h.b16 %v9338
    %v9419 = vunpack.c.l.b16 %v9339
    %v9420 = vunpack.c.h.b16 %v9339
    %v9421 = vunpack.c.l.b16 %v9340
    %v9422 = vunpack.c.h.b16 %v9340
    %v9423 = vunpack.c.l.b16 %v9341
    %v9424 = vunpack.c.h.b16 %v9341
    %v9425 = vunpack.c.l.b16 %v9342
    %v9426 = vunpack.c.h.b16 %v9342
    %v9427 = vunpack.c.l.b16 %v9343
    %v9428 = vunpack.c.h.b16 %v9343
    %v9429 = vunpack.c.l.b16 %v9344
    %v9430 = vunpack.c.h.b16 %v9344
    %v9431 = vunpack.c.l.b16 %v9345
    %v9432 = vunpack.c.h.b16 %v9345
    %v9433 = vunpack.c.l.b16 %v9346
    %v9434 = vunpack.c.h.b16 %v9346
    %v9435 = vunpack.c.l.b16 %v9347
    %v9436 = vunpack.c.h.b16 %v9347
    %v9437 = vunpack.c.l.b16 %v9348
    %v9438 = vunpack.c.h.b16 %v9348
    %v9439 = vunpack.c.l.b16 %v9349
    %v9440 = vunpack.c.h.b16 %v9349
    %v9441 = vunpack.c.l.b16 %v9350
    %v9442 = vunpack.c.h.b16 %v9350
    %v9443 = vunpack.c.l.b16 %v9351
    %v9444 = vunpack.c.h.b16 %v9351
    %v9445 = vunpack.c.l.b16 %v9352
    %v9446 = vunpack.c.h.b16 %v9352
    %v9447 = vunpack.c.l.b16 %v9353
    %v9448 = vunpack.c.h.b16 %v9353
    %v9449 = vunpack.c.l.b16 %v9354
    %v9450 = vunpack.c.h.b16 %v9354
    %v9451 = vunpack.c.l.b16 %v9355
    %v9452 = vunpack.c.h.b16 %v9355
    %v9453 = vunpack.c.l.b16 %v9356
    %v9454 = vunpack.c.h.b16 %v9356
    %v9455 = vunpack.c.l.b16 %v9357
    %v9456 = vunpack.c.h.b16 %v9357
    %v9457 = vunpack.c.l.b16 %v9358
    %v9458 = vunpack.c.h.b16 %v9358
    %v9459 = vunpack.c.l.b16 %v9359
    %v9460 = vunpack.c.h.b16 %v9359
    %v9461 = vunpack.c.l.b16 %v9360
    %v9462 = vunpack.c.h.b16 %v9360
    %v9463 = vunpack.c.l.b16 %v9361
    %v9464 = vunpack.c.h.b16 %v9361
    %v9465 = vunpack.c.l.b16 %v9362
    %v9466 = vunpack.c.h.b16 %v9362
    %v9467 = vunpack.c.l.b16 %v9363
    %v9468 = vunpack.c.h.b16 %v9363
    %v9469 = vunpack.c.l.b16 %v9364
    %v9470 = vunpack.c.h.b16 %v9364
    %v9471 = vunpack.c.l.b16 %v9365
    %v9472 = vunpack.c.h.b16 %v9365
    %v9473 = vunpack.c.l.b16 %v9366
    %v9474 = vunpack.c.h.b16 %v9366
    %v9475 = vunpack.c.l.b16 %v9367
    %v9476 = vunpack.c.h.b16 %v9367
    %v9477 = vpack.c.b16 %v9415, %v9413
    %v9478 = vpack.c.b16 %v9416, %v9414
    %v9479 = vpack.c.b16 %v9419, %v9417
    %v9480 = vpack.c.b16 %v9420, %v9418
    %v9481 = vpack.c.b16 %v9423, %v9421
    %v9482 = vpack.c.b16 %v9424, %v9422
    %v9483 = vpack.c.b16 %v9427, %v9425
    %v9484 = vpack.c.b16 %v9428, %v9426
    %v9485 = vpack.c.b16 %v9431, %v9429
    %v9486 = vpack.c.b16 %v9432, %v9430
    %v9487 = vpack.c.b16 %v9435, %v9433
    %v9488 = vpack.c.b16 %v9436, %v9434
    %v9489 = vpack.c.b16 %v9439, %v9437
    %v9490 = vpack.c.b16 %v9440, %v9438
    %v9491 = vpack.c.b16 %v9443, %v9441
    %v9492 = vpack.c.b16 %v9444, %v9442
    %v9493 = vpack.c.b16 %v9447, %v9445
    %v9494 = vpack.c.b16 %v9448, %v9446
    %v9495 = vpack.c.b16 %v9451, %v9449
    %v9496 = vpack.c.b16 %v9452, %v9450
    %v9497 = vpack.c.b16 %v9455, %v9453
    %v9498 = vpack.c.b16 %v9456, %v9454
    %v9499 = vpack.c.b16 %v9459, %v9457
    %v9500 = vpack.c.b16 %v9460, %v9458
    %v9501 = vpack.c.b16 %v9463, %v9461
    %v9502 = vpack.c.b16 %v9464, %v9462
    %v9503 = vpack.c.b16 %v9467, %v9465
    %v9504 = vpack.c.b16 %v9468, %v9466
    %v9505 = vpack.c.b16 %v9471, %v9469
    %v9506 = vpack.c.b16 %v9472, %v9470
    %v9507 = vpack.c.b16 %v9475, %v9473
    %v9508 = vpack.c.b16 %v9476, %v9474
    %9541 = vmatprep.subr.bf16.mxu0 %v9478
    %9542 = vmatpush1.bf16.msra.mxu0 %v9477
    %9543 = vmatprep.subr.bf16.mxu0 %v9480
    %9544 = vmatpush1.bf16.msra.mxu0 %v9479
    %9545 = vmatprep.subr.bf16.mxu0 %v9482
    %9546 = vmatpush1.bf16.msra.mxu0 %v9481
    %9547 = vmatprep.subr.bf16.mxu0 %v9484
    %9548 = vmatpush1.bf16.msra.mxu0 %v9483
    %9549 = vmatprep.subr.bf16.mxu0 %v9486
    %9550 = vmatpush1.bf16.msra.mxu0 %v9485
    %9551 = vmatprep.subr.bf16.mxu0 %v9488
    %9552 = vmatpush1.bf16.msra.mxu0 %v9487
    %9553 = vmatprep.subr.bf16.mxu0 %v9490
    %9554 = vmatpush1.bf16.msra.mxu0 %v9489
    %9555 = vmatprep.subr.bf16.mxu0 %v9492
    %9556 = vmatpush1.bf16.msra.mxu0 %v9491
    %9557 = vmatprep.subr.bf16.mxu0 %v9494
    %9558 = vmatpush1.bf16.msra.mxu0 %v9493
    %9559 = vmatprep.subr.bf16.mxu0 %v9496
    %9560 = vmatpush1.bf16.msra.mxu0 %v9495
    %9561 = vmatprep.subr.bf16.mxu0 %v9498
    %9562 = vmatpush1.bf16.msra.mxu0 %v9497
    %9563 = vmatprep.subr.bf16.mxu0 %v9500
    %9564 = vmatpush1.bf16.msra.mxu0 %v9499
    %9565 = vmatprep.subr.bf16.mxu0 %v9502
    %9566 = vmatpush1.bf16.msra.mxu0 %v9501
    %9567 = vmatprep.subr.bf16.mxu0 %v9504
    %9568 = vmatpush1.bf16.msra.mxu0 %v9503
    %9569 = vmatprep.subr.bf16.mxu0 %v9506
    %9570 = vmatpush1.bf16.msra.mxu0 %v9505
    %9571 = vmatprep.subr.bf16.mxu0 %v9508
    %9572 = vmatpush1.bf16.msra.mxu0 %v9507
    %9573 = vmatprep.mubr.bf16.mxu0 %v9334
    %9574 = vmatmul.mubr.bf16.gmra.mrb[0].mxu0 %v9333
    %v9575 = vpop.f32.mrb[0].mxu0
    %v9576 = vadd.f32 %v9374, %v9575
    %v9577 = vpop.f32.mrb[0].mxu0
    %v9578 = vadd.f32 %v9378, %v9577
    %v9579 = vpop.f32.mrb[0].mxu0
    %v9580 = vpop.f32.mrb[0].mxu0
    %9581 = vdwg.mxu0
    %v9582 = vpack.c.bf16 %v9576, %v9576
    %v9583 = vpack.c.bf16 %v9578, %v9578
    %s9584 = scalar_lea.vmem [#allocation11], 512
    %v9585 = vld [vmem:[%s9584] sm:$0xff]
    %v9586 = vld [vmem:[%s9584 + $0x8] sm:$0xff]
    %v9587 = vld [vmem:[%s9584 + $0x10] sm:$0xff]
    %v9588 = vld [vmem:[%s9584 + $0x18] sm:$0xff]
    %v9589 = vld [vmem:[%s9584 + $0x20] sm:$0xff]
    %v9590 = vld [vmem:[%s9584 + $0x28] sm:$0xff]
    %v9591 = vld [vmem:[%s9584 + $0x30] sm:$0xff]
    %v9592 = vld [vmem:[%s9584 + $0x38] sm:$0xff]
    %v9593 = vld [vmem:[%s9584 + $0x40] sm:$0xff]
    %v9594 = vld [vmem:[%s9584 + $0x48] sm:$0xff]
    %v9595 = vld [vmem:[%s9584 + $0x50] sm:$0xff]
    %v9596 = vld [vmem:[%s9584 + $0x58] sm:$0xff]
    %v9597 = vld [vmem:[%s9584 + $0x60] sm:$0xff]
    %v9598 = vld [vmem:[%s9584 + $0x68] sm:$0xff]
    %v9599 = vld [vmem:[%s9584 + $0x70] sm:$0xff]
    %v9600 = vld [vmem:[%s9584 + $0x78] sm:$0xff]
    %v9601 = vld [vmem:[%s9584 + $0x80] sm:$0xff]
    %v9602 = vld [vmem:[%s9584 + $0x88] sm:$0xff]
    %v9603 = vld [vmem:[%s9584 + $0x90] sm:$0xff]
    %v9604 = vld [vmem:[%s9584 + $0x98] sm:$0xff]
    %v9605 = vld [vmem:[%s9584 + $0xa0] sm:$0xff]
    %v9606 = vld [vmem:[%s9584 + $0xa8] sm:$0xff]
    %v9607 = vld [vmem:[%s9584 + $0xb0] sm:$0xff]
    %v9608 = vld [vmem:[%s9584 + $0xb8] sm:$0xff]
    %v9609 = vld [vmem:[%s9584 + $0xc0] sm:$0xff]
    %v9610 = vld [vmem:[%s9584 + $0xc8] sm:$0xff]
    %v9611 = vld [vmem:[%s9584 + $0xd0] sm:$0xff]
    %v9612 = vld [vmem:[%s9584 + $0xd8] sm:$0xff]
    %v9613 = vld [vmem:[%s9584 + $0xe0] sm:$0xff]
    %v9614 = vld [vmem:[%s9584 + $0xe8] sm:$0xff]
    %v9615 = vld [vmem:[%s9584 + $0xf0] sm:$0xff]
    %v9616 = vld [vmem:[%s9584 + $0xf8] sm:$0xff]
    %s9617 = scalar_lea.vmem [#allocation13], 4
    %v9618 = vld [vmem:[%s9617] sm:$0x3]
    %v9620 = vlaneseq
    %v9621 = vshrl.u32 %v9620, 7
    %v9622 = vsub.s32 0, %v9621
    %v9623 = vrot.slane %v9618, %v9622
    %v9624 = vlaneseq
    %v9625 = vshrl.u32 %v9624, 7
    %v9626 = vsub.s32 1, %v9625
    %v9627 = vrot.slane %v9618, %v9626
    %v9662 = vunpack.c.l.b16 %v9585
    %v9663 = vunpack.c.h.b16 %v9585
    %v9664 = vunpack.c.l.b16 %v9586
    %v9665 = vunpack.c.h.b16 %v9586
    %v9666 = vunpack.c.l.b16 %v9587
    %v9667 = vunpack.c.h.b16 %v9587
    %v9668 = vunpack.c.l.b16 %v9588
    %v9669 = vunpack.c.h.b16 %v9588
    %v9670 = vunpack.c.l.b16 %v9589
    %v9671 = vunpack.c.h.b16 %v9589
    %v9672 = vunpack.c.l.b16 %v9590
    %v9673 = vunpack.c.h.b16 %v9590
    %v9674 = vunpack.c.l.b16 %v9591
    %v9675 = vunpack.c.h.b16 %v9591
    %v9676 = vunpack.c.l.b16 %v9592
    %v9677 = vunpack.c.h.b16 %v9592
    %v9678 = vunpack.c.l.b16 %v9593
    %v9679 = vunpack.c.h.b16 %v9593
    %v9680 = vunpack.c.l.b16 %v9594
    %v9681 = vunpack.c.h.b16 %v9594
    %v9682 = vunpack.c.l.b16 %v9595
    %v9683 = vunpack.c.h.b16 %v9595
    %v9684 = vunpack.c.l.b16 %v9596
    %v9685 = vunpack.c.h.b16 %v9596
    %v9686 = vunpack.c.l.b16 %v9597
    %v9687 = vunpack.c.h.b16 %v9597
    %v9688 = vunpack.c.l.b16 %v9598
    %v9689 = vunpack.c.h.b16 %v9598
    %v9690 = vunpack.c.l.b16 %v9599
    %v9691 = vunpack.c.h.b16 %v9599
    %v9692 = vunpack.c.l.b16 %v9600
    %v9693 = vunpack.c.h.b16 %v9600
    %v9694 = vunpack.c.l.b16 %v9601
    %v9695 = vunpack.c.h.b16 %v9601
    %v9696 = vunpack.c.l.b16 %v9602
    %v9697 = vunpack.c.h.b16 %v9602
    %v9698 = vunpack.c.l.b16 %v9603
    %v9699 = vunpack.c.h.b16 %v9603
    %v9700 = vunpack.c.l.b16 %v9604
    %v9701 = vunpack.c.h.b16 %v9604
    %v9702 = vunpack.c.l.b16 %v9605
    %v9703 = vunpack.c.h.b16 %v9605
    %v9704 = vunpack.c.l.b16 %v9606
    %v9705 = vunpack.c.h.b16 %v9606
    %v9706 = vunpack.c.l.b16 %v9607
    %v9707 = vunpack.c.h.b16 %v9607
    %v9708 = vunpack.c.l.b16 %v9608
    %v9709 = vunpack.c.h.b16 %v9608
    %v9710 = vunpack.c.l.b16 %v9609
    %v9711 = vunpack.c.h.b16 %v9609
    %v9712 = vunpack.c.l.b16 %v9610
    %v9713 = vunpack.c.h.b16 %v9610
    %v9714 = vunpack.c.l.b16 %v9611
    %v9715 = vunpack.c.h.b16 %v9611
    %v9716 = vunpack.c.l.b16 %v9612
    %v9717 = vunpack.c.h.b16 %v9612
    %v9718 = vunpack.c.l.b16 %v9613
    %v9719 = vunpack.c.h.b16 %v9613
    %v9720 = vunpack.c.l.b16 %v9614
    %v9721 = vunpack.c.h.b16 %v9614
    %v9722 = vunpack.c.l.b16 %v9615
    %v9723 = vunpack.c.h.b16 %v9615
    %v9724 = vunpack.c.l.b16 %v9616
    %v9725 = vunpack.c.h.b16 %v9616
    %v9726 = vpack.c.b16 %v9664, %v9662
    %v9727 = vpack.c.b16 %v9665, %v9663
    %v9728 = vpack.c.b16 %v9668, %v9666
    %v9729 = vpack.c.b16 %v9669, %v9667
    %v9730 = vpack.c.b16 %v9672, %v9670
    %v9731 = vpack.c.b16 %v9673, %v9671
    %v9732 = vpack.c.b16 %v9676, %v9674
    %v9733 = vpack.c.b16 %v9677, %v9675
    %v9734 = vpack.c.b16 %v9680, %v9678
    %v9735 = vpack.c.b16 %v9681, %v9679
    %v9736 = vpack.c.b16 %v9684, %v9682
    %v9737 = vpack.c.b16 %v9685, %v9683
    %v9738 = vpack.c.b16 %v9688, %v9686
    %v9739 = vpack.c.b16 %v9689, %v9687
    %v9740 = vpack.c.b16 %v9692, %v9690
    %v9741 = vpack.c.b16 %v9693, %v9691
    %v9742 = vpack.c.b16 %v9696, %v9694
    %v9743 = vpack.c.b16 %v9697, %v9695
    %v9744 = vpack.c.b16 %v9700, %v9698
    %v9745 = vpack.c.b16 %v9701, %v9699
    %v9746 = vpack.c.b16 %v9704, %v9702
    %v9747 = vpack.c.b16 %v9705, %v9703
    %v9748 = vpack.c.b16 %v9708, %v9706
    %v9749 = vpack.c.b16 %v9709, %v9707
    %v9750 = vpack.c.b16 %v9712, %v9710
    %v9751 = vpack.c.b16 %v9713, %v9711
    %v9752 = vpack.c.b16 %v9716, %v9714
    %v9753 = vpack.c.b16 %v9717, %v9715
    %v9754 = vpack.c.b16 %v9720, %v9718
    %v9755 = vpack.c.b16 %v9721, %v9719
    %v9756 = vpack.c.b16 %v9724, %v9722
    %v9757 = vpack.c.b16 %v9725, %v9723
    %9790 = vmatprep.subr.bf16.mxu0 %v9727
    %9791 = vmatpush1.bf16.msra.mxu0 %v9726
    %9792 = vmatprep.subr.bf16.mxu0 %v9729
    %9793 = vmatpush1.bf16.msra.mxu0 %v9728
    %9794 = vmatprep.subr.bf16.mxu0 %v9731
    %9795 = vmatpush1.bf16.msra.mxu0 %v9730
    %9796 = vmatprep.subr.bf16.mxu0 %v9733
    %9797 = vmatpush1.bf16.msra.mxu0 %v9732
    %9798 = vmatprep.subr.bf16.mxu0 %v9735
    %9799 = vmatpush1.bf16.msra.mxu0 %v9734
    %9800 = vmatprep.subr.bf16.mxu0 %v9737
    %9801 = vmatpush1.bf16.msra.mxu0 %v9736
    %9802 = vmatprep.subr.bf16.mxu0 %v9739
    %9803 = vmatpush1.bf16.msra.mxu0 %v9738
    %9804 = vmatprep.subr.bf16.mxu0 %v9741
    %9805 = vmatpush1.bf16.msra.mxu0 %v9740
    %9806 = vmatprep.subr.bf16.mxu0 %v9743
    %9807 = vmatpush1.bf16.msra.mxu0 %v9742
    %9808 = vmatprep.subr.bf16.mxu0 %v9745
    %9809 = vmatpush1.bf16.msra.mxu0 %v9744
    %9810 = vmatprep.subr.bf16.mxu0 %v9747
    %9811 = vmatpush1.bf16.msra.mxu0 %v9746
    %9812 = vmatprep.subr.bf16.mxu0 %v9749
    %9813 = vmatpush1.bf16.msra.mxu0 %v9748
    %9814 = vmatprep.subr.bf16.mxu0 %v9751
    %9815 = vmatpush1.bf16.msra.mxu0 %v9750
    %9816 = vmatprep.subr.bf16.mxu0 %v9753
    %9817 = vmatpush1.bf16.msra.mxu0 %v9752
    %9818 = vmatprep.subr.bf16.mxu0 %v9755
    %9819 = vmatpush1.bf16.msra.mxu0 %v9754
    %9820 = vmatprep.subr.bf16.mxu0 %v9757
    %9821 = vmatpush1.bf16.msra.mxu0 %v9756
    %9822 = vmatprep.mubr.bf16.mxu0 %v9583
    %9823 = vmatmul.mubr.bf16.gmra.mrb[0].mxu0 %v9582
    %v9824 = vpop.f32.mrb[0].mxu0
    %v9825 = vadd.f32 %v9623, %v9824
    %v9826 = vpop.f32.mrb[0].mxu0
    %v9827 = vadd.f32 %v9627, %v9826
    %v9828 = vpop.f32.mrb[0].mxu0
    %v9829 = vpop.f32.mrb[0].mxu0
    %9830 = vdwg.mxu0
    %v9831 = vadd.f32 %v9331, %v9825
    %v9832 = vadd.f32 %v9332, %v9827
    %s9833 = scalar_lea.vmem [#allocation14], 4
    %v9834 = vld [vmem:[%s9833] sm:$0x3]
    %s9835 = scalar_lea.vmem [#allocation16], 4
    %v9836 = vld [vmem:[%s9835] sm:$0x3]
    %v9837 = vadd.f32 %v9831, %v9832
    %9838 = vadd.xlane.f32.xlu0 %v9837
    %v9839 = vpop.xlane.xlu0 %9838
    %v9840 = vmul.f32 %v9839, %v933
    %v9841 = vsub.f32 %v9831, %v9840
    %v9842 = vsub.f32 %v9832, %v9840
    %v9843 = vmul.f32 %v9841, %v9841
    %v9844 = vmul.f32 %v9842, %v9842
    %v9845 = vadd.f32 %v9843, %v9844
    %9846 = vadd.xlane.f32.xlu0 %v9845
    %v9847 = vpop.xlane.xlu0 %9846
    %v9848 = vmul.f32 %v9847, %v933
    %v9849 = vadd.f32 %v9848, 1e-05
    %v9850 = vrsqrt.pop %v9849
    %v9851 = vmul.f32 %v9841, %v9850
    %v9852 = vmul.f32 %v9842, %v9850
    %v9854 = vlaneseq
    %v9855 = vshrl.u32 %v9854, 7
    %v9856 = vsub.s32 0, %v9855
    %v9857 = vrot.slane %v9834, %v9856
    %v9858 = vlaneseq
    %v9859 = vshrl.u32 %v9858, 7
    %v9860 = vsub.s32 1, %v9859
    %v9861 = vrot.slane %v9834, %v9860
    %v9864 = vmul.f32 %v9851, %v9857
    %v9865 = vmul.f32 %v9852, %v9861
    %v9867 = vlaneseq
    %v9868 = vshrl.u32 %v9867, 7
    %v9869 = vsub.s32 0, %v9868
    %v9870 = vrot.slane %v9836, %v9869
    %v9871 = vlaneseq
    %v9872 = vshrl.u32 %v9871, 7
    %v9873 = vsub.s32 1, %v9872
    %v9874 = vrot.slane %v9836, %v9873
    %v9877 = vadd.f32 %v9864, %v9870
    %v9878 = vadd.f32 %v9865, %v9874
    %v9879 = vpack.c.bf16 %v9877, %v9877
    %v9880 = vpack.c.bf16 %v9878, %v9878
    %s9881 = scalar_lea.vmem [#allocation17], 4096
    %v9882 = vld [vmem:[%s9881] sm:$0xff]
    %v9883 = vld [vmem:[%s9881 + $0x8] sm:$0xff]
    %v9884 = vld [vmem:[%s9881 + $0x10] sm:$0xff]
    %v9885 = vld [vmem:[%s9881 + $0x18] sm:$0xff]
    %v9886 = vld [vmem:[%s9881 + $0x20] sm:$0xff]
    %v9887 = vld [vmem:[%s9881 + $0x28] sm:$0xff]
    %v9888 = vld [vmem:[%s9881 + $0x30] sm:$0xff]
    %v9889 = vld [vmem:[%s9881 + $0x38] sm:$0xff]
    %v9890 = vld [vmem:[%s9881 + $0x40] sm:$0xff]
    %v9891 = vld [vmem:[%s9881 + $0x48] sm:$0xff]
    %v9892 = vld [vmem:[%s9881 + $0x50] sm:$0xff]
    %v9893 = vld [vmem:[%s9881 + $0x58] sm:$0xff]
    %v9894 = vld [vmem:[%s9881 + $0x60] sm:$0xff]
    %v9895 = vld [vmem:[%s9881 + $0x68] sm:$0xff]
    %v9896 = vld [vmem:[%s9881 + $0x70] sm:$0xff]
    %v9897 = vld [vmem:[%s9881 + $0x78] sm:$0xff]
    %v9898 = vld [vmem:[%s9881 + $0x80] sm:$0xff]
    %v9899 = vld [vmem:[%s9881 + $0x88] sm:$0xff]
    %v9900 = vld [vmem:[%s9881 + $0x90] sm:$0xff]
    %v9901 = vld [vmem:[%s9881 + $0x98] sm:$0xff]
    %v9902 = vld [vmem:[%s9881 + $0xa0] sm:$0xff]
    %v9903 = vld [vmem:[%s9881 + $0xa8] sm:$0xff]
    %v9904 = vld [vmem:[%s9881 + $0xb0] sm:$0xff]
    %v9905 = vld [vmem:[%s9881 + $0xb8] sm:$0xff]
    %v9906 = vld [vmem:[%s9881 + $0xc0] sm:$0xff]
    %v9907 = vld [vmem:[%s9881 + $0xc8] sm:$0xff]
    %v9908 = vld [vmem:[%s9881 + $0xd0] sm:$0xff]
    %v9909 = vld [vmem:[%s9881 + $0xd8] sm:$0xff]
    %v9910 = vld [vmem:[%s9881 + $0xe0] sm:$0xff]
    %v9911 = vld [vmem:[%s9881 + $0xe8] sm:$0xff]
    %v9912 = vld [vmem:[%s9881 + $0xf0] sm:$0xff]
    %v9913 = vld [vmem:[%s9881 + $0xf8] sm:$0xff]
    %v9914 = vld [vmem:[%s9881 + $0x100] sm:$0xff]
    %v9915 = vld [vmem:[%s9881 + $0x108] sm:$0xff]
    %v9916 = vld [vmem:[%s9881 + $0x110] sm:$0xff]
    %v9917 = vld [vmem:[%s9881 + $0x118] sm:$0xff]
    %v9918 = vld [vmem:[%s9881 + $0x120] sm:$0xff]
    %v9919 = vld [vmem:[%s9881 + $0x128] sm:$0xff]
    %v9920 = vld [vmem:[%s9881 + $0x130] sm:$0xff]
    %v9921 = vld [vmem:[%s9881 + $0x138] sm:$0xff]
    %v9922 = vld [vmem:[%s9881 + $0x140] sm:$0xff]
    %v9923 = vld [vmem:[%s9881 + $0x148] sm:$0xff]
    %v9924 = vld [vmem:[%s9881 + $0x150] sm:$0xff]
    %v9925 = vld [vmem:[%s9881 + $0x158] sm:$0xff]
    %v9926 = vld [vmem:[%s9881 + $0x160] sm:$0xff]
    %v9927 = vld [vmem:[%s9881 + $0x168] sm:$0xff]
    %v9928 = vld [vmem:[%s9881 + $0x170] sm:$0xff]
    %v9929 = vld [vmem:[%s9881 + $0x178] sm:$0xff]
    %v9930 = vld [vmem:[%s9881 + $0x180] sm:$0xff]
    %v9931 = vld [vmem:[%s9881 + $0x188] sm:$0xff]
    %v9932 = vld [vmem:[%s9881 + $0x190] sm:$0xff]
    %v9933 = vld [vmem:[%s9881 + $0x198] sm:$0xff]
    %v9934 = vld [vmem:[%s9881 + $0x1a0] sm:$0xff]
    %v9935 = vld [vmem:[%s9881 + $0x1a8] sm:$0xff]
    %v9936 = vld [vmem:[%s9881 + $0x1b0] sm:$0xff]
    %v9937 = vld [vmem:[%s9881 + $0x1b8] sm:$0xff]
    %v9938 = vld [vmem:[%s9881 + $0x1c0] sm:$0xff]
    %v9939 = vld [vmem:[%s9881 + $0x1c8] sm:$0xff]
    %v9940 = vld [vmem:[%s9881 + $0x1d0] sm:$0xff]
    %v9941 = vld [vmem:[%s9881 + $0x1d8] sm:$0xff]
    %v9942 = vld [vmem:[%s9881 + $0x1e0] sm:$0xff]
    %v9943 = vld [vmem:[%s9881 + $0x1e8] sm:$0xff]
    %v9944 = vld [vmem:[%s9881 + $0x1f0] sm:$0xff]
    %v9945 = vld [vmem:[%s9881 + $0x1f8] sm:$0xff]
    %v9946 = vld [vmem:[%s9881 + $0x200] sm:$0xff]
    %v9947 = vld [vmem:[%s9881 + $0x208] sm:$0xff]
    %v9948 = vld [vmem:[%s9881 + $0x210] sm:$0xff]
    %v9949 = vld [vmem:[%s9881 + $0x218] sm:$0xff]
    %v9950 = vld [vmem:[%s9881 + $0x220] sm:$0xff]
    %v9951 = vld [vmem:[%s9881 + $0x228] sm:$0xff]
    %v9952 = vld [vmem:[%s9881 + $0x230] sm:$0xff]
    %v9953 = vld [vmem:[%s9881 + $0x238] sm:$0xff]
    %v9954 = vld [vmem:[%s9881 + $0x240] sm:$0xff]
    %v9955 = vld [vmem:[%s9881 + $0x248] sm:$0xff]
    %v9956 = vld [vmem:[%s9881 + $0x250] sm:$0xff]
    %v9957 = vld [vmem:[%s9881 + $0x258] sm:$0xff]
    %v9958 = vld [vmem:[%s9881 + $0x260] sm:$0xff]
    %v9959 = vld [vmem:[%s9881 + $0x268] sm:$0xff]
    %v9960 = vld [vmem:[%s9881 + $0x270] sm:$0xff]
    %v9961 = vld [vmem:[%s9881 + $0x278] sm:$0xff]
    %v9962 = vld [vmem:[%s9881 + $0x280] sm:$0xff]
    %v9963 = vld [vmem:[%s9881 + $0x288] sm:$0xff]
    %v9964 = vld [vmem:[%s9881 + $0x290] sm:$0xff]
    %v9965 = vld [vmem:[%s9881 + $0x298] sm:$0xff]
    %v9966 = vld [vmem:[%s9881 + $0x2a0] sm:$0xff]
    %v9967 = vld [vmem:[%s9881 + $0x2a8] sm:$0xff]
    %v9968 = vld [vmem:[%s9881 + $0x2b0] sm:$0xff]
    %v9969 = vld [vmem:[%s9881 + $0x2b8] sm:$0xff]
    %v9970 = vld [vmem:[%s9881 + $0x2c0] sm:$0xff]
    %v9971 = vld [vmem:[%s9881 + $0x2c8] sm:$0xff]
    %v9972 = vld [vmem:[%s9881 + $0x2d0] sm:$0xff]
    %v9973 = vld [vmem:[%s9881 + $0x2d8] sm:$0xff]
    %v9974 = vld [vmem:[%s9881 + $0x2e0] sm:$0xff]
    %v9975 = vld [vmem:[%s9881 + $0x2e8] sm:$0xff]
    %v9976 = vld [vmem:[%s9881 + $0x2f0] sm:$0xff]
    %v9977 = vld [vmem:[%s9881 + $0x2f8] sm:$0xff]
    %v9978 = vld [vmem:[%s9881 + $0x300] sm:$0xff]
    %v9979 = vld [vmem:[%s9881 + $0x308] sm:$0xff]
    %v9980 = vld [vmem:[%s9881 + $0x310] sm:$0xff]
    %v9981 = vld [vmem:[%s9881 + $0x318] sm:$0xff]
    %v9982 = vld [vmem:[%s9881 + $0x320] sm:$0xff]
    %v9983 = vld [vmem:[%s9881 + $0x328] sm:$0xff]
    %v9984 = vld [vmem:[%s9881 + $0x330] sm:$0xff]
    %v9985 = vld [vmem:[%s9881 + $0x338] sm:$0xff]
    %v9986 = vld [vmem:[%s9881 + $0x340] sm:$0xff]
    %v9987 = vld [vmem:[%s9881 + $0x348] sm:$0xff]
    %v9988 = vld [vmem:[%s9881 + $0x350] sm:$0xff]
    %v9989 = vld [vmem:[%s9881 + $0x358] sm:$0xff]
    %v9990 = vld [vmem:[%s9881 + $0x360] sm:$0xff]
    %v9991 = vld [vmem:[%s9881 + $0x368] sm:$0xff]
    %v9992 = vld [vmem:[%s9881 + $0x370] sm:$0xff]
    %v9993 = vld [vmem:[%s9881 + $0x378] sm:$0xff]
    %v9994 = vld [vmem:[%s9881 + $0x380] sm:$0xff]
    %v9995 = vld [vmem:[%s9881 + $0x388] sm:$0xff]
    %v9996 = vld [vmem:[%s9881 + $0x390] sm:$0xff]
    %v9997 = vld [vmem:[%s9881 + $0x398] sm:$0xff]
    %v9998 = vld [vmem:[%s9881 + $0x3a0] sm:$0xff]
    %v9999 = vld [vmem:[%s9881 + $0x3a8] sm:$0xff]
    %v10000 = vld [vmem:[%s9881 + $0x3b0] sm:$0xff]
    %v10001 = vld [vmem:[%s9881 + $0x3b8] sm:$0xff]
    %v10002 = vld [vmem:[%s9881 + $0x3c0] sm:$0xff]
    %v10003 = vld [vmem:[%s9881 + $0x3c8] sm:$0xff]
    %v10004 = vld [vmem:[%s9881 + $0x3d0] sm:$0xff]
    %v10005 = vld [vmem:[%s9881 + $0x3d8] sm:$0xff]
    %v10006 = vld [vmem:[%s9881 + $0x3e0] sm:$0xff]
    %v10007 = vld [vmem:[%s9881 + $0x3e8] sm:$0xff]
    %v10008 = vld [vmem:[%s9881 + $0x3f0] sm:$0xff]
    %v10009 = vld [vmem:[%s9881 + $0x3f8] sm:$0xff]
    %v10010 = vld [vmem:[%s9881 + $0x400] sm:$0xff]
    %v10011 = vld [vmem:[%s9881 + $0x408] sm:$0xff]
    %v10012 = vld [vmem:[%s9881 + $0x410] sm:$0xff]
    %v10013 = vld [vmem:[%s9881 + $0x418] sm:$0xff]
    %v10014 = vld [vmem:[%s9881 + $0x420] sm:$0xff]
    %v10015 = vld [vmem:[%s9881 + $0x428] sm:$0xff]
    %v10016 = vld [vmem:[%s9881 + $0x430] sm:$0xff]
    %v10017 = vld [vmem:[%s9881 + $0x438] sm:$0xff]
    %v10018 = vld [vmem:[%s9881 + $0x440] sm:$0xff]
    %v10019 = vld [vmem:[%s9881 + $0x448] sm:$0xff]
    %v10020 = vld [vmem:[%s9881 + $0x450] sm:$0xff]
    %v10021 = vld [vmem:[%s9881 + $0x458] sm:$0xff]
    %v10022 = vld [vmem:[%s9881 + $0x460] sm:$0xff]
    %v10023 = vld [vmem:[%s9881 + $0x468] sm:$0xff]
    %v10024 = vld [vmem:[%s9881 + $0x470] sm:$0xff]
    %v10025 = vld [vmem:[%s9881 + $0x478] sm:$0xff]
    %v10026 = vld [vmem:[%s9881 + $0x480] sm:$0xff]
    %v10027 = vld [vmem:[%s9881 + $0x488] sm:$0xff]
    %v10028 = vld [vmem:[%s9881 + $0x490] sm:$0xff]
    %v10029 = vld [vmem:[%s9881 + $0x498] sm:$0xff]
    %v10030 = vld [vmem:[%s9881 + $0x4a0] sm:$0xff]
    %v10031 = vld [vmem:[%s9881 + $0x4a8] sm:$0xff]
    %v10032 = vld [vmem:[%s9881 + $0x4b0] sm:$0xff]
    %v10033 = vld [vmem:[%s9881 + $0x4b8] sm:$0xff]
    %v10034 = vld [vmem:[%s9881 + $0x4c0] sm:$0xff]
    %v10035 = vld [vmem:[%s9881 + $0x4c8] sm:$0xff]
    %v10036 = vld [vmem:[%s9881 + $0x4d0] sm:$0xff]
    %v10037 = vld [vmem:[%s9881 + $0x4d8] sm:$0xff]
    %v10038 = vld [vmem:[%s9881 + $0x4e0] sm:$0xff]
    %v10039 = vld [vmem:[%s9881 + $0x4e8] sm:$0xff]
    %v10040 = vld [vmem:[%s9881 + $0x4f0] sm:$0xff]
    %v10041 = vld [vmem:[%s9881 + $0x4f8] sm:$0xff]
    %v10042 = vld [vmem:[%s9881 + $0x500] sm:$0xff]
    %v10043 = vld [vmem:[%s9881 + $0x508] sm:$0xff]
    %v10044 = vld [vmem:[%s9881 + $0x510] sm:$0xff]
    %v10045 = vld [vmem:[%s9881 + $0x518] sm:$0xff]
    %v10046 = vld [vmem:[%s9881 + $0x520] sm:$0xff]
    %v10047 = vld [vmem:[%s9881 + $0x528] sm:$0xff]
    %v10048 = vld [vmem:[%s9881 + $0x530] sm:$0xff]
    %v10049 = vld [vmem:[%s9881 + $0x538] sm:$0xff]
    %v10050 = vld [vmem:[%s9881 + $0x540] sm:$0xff]
    %v10051 = vld [vmem:[%s9881 + $0x548] sm:$0xff]
    %v10052 = vld [vmem:[%s9881 + $0x550] sm:$0xff]
    %v10053 = vld [vmem:[%s9881 + $0x558] sm:$0xff]
    %v10054 = vld [vmem:[%s9881 + $0x560] sm:$0xff]
    %v10055 = vld [vmem:[%s9881 + $0x568] sm:$0xff]
    %v10056 = vld [vmem:[%s9881 + $0x570] sm:$0xff]
    %v10057 = vld [vmem:[%s9881 + $0x578] sm:$0xff]
    %v10058 = vld [vmem:[%s9881 + $0x580] sm:$0xff]
    %v10059 = vld [vmem:[%s9881 + $0x588] sm:$0xff]
    %v10060 = vld [vmem:[%s9881 + $0x590] sm:$0xff]
    %v10061 = vld [vmem:[%s9881 + $0x598] sm:$0xff]
    %v10062 = vld [vmem:[%s9881 + $0x5a0] sm:$0xff]
    %v10063 = vld [vmem:[%s9881 + $0x5a8] sm:$0xff]
    %v10064 = vld [vmem:[%s9881 + $0x5b0] sm:$0xff]
    %v10065 = vld [vmem:[%s9881 + $0x5b8] sm:$0xff]
    %v10066 = vld [vmem:[%s9881 + $0x5c0] sm:$0xff]
    %v10067 = vld [vmem:[%s9881 + $0x5c8] sm:$0xff]
    %v10068 = vld [vmem:[%s9881 + $0x5d0] sm:$0xff]
    %v10069 = vld [vmem:[%s9881 + $0x5d8] sm:$0xff]
    %v10070 = vld [vmem:[%s9881 + $0x5e0] sm:$0xff]
    %v10071 = vld [vmem:[%s9881 + $0x5e8] sm:$0xff]
    %v10072 = vld [vmem:[%s9881 + $0x5f0] sm:$0xff]
    %v10073 = vld [vmem:[%s9881 + $0x5f8] sm:$0xff]
    %v10074 = vld [vmem:[%s9881 + $0x600] sm:$0xff]
    %v10075 = vld [vmem:[%s9881 + $0x608] sm:$0xff]
    %v10076 = vld [vmem:[%s9881 + $0x610] sm:$0xff]
    %v10077 = vld [vmem:[%s9881 + $0x618] sm:$0xff]
    %v10078 = vld [vmem:[%s9881 + $0x620] sm:$0xff]
    %v10079 = vld [vmem:[%s9881 + $0x628] sm:$0xff]
    %v10080 = vld [vmem:[%s9881 + $0x630] sm:$0xff]
    %v10081 = vld [vmem:[%s9881 + $0x638] sm:$0xff]
    %v10082 = vld [vmem:[%s9881 + $0x640] sm:$0xff]
    %v10083 = vld [vmem:[%s9881 + $0x648] sm:$0xff]
    %v10084 = vld [vmem:[%s9881 + $0x650] sm:$0xff]
    %v10085 = vld [vmem:[%s9881 + $0x658] sm:$0xff]
    %v10086 = vld [vmem:[%s9881 + $0x660] sm:$0xff]
    %v10087 = vld [vmem:[%s9881 + $0x668] sm:$0xff]
    %v10088 = vld [vmem:[%s9881 + $0x670] sm:$0xff]
    %v10089 = vld [vmem:[%s9881 + $0x678] sm:$0xff]
    %v10090 = vld [vmem:[%s9881 + $0x680] sm:$0xff]
    %v10091 = vld [vmem:[%s9881 + $0x688] sm:$0xff]
    %v10092 = vld [vmem:[%s9881 + $0x690] sm:$0xff]
    %v10093 = vld [vmem:[%s9881 + $0x698] sm:$0xff]
    %v10094 = vld [vmem:[%s9881 + $0x6a0] sm:$0xff]
    %v10095 = vld [vmem:[%s9881 + $0x6a8] sm:$0xff]
    %v10096 = vld [vmem:[%s9881 + $0x6b0] sm:$0xff]
    %v10097 = vld [vmem:[%s9881 + $0x6b8] sm:$0xff]
    %v10098 = vld [vmem:[%s9881 + $0x6c0] sm:$0xff]
    %v10099 = vld [vmem:[%s9881 + $0x6c8] sm:$0xff]
    %v10100 = vld [vmem:[%s9881 + $0x6d0] sm:$0xff]
    %v10101 = vld [vmem:[%s9881 + $0x6d8] sm:$0xff]
    %v10102 = vld [vmem:[%s9881 + $0x6e0] sm:$0xff]
    %v10103 = vld [vmem:[%s9881 + $0x6e8] sm:$0xff]
    %v10104 = vld [vmem:[%s9881 + $0x6f0] sm:$0xff]
    %v10105 = vld [vmem:[%s9881 + $0x6f8] sm:$0xff]
    %v10106 = vld [vmem:[%s9881 + $0x700] sm:$0xff]
    %v10107 = vld [vmem:[%s9881 + $0x708] sm:$0xff]
    %v10108 = vld [vmem:[%s9881 + $0x710] sm:$0xff]
    %v10109 = vld [vmem:[%s9881 + $0x718] sm:$0xff]
    %v10110 = vld [vmem:[%s9881 + $0x720] sm:$0xff]
    %v10111 = vld [vmem:[%s9881 + $0x728] sm:$0xff]
    %v10112 = vld [vmem:[%s9881 + $0x730] sm:$0xff]
    %v10113 = vld [vmem:[%s9881 + $0x738] sm:$0xff]
    %v10114 = vld [vmem:[%s9881 + $0x740] sm:$0xff]
    %v10115 = vld [vmem:[%s9881 + $0x748] sm:$0xff]
    %v10116 = vld [vmem:[%s9881 + $0x750] sm:$0xff]
    %v10117 = vld [vmem:[%s9881 + $0x758] sm:$0xff]
    %v10118 = vld [vmem:[%s9881 + $0x760] sm:$0xff]
    %v10119 = vld [vmem:[%s9881 + $0x768] sm:$0xff]
    %v10120 = vld [vmem:[%s9881 + $0x770] sm:$0xff]
    %v10121 = vld [vmem:[%s9881 + $0x778] sm:$0xff]
    %v10122 = vld [vmem:[%s9881 + $0x780] sm:$0xff]
    %v10123 = vld [vmem:[%s9881 + $0x788] sm:$0xff]
    %v10124 = vld [vmem:[%s9881 + $0x790] sm:$0xff]
    %v10125 = vld [vmem:[%s9881 + $0x798] sm:$0xff]
    %v10126 = vld [vmem:[%s9881 + $0x7a0] sm:$0xff]
    %v10127 = vld [vmem:[%s9881 + $0x7a8] sm:$0xff]
    %v10128 = vld [vmem:[%s9881 + $0x7b0] sm:$0xff]
    %v10129 = vld [vmem:[%s9881 + $0x7b8] sm:$0xff]
    %v10130 = vld [vmem:[%s9881 + $0x7c0] sm:$0xff]
    %v10131 = vld [vmem:[%s9881 + $0x7c8] sm:$0xff]
    %v10132 = vld [vmem:[%s9881 + $0x7d0] sm:$0xff]
    %v10133 = vld [vmem:[%s9881 + $0x7d8] sm:$0xff]
    %v10134 = vld [vmem:[%s9881 + $0x7e0] sm:$0xff]
    %v10135 = vld [vmem:[%s9881 + $0x7e8] sm:$0xff]
    %v10136 = vld [vmem:[%s9881 + $0x7f0] sm:$0xff]
    %v10137 = vld [vmem:[%s9881 + $0x7f8] sm:$0xff]
    %s10138 = scalar_lea.vmem [#allocation19], 32
    %v10139 = vld [vmem:[%s10138] sm:$0xff]
    %v10140 = vld [vmem:[%s10138 + $0x8] sm:$0xff]
    %v10143 = vlaneseq
    %v10144 = vshrl.u32 %v10143, 7
    %v10145 = vsub.s32 0, %v10144
    %v10146 = vrot.slane %v10139, %v10145
    %v10147 = vlaneseq
    %v10148 = vshrl.u32 %v10147, 7
    %v10149 = vsub.s32 1, %v10148
    %v10150 = vrot.slane %v10139, %v10149
    %v10151 = vlaneseq
    %v10152 = vshrl.u32 %v10151, 7
    %v10153 = vsub.s32 2, %v10152
    %v10154 = vrot.slane %v10139, %v10153
    %v10155 = vlaneseq
    %v10156 = vshrl.u32 %v10155, 7
    %v10157 = vsub.s32 3, %v10156
    %v10158 = vrot.slane %v10139, %v10157
    %v10159 = vlaneseq
    %v10160 = vshrl.u32 %v10159, 7
    %v10161 = vsub.s32 4, %v10160
    %v10162 = vrot.slane %v10139, %v10161
    %v10163 = vlaneseq
    %v10164 = vshrl.u32 %v10163, 7
    %v10165 = vsub.s32 5, %v10164
    %v10166 = vrot.slane %v10139, %v10165
    %v10167 = vlaneseq
    %v10168 = vshrl.u32 %v10167, 7
    %v10169 = vsub.s32 6, %v10168
    %v10170 = vrot.slane %v10139, %v10169
    %v10171 = vlaneseq
    %v10172 = vshrl.u32 %v10171, 7
    %v10173 = vsub.s32 7, %v10172
    %v10174 = vrot.slane %v10139, %v10173
    %v10175 = vlaneseq
    %v10176 = vshrl.u32 %v10175, 7
    %v10177 = vsub.s32 0, %v10176
    %v10178 = vrot.slane %v10140, %v10177
    %v10179 = vlaneseq
    %v10180 = vshrl.u32 %v10179, 7
    %v10181 = vsub.s32 1, %v10180
    %v10182 = vrot.slane %v10140, %v10181
    %v10183 = vlaneseq
    %v10184 = vshrl.u32 %v10183, 7
    %v10185 = vsub.s32 2, %v10184
    %v10186 = vrot.slane %v10140, %v10185
    %v10187 = vlaneseq
    %v10188 = vshrl.u32 %v10187, 7
    %v10189 = vsub.s32 3, %v10188
    %v10190 = vrot.slane %v10140, %v10189
    %v10191 = vlaneseq
    %v10192 = vshrl.u32 %v10191, 7
    %v10193 = vsub.s32 4, %v10192
    %v10194 = vrot.slane %v10140, %v10193
    %v10195 = vlaneseq
    %v10196 = vshrl.u32 %v10195, 7
    %v10197 = vsub.s32 5, %v10196
    %v10198 = vrot.slane %v10140, %v10197
    %v10199 = vlaneseq
    %v10200 = vshrl.u32 %v10199, 7
    %v10201 = vsub.s32 6, %v10200
    %v10202 = vrot.slane %v10140, %v10201
    %v10203 = vlaneseq
    %v10204 = vshrl.u32 %v10203, 7
    %v10205 = vsub.s32 7, %v10204
    %v10206 = vrot.slane %v10140, %v10205
    %v10479 = vunpack.c.l.b16 %v9882
    %v10480 = vunpack.c.h.b16 %v9882
    %v10481 = vunpack.c.l.b16 %v9883
    %v10482 = vunpack.c.h.b16 %v9883
    %v10483 = vunpack.c.l.b16 %v9884
    %v10484 = vunpack.c.h.b16 %v9884
    %v10485 = vunpack.c.l.b16 %v9885
    %v10486 = vunpack.c.h.b16 %v9885
    %v10487 = vunpack.c.l.b16 %v9886
    %v10488 = vunpack.c.h.b16 %v9886
    %v10489 = vunpack.c.l.b16 %v9887
    %v10490 = vunpack.c.h.b16 %v9887
    %v10491 = vunpack.c.l.b16 %v9888
    %v10492 = vunpack.c.h.b16 %v9888
    %v10493 = vunpack.c.l.b16 %v9889
    %v10494 = vunpack.c.h.b16 %v9889
    %v10495 = vunpack.c.l.b16 %v9890
    %v10496 = vunpack.c.h.b16 %v9890
    %v10497 = vunpack.c.l.b16 %v9891
    %v10498 = vunpack.c.h.b16 %v9891
    %v10499 = vunpack.c.l.b16 %v9892
    %v10500 = vunpack.c.h.b16 %v9892
    %v10501 = vunpack.c.l.b16 %v9893
    %v10502 = vunpack.c.h.b16 %v9893
    %v10503 = vunpack.c.l.b16 %v9894
    %v10504 = vunpack.c.h.b16 %v9894
    %v10505 = vunpack.c.l.b16 %v9895
    %v10506 = vunpack.c.h.b16 %v9895
    %v10507 = vunpack.c.l.b16 %v9896
    %v10508 = vunpack.c.h.b16 %v9896
    %v10509 = vunpack.c.l.b16 %v9897
    %v10510 = vunpack.c.h.b16 %v9897
    %v10511 = vunpack.c.l.b16 %v9898
    %v10512 = vunpack.c.h.b16 %v9898
    %v10513 = vunpack.c.l.b16 %v9899
    %v10514 = vunpack.c.h.b16 %v9899
    %v10515 = vunpack.c.l.b16 %v9900
    %v10516 = vunpack.c.h.b16 %v9900
    %v10517 = vunpack.c.l.b16 %v9901
    %v10518 = vunpack.c.h.b16 %v9901
    %v10519 = vunpack.c.l.b16 %v9902
    %v10520 = vunpack.c.h.b16 %v9902
    %v10521 = vunpack.c.l.b16 %v9903
    %v10522 = vunpack.c.h.b16 %v9903
    %v10523 = vunpack.c.l.b16 %v9904
    %v10524 = vunpack.c.h.b16 %v9904
    %v10525 = vunpack.c.l.b16 %v9905
    %v10526 = vunpack.c.h.b16 %v9905
    %v10527 = vunpack.c.l.b16 %v9906
    %v10528 = vunpack.c.h.b16 %v9906
    %v10529 = vunpack.c.l.b16 %v9907
    %v10530 = vunpack.c.h.b16 %v9907
    %v10531 = vunpack.c.l.b16 %v9908
    %v10532 = vunpack.c.h.b16 %v9908
    %v10533 = vunpack.c.l.b16 %v9909
    %v10534 = vunpack.c.h.b16 %v9909
    %v10535 = vunpack.c.l.b16 %v9910
    %v10536 = vunpack.c.h.b16 %v9910
    %v10537 = vunpack.c.l.b16 %v9911
    %v10538 = vunpack.c.h.b16 %v9911
    %v10539 = vunpack.c.l.b16 %v9912
    %v10540 = vunpack.c.h.b16 %v9912
    %v10541 = vunpack.c.l.b16 %v9913
    %v10542 = vunpack.c.h.b16 %v9913
    %v10543 = vunpack.c.l.b16 %v9914
    %v10544 = vunpack.c.h.b16 %v9914
    %v10545 = vunpack.c.l.b16 %v9915
    %v10546 = vunpack.c.h.b16 %v9915
    %v10547 = vunpack.c.l.b16 %v9916
    %v10548 = vunpack.c.h.b16 %v9916
    %v10549 = vunpack.c.l.b16 %v9917
    %v10550 = vunpack.c.h.b16 %v9917
    %v10551 = vunpack.c.l.b16 %v9918
    %v10552 = vunpack.c.h.b16 %v9918
    %v10553 = vunpack.c.l.b16 %v9919
    %v10554 = vunpack.c.h.b16 %v9919
    %v10555 = vunpack.c.l.b16 %v9920
    %v10556 = vunpack.c.h.b16 %v9920
    %v10557 = vunpack.c.l.b16 %v9921
    %v10558 = vunpack.c.h.b16 %v9921
    %v10559 = vunpack.c.l.b16 %v9922
    %v10560 = vunpack.c.h.b16 %v9922
    %v10561 = vunpack.c.l.b16 %v9923
    %v10562 = vunpack.c.h.b16 %v9923
    %v10563 = vunpack.c.l.b16 %v9924
    %v10564 = vunpack.c.h.b16 %v9924
    %v10565 = vunpack.c.l.b16 %v9925
    %v10566 = vunpack.c.h.b16 %v9925
    %v10567 = vunpack.c.l.b16 %v9926
    %v10568 = vunpack.c.h.b16 %v9926
    %v10569 = vunpack.c.l.b16 %v9927
    %v10570 = vunpack.c.h.b16 %v9927
    %v10571 = vunpack.c.l.b16 %v9928
    %v10572 = vunpack.c.h.b16 %v9928
    %v10573 = vunpack.c.l.b16 %v9929
    %v10574 = vunpack.c.h.b16 %v9929
    %v10575 = vunpack.c.l.b16 %v9930
    %v10576 = vunpack.c.h.b16 %v9930
    %v10577 = vunpack.c.l.b16 %v9931
    %v10578 = vunpack.c.h.b16 %v9931
    %v10579 = vunpack.c.l.b16 %v9932
    %v10580 = vunpack.c.h.b16 %v9932
    %v10581 = vunpack.c.l.b16 %v9933
    %v10582 = vunpack.c.h.b16 %v9933
    %v10583 = vunpack.c.l.b16 %v9934
    %v10584 = vunpack.c.h.b16 %v9934
    %v10585 = vunpack.c.l.b16 %v9935
    %v10586 = vunpack.c.h.b16 %v9935
    %v10587 = vunpack.c.l.b16 %v9936
    %v10588 = vunpack.c.h.b16 %v9936
    %v10589 = vunpack.c.l.b16 %v9937
    %v10590 = vunpack.c.h.b16 %v9937
    %v10591 = vunpack.c.l.b16 %v9938
    %v10592 = vunpack.c.h.b16 %v9938
    %v10593 = vunpack.c.l.b16 %v9939
    %v10594 = vunpack.c.h.b16 %v9939
    %v10595 = vunpack.c.l.b16 %v9940
    %v10596 = vunpack.c.h.b16 %v9940
    %v10597 = vunpack.c.l.b16 %v9941
    %v10598 = vunpack.c.h.b16 %v9941
    %v10599 = vunpack.c.l.b16 %v9942
    %v10600 = vunpack.c.h.b16 %v9942
    %v10601 = vunpack.c.l.b16 %v9943
    %v10602 = vunpack.c.h.b16 %v9943
    %v10603 = vunpack.c.l.b16 %v9944
    %v10604 = vunpack.c.h.b16 %v9944
    %v10605 = vunpack.c.l.b16 %v9945
    %v10606 = vunpack.c.h.b16 %v9945
    %v10607 = vunpack.c.l.b16 %v9946
    %v10608 = vunpack.c.h.b16 %v9946
    %v10609 = vunpack.c.l.b16 %v9947
    %v10610 = vunpack.c.h.b16 %v9947
    %v10611 = vunpack.c.l.b16 %v9948
    %v10612 = vunpack.c.h.b16 %v9948
    %v10613 = vunpack.c.l.b16 %v9949
    %v10614 = vunpack.c.h.b16 %v9949
    %v10615 = vunpack.c.l.b16 %v9950
    %v10616 = vunpack.c.h.b16 %v9950
    %v10617 = vunpack.c.l.b16 %v9951
    %v10618 = vunpack.c.h.b16 %v9951
    %v10619 = vunpack.c.l.b16 %v9952
    %v10620 = vunpack.c.h.b16 %v9952
    %v10621 = vunpack.c.l.b16 %v9953
    %v10622 = vunpack.c.h.b16 %v9953
    %v10623 = vunpack.c.l.b16 %v9954
    %v10624 = vunpack.c.h.b16 %v9954
    %v10625 = vunpack.c.l.b16 %v9955
    %v10626 = vunpack.c.h.b16 %v9955
    %v10627 = vunpack.c.l.b16 %v9956
    %v10628 = vunpack.c.h.b16 %v9956
    %v10629 = vunpack.c.l.b16 %v9957
    %v10630 = vunpack.c.h.b16 %v9957
    %v10631 = vunpack.c.l.b16 %v9958
    %v10632 = vunpack.c.h.b16 %v9958
    %v10633 = vunpack.c.l.b16 %v9959
    %v10634 = vunpack.c.h.b16 %v9959
    %v10635 = vunpack.c.l.b16 %v9960
    %v10636 = vunpack.c.h.b16 %v9960
    %v10637 = vunpack.c.l.b16 %v9961
    %v10638 = vunpack.c.h.b16 %v9961
    %v10639 = vunpack.c.l.b16 %v9962
    %v10640 = vunpack.c.h.b16 %v9962
    %v10641 = vunpack.c.l.b16 %v9963
    %v10642 = vunpack.c.h.b16 %v9963
    %v10643 = vunpack.c.l.b16 %v9964
    %v10644 = vunpack.c.h.b16 %v9964
    %v10645 = vunpack.c.l.b16 %v9965
    %v10646 = vunpack.c.h.b16 %v9965
    %v10647 = vunpack.c.l.b16 %v9966
    %v10648 = vunpack.c.h.b16 %v9966
    %v10649 = vunpack.c.l.b16 %v9967
    %v10650 = vunpack.c.h.b16 %v9967
    %v10651 = vunpack.c.l.b16 %v9968
    %v10652 = vunpack.c.h.b16 %v9968
    %v10653 = vunpack.c.l.b16 %v9969
    %v10654 = vunpack.c.h.b16 %v9969
    %v10655 = vunpack.c.l.b16 %v9970
    %v10656 = vunpack.c.h.b16 %v9970
    %v10657 = vunpack.c.l.b16 %v9971
    %v10658 = vunpack.c.h.b16 %v9971
    %v10659 = vunpack.c.l.b16 %v9972
    %v10660 = vunpack.c.h.b16 %v9972
    %v10661 = vunpack.c.l.b16 %v9973
    %v10662 = vunpack.c.h.b16 %v9973
    %v10663 = vunpack.c.l.b16 %v9974
    %v10664 = vunpack.c.h.b16 %v9974
    %v10665 = vunpack.c.l.b16 %v9975
    %v10666 = vunpack.c.h.b16 %v9975
    %v10667 = vunpack.c.l.b16 %v9976
    %v10668 = vunpack.c.h.b16 %v9976
    %v10669 = vunpack.c.l.b16 %v9977
    %v10670 = vunpack.c.h.b16 %v9977
    %v10671 = vunpack.c.l.b16 %v9978
    %v10672 = vunpack.c.h.b16 %v9978
    %v10673 = vunpack.c.l.b16 %v9979
    %v10674 = vunpack.c.h.b16 %v9979
    %v10675 = vunpack.c.l.b16 %v9980
    %v10676 = vunpack.c.h.b16 %v9980
    %v10677 = vunpack.c.l.b16 %v9981
    %v10678 = vunpack.c.h.b16 %v9981
    %v10679 = vunpack.c.l.b16 %v9982
    %v10680 = vunpack.c.h.b16 %v9982
    %v10681 = vunpack.c.l.b16 %v9983
    %v10682 = vunpack.c.h.b16 %v9983
    %v10683 = vunpack.c.l.b16 %v9984
    %v10684 = vunpack.c.h.b16 %v9984
    %v10685 = vunpack.c.l.b16 %v9985
    %v10686 = vunpack.c.h.b16 %v9985
    %v10687 = vunpack.c.l.b16 %v9986
    %v10688 = vunpack.c.h.b16 %v9986
    %v10689 = vunpack.c.l.b16 %v9987
    %v10690 = vunpack.c.h.b16 %v9987
    %v10691 = vunpack.c.l.b16 %v9988
    %v10692 = vunpack.c.h.b16 %v9988
    %v10693 = vunpack.c.l.b16 %v9989
    %v10694 = vunpack.c.h.b16 %v9989
    %v10695 = vunpack.c.l.b16 %v9990
    %v10696 = vunpack.c.h.b16 %v9990
    %v10697 = vunpack.c.l.b16 %v9991
    %v10698 = vunpack.c.h.b16 %v9991
    %v10699 = vunpack.c.l.b16 %v9992
    %v10700 = vunpack.c.h.b16 %v9992
    %v10701 = vunpack.c.l.b16 %v9993
    %v10702 = vunpack.c.h.b16 %v9993
    %v10703 = vunpack.c.l.b16 %v9994
    %v10704 = vunpack.c.h.b16 %v9994
    %v10705 = vunpack.c.l.b16 %v9995
    %v10706 = vunpack.c.h.b16 %v9995
    %v10707 = vunpack.c.l.b16 %v9996
    %v10708 = vunpack.c.h.b16 %v9996
    %v10709 = vunpack.c.l.b16 %v9997
    %v10710 = vunpack.c.h.b16 %v9997
    %v10711 = vunpack.c.l.b16 %v9998
    %v10712 = vunpack.c.h.b16 %v9998
    %v10713 = vunpack.c.l.b16 %v9999
    %v10714 = vunpack.c.h.b16 %v9999
    %v10715 = vunpack.c.l.b16 %v10000
    %v10716 = vunpack.c.h.b16 %v10000
    %v10717 = vunpack.c.l.b16 %v10001
    %v10718 = vunpack.c.h.b16 %v10001
    %v10719 = vunpack.c.l.b16 %v10002
    %v10720 = vunpack.c.h.b16 %v10002
    %v10721 = vunpack.c.l.b16 %v10003
    %v10722 = vunpack.c.h.b16 %v10003
    %v10723 = vunpack.c.l.b16 %v10004
    %v10724 = vunpack.c.h.b16 %v10004
    %v10725 = vunpack.c.l.b16 %v10005
    %v10726 = vunpack.c.h.b16 %v10005
    %v10727 = vunpack.c.l.b16 %v10006
    %v10728 = vunpack.c.h.b16 %v10006
    %v10729 = vunpack.c.l.b16 %v10007
    %v10730 = vunpack.c.h.b16 %v10007
    %v10731 = vunpack.c.l.b16 %v10008
    %v10732 = vunpack.c.h.b16 %v10008
    %v10733 = vunpack.c.l.b16 %v10009
    %v10734 = vunpack.c.h.b16 %v10009
    %v10735 = vunpack.c.l.b16 %v10010
    %v10736 = vunpack.c.h.b16 %v10010
    %v10737 = vunpack.c.l.b16 %v10011
    %v10738 = vunpack.c.h.b16 %v10011
    %v10739 = vunpack.c.l.b16 %v10012
    %v10740 = vunpack.c.h.b16 %v10012
    %v10741 = vunpack.c.l.b16 %v10013
    %v10742 = vunpack.c.h.b16 %v10013
    %v10743 = vunpack.c.l.b16 %v10014
    %v10744 = vunpack.c.h.b16 %v10014
    %v10745 = vunpack.c.l.b16 %v10015
    %v10746 = vunpack.c.h.b16 %v10015
    %v10747 = vunpack.c.l.b16 %v10016
    %v10748 = vunpack.c.h.b16 %v10016
    %v10749 = vunpack.c.l.b16 %v10017
    %v10750 = vunpack.c.h.b16 %v10017
    %v10751 = vunpack.c.l.b16 %v10018
    %v10752 = vunpack.c.h.b16 %v10018
    %v10753 = vunpack.c.l.b16 %v10019
    %v10754 = vunpack.c.h.b16 %v10019
    %v10755 = vunpack.c.l.b16 %v10020
    %v10756 = vunpack.c.h.b16 %v10020
    %v10757 = vunpack.c.l.b16 %v10021
    %v10758 = vunpack.c.h.b16 %v10021
    %v10759 = vunpack.c.l.b16 %v10022
    %v10760 = vunpack.c.h.b16 %v10022
    %v10761 = vunpack.c.l.b16 %v10023
    %v10762 = vunpack.c.h.b16 %v10023
    %v10763 = vunpack.c.l.b16 %v10024
    %v10764 = vunpack.c.h.b16 %v10024
    %v10765 = vunpack.c.l.b16 %v10025
    %v10766 = vunpack.c.h.b16 %v10025
    %v10767 = vunpack.c.l.b16 %v10026
    %v10768 = vunpack.c.h.b16 %v10026
    %v10769 = vunpack.c.l.b16 %v10027
    %v10770 = vunpack.c.h.b16 %v10027
    %v10771 = vunpack.c.l.b16 %v10028
    %v10772 = vunpack.c.h.b16 %v10028
    %v10773 = vunpack.c.l.b16 %v10029
    %v10774 = vunpack.c.h.b16 %v10029
    %v10775 = vunpack.c.l.b16 %v10030
    %v10776 = vunpack.c.h.b16 %v10030
    %v10777 = vunpack.c.l.b16 %v10031
    %v10778 = vunpack.c.h.b16 %v10031
    %v10779 = vunpack.c.l.b16 %v10032
    %v10780 = vunpack.c.h.b16 %v10032
    %v10781 = vunpack.c.l.b16 %v10033
    %v10782 = vunpack.c.h.b16 %v10033
    %v10783 = vunpack.c.l.b16 %v10034
    %v10784 = vunpack.c.h.b16 %v10034
    %v10785 = vunpack.c.l.b16 %v10035
    %v10786 = vunpack.c.h.b16 %v10035
    %v10787 = vunpack.c.l.b16 %v10036
    %v10788 = vunpack.c.h.b16 %v10036
    %v10789 = vunpack.c.l.b16 %v10037
    %v10790 = vunpack.c.h.b16 %v10037
    %v10791 = vunpack.c.l.b16 %v10038
    %v10792 = vunpack.c.h.b16 %v10038
    %v10793 = vunpack.c.l.b16 %v10039
    %v10794 = vunpack.c.h.b16 %v10039
    %v10795 = vunpack.c.l.b16 %v10040
    %v10796 = vunpack.c.h.b16 %v10040
    %v10797 = vunpack.c.l.b16 %v10041
    %v10798 = vunpack.c.h.b16 %v10041
    %v10799 = vunpack.c.l.b16 %v10042
    %v10800 = vunpack.c.h.b16 %v10042
    %v10801 = vunpack.c.l.b16 %v10043
    %v10802 = vunpack.c.h.b16 %v10043
    %v10803 = vunpack.c.l.b16 %v10044
    %v10804 = vunpack.c.h.b16 %v10044
    %v10805 = vunpack.c.l.b16 %v10045
    %v10806 = vunpack.c.h.b16 %v10045
    %v10807 = vunpack.c.l.b16 %v10046
    %v10808 = vunpack.c.h.b16 %v10046
    %v10809 = vunpack.c.l.b16 %v10047
    %v10810 = vunpack.c.h.b16 %v10047
    %v10811 = vunpack.c.l.b16 %v10048
    %v10812 = vunpack.c.h.b16 %v10048
    %v10813 = vunpack.c.l.b16 %v10049
    %v10814 = vunpack.c.h.b16 %v10049
    %v10815 = vunpack.c.l.b16 %v10050
    %v10816 = vunpack.c.h.b16 %v10050
    %v10817 = vunpack.c.l.b16 %v10051
    %v10818 = vunpack.c.h.b16 %v10051
    %v10819 = vunpack.c.l.b16 %v10052
    %v10820 = vunpack.c.h.b16 %v10052
    %v10821 = vunpack.c.l.b16 %v10053
    %v10822 = vunpack.c.h.b16 %v10053
    %v10823 = vunpack.c.l.b16 %v10054
    %v10824 = vunpack.c.h.b16 %v10054
    %v10825 = vunpack.c.l.b16 %v10055
    %v10826 = vunpack.c.h.b16 %v10055
    %v10827 = vunpack.c.l.b16 %v10056
    %v10828 = vunpack.c.h.b16 %v10056
    %v10829 = vunpack.c.l.b16 %v10057
    %v10830 = vunpack.c.h.b16 %v10057
    %v10831 = vunpack.c.l.b16 %v10058
    %v10832 = vunpack.c.h.b16 %v10058
    %v10833 = vunpack.c.l.b16 %v10059
    %v10834 = vunpack.c.h.b16 %v10059
    %v10835 = vunpack.c.l.b16 %v10060
    %v10836 = vunpack.c.h.b16 %v10060
    %v10837 = vunpack.c.l.b16 %v10061
    %v10838 = vunpack.c.h.b16 %v10061
    %v10839 = vunpack.c.l.b16 %v10062
    %v10840 = vunpack.c.h.b16 %v10062
    %v10841 = vunpack.c.l.b16 %v10063
    %v10842 = vunpack.c.h.b16 %v10063
    %v10843 = vunpack.c.l.b16 %v10064
    %v10844 = vunpack.c.h.b16 %v10064
    %v10845 = vunpack.c.l.b16 %v10065
    %v10846 = vunpack.c.h.b16 %v10065
    %v10847 = vunpack.c.l.b16 %v10066
    %v10848 = vunpack.c.h.b16 %v10066
    %v10849 = vunpack.c.l.b16 %v10067
    %v10850 = vunpack.c.h.b16 %v10067
    %v10851 = vunpack.c.l.b16 %v10068
    %v10852 = vunpack.c.h.b16 %v10068
    %v10853 = vunpack.c.l.b16 %v10069
    %v10854 = vunpack.c.h.b16 %v10069
    %v10855 = vunpack.c.l.b16 %v10070
    %v10856 = vunpack.c.h.b16 %v10070
    %v10857 = vunpack.c.l.b16 %v10071
    %v10858 = vunpack.c.h.b16 %v10071
    %v10859 = vunpack.c.l.b16 %v10072
    %v10860 = vunpack.c.h.b16 %v10072
    %v10861 = vunpack.c.l.b16 %v10073
    %v10862 = vunpack.c.h.b16 %v10073
    %v10863 = vunpack.c.l.b16 %v10074
    %v10864 = vunpack.c.h.b16 %v10074
    %v10865 = vunpack.c.l.b16 %v10075
    %v10866 = vunpack.c.h.b16 %v10075
    %v10867 = vunpack.c.l.b16 %v10076
    %v10868 = vunpack.c.h.b16 %v10076
    %v10869 = vunpack.c.l.b16 %v10077
    %v10870 = vunpack.c.h.b16 %v10077
    %v10871 = vunpack.c.l.b16 %v10078
    %v10872 = vunpack.c.h.b16 %v10078
    %v10873 = vunpack.c.l.b16 %v10079
    %v10874 = vunpack.c.h.b16 %v10079
    %v10875 = vunpack.c.l.b16 %v10080
    %v10876 = vunpack.c.h.b16 %v10080
    %v10877 = vunpack.c.l.b16 %v10081
    %v10878 = vunpack.c.h.b16 %v10081
    %v10879 = vunpack.c.l.b16 %v10082
    %v10880 = vunpack.c.h.b16 %v10082
    %v10881 = vunpack.c.l.b16 %v10083
    %v10882 = vunpack.c.h.b16 %v10083
    %v10883 = vunpack.c.l.b16 %v10084
    %v10884 = vunpack.c.h.b16 %v10084
    %v10885 = vunpack.c.l.b16 %v10085
    %v10886 = vunpack.c.h.b16 %v10085
    %v10887 = vunpack.c.l.b16 %v10086
    %v10888 = vunpack.c.h.b16 %v10086
    %v10889 = vunpack.c.l.b16 %v10087
    %v10890 = vunpack.c.h.b16 %v10087
    %v10891 = vunpack.c.l.b16 %v10088
    %v10892 = vunpack.c.h.b16 %v10088
    %v10893 = vunpack.c.l.b16 %v10089
    %v10894 = vunpack.c.h.b16 %v10089
    %v10895 = vunpack.c.l.b16 %v10090
    %v10896 = vunpack.c.h.b16 %v10090
    %v10897 = vunpack.c.l.b16 %v10091
    %v10898 = vunpack.c.h.b16 %v10091
    %v10899 = vunpack.c.l.b16 %v10092
    %v10900 = vunpack.c.h.b16 %v10092
    %v10901 = vunpack.c.l.b16 %v10093
    %v10902 = vunpack.c.h.b16 %v10093
    %v10903 = vunpack.c.l.b16 %v10094
    %v10904 = vunpack.c.h.b16 %v10094
    %v10905 = vunpack.c.l.b16 %v10095
    %v10906 = vunpack.c.h.b16 %v10095
    %v10907 = vunpack.c.l.b16 %v10096
    %v10908 = vunpack.c.h.b16 %v10096
    %v10909 = vunpack.c.l.b16 %v10097
    %v10910 = vunpack.c.h.b16 %v10097
    %v10911 = vunpack.c.l.b16 %v10098
    %v10912 = vunpack.c.h.b16 %v10098
    %v10913 = vunpack.c.l.b16 %v10099
    %v10914 = vunpack.c.h.b16 %v10099
    %v10915 = vunpack.c.l.b16 %v10100
    %v10916 = vunpack.c.h.b16 %v10100
    %v10917 = vunpack.c.l.b16 %v10101
    %v10918 = vunpack.c.h.b16 %v10101
    %v10919 = vunpack.c.l.b16 %v10102
    %v10920 = vunpack.c.h.b16 %v10102
    %v10921 = vunpack.c.l.b16 %v10103
    %v10922 = vunpack.c.h.b16 %v10103
    %v10923 = vunpack.c.l.b16 %v10104
    %v10924 = vunpack.c.h.b16 %v10104
    %v10925 = vunpack.c.l.b16 %v10105
    %v10926 = vunpack.c.h.b16 %v10105
    %v10927 = vunpack.c.l.b16 %v10106
    %v10928 = vunpack.c.h.b16 %v10106
    %v10929 = vunpack.c.l.b16 %v10107
    %v10930 = vunpack.c.h.b16 %v10107
    %v10931 = vunpack.c.l.b16 %v10108
    %v10932 = vunpack.c.h.b16 %v10108
    %v10933 = vunpack.c.l.b16 %v10109
    %v10934 = vunpack.c.h.b16 %v10109
    %v10935 = vunpack.c.l.b16 %v10110
    %v10936 = vunpack.c.h.b16 %v10110
    %v10937 = vunpack.c.l.b16 %v10111
    %v10938 = vunpack.c.h.b16 %v10111
    %v10939 = vunpack.c.l.b16 %v10112
    %v10940 = vunpack.c.h.b16 %v10112
    %v10941 = vunpack.c.l.b16 %v10113
    %v10942 = vunpack.c.h.b16 %v10113
    %v10943 = vunpack.c.l.b16 %v10114
    %v10944 = vunpack.c.h.b16 %v10114
    %v10945 = vunpack.c.l.b16 %v10115
    %v10946 = vunpack.c.h.b16 %v10115
    %v10947 = vunpack.c.l.b16 %v10116
    %v10948 = vunpack.c.h.b16 %v10116
    %v10949 = vunpack.c.l.b16 %v10117
    %v10950 = vunpack.c.h.b16 %v10117
    %v10951 = vunpack.c.l.b16 %v10118
    %v10952 = vunpack.c.h.b16 %v10118
    %v10953 = vunpack.c.l.b16 %v10119
    %v10954 = vunpack.c.h.b16 %v10119
    %v10955 = vunpack.c.l.b16 %v10120
    %v10956 = vunpack.c.h.b16 %v10120
    %v10957 = vunpack.c.l.b16 %v10121
    %v10958 = vunpack.c.h.b16 %v10121
    %v10959 = vunpack.c.l.b16 %v10122
    %v10960 = vunpack.c.h.b16 %v10122
    %v10961 = vunpack.c.l.b16 %v10123
    %v10962 = vunpack.c.h.b16 %v10123
    %v10963 = vunpack.c.l.b16 %v10124
    %v10964 = vunpack.c.h.b16 %v10124
    %v10965 = vunpack.c.l.b16 %v10125
    %v10966 = vunpack.c.h.b16 %v10125
    %v10967 = vunpack.c.l.b16 %v10126
    %v10968 = vunpack.c.h.b16 %v10126
    %v10969 = vunpack.c.l.b16 %v10127
    %v10970 = vunpack.c.h.b16 %v10127
    %v10971 = vunpack.c.l.b16 %v10128
    %v10972 = vunpack.c.h.b16 %v10128
    %v10973 = vunpack.c.l.b16 %v10129
    %v10974 = vunpack.c.h.b16 %v10129
    %v10975 = vunpack.c.l.b16 %v10130
    %v10976 = vunpack.c.h.b16 %v10130
    %v10977 = vunpack.c.l.b16 %v10131
    %v10978 = vunpack.c.h.b16 %v10131
    %v10979 = vunpack.c.l.b16 %v10132
    %v10980 = vunpack.c.h.b16 %v10132
    %v10981 = vunpack.c.l.b16 %v10133
    %v10982 = vunpack.c.h.b16 %v10133
    %v10983 = vunpack.c.l.b16 %v10134
    %v10984 = vunpack.c.h.b16 %v10134
    %v10985 = vunpack.c.l.b16 %v10135
    %v10986 = vunpack.c.h.b16 %v10135
    %v10987 = vunpack.c.l.b16 %v10136
    %v10988 = vunpack.c.h.b16 %v10136
    %v10989 = vunpack.c.l.b16 %v10137
    %v10990 = vunpack.c.h.b16 %v10137
    %v10991 = vpack.c.b16 %v10495, %v10479
    %v10992 = vpack.c.b16 %v10496, %v10480
    %v10993 = vpack.c.b16 %v10497, %v10481
    %v10994 = vpack.c.b16 %v10498, %v10482
    %v10995 = vpack.c.b16 %v10499, %v10483
    %v10996 = vpack.c.b16 %v10500, %v10484
    %v10997 = vpack.c.b16 %v10501, %v10485
    %v10998 = vpack.c.b16 %v10502, %v10486
    %v10999 = vpack.c.b16 %v10503, %v10487
    %v11000 = vpack.c.b16 %v10504, %v10488
    %v11001 = vpack.c.b16 %v10505, %v10489
    %v11002 = vpack.c.b16 %v10506, %v10490
    %v11003 = vpack.c.b16 %v10507, %v10491
    %v11004 = vpack.c.b16 %v10508, %v10492
    %v11005 = vpack.c.b16 %v10509, %v10493
    %v11006 = vpack.c.b16 %v10510, %v10494
    %v11007 = vpack.c.b16 %v10527, %v10511
    %v11008 = vpack.c.b16 %v10528, %v10512
    %v11009 = vpack.c.b16 %v10529, %v10513
    %v11010 = vpack.c.b16 %v10530, %v10514
    %v11011 = vpack.c.b16 %v10531, %v10515
    %v11012 = vpack.c.b16 %v10532, %v10516
    %v11013 = vpack.c.b16 %v10533, %v10517
    %v11014 = vpack.c.b16 %v10534, %v10518
    %v11015 = vpack.c.b16 %v10535, %v10519
    %v11016 = vpack.c.b16 %v10536, %v10520
    %v11017 = vpack.c.b16 %v10537, %v10521
    %v11018 = vpack.c.b16 %v10538, %v10522
    %v11019 = vpack.c.b16 %v10539, %v10523
    %v11020 = vpack.c.b16 %v10540, %v10524
    %v11021 = vpack.c.b16 %v10541, %v10525
    %v11022 = vpack.c.b16 %v10542, %v10526
    %v11023 = vpack.c.b16 %v10559, %v10543
    %v11024 = vpack.c.b16 %v10560, %v10544
    %v11025 = vpack.c.b16 %v10561, %v10545
    %v11026 = vpack.c.b16 %v10562, %v10546
    %v11027 = vpack.c.b16 %v10563, %v10547
    %v11028 = vpack.c.b16 %v10564, %v10548
    %v11029 = vpack.c.b16 %v10565, %v10549
    %v11030 = vpack.c.b16 %v10566, %v10550
    %v11031 = vpack.c.b16 %v10567, %v10551
    %v11032 = vpack.c.b16 %v10568, %v10552
    %v11033 = vpack.c.b16 %v10569, %v10553
    %v11034 = vpack.c.b16 %v10570, %v10554
    %v11035 = vpack.c.b16 %v10571, %v10555
    %v11036 = vpack.c.b16 %v10572, %v10556
    %v11037 = vpack.c.b16 %v10573, %v10557
    %v11038 = vpack.c.b16 %v10574, %v10558
    %v11039 = vpack.c.b16 %v10591, %v10575
    %v11040 = vpack.c.b16 %v10592, %v10576
    %v11041 = vpack.c.b16 %v10593, %v10577
    %v11042 = vpack.c.b16 %v10594, %v10578
    %v11043 = vpack.c.b16 %v10595, %v10579
    %v11044 = vpack.c.b16 %v10596, %v10580
    %v11045 = vpack.c.b16 %v10597, %v10581
    %v11046 = vpack.c.b16 %v10598, %v10582
    %v11047 = vpack.c.b16 %v10599, %v10583
    %v11048 = vpack.c.b16 %v10600, %v10584
    %v11049 = vpack.c.b16 %v10601, %v10585
    %v11050 = vpack.c.b16 %v10602, %v10586
    %v11051 = vpack.c.b16 %v10603, %v10587
    %v11052 = vpack.c.b16 %v10604, %v10588
    %v11053 = vpack.c.b16 %v10605, %v10589
    %v11054 = vpack.c.b16 %v10606, %v10590
    %v11055 = vpack.c.b16 %v10623, %v10607
    %v11056 = vpack.c.b16 %v10624, %v10608
    %v11057 = vpack.c.b16 %v10625, %v10609
    %v11058 = vpack.c.b16 %v10626, %v10610
    %v11059 = vpack.c.b16 %v10627, %v10611
    %v11060 = vpack.c.b16 %v10628, %v10612
    %v11061 = vpack.c.b16 %v10629, %v10613
    %v11062 = vpack.c.b16 %v10630, %v10614
    %v11063 = vpack.c.b16 %v10631, %v10615
    %v11064 = vpack.c.b16 %v10632, %v10616
    %v11065 = vpack.c.b16 %v10633, %v10617
    %v11066 = vpack.c.b16 %v10634, %v10618
    %v11067 = vpack.c.b16 %v10635, %v10619
    %v11068 = vpack.c.b16 %v10636, %v10620
    %v11069 = vpack.c.b16 %v10637, %v10621
    %v11070 = vpack.c.b16 %v10638, %v10622
    %v11071 = vpack.c.b16 %v10655, %v10639
    %v11072 = vpack.c.b16 %v10656, %v10640
    %v11073 = vpack.c.b16 %v10657, %v10641
    %v11074 = vpack.c.b16 %v10658, %v10642
    %v11075 = vpack.c.b16 %v10659, %v10643
    %v11076 = vpack.c.b16 %v10660, %v10644
    %v11077 = vpack.c.b16 %v10661, %v10645
    %v11078 = vpack.c.b16 %v10662, %v10646
    %v11079 = vpack.c.b16 %v10663, %v10647
    %v11080 = vpack.c.b16 %v10664, %v10648
    %v11081 = vpack.c.b16 %v10665, %v10649
    %v11082 = vpack.c.b16 %v10666, %v10650
    %v11083 = vpack.c.b16 %v10667, %v10651
    %v11084 = vpack.c.b16 %v10668, %v10652
    %v11085 = vpack.c.b16 %v10669, %v10653
    %v11086 = vpack.c.b16 %v10670, %v10654
    %v11087 = vpack.c.b16 %v10687, %v10671
    %v11088 = vpack.c.b16 %v10688, %v10672
    %v11089 = vpack.c.b16 %v10689, %v10673
    %v11090 = vpack.c.b16 %v10690, %v10674
    %v11091 = vpack.c.b16 %v10691, %v10675
    %v11092 = vpack.c.b16 %v10692, %v10676
    %v11093 = vpack.c.b16 %v10693, %v10677
    %v11094 = vpack.c.b16 %v10694, %v10678
    %v11095 = vpack.c.b16 %v10695, %v10679
    %v11096 = vpack.c.b16 %v10696, %v10680
    %v11097 = vpack.c.b16 %v10697, %v10681
    %v11098 = vpack.c.b16 %v10698, %v10682
    %v11099 = vpack.c.b16 %v10699, %v10683
    %v11100 = vpack.c.b16 %v10700, %v10684
    %v11101 = vpack.c.b16 %v10701, %v10685
    %v11102 = vpack.c.b16 %v10702, %v10686
    %v11103 = vpack.c.b16 %v10719, %v10703
    %v11104 = vpack.c.b16 %v10720, %v10704
    %v11105 = vpack.c.b16 %v10721, %v10705
    %v11106 = vpack.c.b16 %v10722, %v10706
    %v11107 = vpack.c.b16 %v10723, %v10707
    %v11108 = vpack.c.b16 %v10724, %v10708
    %v11109 = vpack.c.b16 %v10725, %v10709
    %v11110 = vpack.c.b16 %v10726, %v10710
    %v11111 = vpack.c.b16 %v10727, %v10711
    %v11112 = vpack.c.b16 %v10728, %v10712
    %v11113 = vpack.c.b16 %v10729, %v10713
    %v11114 = vpack.c.b16 %v10730, %v10714
    %v11115 = vpack.c.b16 %v10731, %v10715
    %v11116 = vpack.c.b16 %v10732, %v10716
    %v11117 = vpack.c.b16 %v10733, %v10717
    %v11118 = vpack.c.b16 %v10734, %v10718
    %v11119 = vpack.c.b16 %v10751, %v10735
    %v11120 = vpack.c.b16 %v10752, %v10736
    %v11121 = vpack.c.b16 %v10753, %v10737
    %v11122 = vpack.c.b16 %v10754, %v10738
    %v11123 = vpack.c.b16 %v10755, %v10739
    %v11124 = vpack.c.b16 %v10756, %v10740
    %v11125 = vpack.c.b16 %v10757, %v10741
    %v11126 = vpack.c.b16 %v10758, %v10742
    %v11127 = vpack.c.b16 %v10759, %v10743
    %v11128 = vpack.c.b16 %v10760, %v10744
    %v11129 = vpack.c.b16 %v10761, %v10745
    %v11130 = vpack.c.b16 %v10762, %v10746
    %v11131 = vpack.c.b16 %v10763, %v10747
    %v11132 = vpack.c.b16 %v10764, %v10748
    %v11133 = vpack.c.b16 %v10765, %v10749
    %v11134 = vpack.c.b16 %v10766, %v10750
    %v11135 = vpack.c.b16 %v10783, %v10767
    %v11136 = vpack.c.b16 %v10784, %v10768
    %v11137 = vpack.c.b16 %v10785, %v10769
    %v11138 = vpack.c.b16 %v10786, %v10770
    %v11139 = vpack.c.b16 %v10787, %v10771
    %v11140 = vpack.c.b16 %v10788, %v10772
    %v11141 = vpack.c.b16 %v10789, %v10773
    %v11142 = vpack.c.b16 %v10790, %v10774
    %v11143 = vpack.c.b16 %v10791, %v10775
    %v11144 = vpack.c.b16 %v10792, %v10776
    %v11145 = vpack.c.b16 %v10793, %v10777
    %v11146 = vpack.c.b16 %v10794, %v10778
    %v11147 = vpack.c.b16 %v10795, %v10779
    %v11148 = vpack.c.b16 %v10796, %v10780
    %v11149 = vpack.c.b16 %v10797, %v10781
    %v11150 = vpack.c.b16 %v10798, %v10782
    %v11151 = vpack.c.b16 %v10815, %v10799
    %v11152 = vpack.c.b16 %v10816, %v10800
    %v11153 = vpack.c.b16 %v10817, %v10801
    %v11154 = vpack.c.b16 %v10818, %v10802
    %v11155 = vpack.c.b16 %v10819, %v10803
    %v11156 = vpack.c.b16 %v10820, %v10804
    %v11157 = vpack.c.b16 %v10821, %v10805
    %v11158 = vpack.c.b16 %v10822, %v10806
    %v11159 = vpack.c.b16 %v10823, %v10807
    %v11160 = vpack.c.b16 %v10824, %v10808
    %v11161 = vpack.c.b16 %v10825, %v10809
    %v11162 = vpack.c.b16 %v10826, %v10810
    %v11163 = vpack.c.b16 %v10827, %v10811
    %v11164 = vpack.c.b16 %v10828, %v10812
    %v11165 = vpack.c.b16 %v10829, %v10813
    %v11166 = vpack.c.b16 %v10830, %v10814
    %v11167 = vpack.c.b16 %v10847, %v10831
    %v11168 = vpack.c.b16 %v10848, %v10832
    %v11169 = vpack.c.b16 %v10849, %v10833
    %v11170 = vpack.c.b16 %v10850, %v10834
    %v11171 = vpack.c.b16 %v10851, %v10835
    %v11172 = vpack.c.b16 %v10852, %v10836
    %v11173 = vpack.c.b16 %v10853, %v10837
    %v11174 = vpack.c.b16 %v10854, %v10838
    %v11175 = vpack.c.b16 %v10855, %v10839
    %v11176 = vpack.c.b16 %v10856, %v10840
    %v11177 = vpack.c.b16 %v10857, %v10841
    %v11178 = vpack.c.b16 %v10858, %v10842
    %v11179 = vpack.c.b16 %v10859, %v10843
    %v11180 = vpack.c.b16 %v10860, %v10844
    %v11181 = vpack.c.b16 %v10861, %v10845
    %v11182 = vpack.c.b16 %v10862, %v10846
    %v11183 = vpack.c.b16 %v10879, %v10863
    %v11184 = vpack.c.b16 %v10880, %v10864
    %v11185 = vpack.c.b16 %v10881, %v10865
    %v11186 = vpack.c.b16 %v10882, %v10866
    %v11187 = vpack.c.b16 %v10883, %v10867
    %v11188 = vpack.c.b16 %v10884, %v10868
    %v11189 = vpack.c.b16 %v10885, %v10869
    %v11190 = vpack.c.b16 %v10886, %v10870
    %v11191 = vpack.c.b16 %v10887, %v10871
    %v11192 = vpack.c.b16 %v10888, %v10872
    %v11193 = vpack.c.b16 %v10889, %v10873
    %v11194 = vpack.c.b16 %v10890, %v10874
    %v11195 = vpack.c.b16 %v10891, %v10875
    %v11196 = vpack.c.b16 %v10892, %v10876
    %v11197 = vpack.c.b16 %v10893, %v10877
    %v11198 = vpack.c.b16 %v10894, %v10878
    %v11199 = vpack.c.b16 %v10911, %v10895
    %v11200 = vpack.c.b16 %v10912, %v10896
    %v11201 = vpack.c.b16 %v10913, %v10897
    %v11202 = vpack.c.b16 %v10914, %v10898
    %v11203 = vpack.c.b16 %v10915, %v10899
    %v11204 = vpack.c.b16 %v10916, %v10900
    %v11205 = vpack.c.b16 %v10917, %v10901
    %v11206 = vpack.c.b16 %v10918, %v10902
    %v11207 = vpack.c.b16 %v10919, %v10903
    %v11208 = vpack.c.b16 %v10920, %v10904
    %v11209 = vpack.c.b16 %v10921, %v10905
    %v11210 = vpack.c.b16 %v10922, %v10906
    %v11211 = vpack.c.b16 %v10923, %v10907
    %v11212 = vpack.c.b16 %v10924, %v10908
    %v11213 = vpack.c.b16 %v10925, %v10909
    %v11214 = vpack.c.b16 %v10926, %v10910
    %v11215 = vpack.c.b16 %v10943, %v10927
    %v11216 = vpack.c.b16 %v10944, %v10928
    %v11217 = vpack.c.b16 %v10945, %v10929
    %v11218 = vpack.c.b16 %v10946, %v10930
    %v11219 = vpack.c.b16 %v10947, %v10931
    %v11220 = vpack.c.b16 %v10948, %v10932
    %v11221 = vpack.c.b16 %v10949, %v10933
    %v11222 = vpack.c.b16 %v10950, %v10934
    %v11223 = vpack.c.b16 %v10951, %v10935
    %v11224 = vpack.c.b16 %v10952, %v10936
    %v11225 = vpack.c.b16 %v10953, %v10937
    %v11226 = vpack.c.b16 %v10954, %v10938
    %v11227 = vpack.c.b16 %v10955, %v10939
    %v11228 = vpack.c.b16 %v10956, %v10940
    %v11229 = vpack.c.b16 %v10957, %v10941
    %v11230 = vpack.c.b16 %v10958, %v10942
    %v11231 = vpack.c.b16 %v10975, %v10959
    %v11232 = vpack.c.b16 %v10976, %v10960
    %v11233 = vpack.c.b16 %v10977, %v10961
    %v11234 = vpack.c.b16 %v10978, %v10962
    %v11235 = vpack.c.b16 %v10979, %v10963
    %v11236 = vpack.c.b16 %v10980, %v10964
    %v11237 = vpack.c.b16 %v10981, %v10965
    %v11238 = vpack.c.b16 %v10982, %v10966
    %v11239 = vpack.c.b16 %v10983, %v10967
    %v11240 = vpack.c.b16 %v10984, %v10968
    %v11241 = vpack.c.b16 %v10985, %v10969
    %v11242 = vpack.c.b16 %v10986, %v10970
    %v11243 = vpack.c.b16 %v10987, %v10971
    %v11244 = vpack.c.b16 %v10988, %v10972
    %v11245 = vpack.c.b16 %v10989, %v10973
    %v11246 = vpack.c.b16 %v10990, %v10974
    %11503 = vmatprep.subr.bf16.mxu0 %v10992
    %11504 = vmatpush1.bf16.msra.mxu0 %v10991
    %11505 = vmatprep.subr.bf16.mxu0 %v11008
    %11506 = vmatpush1.bf16.msra.mxu0 %v11007
    %11507 = vmatprep.subr.bf16.mxu0 %v11024
    %11508 = vmatpush1.bf16.msra.mxu0 %v11023
    %11509 = vmatprep.subr.bf16.mxu0 %v11040
    %11510 = vmatpush1.bf16.msra.mxu0 %v11039
    %11511 = vmatprep.subr.bf16.mxu0 %v11056
    %11512 = vmatpush1.bf16.msra.mxu0 %v11055
    %11513 = vmatprep.subr.bf16.mxu0 %v11072
    %11514 = vmatpush1.bf16.msra.mxu0 %v11071
    %11515 = vmatprep.subr.bf16.mxu0 %v11088
    %11516 = vmatpush1.bf16.msra.mxu0 %v11087
    %11517 = vmatprep.subr.bf16.mxu0 %v11104
    %11518 = vmatpush1.bf16.msra.mxu0 %v11103
    %11519 = vmatprep.subr.bf16.mxu0 %v11120
    %11520 = vmatpush1.bf16.msra.mxu0 %v11119
    %11521 = vmatprep.subr.bf16.mxu0 %v11136
    %11522 = vmatpush1.bf16.msra.mxu0 %v11135
    %11523 = vmatprep.subr.bf16.mxu0 %v11152
    %11524 = vmatpush1.bf16.msra.mxu0 %v11151
    %11525 = vmatprep.subr.bf16.mxu0 %v11168
    %11526 = vmatpush1.bf16.msra.mxu0 %v11167
    %11527 = vmatprep.subr.bf16.mxu0 %v11184
    %11528 = vmatpush1.bf16.msra.mxu0 %v11183
    %11529 = vmatprep.subr.bf16.mxu0 %v11200
    %11530 = vmatpush1.bf16.msra.mxu0 %v11199
    %11531 = vmatprep.subr.bf16.mxu0 %v11216
    %11532 = vmatpush1.bf16.msra.mxu0 %v11215
    %11533 = vmatprep.subr.bf16.mxu0 %v11232
    %11534 = vmatpush1.bf16.msra.mxu0 %v11231
    %11535 = vmatprep.mubr.bf16.mxu0 %v9880
    %11536 = vmatmul.mubr.bf16.gmra.mrb[0].mxu0 %v9879
    %v11537 = vpop.f32.mrb[0].mxu0
    %v11538 = vadd.f32 %v10146, %v11537
    %v11539 = vpop.f32.mrb[0].mxu0
    %v11540 = vadd.f32 %v10150, %v11539
    %v11541 = vpop.f32.mrb[0].mxu0
    %v11542 = vpop.f32.mrb[0].mxu0
    %11543 = vdwg.mxu0
    %11544 = vmatprep.subr.bf16.mxu0 %v10994
    %11545 = vmatpush1.bf16.msra.mxu0 %v10993
    %11546 = vmatprep.subr.bf16.mxu0 %v11010
    %11547 = vmatpush1.bf16.msra.mxu0 %v11009
    %11548 = vmatprep.subr.bf16.mxu0 %v11026
    %11549 = vmatpush1.bf16.msra.mxu0 %v11025
    %11550 = vmatprep.subr.bf16.mxu0 %v11042
    %11551 = vmatpush1.bf16.msra.mxu0 %v11041
    %11552 = vmatprep.subr.bf16.mxu0 %v11058
    %11553 = vmatpush1.bf16.msra.mxu0 %v11057
    %11554 = vmatprep.subr.bf16.mxu0 %v11074
    %11555 = vmatpush1.bf16.msra.mxu0 %v11073
    %11556 = vmatprep.subr.bf16.mxu0 %v11090
    %11557 = vmatpush1.bf16.msra.mxu0 %v11089
    %11558 = vmatprep.subr.bf16.mxu0 %v11106
    %11559 = vmatpush1.bf16.msra.mxu0 %v11105
    %11560 = vmatprep.subr.bf16.mxu0 %v11122
    %11561 = vmatpush1.bf16.msra.mxu0 %v11121
    %11562 = vmatprep.subr.bf16.mxu0 %v11138
    %11563 = vmatpush1.bf16.msra.mxu0 %v11137
    %11564 = vmatprep.subr.bf16.mxu0 %v11154
    %11565 = vmatpush1.bf16.msra.mxu0 %v11153
    %11566 = vmatprep.subr.bf16.mxu0 %v11170
    %11567 = vmatpush1.bf16.msra.mxu0 %v11169
    %11568 = vmatprep.subr.bf16.mxu0 %v11186
    %11569 = vmatpush1.bf16.msra.mxu0 %v11185
    %11570 = vmatprep.subr.bf16.mxu0 %v11202
    %11571 = vmatpush1.bf16.msra.mxu0 %v11201
    %11572 = vmatprep.subr.bf16.mxu0 %v11218
    %11573 = vmatpush1.bf16.msra.mxu0 %v11217
    %11574 = vmatprep.subr.bf16.mxu0 %v11234
    %11575 = vmatpush1.bf16.msra.mxu0 %v11233
    %11576 = vmatprep.mubr.bf16.mxu0 %v9880
    %11577 = vmatmul.mubr.bf16.gmra.mrb[0].mxu0 %v9879
    %v11578 = vpop.f32.mrb[0].mxu0
    %v11579 = vadd.f32 %v10154, %v11578
    %v11580 = vpop.f32.mrb[0].mxu0
    %v11581 = vadd.f32 %v10158, %v11580
    %v11582 = vpop.f32.mrb[0].mxu0
    %v11583 = vpop.f32.mrb[0].mxu0
    %11584 = vdwg.mxu0
    %11585 = vmatprep.subr.bf16.mxu0 %v10996
    %11586 = vmatpush1.bf16.msra.mxu0 %v10995
    %11587 = vmatprep.subr.bf16.mxu0 %v11012
    %11588 = vmatpush1.bf16.msra.mxu0 %v11011
    %11589 = vmatprep.subr.bf16.mxu0 %v11028
    %11590 = vmatpush1.bf16.msra.mxu0 %v11027
    %11591 = vmatprep.subr.bf16.mxu0 %v11044
    %11592 = vmatpush1.bf16.msra.mxu0 %v11043
    %11593 = vmatprep.subr.bf16.mxu0 %v11060
    %11594 = vmatpush1.bf16.msra.mxu0 %v11059
    %11595 = vmatprep.subr.bf16.mxu0 %v11076
    %11596 = vmatpush1.bf16.msra.mxu0 %v11075
    %11597 = vmatprep.subr.bf16.mxu0 %v11092
    %11598 = vmatpush1.bf16.msra.mxu0 %v11091
    %11599 = vmatprep.subr.bf16.mxu0 %v11108
    %11600 = vmatpush1.bf16.msra.mxu0 %v11107
    %11601 = vmatprep.subr.bf16.mxu0 %v11124
    %11602 = vmatpush1.bf16.msra.mxu0 %v11123
    %11603 = vmatprep.subr.bf16.mxu0 %v11140
    %11604 = vmatpush1.bf16.msra.mxu0 %v11139
    %11605 = vmatprep.subr.bf16.mxu0 %v11156
    %11606 = vmatpush1.bf16.msra.mxu0 %v11155
    %11607 = vmatprep.subr.bf16.mxu0 %v11172
    %11608 = vmatpush1.bf16.msra.mxu0 %v11171
    %11609 = vmatprep.subr.bf16.mxu0 %v11188
    %11610 = vmatpush1.bf16.msra.mxu0 %v11187
    %11611 = vmatprep.subr.bf16.mxu0 %v11204
    %11612 = vmatpush1.bf16.msra.mxu0 %v11203
    %11613 = vmatprep.subr.bf16.mxu0 %v11220
    %11614 = vmatpush1.bf16.msra.mxu0 %v11219
    %11615 = vmatprep.subr.bf16.mxu0 %v11236
    %11616 = vmatpush1.bf16.msra.mxu0 %v11235
    %11617 = vmatprep.mubr.bf16.mxu0 %v9880
    %11618 = vmatmul.mubr.bf16.gmra.mrb[0].mxu0 %v9879
    %v11619 = vpop.f32.mrb[0].mxu0
    %v11620 = vadd.f32 %v10162, %v11619
    %v11621 = vpop.f32.mrb[0].mxu0
    %v11622 = vadd.f32 %v10166, %v11621
    %v11623 = vpop.f32.mrb[0].mxu0
    %v11624 = vpop.f32.mrb[0].mxu0
    %11625 = vdwg.mxu0
    %11626 = vmatprep.subr.bf16.mxu0 %v10998
    %11627 = vmatpush1.bf16.msra.mxu0 %v10997
    %11628 = vmatprep.subr.bf16.mxu0 %v11014
    %11629 = vmatpush1.bf16.msra.mxu0 %v11013
    %11630 = vmatprep.subr.bf16.mxu0 %v11030
    %11631 = vmatpush1.bf16.msra.mxu0 %v11029
    %11632 = vmatprep.subr.bf16.mxu0 %v11046
    %11633 = vmatpush1.bf16.msra.mxu0 %v11045
    %11634 = vmatprep.subr.bf16.mxu0 %v11062
    %11635 = vmatpush1.bf16.msra.mxu0 %v11061
    %11636 = vmatprep.subr.bf16.mxu0 %v11078
    %11637 = vmatpush1.bf16.msra.mxu0 %v11077
    %11638 = vmatprep.subr.bf16.mxu0 %v11094
    %11639 = vmatpush1.bf16.msra.mxu0 %v11093
    %11640 = vmatprep.subr.bf16.mxu0 %v11110
    %11641 = vmatpush1.bf16.msra.mxu0 %v11109
    %11642 = vmatprep.subr.bf16.mxu0 %v11126
    %11643 = vmatpush1.bf16.msra.mxu0 %v11125
    %11644 = vmatprep.subr.bf16.mxu0 %v11142
    %11645 = vmatpush1.bf16.msra.mxu0 %v11141
    %11646 = vmatprep.subr.bf16.mxu0 %v11158
    %11647 = vmatpush1.bf16.msra.mxu0 %v11157
    %11648 = vmatprep.subr.bf16.mxu0 %v11174
    %11649 = vmatpush1.bf16.msra.mxu0 %v11173
    %11650 = vmatprep.subr.bf16.mxu0 %v11190
    %11651 = vmatpush1.bf16.msra.mxu0 %v11189
    %11652 = vmatprep.subr.bf16.mxu0 %v11206
    %11653 = vmatpush1.bf16.msra.mxu0 %v11205
    %11654 = vmatprep.subr.bf16.mxu0 %v11222
    %11655 = vmatpush1.bf16.msra.mxu0 %v11221
    %11656 = vmatprep.subr.bf16.mxu0 %v11238
    %11657 = vmatpush1.bf16.msra.mxu0 %v11237
    %11658 = vmatprep.mubr.bf16.mxu0 %v9880
    %11659 = vmatmul.mubr.bf16.gmra.mrb[0].mxu0 %v9879
    %v11660 = vpop.f32.mrb[0].mxu0
    %v11661 = vadd.f32 %v10170, %v11660
    %v11662 = vpop.f32.mrb[0].mxu0
    %v11663 = vadd.f32 %v10174, %v11662
    %v11664 = vpop.f32.mrb[0].mxu0
    %v11665 = vpop.f32.mrb[0].mxu0
    %11666 = vdwg.mxu0
    %11667 = vmatprep.subr.bf16.mxu0 %v11000
    %11668 = vmatpush1.bf16.msra.mxu0 %v10999
    %11669 = vmatprep.subr.bf16.mxu0 %v11016
    %11670 = vmatpush1.bf16.msra.mxu0 %v11015
    %11671 = vmatprep.subr.bf16.mxu0 %v11032
    %11672 = vmatpush1.bf16.msra.mxu0 %v11031
    %11673 = vmatprep.subr.bf16.mxu0 %v11048
    %11674 = vmatpush1.bf16.msra.mxu0 %v11047
    %11675 = vmatprep.subr.bf16.mxu0 %v11064
    %11676 = vmatpush1.bf16.msra.mxu0 %v11063
    %11677 = vmatprep.subr.bf16.mxu0 %v11080
    %11678 = vmatpush1.bf16.msra.mxu0 %v11079
    %11679 = vmatprep.subr.bf16.mxu0 %v11096
    %11680 = vmatpush1.bf16.msra.mxu0 %v11095
    %11681 = vmatprep.subr.bf16.mxu0 %v11112
    %11682 = vmatpush1.bf16.msra.mxu0 %v11111
    %11683 = vmatprep.subr.bf16.mxu0 %v11128
    %11684 = vmatpush1.bf16.msra.mxu0 %v11127
    %11685 = vmatprep.subr.bf16.mxu0 %v11144
    %11686 = vmatpush1.bf16.msra.mxu0 %v11143
    %11687 = vmatprep.subr.bf16.mxu0 %v11160
    %11688 = vmatpush1.bf16.msra.mxu0 %v11159
    %11689 = vmatprep.subr.bf16.mxu0 %v11176
    %11690 = vmatpush1.bf16.msra.mxu0 %v11175
    %11691 = vmatprep.subr.bf16.mxu0 %v11192
    %11692 = vmatpush1.bf16.msra.mxu0 %v11191
    %11693 = vmatprep.subr.bf16.mxu0 %v11208
    %11694 = vmatpush1.bf16.msra.mxu0 %v11207
    %11695 = vmatprep.subr.bf16.mxu0 %v11224
    %11696 = vmatpush1.bf16.msra.mxu0 %v11223
    %11697 = vmatprep.subr.bf16.mxu0 %v11240
    %11698 = vmatpush1.bf16.msra.mxu0 %v11239
    %11699 = vmatprep.mubr.bf16.mxu0 %v9880
    %11700 = vmatmul.mubr.bf16.gmra.mrb[0].mxu0 %v9879
    %v11701 = vpop.f32.mrb[0].mxu0
    %v11702 = vadd.f32 %v10178, %v11701
    %v11703 = vpop.f32.mrb[0].mxu0
    %v11704 = vadd.f32 %v10182, %v11703
    %v11705 = vpop.f32.mrb[0].mxu0
    %v11706 = vpop.f32.mrb[0].mxu0
    %11707 = vdwg.mxu0
    %11708 = vmatprep.subr.bf16.mxu0 %v11002
    %11709 = vmatpush1.bf16.msra.mxu0 %v11001
    %11710 = vmatprep.subr.bf16.mxu0 %v11018
    %11711 = vmatpush1.bf16.msra.mxu0 %v11017
    %11712 = vmatprep.subr.bf16.mxu0 %v11034
    %11713 = vmatpush1.bf16.msra.mxu0 %v11033
    %11714 = vmatprep.subr.bf16.mxu0 %v11050
    %11715 = vmatpush1.bf16.msra.mxu0 %v11049
    %11716 = vmatprep.subr.bf16.mxu0 %v11066
    %11717 = vmatpush1.bf16.msra.mxu0 %v11065
    %11718 = vmatprep.subr.bf16.mxu0 %v11082
    %11719 = vmatpush1.bf16.msra.mxu0 %v11081
    %11720 = vmatprep.subr.bf16.mxu0 %v11098
    %11721 = vmatpush1.bf16.msra.mxu0 %v11097
    %11722 = vmatprep.subr.bf16.mxu0 %v11114
    %11723 = vmatpush1.bf16.msra.mxu0 %v11113
    %11724 = vmatprep.subr.bf16.mxu0 %v11130
    %11725 = vmatpush1.bf16.msra.mxu0 %v11129
    %11726 = vmatprep.subr.bf16.mxu0 %v11146
    %11727 = vmatpush1.bf16.msra.mxu0 %v11145
    %11728 = vmatprep.subr.bf16.mxu0 %v11162
    %11729 = vmatpush1.bf16.msra.mxu0 %v11161
    %11730 = vmatprep.subr.bf16.mxu0 %v11178
    %11731 = vmatpush1.bf16.msra.mxu0 %v11177
    %11732 = vmatprep.subr.bf16.mxu0 %v11194
    %11733 = vmatpush1.bf16.msra.mxu0 %v11193
    %11734 = vmatprep.subr.bf16.mxu0 %v11210
    %11735 = vmatpush1.bf16.msra.mxu0 %v11209
    %11736 = vmatprep.subr.bf16.mxu0 %v11226
    %11737 = vmatpush1.bf16.msra.mxu0 %v11225
    %11738 = vmatprep.subr.bf16.mxu0 %v11242
    %11739 = vmatpush1.bf16.msra.mxu0 %v11241
    %11740 = vmatprep.mubr.bf16.mxu0 %v9880
    %11741 = vmatmul.mubr.bf16.gmra.mrb[0].mxu0 %v9879
    %v11742 = vpop.f32.mrb[0].mxu0
    %v11743 = vadd.f32 %v10186, %v11742
    %v11744 = vpop.f32.mrb[0].mxu0
    %v11745 = vadd.f32 %v10190, %v11744
    %v11746 = vpop.f32.mrb[0].mxu0
    %v11747 = vpop.f32.mrb[0].mxu0
    %11748 = vdwg.mxu0
    %11749 = vmatprep.subr.bf16.mxu0 %v11004
    %11750 = vmatpush1.bf16.msra.mxu0 %v11003
    %11751 = vmatprep.subr.bf16.mxu0 %v11020
    %11752 = vmatpush1.bf16.msra.mxu0 %v11019
    %11753 = vmatprep.subr.bf16.mxu0 %v11036
    %11754 = vmatpush1.bf16.msra.mxu0 %v11035
    %11755 = vmatprep.subr.bf16.mxu0 %v11052
    %11756 = vmatpush1.bf16.msra.mxu0 %v11051
    %11757 = vmatprep.subr.bf16.mxu0 %v11068
    %11758 = vmatpush1.bf16.msra.mxu0 %v11067
    %11759 = vmatprep.subr.bf16.mxu0 %v11084
    %11760 = vmatpush1.bf16.msra.mxu0 %v11083
    %11761 = vmatprep.subr.bf16.mxu0 %v11100
    %11762 = vmatpush1.bf16.msra.mxu0 %v11099
    %11763 = vmatprep.subr.bf16.mxu0 %v11116
    %11764 = vmatpush1.bf16.msra.mxu0 %v11115
    %11765 = vmatprep.subr.bf16.mxu0 %v11132
    %11766 = vmatpush1.bf16.msra.mxu0 %v11131
    %11767 = vmatprep.subr.bf16.mxu0 %v11148
    %11768 = vmatpush1.bf16.msra.mxu0 %v11147
    %11769 = vmatprep.subr.bf16.mxu0 %v11164
    %11770 = vmatpush1.bf16.msra.mxu0 %v11163
    %11771 = vmatprep.subr.bf16.mxu0 %v11180
    %11772 = vmatpush1.bf16.msra.mxu0 %v11179
    %11773 = vmatprep.subr.bf16.mxu0 %v11196
    %11774 = vmatpush1.bf16.msra.mxu0 %v11195
    %11775 = vmatprep.subr.bf16.mxu0 %v11212
    %11776 = vmatpush1.bf16.msra.mxu0 %v11211
    %11777 = vmatprep.subr.bf16.mxu0 %v11228
    %11778 = vmatpush1.bf16.msra.mxu0 %v11227
    %11779 = vmatprep.subr.bf16.mxu0 %v11244
    %11780 = vmatpush1.bf16.msra.mxu0 %v11243
    %11781 = vmatprep.mubr.bf16.mxu0 %v9880
    %11782 = vmatmul.mubr.bf16.gmra.mrb[0].mxu0 %v9879
    %v11783 = vpop.f32.mrb[0].mxu0
    %v11784 = vadd.f32 %v10194, %v11783
    %v11785 = vpop.f32.mrb[0].mxu0
    %v11786 = vadd.f32 %v10198, %v11785
    %v11787 = vpop.f32.mrb[0].mxu0
    %v11788 = vpop.f32.mrb[0].mxu0
    %11789 = vdwg.mxu0
    %11790 = vmatprep.subr.bf16.mxu0 %v11006
    %11791 = vmatpush1.bf16.msra.mxu0 %v11005
    %11792 = vmatprep.subr.bf16.mxu0 %v11022
    %11793 = vmatpush1.bf16.msra.mxu0 %v11021
    %11794 = vmatprep.subr.bf16.mxu0 %v11038
    %11795 = vmatpush1.bf16.msra.mxu0 %v11037
    %11796 = vmatprep.subr.bf16.mxu0 %v11054
    %11797 = vmatpush1.bf16.msra.mxu0 %v11053
    %11798 = vmatprep.subr.bf16.mxu0 %v11070
    %11799 = vmatpush1.bf16.msra.mxu0 %v11069
    %11800 = vmatprep.subr.bf16.mxu0 %v11086
    %11801 = vmatpush1.bf16.msra.mxu0 %v11085
    %11802 = vmatprep.subr.bf16.mxu0 %v11102
    %11803 = vmatpush1.bf16.msra.mxu0 %v11101
    %11804 = vmatprep.subr.bf16.mxu0 %v11118
    %11805 = vmatpush1.bf16.msra.mxu0 %v11117
    %11806 = vmatprep.subr.bf16.mxu0 %v11134
    %11807 = vmatpush1.bf16.msra.mxu0 %v11133
    %11808 = vmatprep.subr.bf16.mxu0 %v11150
    %11809 = vmatpush1.bf16.msra.mxu0 %v11149
    %11810 = vmatprep.subr.bf16.mxu0 %v11166
    %11811 = vmatpush1.bf16.msra.mxu0 %v11165
    %11812 = vmatprep.subr.bf16.mxu0 %v11182
    %11813 = vmatpush1.bf16.msra.mxu0 %v11181
    %11814 = vmatprep.subr.bf16.mxu0 %v11198
    %11815 = vmatpush1.bf16.msra.mxu0 %v11197
    %11816 = vmatprep.subr.bf16.mxu0 %v11214
    %11817 = vmatpush1.bf16.msra.mxu0 %v11213
    %11818 = vmatprep.subr.bf16.mxu0 %v11230
    %11819 = vmatpush1.bf16.msra.mxu0 %v11229
    %11820 = vmatprep.subr.bf16.mxu0 %v11246
    %11821 = vmatpush1.bf16.msra.mxu0 %v11245
    %11822 = vmatprep.mubr.bf16.mxu0 %v9880
    %11823 = vmatmul.mubr.bf16.gmra.mrb[0].mxu0 %v9879
    %v11824 = vpop.f32.mrb[0].mxu0
    %v11825 = vadd.f32 %v10202, %v11824
    %v11826 = vpop.f32.mrb[0].mxu0
    %v11827 = vadd.f32 %v10206, %v11826
    %v11828 = vpop.f32.mrb[0].mxu0
    %v11829 = vpop.f32.mrb[0].mxu0
    %11830 = vdwg.mxu0
    %v11831 = vmax.f32 %v11538, 0.0
    %v11832 = vmax.f32 %v11540, 0.0
    %v11833 = vmax.f32 %v11579, 0.0
    %v11834 = vmax.f32 %v11581, 0.0
    %v11835 = vmax.f32 %v11620, 0.0
    %v11836 = vmax.f32 %v11622, 0.0
    %v11837 = vmax.f32 %v11661, 0.0
    %v11838 = vmax.f32 %v11663, 0.0
    %v11839 = vmax.f32 %v11702, 0.0
    %v11840 = vmax.f32 %v11704, 0.0
    %v11841 = vmax.f32 %v11743, 0.0
    %v11842 = vmax.f32 %v11745, 0.0
    %v11843 = vmax.f32 %v11784, 0.0
    %v11844 = vmax.f32 %v11786, 0.0
    %v11845 = vmax.f32 %v11825, 0.0
    %v11846 = vmax.f32 %v11827, 0.0
    %v11847 = vpack.c.bf16 %v11831, %v11831
    %v11848 = vpack.c.bf16 %v11832, %v11832
    %v11849 = vpack.c.bf16 %v11833, %v11833
    %v11850 = vpack.c.bf16 %v11834, %v11834
    %v11851 = vpack.c.bf16 %v11835, %v11835
    %v11852 = vpack.c.bf16 %v11836, %v11836
    %v11853 = vpack.c.bf16 %v11837, %v11837
    %v11854 = vpack.c.bf16 %v11838, %v11838
    %v11855 = vpack.c.bf16 %v11839, %v11839
    %v11856 = vpack.c.bf16 %v11840, %v11840
    %v11857 = vpack.c.bf16 %v11841, %v11841
    %v11858 = vpack.c.bf16 %v11842, %v11842
    %v11859 = vpack.c.bf16 %v11843, %v11843
    %v11860 = vpack.c.bf16 %v11844, %v11844
    %v11861 = vpack.c.bf16 %v11845, %v11845
    %v11862 = vpack.c.bf16 %v11846, %v11846
    %s11863 = scalar_lea.vmem [#allocation20], 4096
    %v11864 = vld [vmem:[%s11863] sm:$0xff]
    %v11865 = vld [vmem:[%s11863 + $0x8] sm:$0xff]
    %v11866 = vld [vmem:[%s11863 + $0x10] sm:$0xff]
    %v11867 = vld [vmem:[%s11863 + $0x18] sm:$0xff]
    %v11868 = vld [vmem:[%s11863 + $0x20] sm:$0xff]
    %v11869 = vld [vmem:[%s11863 + $0x28] sm:$0xff]
    %v11870 = vld [vmem:[%s11863 + $0x30] sm:$0xff]
    %v11871 = vld [vmem:[%s11863 + $0x38] sm:$0xff]
    %v11872 = vld [vmem:[%s11863 + $0x40] sm:$0xff]
    %v11873 = vld [vmem:[%s11863 + $0x48] sm:$0xff]
    %v11874 = vld [vmem:[%s11863 + $0x50] sm:$0xff]
    %v11875 = vld [vmem:[%s11863 + $0x58] sm:$0xff]
    %v11876 = vld [vmem:[%s11863 + $0x60] sm:$0xff]
    %v11877 = vld [vmem:[%s11863 + $0x68] sm:$0xff]
    %v11878 = vld [vmem:[%s11863 + $0x70] sm:$0xff]
    %v11879 = vld [vmem:[%s11863 + $0x78] sm:$0xff]
    %v11880 = vld [vmem:[%s11863 + $0x80] sm:$0xff]
    %v11881 = vld [vmem:[%s11863 + $0x88] sm:$0xff]
    %v11882 = vld [vmem:[%s11863 + $0x90] sm:$0xff]
    %v11883 = vld [vmem:[%s11863 + $0x98] sm:$0xff]
    %v11884 = vld [vmem:[%s11863 + $0xa0] sm:$0xff]
    %v11885 = vld [vmem:[%s11863 + $0xa8] sm:$0xff]
    %v11886 = vld [vmem:[%s11863 + $0xb0] sm:$0xff]
    %v11887 = vld [vmem:[%s11863 + $0xb8] sm:$0xff]
    %v11888 = vld [vmem:[%s11863 + $0xc0] sm:$0xff]
    %v11889 = vld [vmem:[%s11863 + $0xc8] sm:$0xff]
    %v11890 = vld [vmem:[%s11863 + $0xd0] sm:$0xff]
    %v11891 = vld [vmem:[%s11863 + $0xd8] sm:$0xff]
    %v11892 = vld [vmem:[%s11863 + $0xe0] sm:$0xff]
    %v11893 = vld [vmem:[%s11863 + $0xe8] sm:$0xff]
    %v11894 = vld [vmem:[%s11863 + $0xf0] sm:$0xff]
    %v11895 = vld [vmem:[%s11863 + $0xf8] sm:$0xff]
    %v11896 = vld [vmem:[%s11863 + $0x100] sm:$0xff]
    %v11897 = vld [vmem:[%s11863 + $0x108] sm:$0xff]
    %v11898 = vld [vmem:[%s11863 + $0x110] sm:$0xff]
    %v11899 = vld [vmem:[%s11863 + $0x118] sm:$0xff]
    %v11900 = vld [vmem:[%s11863 + $0x120] sm:$0xff]
    %v11901 = vld [vmem:[%s11863 + $0x128] sm:$0xff]
    %v11902 = vld [vmem:[%s11863 + $0x130] sm:$0xff]
    %v11903 = vld [vmem:[%s11863 + $0x138] sm:$0xff]
    %v11904 = vld [vmem:[%s11863 + $0x140] sm:$0xff]
    %v11905 = vld [vmem:[%s11863 + $0x148] sm:$0xff]
    %v11906 = vld [vmem:[%s11863 + $0x150] sm:$0xff]
    %v11907 = vld [vmem:[%s11863 + $0x158] sm:$0xff]
    %v11908 = vld [vmem:[%s11863 + $0x160] sm:$0xff]
    %v11909 = vld [vmem:[%s11863 + $0x168] sm:$0xff]
    %v11910 = vld [vmem:[%s11863 + $0x170] sm:$0xff]
    %v11911 = vld [vmem:[%s11863 + $0x178] sm:$0xff]
    %v11912 = vld [vmem:[%s11863 + $0x180] sm:$0xff]
    %v11913 = vld [vmem:[%s11863 + $0x188] sm:$0xff]
    %v11914 = vld [vmem:[%s11863 + $0x190] sm:$0xff]
    %v11915 = vld [vmem:[%s11863 + $0x198] sm:$0xff]
    %v11916 = vld [vmem:[%s11863 + $0x1a0] sm:$0xff]
    %v11917 = vld [vmem:[%s11863 + $0x1a8] sm:$0xff]
    %v11918 = vld [vmem:[%s11863 + $0x1b0] sm:$0xff]
    %v11919 = vld [vmem:[%s11863 + $0x1b8] sm:$0xff]
    %v11920 = vld [vmem:[%s11863 + $0x1c0] sm:$0xff]
    %v11921 = vld [vmem:[%s11863 + $0x1c8] sm:$0xff]
    %v11922 = vld [vmem:[%s11863 + $0x1d0] sm:$0xff]
    %v11923 = vld [vmem:[%s11863 + $0x1d8] sm:$0xff]
    %v11924 = vld [vmem:[%s11863 + $0x1e0] sm:$0xff]
    %v11925 = vld [vmem:[%s11863 + $0x1e8] sm:$0xff]
    %v11926 = vld [vmem:[%s11863 + $0x1f0] sm:$0xff]
    %v11927 = vld [vmem:[%s11863 + $0x1f8] sm:$0xff]
    %v11928 = vld [vmem:[%s11863 + $0x200] sm:$0xff]
    %v11929 = vld [vmem:[%s11863 + $0x208] sm:$0xff]
    %v11930 = vld [vmem:[%s11863 + $0x210] sm:$0xff]
    %v11931 = vld [vmem:[%s11863 + $0x218] sm:$0xff]
    %v11932 = vld [vmem:[%s11863 + $0x220] sm:$0xff]
    %v11933 = vld [vmem:[%s11863 + $0x228] sm:$0xff]
    %v11934 = vld [vmem:[%s11863 + $0x230] sm:$0xff]
    %v11935 = vld [vmem:[%s11863 + $0x238] sm:$0xff]
    %v11936 = vld [vmem:[%s11863 + $0x240] sm:$0xff]
    %v11937 = vld [vmem:[%s11863 + $0x248] sm:$0xff]
    %v11938 = vld [vmem:[%s11863 + $0x250] sm:$0xff]
    %v11939 = vld [vmem:[%s11863 + $0x258] sm:$0xff]
    %v11940 = vld [vmem:[%s11863 + $0x260] sm:$0xff]
    %v11941 = vld [vmem:[%s11863 + $0x268] sm:$0xff]
    %v11942 = vld [vmem:[%s11863 + $0x270] sm:$0xff]
    %v11943 = vld [vmem:[%s11863 + $0x278] sm:$0xff]
    %v11944 = vld [vmem:[%s11863 + $0x280] sm:$0xff]
    %v11945 = vld [vmem:[%s11863 + $0x288] sm:$0xff]
    %v11946 = vld [vmem:[%s11863 + $0x290] sm:$0xff]
    %v11947 = vld [vmem:[%s11863 + $0x298] sm:$0xff]
    %v11948 = vld [vmem:[%s11863 + $0x2a0] sm:$0xff]
    %v11949 = vld [vmem:[%s11863 + $0x2a8] sm:$0xff]
    %v11950 = vld [vmem:[%s11863 + $0x2b0] sm:$0xff]
    %v11951 = vld [vmem:[%s11863 + $0x2b8] sm:$0xff]
    %v11952 = vld [vmem:[%s11863 + $0x2c0] sm:$0xff]
    %v11953 = vld [vmem:[%s11863 + $0x2c8] sm:$0xff]
    %v11954 = vld [vmem:[%s11863 + $0x2d0] sm:$0xff]
    %v11955 = vld [vmem:[%s11863 + $0x2d8] sm:$0xff]
    %v11956 = vld [vmem:[%s11863 + $0x2e0] sm:$0xff]
    %v11957 = vld [vmem:[%s11863 + $0x2e8] sm:$0xff]
    %v11958 = vld [vmem:[%s11863 + $0x2f0] sm:$0xff]
    %v11959 = vld [vmem:[%s11863 + $0x2f8] sm:$0xff]
    %v11960 = vld [vmem:[%s11863 + $0x300] sm:$0xff]
    %v11961 = vld [vmem:[%s11863 + $0x308] sm:$0xff]
    %v11962 = vld [vmem:[%s11863 + $0x310] sm:$0xff]
    %v11963 = vld [vmem:[%s11863 + $0x318] sm:$0xff]
    %v11964 = vld [vmem:[%s11863 + $0x320] sm:$0xff]
    %v11965 = vld [vmem:[%s11863 + $0x328] sm:$0xff]
    %v11966 = vld [vmem:[%s11863 + $0x330] sm:$0xff]
    %v11967 = vld [vmem:[%s11863 + $0x338] sm:$0xff]
    %v11968 = vld [vmem:[%s11863 + $0x340] sm:$0xff]
    %v11969 = vld [vmem:[%s11863 + $0x348] sm:$0xff]
    %v11970 = vld [vmem:[%s11863 + $0x350] sm:$0xff]
    %v11971 = vld [vmem:[%s11863 + $0x358] sm:$0xff]
    %v11972 = vld [vmem:[%s11863 + $0x360] sm:$0xff]
    %v11973 = vld [vmem:[%s11863 + $0x368] sm:$0xff]
    %v11974 = vld [vmem:[%s11863 + $0x370] sm:$0xff]
    %v11975 = vld [vmem:[%s11863 + $0x378] sm:$0xff]
    %v11976 = vld [vmem:[%s11863 + $0x380] sm:$0xff]
    %v11977 = vld [vmem:[%s11863 + $0x388] sm:$0xff]
    %v11978 = vld [vmem:[%s11863 + $0x390] sm:$0xff]
    %v11979 = vld [vmem:[%s11863 + $0x398] sm:$0xff]
    %v11980 = vld [vmem:[%s11863 + $0x3a0] sm:$0xff]
    %v11981 = vld [vmem:[%s11863 + $0x3a8] sm:$0xff]
    %v11982 = vld [vmem:[%s11863 + $0x3b0] sm:$0xff]
    %v11983 = vld [vmem:[%s11863 + $0x3b8] sm:$0xff]
    %v11984 = vld [vmem:[%s11863 + $0x3c0] sm:$0xff]
    %v11985 = vld [vmem:[%s11863 + $0x3c8] sm:$0xff]
    %v11986 = vld [vmem:[%s11863 + $0x3d0] sm:$0xff]
    %v11987 = vld [vmem:[%s11863 + $0x3d8] sm:$0xff]
    %v11988 = vld [vmem:[%s11863 + $0x3e0] sm:$0xff]
    %v11989 = vld [vmem:[%s11863 + $0x3e8] sm:$0xff]
    %v11990 = vld [vmem:[%s11863 + $0x3f0] sm:$0xff]
    %v11991 = vld [vmem:[%s11863 + $0x3f8] sm:$0xff]
    %v11992 = vld [vmem:[%s11863 + $0x400] sm:$0xff]
    %v11993 = vld [vmem:[%s11863 + $0x408] sm:$0xff]
    %v11994 = vld [vmem:[%s11863 + $0x410] sm:$0xff]
    %v11995 = vld [vmem:[%s11863 + $0x418] sm:$0xff]
    %v11996 = vld [vmem:[%s11863 + $0x420] sm:$0xff]
    %v11997 = vld [vmem:[%s11863 + $0x428] sm:$0xff]
    %v11998 = vld [vmem:[%s11863 + $0x430] sm:$0xff]
    %v11999 = vld [vmem:[%s11863 + $0x438] sm:$0xff]
    %v12000 = vld [vmem:[%s11863 + $0x440] sm:$0xff]
    %v12001 = vld [vmem:[%s11863 + $0x448] sm:$0xff]
    %v12002 = vld [vmem:[%s11863 + $0x450] sm:$0xff]
    %v12003 = vld [vmem:[%s11863 + $0x458] sm:$0xff]
    %v12004 = vld [vmem:[%s11863 + $0x460] sm:$0xff]
    %v12005 = vld [vmem:[%s11863 + $0x468] sm:$0xff]
    %v12006 = vld [vmem:[%s11863 + $0x470] sm:$0xff]
    %v12007 = vld [vmem:[%s11863 + $0x478] sm:$0xff]
    %v12008 = vld [vmem:[%s11863 + $0x480] sm:$0xff]
    %v12009 = vld [vmem:[%s11863 + $0x488] sm:$0xff]
    %v12010 = vld [vmem:[%s11863 + $0x490] sm:$0xff]
    %v12011 = vld [vmem:[%s11863 + $0x498] sm:$0xff]
    %v12012 = vld [vmem:[%s11863 + $0x4a0] sm:$0xff]
    %v12013 = vld [vmem:[%s11863 + $0x4a8] sm:$0xff]
    %v12014 = vld [vmem:[%s11863 + $0x4b0] sm:$0xff]
    %v12015 = vld [vmem:[%s11863 + $0x4b8] sm:$0xff]
    %v12016 = vld [vmem:[%s11863 + $0x4c0] sm:$0xff]
    %v12017 = vld [vmem:[%s11863 + $0x4c8] sm:$0xff]
    %v12018 = vld [vmem:[%s11863 + $0x4d0] sm:$0xff]
    %v12019 = vld [vmem:[%s11863 + $0x4d8] sm:$0xff]
    %v12020 = vld [vmem:[%s11863 + $0x4e0] sm:$0xff]
    %v12021 = vld [vmem:[%s11863 + $0x4e8] sm:$0xff]
    %v12022 = vld [vmem:[%s11863 + $0x4f0] sm:$0xff]
    %v12023 = vld [vmem:[%s11863 + $0x4f8] sm:$0xff]
    %v12024 = vld [vmem:[%s11863 + $0x500] sm:$0xff]
    %v12025 = vld [vmem:[%s11863 + $0x508] sm:$0xff]
    %v12026 = vld [vmem:[%s11863 + $0x510] sm:$0xff]
    %v12027 = vld [vmem:[%s11863 + $0x518] sm:$0xff]
    %v12028 = vld [vmem:[%s11863 + $0x520] sm:$0xff]
    %v12029 = vld [vmem:[%s11863 + $0x528] sm:$0xff]
    %v12030 = vld [vmem:[%s11863 + $0x530] sm:$0xff]
    %v12031 = vld [vmem:[%s11863 + $0x538] sm:$0xff]
    %v12032 = vld [vmem:[%s11863 + $0x540] sm:$0xff]
    %v12033 = vld [vmem:[%s11863 + $0x548] sm:$0xff]
    %v12034 = vld [vmem:[%s11863 + $0x550] sm:$0xff]
    %v12035 = vld [vmem:[%s11863 + $0x558] sm:$0xff]
    %v12036 = vld [vmem:[%s11863 + $0x560] sm:$0xff]
    %v12037 = vld [vmem:[%s11863 + $0x568] sm:$0xff]
    %v12038 = vld [vmem:[%s11863 + $0x570] sm:$0xff]
    %v12039 = vld [vmem:[%s11863 + $0x578] sm:$0xff]
    %v12040 = vld [vmem:[%s11863 + $0x580] sm:$0xff]
    %v12041 = vld [vmem:[%s11863 + $0x588] sm:$0xff]
    %v12042 = vld [vmem:[%s11863 + $0x590] sm:$0xff]
    %v12043 = vld [vmem:[%s11863 + $0x598] sm:$0xff]
    %v12044 = vld [vmem:[%s11863 + $0x5a0] sm:$0xff]
    %v12045 = vld [vmem:[%s11863 + $0x5a8] sm:$0xff]
    %v12046 = vld [vmem:[%s11863 + $0x5b0] sm:$0xff]
    %v12047 = vld [vmem:[%s11863 + $0x5b8] sm:$0xff]
    %v12048 = vld [vmem:[%s11863 + $0x5c0] sm:$0xff]
    %v12049 = vld [vmem:[%s11863 + $0x5c8] sm:$0xff]
    %v12050 = vld [vmem:[%s11863 + $0x5d0] sm:$0xff]
    %v12051 = vld [vmem:[%s11863 + $0x5d8] sm:$0xff]
    %v12052 = vld [vmem:[%s11863 + $0x5e0] sm:$0xff]
    %v12053 = vld [vmem:[%s11863 + $0x5e8] sm:$0xff]
    %v12054 = vld [vmem:[%s11863 + $0x5f0] sm:$0xff]
    %v12055 = vld [vmem:[%s11863 + $0x5f8] sm:$0xff]
    %v12056 = vld [vmem:[%s11863 + $0x600] sm:$0xff]
    %v12057 = vld [vmem:[%s11863 + $0x608] sm:$0xff]
    %v12058 = vld [vmem:[%s11863 + $0x610] sm:$0xff]
    %v12059 = vld [vmem:[%s11863 + $0x618] sm:$0xff]
    %v12060 = vld [vmem:[%s11863 + $0x620] sm:$0xff]
    %v12061 = vld [vmem:[%s11863 + $0x628] sm:$0xff]
    %v12062 = vld [vmem:[%s11863 + $0x630] sm:$0xff]
    %v12063 = vld [vmem:[%s11863 + $0x638] sm:$0xff]
    %v12064 = vld [vmem:[%s11863 + $0x640] sm:$0xff]
    %v12065 = vld [vmem:[%s11863 + $0x648] sm:$0xff]
    %v12066 = vld [vmem:[%s11863 + $0x650] sm:$0xff]
    %v12067 = vld [vmem:[%s11863 + $0x658] sm:$0xff]
    %v12068 = vld [vmem:[%s11863 + $0x660] sm:$0xff]
    %v12069 = vld [vmem:[%s11863 + $0x668] sm:$0xff]
    %v12070 = vld [vmem:[%s11863 + $0x670] sm:$0xff]
    %v12071 = vld [vmem:[%s11863 + $0x678] sm:$0xff]
    %v12072 = vld [vmem:[%s11863 + $0x680] sm:$0xff]
    %v12073 = vld [vmem:[%s11863 + $0x688] sm:$0xff]
    %v12074 = vld [vmem:[%s11863 + $0x690] sm:$0xff]
    %v12075 = vld [vmem:[%s11863 + $0x698] sm:$0xff]
    %v12076 = vld [vmem:[%s11863 + $0x6a0] sm:$0xff]
    %v12077 = vld [vmem:[%s11863 + $0x6a8] sm:$0xff]
    %v12078 = vld [vmem:[%s11863 + $0x6b0] sm:$0xff]
    %v12079 = vld [vmem:[%s11863 + $0x6b8] sm:$0xff]
    %v12080 = vld [vmem:[%s11863 + $0x6c0] sm:$0xff]
    %v12081 = vld [vmem:[%s11863 + $0x6c8] sm:$0xff]
    %v12082 = vld [vmem:[%s11863 + $0x6d0] sm:$0xff]
    %v12083 = vld [vmem:[%s11863 + $0x6d8] sm:$0xff]
    %v12084 = vld [vmem:[%s11863 + $0x6e0] sm:$0xff]
    %v12085 = vld [vmem:[%s11863 + $0x6e8] sm:$0xff]
    %v12086 = vld [vmem:[%s11863 + $0x6f0] sm:$0xff]
    %v12087 = vld [vmem:[%s11863 + $0x6f8] sm:$0xff]
    %v12088 = vld [vmem:[%s11863 + $0x700] sm:$0xff]
    %v12089 = vld [vmem:[%s11863 + $0x708] sm:$0xff]
    %v12090 = vld [vmem:[%s11863 + $0x710] sm:$0xff]
    %v12091 = vld [vmem:[%s11863 + $0x718] sm:$0xff]
    %v12092 = vld [vmem:[%s11863 + $0x720] sm:$0xff]
    %v12093 = vld [vmem:[%s11863 + $0x728] sm:$0xff]
    %v12094 = vld [vmem:[%s11863 + $0x730] sm:$0xff]
    %v12095 = vld [vmem:[%s11863 + $0x738] sm:$0xff]
    %v12096 = vld [vmem:[%s11863 + $0x740] sm:$0xff]
    %v12097 = vld [vmem:[%s11863 + $0x748] sm:$0xff]
    %v12098 = vld [vmem:[%s11863 + $0x750] sm:$0xff]
    %v12099 = vld [vmem:[%s11863 + $0x758] sm:$0xff]
    %v12100 = vld [vmem:[%s11863 + $0x760] sm:$0xff]
    %v12101 = vld [vmem:[%s11863 + $0x768] sm:$0xff]
    %v12102 = vld [vmem:[%s11863 + $0x770] sm:$0xff]
    %v12103 = vld [vmem:[%s11863 + $0x778] sm:$0xff]
    %v12104 = vld [vmem:[%s11863 + $0x780] sm:$0xff]
    %v12105 = vld [vmem:[%s11863 + $0x788] sm:$0xff]
    %v12106 = vld [vmem:[%s11863 + $0x790] sm:$0xff]
    %v12107 = vld [vmem:[%s11863 + $0x798] sm:$0xff]
    %v12108 = vld [vmem:[%s11863 + $0x7a0] sm:$0xff]
    %v12109 = vld [vmem:[%s11863 + $0x7a8] sm:$0xff]
    %v12110 = vld [vmem:[%s11863 + $0x7b0] sm:$0xff]
    %v12111 = vld [vmem:[%s11863 + $0x7b8] sm:$0xff]
    %v12112 = vld [vmem:[%s11863 + $0x7c0] sm:$0xff]
    %v12113 = vld [vmem:[%s11863 + $0x7c8] sm:$0xff]
    %v12114 = vld [vmem:[%s11863 + $0x7d0] sm:$0xff]
    %v12115 = vld [vmem:[%s11863 + $0x7d8] sm:$0xff]
    %v12116 = vld [vmem:[%s11863 + $0x7e0] sm:$0xff]
    %v12117 = vld [vmem:[%s11863 + $0x7e8] sm:$0xff]
    %v12118 = vld [vmem:[%s11863 + $0x7f0] sm:$0xff]
    %v12119 = vld [vmem:[%s11863 + $0x7f8] sm:$0xff]
    %s12120 = scalar_lea.vmem [#allocation22], 4
    %v12121 = vld [vmem:[%s12120] sm:$0x3]
    %v12123 = vlaneseq
    %v12124 = vshrl.u32 %v12123, 7
    %v12125 = vsub.s32 0, %v12124
    %v12126 = vrot.slane %v12121, %v12125
    %v12127 = vlaneseq
    %v12128 = vshrl.u32 %v12127, 7
    %v12129 = vsub.s32 1, %v12128
    %v12130 = vrot.slane %v12121, %v12129
    %v12389 = vunpack.c.l.b16 %v11864
    %v12390 = vunpack.c.h.b16 %v11864
    %v12391 = vunpack.c.l.b16 %v11865
    %v12392 = vunpack.c.h.b16 %v11865
    %v12393 = vunpack.c.l.b16 %v11866
    %v12394 = vunpack.c.h.b16 %v11866
    %v12395 = vunpack.c.l.b16 %v11867
    %v12396 = vunpack.c.h.b16 %v11867
    %v12397 = vunpack.c.l.b16 %v11868
    %v12398 = vunpack.c.h.b16 %v11868
    %v12399 = vunpack.c.l.b16 %v11869
    %v12400 = vunpack.c.h.b16 %v11869
    %v12401 = vunpack.c.l.b16 %v11870
    %v12402 = vunpack.c.h.b16 %v11870
    %v12403 = vunpack.c.l.b16 %v11871
    %v12404 = vunpack.c.h.b16 %v11871
    %v12405 = vunpack.c.l.b16 %v11872
    %v12406 = vunpack.c.h.b16 %v11872
    %v12407 = vunpack.c.l.b16 %v11873
    %v12408 = vunpack.c.h.b16 %v11873
    %v12409 = vunpack.c.l.b16 %v11874
    %v12410 = vunpack.c.h.b16 %v11874
    %v12411 = vunpack.c.l.b16 %v11875
    %v12412 = vunpack.c.h.b16 %v11875
    %v12413 = vunpack.c.l.b16 %v11876
    %v12414 = vunpack.c.h.b16 %v11876
    %v12415 = vunpack.c.l.b16 %v11877
    %v12416 = vunpack.c.h.b16 %v11877
    %v12417 = vunpack.c.l.b16 %v11878
    %v12418 = vunpack.c.h.b16 %v11878
    %v12419 = vunpack.c.l.b16 %v11879
    %v12420 = vunpack.c.h.b16 %v11879
    %v12421 = vunpack.c.l.b16 %v11880
    %v12422 = vunpack.c.h.b16 %v11880
    %v12423 = vunpack.c.l.b16 %v11881
    %v12424 = vunpack.c.h.b16 %v11881
    %v12425 = vunpack.c.l.b16 %v11882
    %v12426 = vunpack.c.h.b16 %v11882
    %v12427 = vunpack.c.l.b16 %v11883
    %v12428 = vunpack.c.h.b16 %v11883
    %v12429 = vunpack.c.l.b16 %v11884
    %v12430 = vunpack.c.h.b16 %v11884
    %v12431 = vunpack.c.l.b16 %v11885
    %v12432 = vunpack.c.h.b16 %v11885
    %v12433 = vunpack.c.l.b16 %v11886
    %v12434 = vunpack.c.h.b16 %v11886
    %v12435 = vunpack.c.l.b16 %v11887
    %v12436 = vunpack.c.h.b16 %v11887
    %v12437 = vunpack.c.l.b16 %v11888
    %v12438 = vunpack.c.h.b16 %v11888
    %v12439 = vunpack.c.l.b16 %v11889
    %v12440 = vunpack.c.h.b16 %v11889
    %v12441 = vunpack.c.l.b16 %v11890
    %v12442 = vunpack.c.h.b16 %v11890
    %v12443 = vunpack.c.l.b16 %v11891
    %v12444 = vunpack.c.h.b16 %v11891
    %v12445 = vunpack.c.l.b16 %v11892
    %v12446 = vunpack.c.h.b16 %v11892
    %v12447 = vunpack.c.l.b16 %v11893
    %v12448 = vunpack.c.h.b16 %v11893
    %v12449 = vunpack.c.l.b16 %v11894
    %v12450 = vunpack.c.h.b16 %v11894
    %v12451 = vunpack.c.l.b16 %v11895
    %v12452 = vunpack.c.h.b16 %v11895
    %v12453 = vunpack.c.l.b16 %v11896
    %v12454 = vunpack.c.h.b16 %v11896
    %v12455 = vunpack.c.l.b16 %v11897
    %v12456 = vunpack.c.h.b16 %v11897
    %v12457 = vunpack.c.l.b16 %v11898
    %v12458 = vunpack.c.h.b16 %v11898
    %v12459 = vunpack.c.l.b16 %v11899
    %v12460 = vunpack.c.h.b16 %v11899
    %v12461 = vunpack.c.l.b16 %v11900
    %v12462 = vunpack.c.h.b16 %v11900
    %v12463 = vunpack.c.l.b16 %v11901
    %v12464 = vunpack.c.h.b16 %v11901
    %v12465 = vunpack.c.l.b16 %v11902
    %v12466 = vunpack.c.h.b16 %v11902
    %v12467 = vunpack.c.l.b16 %v11903
    %v12468 = vunpack.c.h.b16 %v11903
    %v12469 = vunpack.c.l.b16 %v11904
    %v12470 = vunpack.c.h.b16 %v11904
    %v12471 = vunpack.c.l.b16 %v11905
    %v12472 = vunpack.c.h.b16 %v11905
    %v12473 = vunpack.c.l.b16 %v11906
    %v12474 = vunpack.c.h.b16 %v11906
    %v12475 = vunpack.c.l.b16 %v11907
    %v12476 = vunpack.c.h.b16 %v11907
    %v12477 = vunpack.c.l.b16 %v11908
    %v12478 = vunpack.c.h.b16 %v11908
    %v12479 = vunpack.c.l.b16 %v11909
    %v12480 = vunpack.c.h.b16 %v11909
    %v12481 = vunpack.c.l.b16 %v11910
    %v12482 = vunpack.c.h.b16 %v11910
    %v12483 = vunpack.c.l.b16 %v11911
    %v12484 = vunpack.c.h.b16 %v11911
    %v12485 = vunpack.c.l.b16 %v11912
    %v12486 = vunpack.c.h.b16 %v11912
    %v12487 = vunpack.c.l.b16 %v11913
    %v12488 = vunpack.c.h.b16 %v11913
    %v12489 = vunpack.c.l.b16 %v11914
    %v12490 = vunpack.c.h.b16 %v11914
    %v12491 = vunpack.c.l.b16 %v11915
    %v12492 = vunpack.c.h.b16 %v11915
    %v12493 = vunpack.c.l.b16 %v11916
    %v12494 = vunpack.c.h.b16 %v11916
    %v12495 = vunpack.c.l.b16 %v11917
    %v12496 = vunpack.c.h.b16 %v11917
    %v12497 = vunpack.c.l.b16 %v11918
    %v12498 = vunpack.c.h.b16 %v11918
    %v12499 = vunpack.c.l.b16 %v11919
    %v12500 = vunpack.c.h.b16 %v11919
    %v12501 = vunpack.c.l.b16 %v11920
    %v12502 = vunpack.c.h.b16 %v11920
    %v12503 = vunpack.c.l.b16 %v11921
    %v12504 = vunpack.c.h.b16 %v11921
    %v12505 = vunpack.c.l.b16 %v11922
    %v12506 = vunpack.c.h.b16 %v11922
    %v12507 = vunpack.c.l.b16 %v11923
    %v12508 = vunpack.c.h.b16 %v11923
    %v12509 = vunpack.c.l.b16 %v11924
    %v12510 = vunpack.c.h.b16 %v11924
    %v12511 = vunpack.c.l.b16 %v11925
    %v12512 = vunpack.c.h.b16 %v11925
    %v12513 = vunpack.c.l.b16 %v11926
    %v12514 = vunpack.c.h.b16 %v11926
    %v12515 = vunpack.c.l.b16 %v11927
    %v12516 = vunpack.c.h.b16 %v11927
    %v12517 = vunpack.c.l.b16 %v11928
    %v12518 = vunpack.c.h.b16 %v11928
    %v12519 = vunpack.c.l.b16 %v11929
    %v12520 = vunpack.c.h.b16 %v11929
    %v12521 = vunpack.c.l.b16 %v11930
    %v12522 = vunpack.c.h.b16 %v11930
    %v12523 = vunpack.c.l.b16 %v11931
    %v12524 = vunpack.c.h.b16 %v11931
    %v12525 = vunpack.c.l.b16 %v11932
    %v12526 = vunpack.c.h.b16 %v11932
    %v12527 = vunpack.c.l.b16 %v11933
    %v12528 = vunpack.c.h.b16 %v11933
    %v12529 = vunpack.c.l.b16 %v11934
    %v12530 = vunpack.c.h.b16 %v11934
    %v12531 = vunpack.c.l.b16 %v11935
    %v12532 = vunpack.c.h.b16 %v11935
    %v12533 = vunpack.c.l.b16 %v11936
    %v12534 = vunpack.c.h.b16 %v11936
    %v12535 = vunpack.c.l.b16 %v11937
    %v12536 = vunpack.c.h.b16 %v11937
    %v12537 = vunpack.c.l.b16 %v11938
    %v12538 = vunpack.c.h.b16 %v11938
    %v12539 = vunpack.c.l.b16 %v11939
    %v12540 = vunpack.c.h.b16 %v11939
    %v12541 = vunpack.c.l.b16 %v11940
    %v12542 = vunpack.c.h.b16 %v11940
    %v12543 = vunpack.c.l.b16 %v11941
    %v12544 = vunpack.c.h.b16 %v11941
    %v12545 = vunpack.c.l.b16 %v11942
    %v12546 = vunpack.c.h.b16 %v11942
    %v12547 = vunpack.c.l.b16 %v11943
    %v12548 = vunpack.c.h.b16 %v11943
    %v12549 = vunpack.c.l.b16 %v11944
    %v12550 = vunpack.c.h.b16 %v11944
    %v12551 = vunpack.c.l.b16 %v11945
    %v12552 = vunpack.c.h.b16 %v11945
    %v12553 = vunpack.c.l.b16 %v11946
    %v12554 = vunpack.c.h.b16 %v11946
    %v12555 = vunpack.c.l.b16 %v11947
    %v12556 = vunpack.c.h.b16 %v11947
    %v12557 = vunpack.c.l.b16 %v11948
    %v12558 = vunpack.c.h.b16 %v11948
    %v12559 = vunpack.c.l.b16 %v11949
    %v12560 = vunpack.c.h.b16 %v11949
    %v12561 = vunpack.c.l.b16 %v11950
    %v12562 = vunpack.c.h.b16 %v11950
    %v12563 = vunpack.c.l.b16 %v11951
    %v12564 = vunpack.c.h.b16 %v11951
    %v12565 = vunpack.c.l.b16 %v11952
    %v12566 = vunpack.c.h.b16 %v11952
    %v12567 = vunpack.c.l.b16 %v11953
    %v12568 = vunpack.c.h.b16 %v11953
    %v12569 = vunpack.c.l.b16 %v11954
    %v12570 = vunpack.c.h.b16 %v11954
    %v12571 = vunpack.c.l.b16 %v11955
    %v12572 = vunpack.c.h.b16 %v11955
    %v12573 = vunpack.c.l.b16 %v11956
    %v12574 = vunpack.c.h.b16 %v11956
    %v12575 = vunpack.c.l.b16 %v11957
    %v12576 = vunpack.c.h.b16 %v11957
    %v12577 = vunpack.c.l.b16 %v11958
    %v12578 = vunpack.c.h.b16 %v11958
    %v12579 = vunpack.c.l.b16 %v11959
    %v12580 = vunpack.c.h.b16 %v11959
    %v12581 = vunpack.c.l.b16 %v11960
    %v12582 = vunpack.c.h.b16 %v11960
    %v12583 = vunpack.c.l.b16 %v11961
    %v12584 = vunpack.c.h.b16 %v11961
    %v12585 = vunpack.c.l.b16 %v11962
    %v12586 = vunpack.c.h.b16 %v11962
    %v12587 = vunpack.c.l.b16 %v11963
    %v12588 = vunpack.c.h.b16 %v11963
    %v12589 = vunpack.c.l.b16 %v11964
    %v12590 = vunpack.c.h.b16 %v11964
    %v12591 = vunpack.c.l.b16 %v11965
    %v12592 = vunpack.c.h.b16 %v11965
    %v12593 = vunpack.c.l.b16 %v11966
    %v12594 = vunpack.c.h.b16 %v11966
    %v12595 = vunpack.c.l.b16 %v11967
    %v12596 = vunpack.c.h.b16 %v11967
    %v12597 = vunpack.c.l.b16 %v11968
    %v12598 = vunpack.c.h.b16 %v11968
    %v12599 = vunpack.c.l.b16 %v11969
    %v12600 = vunpack.c.h.b16 %v11969
    %v12601 = vunpack.c.l.b16 %v11970
    %v12602 = vunpack.c.h.b16 %v11970
    %v12603 = vunpack.c.l.b16 %v11971
    %v12604 = vunpack.c.h.b16 %v11971
    %v12605 = vunpack.c.l.b16 %v11972
    %v12606 = vunpack.c.h.b16 %v11972
    %v12607 = vunpack.c.l.b16 %v11973
    %v12608 = vunpack.c.h.b16 %v11973
    %v12609 = vunpack.c.l.b16 %v11974
    %v12610 = vunpack.c.h.b16 %v11974
    %v12611 = vunpack.c.l.b16 %v11975
    %v12612 = vunpack.c.h.b16 %v11975
    %v12613 = vunpack.c.l.b16 %v11976
    %v12614 = vunpack.c.h.b16 %v11976
    %v12615 = vunpack.c.l.b16 %v11977
    %v12616 = vunpack.c.h.b16 %v11977
    %v12617 = vunpack.c.l.b16 %v11978
    %v12618 = vunpack.c.h.b16 %v11978
    %v12619 = vunpack.c.l.b16 %v11979
    %v12620 = vunpack.c.h.b16 %v11979
    %v12621 = vunpack.c.l.b16 %v11980
    %v12622 = vunpack.c.h.b16 %v11980
    %v12623 = vunpack.c.l.b16 %v11981
    %v12624 = vunpack.c.h.b16 %v11981
    %v12625 = vunpack.c.l.b16 %v11982
    %v12626 = vunpack.c.h.b16 %v11982
    %v12627 = vunpack.c.l.b16 %v11983
    %v12628 = vunpack.c.h.b16 %v11983
    %v12629 = vunpack.c.l.b16 %v11984
    %v12630 = vunpack.c.h.b16 %v11984
    %v12631 = vunpack.c.l.b16 %v11985
    %v12632 = vunpack.c.h.b16 %v11985
    %v12633 = vunpack.c.l.b16 %v11986
    %v12634 = vunpack.c.h.b16 %v11986
    %v12635 = vunpack.c.l.b16 %v11987
    %v12636 = vunpack.c.h.b16 %v11987
    %v12637 = vunpack.c.l.b16 %v11988
    %v12638 = vunpack.c.h.b16 %v11988
    %v12639 = vunpack.c.l.b16 %v11989
    %v12640 = vunpack.c.h.b16 %v11989
    %v12641 = vunpack.c.l.b16 %v11990
    %v12642 = vunpack.c.h.b16 %v11990
    %v12643 = vunpack.c.l.b16 %v11991
    %v12644 = vunpack.c.h.b16 %v11991
    %v12645 = vunpack.c.l.b16 %v11992
    %v12646 = vunpack.c.h.b16 %v11992
    %v12647 = vunpack.c.l.b16 %v11993
    %v12648 = vunpack.c.h.b16 %v11993
    %v12649 = vunpack.c.l.b16 %v11994
    %v12650 = vunpack.c.h.b16 %v11994
    %v12651 = vunpack.c.l.b16 %v11995
    %v12652 = vunpack.c.h.b16 %v11995
    %v12653 = vunpack.c.l.b16 %v11996
    %v12654 = vunpack.c.h.b16 %v11996
    %v12655 = vunpack.c.l.b16 %v11997
    %v12656 = vunpack.c.h.b16 %v11997
    %v12657 = vunpack.c.l.b16 %v11998
    %v12658 = vunpack.c.h.b16 %v11998
    %v12659 = vunpack.c.l.b16 %v11999
    %v12660 = vunpack.c.h.b16 %v11999
    %v12661 = vunpack.c.l.b16 %v12000
    %v12662 = vunpack.c.h.b16 %v12000
    %v12663 = vunpack.c.l.b16 %v12001
    %v12664 = vunpack.c.h.b16 %v12001
    %v12665 = vunpack.c.l.b16 %v12002
    %v12666 = vunpack.c.h.b16 %v12002
    %v12667 = vunpack.c.l.b16 %v12003
    %v12668 = vunpack.c.h.b16 %v12003
    %v12669 = vunpack.c.l.b16 %v12004
    %v12670 = vunpack.c.h.b16 %v12004
    %v12671 = vunpack.c.l.b16 %v12005
    %v12672 = vunpack.c.h.b16 %v12005
    %v12673 = vunpack.c.l.b16 %v12006
    %v12674 = vunpack.c.h.b16 %v12006
    %v12675 = vunpack.c.l.b16 %v12007
    %v12676 = vunpack.c.h.b16 %v12007
    %v12677 = vunpack.c.l.b16 %v12008
    %v12678 = vunpack.c.h.b16 %v12008
    %v12679 = vunpack.c.l.b16 %v12009
    %v12680 = vunpack.c.h.b16 %v12009
    %v12681 = vunpack.c.l.b16 %v12010
    %v12682 = vunpack.c.h.b16 %v12010
    %v12683 = vunpack.c.l.b16 %v12011
    %v12684 = vunpack.c.h.b16 %v12011
    %v12685 = vunpack.c.l.b16 %v12012
    %v12686 = vunpack.c.h.b16 %v12012
    %v12687 = vunpack.c.l.b16 %v12013
    %v12688 = vunpack.c.h.b16 %v12013
    %v12689 = vunpack.c.l.b16 %v12014
    %v12690 = vunpack.c.h.b16 %v12014
    %v12691 = vunpack.c.l.b16 %v12015
    %v12692 = vunpack.c.h.b16 %v12015
    %v12693 = vunpack.c.l.b16 %v12016
    %v12694 = vunpack.c.h.b16 %v12016
    %v12695 = vunpack.c.l.b16 %v12017
    %v12696 = vunpack.c.h.b16 %v12017
    %v12697 = vunpack.c.l.b16 %v12018
    %v12698 = vunpack.c.h.b16 %v12018
    %v12699 = vunpack.c.l.b16 %v12019
    %v12700 = vunpack.c.h.b16 %v12019
    %v12701 = vunpack.c.l.b16 %v12020
    %v12702 = vunpack.c.h.b16 %v12020
    %v12703 = vunpack.c.l.b16 %v12021
    %v12704 = vunpack.c.h.b16 %v12021
    %v12705 = vunpack.c.l.b16 %v12022
    %v12706 = vunpack.c.h.b16 %v12022
    %v12707 = vunpack.c.l.b16 %v12023
    %v12708 = vunpack.c.h.b16 %v12023
    %v12709 = vunpack.c.l.b16 %v12024
    %v12710 = vunpack.c.h.b16 %v12024
    %v12711 = vunpack.c.l.b16 %v12025
    %v12712 = vunpack.c.h.b16 %v12025
    %v12713 = vunpack.c.l.b16 %v12026
    %v12714 = vunpack.c.h.b16 %v12026
    %v12715 = vunpack.c.l.b16 %v12027
    %v12716 = vunpack.c.h.b16 %v12027
    %v12717 = vunpack.c.l.b16 %v12028
    %v12718 = vunpack.c.h.b16 %v12028
    %v12719 = vunpack.c.l.b16 %v12029
    %v12720 = vunpack.c.h.b16 %v12029
    %v12721 = vunpack.c.l.b16 %v12030
    %v12722 = vunpack.c.h.b16 %v12030
    %v12723 = vunpack.c.l.b16 %v12031
    %v12724 = vunpack.c.h.b16 %v12031
    %v12725 = vunpack.c.l.b16 %v12032
    %v12726 = vunpack.c.h.b16 %v12032
    %v12727 = vunpack.c.l.b16 %v12033
    %v12728 = vunpack.c.h.b16 %v12033
    %v12729 = vunpack.c.l.b16 %v12034
    %v12730 = vunpack.c.h.b16 %v12034
    %v12731 = vunpack.c.l.b16 %v12035
    %v12732 = vunpack.c.h.b16 %v12035
    %v12733 = vunpack.c.l.b16 %v12036
    %v12734 = vunpack.c.h.b16 %v12036
    %v12735 = vunpack.c.l.b16 %v12037
    %v12736 = vunpack.c.h.b16 %v12037
    %v12737 = vunpack.c.l.b16 %v12038
    %v12738 = vunpack.c.h.b16 %v12038
    %v12739 = vunpack.c.l.b16 %v12039
    %v12740 = vunpack.c.h.b16 %v12039
    %v12741 = vunpack.c.l.b16 %v12040
    %v12742 = vunpack.c.h.b16 %v12040
    %v12743 = vunpack.c.l.b16 %v12041
    %v12744 = vunpack.c.h.b16 %v12041
    %v12745 = vunpack.c.l.b16 %v12042
    %v12746 = vunpack.c.h.b16 %v12042
    %v12747 = vunpack.c.l.b16 %v12043
    %v12748 = vunpack.c.h.b16 %v12043
    %v12749 = vunpack.c.l.b16 %v12044
    %v12750 = vunpack.c.h.b16 %v12044
    %v12751 = vunpack.c.l.b16 %v12045
    %v12752 = vunpack.c.h.b16 %v12045
    %v12753 = vunpack.c.l.b16 %v12046
    %v12754 = vunpack.c.h.b16 %v12046
    %v12755 = vunpack.c.l.b16 %v12047
    %v12756 = vunpack.c.h.b16 %v12047
    %v12757 = vunpack.c.l.b16 %v12048
    %v12758 = vunpack.c.h.b16 %v12048
    %v12759 = vunpack.c.l.b16 %v12049
    %v12760 = vunpack.c.h.b16 %v12049
    %v12761 = vunpack.c.l.b16 %v12050
    %v12762 = vunpack.c.h.b16 %v12050
    %v12763 = vunpack.c.l.b16 %v12051
    %v12764 = vunpack.c.h.b16 %v12051
    %v12765 = vunpack.c.l.b16 %v12052
    %v12766 = vunpack.c.h.b16 %v12052
    %v12767 = vunpack.c.l.b16 %v12053
    %v12768 = vunpack.c.h.b16 %v12053
    %v12769 = vunpack.c.l.b16 %v12054
    %v12770 = vunpack.c.h.b16 %v12054
    %v12771 = vunpack.c.l.b16 %v12055
    %v12772 = vunpack.c.h.b16 %v12055
    %v12773 = vunpack.c.l.b16 %v12056
    %v12774 = vunpack.c.h.b16 %v12056
    %v12775 = vunpack.c.l.b16 %v12057
    %v12776 = vunpack.c.h.b16 %v12057
    %v12777 = vunpack.c.l.b16 %v12058
    %v12778 = vunpack.c.h.b16 %v12058
    %v12779 = vunpack.c.l.b16 %v12059
    %v12780 = vunpack.c.h.b16 %v12059
    %v12781 = vunpack.c.l.b16 %v12060
    %v12782 = vunpack.c.h.b16 %v12060
    %v12783 = vunpack.c.l.b16 %v12061
    %v12784 = vunpack.c.h.b16 %v12061
    %v12785 = vunpack.c.l.b16 %v12062
    %v12786 = vunpack.c.h.b16 %v12062
    %v12787 = vunpack.c.l.b16 %v12063
    %v12788 = vunpack.c.h.b16 %v12063
    %v12789 = vunpack.c.l.b16 %v12064
    %v12790 = vunpack.c.h.b16 %v12064
    %v12791 = vunpack.c.l.b16 %v12065
    %v12792 = vunpack.c.h.b16 %v12065
    %v12793 = vunpack.c.l.b16 %v12066
    %v12794 = vunpack.c.h.b16 %v12066
    %v12795 = vunpack.c.l.b16 %v12067
    %v12796 = vunpack.c.h.b16 %v12067
    %v12797 = vunpack.c.l.b16 %v12068
    %v12798 = vunpack.c.h.b16 %v12068
    %v12799 = vunpack.c.l.b16 %v12069
    %v12800 = vunpack.c.h.b16 %v12069
    %v12801 = vunpack.c.l.b16 %v12070
    %v12802 = vunpack.c.h.b16 %v12070
    %v12803 = vunpack.c.l.b16 %v12071
    %v12804 = vunpack.c.h.b16 %v12071
    %v12805 = vunpack.c.l.b16 %v12072
    %v12806 = vunpack.c.h.b16 %v12072
    %v12807 = vunpack.c.l.b16 %v12073
    %v12808 = vunpack.c.h.b16 %v12073
    %v12809 = vunpack.c.l.b16 %v12074
    %v12810 = vunpack.c.h.b16 %v12074
    %v12811 = vunpack.c.l.b16 %v12075
    %v12812 = vunpack.c.h.b16 %v12075
    %v12813 = vunpack.c.l.b16 %v12076
    %v12814 = vunpack.c.h.b16 %v12076
    %v12815 = vunpack.c.l.b16 %v12077
    %v12816 = vunpack.c.h.b16 %v12077
    %v12817 = vunpack.c.l.b16 %v12078
    %v12818 = vunpack.c.h.b16 %v12078
    %v12819 = vunpack.c.l.b16 %v12079
    %v12820 = vunpack.c.h.b16 %v12079
    %v12821 = vunpack.c.l.b16 %v12080
    %v12822 = vunpack.c.h.b16 %v12080
    %v12823 = vunpack.c.l.b16 %v12081
    %v12824 = vunpack.c.h.b16 %v12081
    %v12825 = vunpack.c.l.b16 %v12082
    %v12826 = vunpack.c.h.b16 %v12082
    %v12827 = vunpack.c.l.b16 %v12083
    %v12828 = vunpack.c.h.b16 %v12083
    %v12829 = vunpack.c.l.b16 %v12084
    %v12830 = vunpack.c.h.b16 %v12084
    %v12831 = vunpack.c.l.b16 %v12085
    %v12832 = vunpack.c.h.b16 %v12085
    %v12833 = vunpack.c.l.b16 %v12086
    %v12834 = vunpack.c.h.b16 %v12086
    %v12835 = vunpack.c.l.b16 %v12087
    %v12836 = vunpack.c.h.b16 %v12087
    %v12837 = vunpack.c.l.b16 %v12088
    %v12838 = vunpack.c.h.b16 %v12088
    %v12839 = vunpack.c.l.b16 %v12089
    %v12840 = vunpack.c.h.b16 %v12089
    %v12841 = vunpack.c.l.b16 %v12090
    %v12842 = vunpack.c.h.b16 %v12090
    %v12843 = vunpack.c.l.b16 %v12091
    %v12844 = vunpack.c.h.b16 %v12091
    %v12845 = vunpack.c.l.b16 %v12092
    %v12846 = vunpack.c.h.b16 %v12092
    %v12847 = vunpack.c.l.b16 %v12093
    %v12848 = vunpack.c.h.b16 %v12093
    %v12849 = vunpack.c.l.b16 %v12094
    %v12850 = vunpack.c.h.b16 %v12094
    %v12851 = vunpack.c.l.b16 %v12095
    %v12852 = vunpack.c.h.b16 %v12095
    %v12853 = vunpack.c.l.b16 %v12096
    %v12854 = vunpack.c.h.b16 %v12096
    %v12855 = vunpack.c.l.b16 %v12097
    %v12856 = vunpack.c.h.b16 %v12097
    %v12857 = vunpack.c.l.b16 %v12098
    %v12858 = vunpack.c.h.b16 %v12098
    %v12859 = vunpack.c.l.b16 %v12099
    %v12860 = vunpack.c.h.b16 %v12099
    %v12861 = vunpack.c.l.b16 %v12100
    %v12862 = vunpack.c.h.b16 %v12100
    %v12863 = vunpack.c.l.b16 %v12101
    %v12864 = vunpack.c.h.b16 %v12101
    %v12865 = vunpack.c.l.b16 %v12102
    %v12866 = vunpack.c.h.b16 %v12102
    %v12867 = vunpack.c.l.b16 %v12103
    %v12868 = vunpack.c.h.b16 %v12103
    %v12869 = vunpack.c.l.b16 %v12104
    %v12870 = vunpack.c.h.b16 %v12104
    %v12871 = vunpack.c.l.b16 %v12105
    %v12872 = vunpack.c.h.b16 %v12105
    %v12873 = vunpack.c.l.b16 %v12106
    %v12874 = vunpack.c.h.b16 %v12106
    %v12875 = vunpack.c.l.b16 %v12107
    %v12876 = vunpack.c.h.b16 %v12107
    %v12877 = vunpack.c.l.b16 %v12108
    %v12878 = vunpack.c.h.b16 %v12108
    %v12879 = vunpack.c.l.b16 %v12109
    %v12880 = vunpack.c.h.b16 %v12109
    %v12881 = vunpack.c.l.b16 %v12110
    %v12882 = vunpack.c.h.b16 %v12110
    %v12883 = vunpack.c.l.b16 %v12111
    %v12884 = vunpack.c.h.b16 %v12111
    %v12885 = vunpack.c.l.b16 %v12112
    %v12886 = vunpack.c.h.b16 %v12112
    %v12887 = vunpack.c.l.b16 %v12113
    %v12888 = vunpack.c.h.b16 %v12113
    %v12889 = vunpack.c.l.b16 %v12114
    %v12890 = vunpack.c.h.b16 %v12114
    %v12891 = vunpack.c.l.b16 %v12115
    %v12892 = vunpack.c.h.b16 %v12115
    %v12893 = vunpack.c.l.b16 %v12116
    %v12894 = vunpack.c.h.b16 %v12116
    %v12895 = vunpack.c.l.b16 %v12117
    %v12896 = vunpack.c.h.b16 %v12117
    %v12897 = vunpack.c.l.b16 %v12118
    %v12898 = vunpack.c.h.b16 %v12118
    %v12899 = vunpack.c.l.b16 %v12119
    %v12900 = vunpack.c.h.b16 %v12119
    %v12901 = vpack.c.b16 %v12391, %v12389
    %v12902 = vpack.c.b16 %v12392, %v12390
    %v12903 = vpack.c.b16 %v12395, %v12393
    %v12904 = vpack.c.b16 %v12396, %v12394
    %v12905 = vpack.c.b16 %v12399, %v12397
    %v12906 = vpack.c.b16 %v12400, %v12398
    %v12907 = vpack.c.b16 %v12403, %v12401
    %v12908 = vpack.c.b16 %v12404, %v12402
    %v12909 = vpack.c.b16 %v12407, %v12405
    %v12910 = vpack.c.b16 %v12408, %v12406
    %v12911 = vpack.c.b16 %v12411, %v12409
    %v12912 = vpack.c.b16 %v12412, %v12410
    %v12913 = vpack.c.b16 %v12415, %v12413
    %v12914 = vpack.c.b16 %v12416, %v12414
    %v12915 = vpack.c.b16 %v12419, %v12417
    %v12916 = vpack.c.b16 %v12420, %v12418
    %v12917 = vpack.c.b16 %v12423, %v12421
    %v12918 = vpack.c.b16 %v12424, %v12422
    %v12919 = vpack.c.b16 %v12427, %v12425
    %v12920 = vpack.c.b16 %v12428, %v12426
    %v12921 = vpack.c.b16 %v12431, %v12429
    %v12922 = vpack.c.b16 %v12432, %v12430
    %v12923 = vpack.c.b16 %v12435, %v12433
    %v12924 = vpack.c.b16 %v12436, %v12434
    %v12925 = vpack.c.b16 %v12439, %v12437
    %v12926 = vpack.c.b16 %v12440, %v12438
    %v12927 = vpack.c.b16 %v12443, %v12441
    %v12928 = vpack.c.b16 %v12444, %v12442
    %v12929 = vpack.c.b16 %v12447, %v12445
    %v12930 = vpack.c.b16 %v12448, %v12446
    %v12931 = vpack.c.b16 %v12451, %v12449
    %v12932 = vpack.c.b16 %v12452, %v12450
    %v12933 = vpack.c.b16 %v12455, %v12453
    %v12934 = vpack.c.b16 %v12456, %v12454
    %v12935 = vpack.c.b16 %v12459, %v12457
    %v12936 = vpack.c.b16 %v12460, %v12458
    %v12937 = vpack.c.b16 %v12463, %v12461
    %v12938 = vpack.c.b16 %v12464, %v12462
    %v12939 = vpack.c.b16 %v12467, %v12465
    %v12940 = vpack.c.b16 %v12468, %v12466
    %v12941 = vpack.c.b16 %v12471, %v12469
    %v12942 = vpack.c.b16 %v12472, %v12470
    %v12943 = vpack.c.b16 %v12475, %v12473
    %v12944 = vpack.c.b16 %v12476, %v12474
    %v12945 = vpack.c.b16 %v12479, %v12477
    %v12946 = vpack.c.b16 %v12480, %v12478
    %v12947 = vpack.c.b16 %v12483, %v12481
    %v12948 = vpack.c.b16 %v12484, %v12482
    %v12949 = vpack.c.b16 %v12487, %v12485
    %v12950 = vpack.c.b16 %v12488, %v12486
    %v12951 = vpack.c.b16 %v12491, %v12489
    %v12952 = vpack.c.b16 %v12492, %v12490
    %v12953 = vpack.c.b16 %v12495, %v12493
    %v12954 = vpack.c.b16 %v12496, %v12494
    %v12955 = vpack.c.b16 %v12499, %v12497
    %v12956 = vpack.c.b16 %v12500, %v12498
    %v12957 = vpack.c.b16 %v12503, %v12501
    %v12958 = vpack.c.b16 %v12504, %v12502
    %v12959 = vpack.c.b16 %v12507, %v12505
    %v12960 = vpack.c.b16 %v12508, %v12506
    %v12961 = vpack.c.b16 %v12511, %v12509
    %v12962 = vpack.c.b16 %v12512, %v12510
    %v12963 = vpack.c.b16 %v12515, %v12513
    %v12964 = vpack.c.b16 %v12516, %v12514
    %v12965 = vpack.c.b16 %v12519, %v12517
    %v12966 = vpack.c.b16 %v12520, %v12518
    %v12967 = vpack.c.b16 %v12523, %v12521
    %v12968 = vpack.c.b16 %v12524, %v12522
    %v12969 = vpack.c.b16 %v12527, %v12525
    %v12970 = vpack.c.b16 %v12528, %v12526
    %v12971 = vpack.c.b16 %v12531, %v12529
    %v12972 = vpack.c.b16 %v12532, %v12530
    %v12973 = vpack.c.b16 %v12535, %v12533
    %v12974 = vpack.c.b16 %v12536, %v12534
    %v12975 = vpack.c.b16 %v12539, %v12537
    %v12976 = vpack.c.b16 %v12540, %v12538
    %v12977 = vpack.c.b16 %v12543, %v12541
    %v12978 = vpack.c.b16 %v12544, %v12542
    %v12979 = vpack.c.b16 %v12547, %v12545
    %v12980 = vpack.c.b16 %v12548, %v12546
    %v12981 = vpack.c.b16 %v12551, %v12549
    %v12982 = vpack.c.b16 %v12552, %v12550
    %v12983 = vpack.c.b16 %v12555, %v12553
    %v12984 = vpack.c.b16 %v12556, %v12554
    %v12985 = vpack.c.b16 %v12559, %v12557
    %v12986 = vpack.c.b16 %v12560, %v12558
    %v12987 = vpack.c.b16 %v12563, %v12561
    %v12988 = vpack.c.b16 %v12564, %v12562
    %v12989 = vpack.c.b16 %v12567, %v12565
    %v12990 = vpack.c.b16 %v12568, %v12566
    %v12991 = vpack.c.b16 %v12571, %v12569
    %v12992 = vpack.c.b16 %v12572, %v12570
    %v12993 = vpack.c.b16 %v12575, %v12573
    %v12994 = vpack.c.b16 %v12576, %v12574
    %v12995 = vpack.c.b16 %v12579, %v12577
    %v12996 = vpack.c.b16 %v12580, %v12578
    %v12997 = vpack.c.b16 %v12583, %v12581
    %v12998 = vpack.c.b16 %v12584, %v12582
    %v12999 = vpack.c.b16 %v12587, %v12585
    %v13000 = vpack.c.b16 %v12588, %v12586
    %v13001 = vpack.c.b16 %v12591, %v12589
    %v13002 = vpack.c.b16 %v12592, %v12590
    %v13003 = vpack.c.b16 %v12595, %v12593
    %v13004 = vpack.c.b16 %v12596, %v12594
    %v13005 = vpack.c.b16 %v12599, %v12597
    %v13006 = vpack.c.b16 %v12600, %v12598
    %v13007 = vpack.c.b16 %v12603, %v12601
    %v13008 = vpack.c.b16 %v12604, %v12602
    %v13009 = vpack.c.b16 %v12607, %v12605
    %v13010 = vpack.c.b16 %v12608, %v12606
    %v13011 = vpack.c.b16 %v12611, %v12609
    %v13012 = vpack.c.b16 %v12612, %v12610
    %v13013 = vpack.c.b16 %v12615, %v12613
    %v13014 = vpack.c.b16 %v12616, %v12614
    %v13015 = vpack.c.b16 %v12619, %v12617
    %v13016 = vpack.c.b16 %v12620, %v12618
    %v13017 = vpack.c.b16 %v12623, %v12621
    %v13018 = vpack.c.b16 %v12624, %v12622
    %v13019 = vpack.c.b16 %v12627, %v12625
    %v13020 = vpack.c.b16 %v12628, %v12626
    %v13021 = vpack.c.b16 %v12631, %v12629
    %v13022 = vpack.c.b16 %v12632, %v12630
    %v13023 = vpack.c.b16 %v12635, %v12633
    %v13024 = vpack.c.b16 %v12636, %v12634
    %v13025 = vpack.c.b16 %v12639, %v12637
    %v13026 = vpack.c.b16 %v12640, %v12638
    %v13027 = vpack.c.b16 %v12643, %v12641
    %v13028 = vpack.c.b16 %v12644, %v12642
    %v13029 = vpack.c.b16 %v12647, %v12645
    %v13030 = vpack.c.b16 %v12648, %v12646
    %v13031 = vpack.c.b16 %v12651, %v12649
    %v13032 = vpack.c.b16 %v12652, %v12650
    %v13033 = vpack.c.b16 %v12655, %v12653
    %v13034 = vpack.c.b16 %v12656, %v12654
    %v13035 = vpack.c.b16 %v12659, %v12657
    %v13036 = vpack.c.b16 %v12660, %v12658
    %v13037 = vpack.c.b16 %v12663, %v12661
    %v13038 = vpack.c.b16 %v12664, %v12662
    %v13039 = vpack.c.b16 %v12667, %v12665
    %v13040 = vpack.c.b16 %v12668, %v12666
    %v13041 = vpack.c.b16 %v12671, %v12669
    %v13042 = vpack.c.b16 %v12672, %v12670
    %v13043 = vpack.c.b16 %v12675, %v12673
    %v13044 = vpack.c.b16 %v12676, %v12674
    %v13045 = vpack.c.b16 %v12679, %v12677
    %v13046 = vpack.c.b16 %v12680, %v12678
    %v13047 = vpack.c.b16 %v12683, %v12681
    %v13048 = vpack.c.b16 %v12684, %v12682
    %v13049 = vpack.c.b16 %v12687, %v12685
    %v13050 = vpack.c.b16 %v12688, %v12686
    %v13051 = vpack.c.b16 %v12691, %v12689
    %v13052 = vpack.c.b16 %v12692, %v12690
    %v13053 = vpack.c.b16 %v12695, %v12693
    %v13054 = vpack.c.b16 %v12696, %v12694
    %v13055 = vpack.c.b16 %v12699, %v12697
    %v13056 = vpack.c.b16 %v12700, %v12698
    %v13057 = vpack.c.b16 %v12703, %v12701
    %v13058 = vpack.c.b16 %v12704, %v12702
    %v13059 = vpack.c.b16 %v12707, %v12705
    %v13060 = vpack.c.b16 %v12708, %v12706
    %v13061 = vpack.c.b16 %v12711, %v12709
    %v13062 = vpack.c.b16 %v12712, %v12710
    %v13063 = vpack.c.b16 %v12715, %v12713
    %v13064 = vpack.c.b16 %v12716, %v12714
    %v13065 = vpack.c.b16 %v12719, %v12717
    %v13066 = vpack.c.b16 %v12720, %v12718
    %v13067 = vpack.c.b16 %v12723, %v12721
    %v13068 = vpack.c.b16 %v12724, %v12722
    %v13069 = vpack.c.b16 %v12727, %v12725
    %v13070 = vpack.c.b16 %v12728, %v12726
    %v13071 = vpack.c.b16 %v12731, %v12729
    %v13072 = vpack.c.b16 %v12732, %v12730
    %v13073 = vpack.c.b16 %v12735, %v12733
    %v13074 = vpack.c.b16 %v12736, %v12734
    %v13075 = vpack.c.b16 %v12739, %v12737
    %v13076 = vpack.c.b16 %v12740, %v12738
    %v13077 = vpack.c.b16 %v12743, %v12741
    %v13078 = vpack.c.b16 %v12744, %v12742
    %v13079 = vpack.c.b16 %v12747, %v12745
    %v13080 = vpack.c.b16 %v12748, %v12746
    %v13081 = vpack.c.b16 %v12751, %v12749
    %v13082 = vpack.c.b16 %v12752, %v12750
    %v13083 = vpack.c.b16 %v12755, %v12753
    %v13084 = vpack.c.b16 %v12756, %v12754
    %v13085 = vpack.c.b16 %v12759, %v12757
    %v13086 = vpack.c.b16 %v12760, %v12758
    %v13087 = vpack.c.b16 %v12763, %v12761
    %v13088 = vpack.c.b16 %v12764, %v12762
    %v13089 = vpack.c.b16 %v12767, %v12765
    %v13090 = vpack.c.b16 %v12768, %v12766
    %v13091 = vpack.c.b16 %v12771, %v12769
    %v13092 = vpack.c.b16 %v12772, %v12770
    %v13093 = vpack.c.b16 %v12775, %v12773
    %v13094 = vpack.c.b16 %v12776, %v12774
    %v13095 = vpack.c.b16 %v12779, %v12777
    %v13096 = vpack.c.b16 %v12780, %v12778
    %v13097 = vpack.c.b16 %v12783, %v12781
    %v13098 = vpack.c.b16 %v12784, %v12782
    %v13099 = vpack.c.b16 %v12787, %v12785
    %v13100 = vpack.c.b16 %v12788, %v12786
    %v13101 = vpack.c.b16 %v12791, %v12789
    %v13102 = vpack.c.b16 %v12792, %v12790
    %v13103 = vpack.c.b16 %v12795, %v12793
    %v13104 = vpack.c.b16 %v12796, %v12794
    %v13105 = vpack.c.b16 %v12799, %v12797
    %v13106 = vpack.c.b16 %v12800, %v12798
    %v13107 = vpack.c.b16 %v12803, %v12801
    %v13108 = vpack.c.b16 %v12804, %v12802
    %v13109 = vpack.c.b16 %v12807, %v12805
    %v13110 = vpack.c.b16 %v12808, %v12806
    %v13111 = vpack.c.b16 %v12811, %v12809
    %v13112 = vpack.c.b16 %v12812, %v12810
    %v13113 = vpack.c.b16 %v12815, %v12813
    %v13114 = vpack.c.b16 %v12816, %v12814
    %v13115 = vpack.c.b16 %v12819, %v12817
    %v13116 = vpack.c.b16 %v12820, %v12818
    %v13117 = vpack.c.b16 %v12823, %v12821
    %v13118 = vpack.c.b16 %v12824, %v12822
    %v13119 = vpack.c.b16 %v12827, %v12825
    %v13120 = vpack.c.b16 %v12828, %v12826
    %v13121 = vpack.c.b16 %v12831, %v12829
    %v13122 = vpack.c.b16 %v12832, %v12830
    %v13123 = vpack.c.b16 %v12835, %v12833
    %v13124 = vpack.c.b16 %v12836, %v12834
    %v13125 = vpack.c.b16 %v12839, %v12837
    %v13126 = vpack.c.b16 %v12840, %v12838
    %v13127 = vpack.c.b16 %v12843, %v12841
    %v13128 = vpack.c.b16 %v12844, %v12842
    %v13129 = vpack.c.b16 %v12847, %v12845
    %v13130 = vpack.c.b16 %v12848, %v12846
    %v13131 = vpack.c.b16 %v12851, %v12849
    %v13132 = vpack.c.b16 %v12852, %v12850
    %v13133 = vpack.c.b16 %v12855, %v12853
    %v13134 = vpack.c.b16 %v12856, %v12854
    %v13135 = vpack.c.b16 %v12859, %v12857
    %v13136 = vpack.c.b16 %v12860, %v12858
    %v13137 = vpack.c.b16 %v12863, %v12861
    %v13138 = vpack.c.b16 %v12864, %v12862
    %v13139 = vpack.c.b16 %v12867, %v12865
    %v13140 = vpack.c.b16 %v12868, %v12866
    %v13141 = vpack.c.b16 %v12871, %v12869
    %v13142 = vpack.c.b16 %v12872, %v12870
    %v13143 = vpack.c.b16 %v12875, %v12873
    %v13144 = vpack.c.b16 %v12876, %v12874
    %v13145 = vpack.c.b16 %v12879, %v12877
    %v13146 = vpack.c.b16 %v12880, %v12878
    %v13147 = vpack.c.b16 %v12883, %v12881
    %v13148 = vpack.c.b16 %v12884, %v12882
    %v13149 = vpack.c.b16 %v12887, %v12885
    %v13150 = vpack.c.b16 %v12888, %v12886
    %v13151 = vpack.c.b16 %v12891, %v12889
    %v13152 = vpack.c.b16 %v12892, %v12890
    %v13153 = vpack.c.b16 %v12895, %v12893
    %v13154 = vpack.c.b16 %v12896, %v12894
    %v13155 = vpack.c.b16 %v12899, %v12897
    %v13156 = vpack.c.b16 %v12900, %v12898
    %13413 = vmatprep.subr.bf16.mxu0 %v12902
    %13414 = vmatpush1.bf16.msra.mxu0 %v12901
    %13415 = vmatprep.subr.bf16.mxu0 %v12904
    %13416 = vmatpush1.bf16.msra.mxu0 %v12903
    %13417 = vmatprep.subr.bf16.mxu0 %v12906
    %13418 = vmatpush1.bf16.msra.mxu0 %v12905
    %13419 = vmatprep.subr.bf16.mxu0 %v12908
    %13420 = vmatpush1.bf16.msra.mxu0 %v12907
    %13421 = vmatprep.subr.bf16.mxu0 %v12910
    %13422 = vmatpush1.bf16.msra.mxu0 %v12909
    %13423 = vmatprep.subr.bf16.mxu0 %v12912
    %13424 = vmatpush1.bf16.msra.mxu0 %v12911
    %13425 = vmatprep.subr.bf16.mxu0 %v12914
    %13426 = vmatpush1.bf16.msra.mxu0 %v12913
    %13427 = vmatprep.subr.bf16.mxu0 %v12916
    %13428 = vmatpush1.bf16.msra.mxu0 %v12915
    %13429 = vmatprep.subr.bf16.mxu0 %v12918
    %13430 = vmatpush1.bf16.msra.mxu0 %v12917
    %13431 = vmatprep.subr.bf16.mxu0 %v12920
    %13432 = vmatpush1.bf16.msra.mxu0 %v12919
    %13433 = vmatprep.subr.bf16.mxu0 %v12922
    %13434 = vmatpush1.bf16.msra.mxu0 %v12921
    %13435 = vmatprep.subr.bf16.mxu0 %v12924
    %13436 = vmatpush1.bf16.msra.mxu0 %v12923
    %13437 = vmatprep.subr.bf16.mxu0 %v12926
    %13438 = vmatpush1.bf16.msra.mxu0 %v12925
    %13439 = vmatprep.subr.bf16.mxu0 %v12928
    %13440 = vmatpush1.bf16.msra.mxu0 %v12927
    %13441 = vmatprep.subr.bf16.mxu0 %v12930
    %13442 = vmatpush1.bf16.msra.mxu0 %v12929
    %13443 = vmatprep.subr.bf16.mxu0 %v12932
    %13444 = vmatpush1.bf16.msra.mxu0 %v12931
    %13445 = vmatprep.mubr.bf16.mxu0 %v11848
    %13446 = vmatmul.mubr.bf16.gmra.mrb[0].mxu0 %v11847
    %v13447 = vpop.f32.mrb[0].mxu0
    %v13448 = vadd.f32 %v12126, %v13447
    %v13449 = vpop.f32.mrb[0].mxu0
    %v13450 = vadd.f32 %v12130, %v13449
    %v13451 = vpop.f32.mrb[0].mxu0
    %v13452 = vpop.f32.mrb[0].mxu0
    %13453 = vdwg.mxu0
    %13454 = vmatprep.subr.bf16.mxu0 %v12934
    %13455 = vmatpush1.bf16.msra.mxu0 %v12933
    %13456 = vmatprep.subr.bf16.mxu0 %v12936
    %13457 = vmatpush1.bf16.msra.mxu0 %v12935
    %13458 = vmatprep.subr.bf16.mxu0 %v12938
    %13459 = vmatpush1.bf16.msra.mxu0 %v12937
    %13460 = vmatprep.subr.bf16.mxu0 %v12940
    %13461 = vmatpush1.bf16.msra.mxu0 %v12939
    %13462 = vmatprep.subr.bf16.mxu0 %v12942
    %13463 = vmatpush1.bf16.msra.mxu0 %v12941
    %13464 = vmatprep.subr.bf16.mxu0 %v12944
    %13465 = vmatpush1.bf16.msra.mxu0 %v12943
    %13466 = vmatprep.subr.bf16.mxu0 %v12946
    %13467 = vmatpush1.bf16.msra.mxu0 %v12945
    %13468 = vmatprep.subr.bf16.mxu0 %v12948
    %13469 = vmatpush1.bf16.msra.mxu0 %v12947
    %13470 = vmatprep.subr.bf16.mxu0 %v12950
    %13471 = vmatpush1.bf16.msra.mxu0 %v12949
    %13472 = vmatprep.subr.bf16.mxu0 %v12952
    %13473 = vmatpush1.bf16.msra.mxu0 %v12951
    %13474 = vmatprep.subr.bf16.mxu0 %v12954
    %13475 = vmatpush1.bf16.msra.mxu0 %v12953
    %13476 = vmatprep.subr.bf16.mxu0 %v12956
    %13477 = vmatpush1.bf16.msra.mxu0 %v12955
    %13478 = vmatprep.subr.bf16.mxu0 %v12958
    %13479 = vmatpush1.bf16.msra.mxu0 %v12957
    %13480 = vmatprep.subr.bf16.mxu0 %v12960
    %13481 = vmatpush1.bf16.msra.mxu0 %v12959
    %13482 = vmatprep.subr.bf16.mxu0 %v12962
    %13483 = vmatpush1.bf16.msra.mxu0 %v12961
    %13484 = vmatprep.subr.bf16.mxu0 %v12964
    %13485 = vmatpush1.bf16.msra.mxu0 %v12963
    %13486 = vmatprep.mubr.bf16.mxu0 %v11850
    %13487 = vmatmul.mubr.bf16.gmra.mrb[0].mxu0 %v11849
    %v13488 = vpop.f32.mrb[0].mxu0
    %v13489 = vadd.f32 %v13448, %v13488
    %v13490 = vpop.f32.mrb[0].mxu0
    %v13491 = vadd.f32 %v13450, %v13490
    %v13492 = vpop.f32.mrb[0].mxu0
    %v13493 = vpop.f32.mrb[0].mxu0
    %13494 = vdwg.mxu0
    %13495 = vmatprep.subr.bf16.mxu0 %v12966
    %13496 = vmatpush1.bf16.msra.mxu0 %v12965
    %13497 = vmatprep.subr.bf16.mxu0 %v12968
    %13498 = vmatpush1.bf16.msra.mxu0 %v12967
    %13499 = vmatprep.subr.bf16.mxu0 %v12970
    %13500 = vmatpush1.bf16.msra.mxu0 %v12969
    %13501 = vmatprep.subr.bf16.mxu0 %v12972
    %13502 = vmatpush1.bf16.msra.mxu0 %v12971
    %13503 = vmatprep.subr.bf16.mxu0 %v12974
    %13504 = vmatpush1.bf16.msra.mxu0 %v12973
    %13505 = vmatprep.subr.bf16.mxu0 %v12976
    %13506 = vmatpush1.bf16.msra.mxu0 %v12975
    %13507 = vmatprep.subr.bf16.mxu0 %v12978
    %13508 = vmatpush1.bf16.msra.mxu0 %v12977
    %13509 = vmatprep.subr.bf16.mxu0 %v12980
    %13510 = vmatpush1.bf16.msra.mxu0 %v12979
    %13511 = vmatprep.subr.bf16.mxu0 %v12982
    %13512 = vmatpush1.bf16.msra.mxu0 %v12981
    %13513 = vmatprep.subr.bf16.mxu0 %v12984
    %13514 = vmatpush1.bf16.msra.mxu0 %v12983
    %13515 = vmatprep.subr.bf16.mxu0 %v12986
    %13516 = vmatpush1.bf16.msra.mxu0 %v12985
    %13517 = vmatprep.subr.bf16.mxu0 %v12988
    %13518 = vmatpush1.bf16.msra.mxu0 %v12987
    %13519 = vmatprep.subr.bf16.mxu0 %v12990
    %13520 = vmatpush1.bf16.msra.mxu0 %v12989
    %13521 = vmatprep.subr.bf16.mxu0 %v12992
    %13522 = vmatpush1.bf16.msra.mxu0 %v12991
    %13523 = vmatprep.subr.bf16.mxu0 %v12994
    %13524 = vmatpush1.bf16.msra.mxu0 %v12993
    %13525 = vmatprep.subr.bf16.mxu0 %v12996
    %13526 = vmatpush1.bf16.msra.mxu0 %v12995
    %13527 = vmatprep.mubr.bf16.mxu0 %v11852
    %13528 = vmatmul.mubr.bf16.gmra.mrb[0].mxu0 %v11851
    %v13529 = vpop.f32.mrb[0].mxu0
    %v13530 = vadd.f32 %v13489, %v13529
    %v13531 = vpop.f32.mrb[0].mxu0
    %v13532 = vadd.f32 %v13491, %v13531
    %v13533 = vpop.f32.mrb[0].mxu0
    %v13534 = vpop.f32.mrb[0].mxu0
    %13535 = vdwg.mxu0
    %13536 = vmatprep.subr.bf16.mxu0 %v12998
    %13537 = vmatpush1.bf16.msra.mxu0 %v12997
    %13538 = vmatprep.subr.bf16.mxu0 %v13000
    %13539 = vmatpush1.bf16.msra.mxu0 %v12999
    %13540 = vmatprep.subr.bf16.mxu0 %v13002
    %13541 = vmatpush1.bf16.msra.mxu0 %v13001
    %13542 = vmatprep.subr.bf16.mxu0 %v13004
    %13543 = vmatpush1.bf16.msra.mxu0 %v13003
    %13544 = vmatprep.subr.bf16.mxu0 %v13006
    %13545 = vmatpush1.bf16.msra.mxu0 %v13005
    %13546 = vmatprep.subr.bf16.mxu0 %v13008
    %13547 = vmatpush1.bf16.msra.mxu0 %v13007
    %13548 = vmatprep.subr.bf16.mxu0 %v13010
    %13549 = vmatpush1.bf16.msra.mxu0 %v13009
    %13550 = vmatprep.subr.bf16.mxu0 %v13012
    %13551 = vmatpush1.bf16.msra.mxu0 %v13011
    %13552 = vmatprep.subr.bf16.mxu0 %v13014
    %13553 = vmatpush1.bf16.msra.mxu0 %v13013
    %13554 = vmatprep.subr.bf16.mxu0 %v13016
    %13555 = vmatpush1.bf16.msra.mxu0 %v13015
    %13556 = vmatprep.subr.bf16.mxu0 %v13018
    %13557 = vmatpush1.bf16.msra.mxu0 %v13017
    %13558 = vmatprep.subr.bf16.mxu0 %v13020
    %13559 = vmatpush1.bf16.msra.mxu0 %v13019
    %13560 = vmatprep.subr.bf16.mxu0 %v13022
    %13561 = vmatpush1.bf16.msra.mxu0 %v13021
    %13562 = vmatprep.subr.bf16.mxu0 %v13024
    %13563 = vmatpush1.bf16.msra.mxu0 %v13023
    %13564 = vmatprep.subr.bf16.mxu0 %v13026
    %13565 = vmatpush1.bf16.msra.mxu0 %v13025
    %13566 = vmatprep.subr.bf16.mxu0 %v13028
    %13567 = vmatpush1.bf16.msra.mxu0 %v13027
    %13568 = vmatprep.mubr.bf16.mxu0 %v11854
    %13569 = vmatmul.mubr.bf16.gmra.mrb[0].mxu0 %v11853
    %v13570 = vpop.f32.mrb[0].mxu0
    %v13571 = vadd.f32 %v13530, %v13570
    %v13572 = vpop.f32.mrb[0].mxu0
    %v13573 = vadd.f32 %v13532, %v13572
    %v13574 = vpop.f32.mrb[0].mxu0
    %v13575 = vpop.f32.mrb[0].mxu0
    %13576 = vdwg.mxu0
    %13577 = vmatprep.subr.bf16.mxu0 %v13030
    %13578 = vmatpush1.bf16.msra.mxu0 %v13029
    %13579 = vmatprep.subr.bf16.mxu0 %v13032
    %13580 = vmatpush1.bf16.msra.mxu0 %v13031
    %13581 = vmatprep.subr.bf16.mxu0 %v13034
    %13582 = vmatpush1.bf16.msra.mxu0 %v13033
    %13583 = vmatprep.subr.bf16.mxu0 %v13036
    %13584 = vmatpush1.bf16.msra.mxu0 %v13035
    %13585 = vmatprep.subr.bf16.mxu0 %v13038
    %13586 = vmatpush1.bf16.msra.mxu0 %v13037
    %13587 = vmatprep.subr.bf16.mxu0 %v13040
    %13588 = vmatpush1.bf16.msra.mxu0 %v13039
    %13589 = vmatprep.subr.bf16.mxu0 %v13042
    %13590 = vmatpush1.bf16.msra.mxu0 %v13041
    %13591 = vmatprep.subr.bf16.mxu0 %v13044
    %13592 = vmatpush1.bf16.msra.mxu0 %v13043
    %13593 = vmatprep.subr.bf16.mxu0 %v13046
    %13594 = vmatpush1.bf16.msra.mxu0 %v13045
    %13595 = vmatprep.subr.bf16.mxu0 %v13048
    %13596 = vmatpush1.bf16.msra.mxu0 %v13047
    %13597 = vmatprep.subr.bf16.mxu0 %v13050
    %13598 = vmatpush1.bf16.msra.mxu0 %v13049
    %13599 = vmatprep.subr.bf16.mxu0 %v13052
    %13600 = vmatpush1.bf16.msra.mxu0 %v13051
    %13601 = vmatprep.subr.bf16.mxu0 %v13054
    %13602 = vmatpush1.bf16.msra.mxu0 %v13053
    %13603 = vmatprep.subr.bf16.mxu0 %v13056
    %13604 = vmatpush1.bf16.msra.mxu0 %v13055
    %13605 = vmatprep.subr.bf16.mxu0 %v13058
    %13606 = vmatpush1.bf16.msra.mxu0 %v13057
    %13607 = vmatprep.subr.bf16.mxu0 %v13060
    %13608 = vmatpush1.bf16.msra.mxu0 %v13059
    %13609 = vmatprep.mubr.bf16.mxu0 %v11856
    %13610 = vmatmul.mubr.bf16.gmra.mrb[0].mxu0 %v11855
    %v13611 = vpop.f32.mrb[0].mxu0
    %v13612 = vadd.f32 %v13571, %v13611
    %v13613 = vpop.f32.mrb[0].mxu0
    %v13614 = vadd.f32 %v13573, %v13613
    %v13615 = vpop.f32.mrb[0].mxu0
    %v13616 = vpop.f32.mrb[0].mxu0
    %13617 = vdwg.mxu0
    %13618 = vmatprep.subr.bf16.mxu0 %v13062
    %13619 = vmatpush1.bf16.msra.mxu0 %v13061
    %13620 = vmatprep.subr.bf16.mxu0 %v13064
    %13621 = vmatpush1.bf16.msra.mxu0 %v13063
    %13622 = vmatprep.subr.bf16.mxu0 %v13066
    %13623 = vmatpush1.bf16.msra.mxu0 %v13065
    %13624 = vmatprep.subr.bf16.mxu0 %v13068
    %13625 = vmatpush1.bf16.msra.mxu0 %v13067
    %13626 = vmatprep.subr.bf16.mxu0 %v13070
    %13627 = vmatpush1.bf16.msra.mxu0 %v13069
    %13628 = vmatprep.subr.bf16.mxu0 %v13072
    %13629 = vmatpush1.bf16.msra.mxu0 %v13071
    %13630 = vmatprep.subr.bf16.mxu0 %v13074
    %13631 = vmatpush1.bf16.msra.mxu0 %v13073
    %13632 = vmatprep.subr.bf16.mxu0 %v13076
    %13633 = vmatpush1.bf16.msra.mxu0 %v13075
    %13634 = vmatprep.subr.bf16.mxu0 %v13078
    %13635 = vmatpush1.bf16.msra.mxu0 %v13077
    %13636 = vmatprep.subr.bf16.mxu0 %v13080
    %13637 = vmatpush1.bf16.msra.mxu0 %v13079
    %13638 = vmatprep.subr.bf16.mxu0 %v13082
    %13639 = vmatpush1.bf16.msra.mxu0 %v13081
    %13640 = vmatprep.subr.bf16.mxu0 %v13084
    %13641 = vmatpush1.bf16.msra.mxu0 %v13083
    %13642 = vmatprep.subr.bf16.mxu0 %v13086
    %13643 = vmatpush1.bf16.msra.mxu0 %v13085
    %13644 = vmatprep.subr.bf16.mxu0 %v13088
    %13645 = vmatpush1.bf16.msra.mxu0 %v13087
    %13646 = vmatprep.subr.bf16.mxu0 %v13090
    %13647 = vmatpush1.bf16.msra.mxu0 %v13089
    %13648 = vmatprep.subr.bf16.mxu0 %v13092
    %13649 = vmatpush1.bf16.msra.mxu0 %v13091
    %13650 = vmatprep.mubr.bf16.mxu0 %v11858
    %13651 = vmatmul.mubr.bf16.gmra.mrb[0].mxu0 %v11857
    %v13652 = vpop.f32.mrb[0].mxu0
    %v13653 = vadd.f32 %v13612, %v13652
    %v13654 = vpop.f32.mrb[0].mxu0
    %v13655 = vadd.f32 %v13614, %v13654
    %v13656 = vpop.f32.mrb[0].mxu0
    %v13657 = vpop.f32.mrb[0].mxu0
    %13658 = vdwg.mxu0
    %13659 = vmatprep.subr.bf16.mxu0 %v13094
    %13660 = vmatpush1.bf16.msra.mxu0 %v13093
    %13661 = vmatprep.subr.bf16.mxu0 %v13096
    %13662 = vmatpush1.bf16.msra.mxu0 %v13095
    %13663 = vmatprep.subr.bf16.mxu0 %v13098
    %13664 = vmatpush1.bf16.msra.mxu0 %v13097
    %13665 = vmatprep.subr.bf16.mxu0 %v13100
    %13666 = vmatpush1.bf16.msra.mxu0 %v13099
    %13667 = vmatprep.subr.bf16.mxu0 %v13102
    %13668 = vmatpush1.bf16.msra.mxu0 %v13101
    %13669 = vmatprep.subr.bf16.mxu0 %v13104
    %13670 = vmatpush1.bf16.msra.mxu0 %v13103
    %13671 = vmatprep.subr.bf16.mxu0 %v13106
    %13672 = vmatpush1.bf16.msra.mxu0 %v13105
    %13673 = vmatprep.subr.bf16.mxu0 %v13108
    %13674 = vmatpush1.bf16.msra.mxu0 %v13107
    %13675 = vmatprep.subr.bf16.mxu0 %v13110
    %13676 = vmatpush1.bf16.msra.mxu0 %v13109
    %13677 = vmatprep.subr.bf16.mxu0 %v13112
    %13678 = vmatpush1.bf16.msra.mxu0 %v13111
    %13679 = vmatprep.subr.bf16.mxu0 %v13114
    %13680 = vmatpush1.bf16.msra.mxu0 %v13113
    %13681 = vmatprep.subr.bf16.mxu0 %v13116
    %13682 = vmatpush1.bf16.msra.mxu0 %v13115
    %13683 = vmatprep.subr.bf16.mxu0 %v13118
    %13684 = vmatpush1.bf16.msra.mxu0 %v13117
    %13685 = vmatprep.subr.bf16.mxu0 %v13120
    %13686 = vmatpush1.bf16.msra.mxu0 %v13119
    %13687 = vmatprep.subr.bf16.mxu0 %v13122
    %13688 = vmatpush1.bf16.msra.mxu0 %v13121
    %13689 = vmatprep.subr.bf16.mxu0 %v13124
    %13690 = vmatpush1.bf16.msra.mxu0 %v13123
    %13691 = vmatprep.mubr.bf16.mxu0 %v11860
    %13692 = vmatmul.mubr.bf16.gmra.mrb[0].mxu0 %v11859
    %v13693 = vpop.f32.mrb[0].mxu0
    %v13694 = vadd.f32 %v13653, %v13693
    %v13695 = vpop.f32.mrb[0].mxu0
    %v13696 = vadd.f32 %v13655, %v13695
    %v13697 = vpop.f32.mrb[0].mxu0
    %v13698 = vpop.f32.mrb[0].mxu0
    %13699 = vdwg.mxu0
    %13700 = vmatprep.subr.bf16.mxu0 %v13126
    %13701 = vmatpush1.bf16.msra.mxu0 %v13125
    %13702 = vmatprep.subr.bf16.mxu0 %v13128
    %13703 = vmatpush1.bf16.msra.mxu0 %v13127
    %13704 = vmatprep.subr.bf16.mxu0 %v13130
    %13705 = vmatpush1.bf16.msra.mxu0 %v13129
    %13706 = vmatprep.subr.bf16.mxu0 %v13132
    %13707 = vmatpush1.bf16.msra.mxu0 %v13131
    %13708 = vmatprep.subr.bf16.mxu0 %v13134
    %13709 = vmatpush1.bf16.msra.mxu0 %v13133
    %13710 = vmatprep.subr.bf16.mxu0 %v13136
    %13711 = vmatpush1.bf16.msra.mxu0 %v13135
    %13712 = vmatprep.subr.bf16.mxu0 %v13138
    %13713 = vmatpush1.bf16.msra.mxu0 %v13137
    %13714 = vmatprep.subr.bf16.mxu0 %v13140
    %13715 = vmatpush1.bf16.msra.mxu0 %v13139
    %13716 = vmatprep.subr.bf16.mxu0 %v13142
    %13717 = vmatpush1.bf16.msra.mxu0 %v13141
    %13718 = vmatprep.subr.bf16.mxu0 %v13144
    %13719 = vmatpush1.bf16.msra.mxu0 %v13143
    %13720 = vmatprep.subr.bf16.mxu0 %v13146
    %13721 = vmatpush1.bf16.msra.mxu0 %v13145
    %13722 = vmatprep.subr.bf16.mxu0 %v13148
    %13723 = vmatpush1.bf16.msra.mxu0 %v13147
    %13724 = vmatprep.subr.bf16.mxu0 %v13150
    %13725 = vmatpush1.bf16.msra.mxu0 %v13149
    %13726 = vmatprep.subr.bf16.mxu0 %v13152
    %13727 = vmatpush1.bf16.msra.mxu0 %v13151
    %13728 = vmatprep.subr.bf16.mxu0 %v13154
    %13729 = vmatpush1.bf16.msra.mxu0 %v13153
    %13730 = vmatprep.subr.bf16.mxu0 %v13156
    %13731 = vmatpush1.bf16.msra.mxu0 %v13155
    %13732 = vmatprep.mubr.bf16.mxu0 %v11862
    %13733 = vmatmul.mubr.bf16.gmra.mrb[0].mxu0 %v11861
    %v13734 = vpop.f32.mrb[0].mxu0
    %v13735 = vadd.f32 %v13694, %v13734
    %v13736 = vpop.f32.mrb[0].mxu0
    %v13737 = vadd.f32 %v13696, %v13736
    %v13738 = vpop.f32.mrb[0].mxu0
    %v13739 = vpop.f32.mrb[0].mxu0
    %13740 = vdwg.mxu0
    %v13741 = vadd.f32 %v9877, %v13735
    %v13742 = vadd.f32 %v9878, %v13737
    %s13743 = scalar_lea.vmem [#allocation23], 4
    %v13744 = vld [vmem:[%s13743] sm:$0x3]
    %s13745 = scalar_lea.vmem [#allocation25], 4
    %v13746 = vld [vmem:[%s13745] sm:$0x3]
    %v13747 = vadd.f32 %v13741, %v13742
    %13748 = vadd.xlane.f32.xlu0 %v13747
    %v13749 = vpop.xlane.xlu0 %13748
    %v13750 = vmul.f32 %v13749, %v933
    %v13751 = vsub.f32 %v13741, %v13750
    %v13752 = vsub.f32 %v13742, %v13750
    %v13753 = vmul.f32 %v13751, %v13751
    %v13754 = vmul.f32 %v13752, %v13752
    %v13755 = vadd.f32 %v13753, %v13754
    %13756 = vadd.xlane.f32.xlu0 %v13755
    %v13757 = vpop.xlane.xlu0 %13756
    %v13758 = vmul.f32 %v13757, %v933
    %v13759 = vadd.f32 %v13758, 1e-05
    %v13760 = vrsqrt.pop %v13759
    %v13761 = vmul.f32 %v13751, %v13760
    %v13762 = vmul.f32 %v13752, %v13760
    %v13764 = vlaneseq
    %v13765 = vshrl.u32 %v13764, 7
    %v13766 = vsub.s32 0, %v13765
    %v13767 = vrot.slane %v13744, %v13766
    %v13768 = vlaneseq
    %v13769 = vshrl.u32 %v13768, 7
    %v13770 = vsub.s32 1, %v13769
    %v13771 = vrot.slane %v13744, %v13770
    %v13774 = vmul.f32 %v13761, %v13767
    %v13775 = vmul.f32 %v13762, %v13771
    %v13777 = vlaneseq
    %v13778 = vshrl.u32 %v13777, 7
    %v13779 = vsub.s32 0, %v13778
    %v13780 = vrot.slane %v13746, %v13779
    %v13781 = vlaneseq
    %v13782 = vshrl.u32 %v13781, 7
    %v13783 = vsub.s32 1, %v13782
    %v13784 = vrot.slane %v13746, %v13783
    %v13787 = vadd.f32 %v13774, %v13780
    %v13788 = vadd.f32 %v13775, %v13784
    %v13789 = vpack.c.bf16 %v13787, %v13787
    %v13790 = vpack.c.bf16 %v13788, %v13788
    %v13791 = vld [vmem:[#allocation26] sm:$0xf]
    %v13792 = vld [vmem:[#allocation26 + $0x4] sm:$0xf]
    %v13793 = vld [vmem:[#allocation26 + $0x8] sm:$0xf]
    %v13794 = vld [vmem:[#allocation26 + $0xc] sm:$0xf]
    %v13795 = vld [vmem:[#allocation26 + $0x10] sm:$0xf]
    %v13796 = vld [vmem:[#allocation26 + $0x14] sm:$0xf]
    %v13797 = vld [vmem:[#allocation26 + $0x18] sm:$0xf]
    %v13798 = vld [vmem:[#allocation26 + $0x1c] sm:$0xf]
    %v13799 = vld [vmem:[#allocation26 + $0x20] sm:$0xf]
    %v13800 = vld [vmem:[#allocation26 + $0x24] sm:$0xf]
    %v13801 = vld [vmem:[#allocation26 + $0x28] sm:$0xf]
    %v13802 = vld [vmem:[#allocation26 + $0x2c] sm:$0xf]
    %v13803 = vld [vmem:[#allocation26 + $0x30] sm:$0xf]
    %v13804 = vld [vmem:[#allocation26 + $0x34] sm:$0xf]
    %v13805 = vld [vmem:[#allocation26 + $0x38] sm:$0xf]
    %v13806 = vld [vmem:[#allocation26 + $0x3c] sm:$0xf]
    %v13807 = vld [vmem:[#allocation26 + $0x40] sm:$0xf]
    %v13808 = vld [vmem:[#allocation26 + $0x44] sm:$0xf]
    %v13809 = vld [vmem:[#allocation26 + $0x48] sm:$0xf]
    %v13810 = vld [vmem:[#allocation26 + $0x4c] sm:$0xf]
    %v13811 = vld [vmem:[#allocation26 + $0x50] sm:$0xf]
    %v13812 = vld [vmem:[#allocation26 + $0x54] sm:$0xf]
    %v13813 = vld [vmem:[#allocation26 + $0x58] sm:$0xf]
    %v13814 = vld [vmem:[#allocation26 + $0x5c] sm:$0xf]
    %v13815 = vld [vmem:[#allocation26 + $0x60] sm:$0xf]
    %v13816 = vld [vmem:[#allocation26 + $0x64] sm:$0xf]
    %v13817 = vld [vmem:[#allocation26 + $0x68] sm:$0xf]
    %v13818 = vld [vmem:[#allocation26 + $0x6c] sm:$0xf]
    %v13819 = vld [vmem:[#allocation26 + $0x70] sm:$0xf]
    %v13820 = vld [vmem:[#allocation26 + $0x74] sm:$0xf]
    %v13821 = vld [vmem:[#allocation26 + $0x78] sm:$0xf]
    %v13822 = vld [vmem:[#allocation26 + $0x7c] sm:$0xf]
    %v13823 = vld [vmem:[#allocation28] sm:$0x1]
    %v13825 = vlaneseq
    %v13826 = vshrl.u32 %v13825, 7
    %v13827 = vsub.s32 0, %v13826
    %v13828 = vrot.slane %v13823, %v13827
    %v13862 = vunpack.c.l.b16 %v13791
    %v13863 = vunpack.c.l.b16 %v13792
    %v13864 = vunpack.c.l.b16 %v13793
    %v13865 = vunpack.c.l.b16 %v13794
    %v13866 = vunpack.c.l.b16 %v13795
    %v13867 = vunpack.c.l.b16 %v13796
    %v13868 = vunpack.c.l.b16 %v13797
    %v13869 = vunpack.c.l.b16 %v13798
    %v13870 = vunpack.c.l.b16 %v13799
    %v13871 = vunpack.c.l.b16 %v13800
    %v13872 = vunpack.c.l.b16 %v13801
    %v13873 = vunpack.c.l.b16 %v13802
    %v13874 = vunpack.c.l.b16 %v13803
    %v13875 = vunpack.c.l.b16 %v13804
    %v13876 = vunpack.c.l.b16 %v13805
    %v13877 = vunpack.c.l.b16 %v13806
    %v13878 = vunpack.c.l.b16 %v13807
    %v13879 = vunpack.c.l.b16 %v13808
    %v13880 = vunpack.c.l.b16 %v13809
    %v13881 = vunpack.c.l.b16 %v13810
    %v13882 = vunpack.c.l.b16 %v13811
    %v13883 = vunpack.c.l.b16 %v13812
    %v13884 = vunpack.c.l.b16 %v13813
    %v13885 = vunpack.c.l.b16 %v13814
    %v13886 = vunpack.c.l.b16 %v13815
    %v13887 = vunpack.c.l.b16 %v13816
    %v13888 = vunpack.c.l.b16 %v13817
    %v13889 = vunpack.c.l.b16 %v13818
    %v13890 = vunpack.c.l.b16 %v13819
    %v13891 = vunpack.c.l.b16 %v13820
    %v13892 = vunpack.c.l.b16 %v13821
    %v13893 = vunpack.c.l.b16 %v13822
    %v13894 = vpack.c.b16 %v13863, %v13862
    %v13895 = vpack.c.b16 %v13865, %v13864
    %v13896 = vpack.c.b16 %v13867, %v13866
    %v13897 = vpack.c.b16 %v13869, %v13868
    %v13898 = vpack.c.b16 %v13871, %v13870
    %v13899 = vpack.c.b16 %v13873, %v13872
    %v13900 = vpack.c.b16 %v13875, %v13874
    %v13901 = vpack.c.b16 %v13877, %v13876
    %v13902 = vpack.c.b16 %v13879, %v13878
    %v13903 = vpack.c.b16 %v13881, %v13880
    %v13904 = vpack.c.b16 %v13883, %v13882
    %v13905 = vpack.c.b16 %v13885, %v13884
    %v13906 = vpack.c.b16 %v13887, %v13886
    %v13907 = vpack.c.b16 %v13889, %v13888
    %v13908 = vpack.c.b16 %v13891, %v13890
    %v13909 = vpack.c.b16 %v13893, %v13892
    %13926 = vmatprep.subr.bf16.mxu0 0
    %13927 = vmatpush1.bf16.msra.mxu0 %v13894
    %13928 = vmatprep.subr.bf16.mxu0 0
    %13929 = vmatpush1.bf16.msra.mxu0 %v13895
    %13930 = vmatprep.subr.bf16.mxu0 0
    %13931 = vmatpush1.bf16.msra.mxu0 %v13896
    %13932 = vmatprep.subr.bf16.mxu0 0
    %13933 = vmatpush1.bf16.msra.mxu0 %v13897
    %13934 = vmatprep.subr.bf16.mxu0 0
    %13935 = vmatpush1.bf16.msra.mxu0 %v13898
    %13936 = vmatprep.subr.bf16.mxu0 0
    %13937 = vmatpush1.bf16.msra.mxu0 %v13899
    %13938 = vmatprep.subr.bf16.mxu0 0
    %13939 = vmatpush1.bf16.msra.mxu0 %v13900
    %13940 = vmatprep.subr.bf16.mxu0 0
    %13941 = vmatpush1.bf16.msra.mxu0 %v13901
    %13942 = vmatprep.subr.bf16.mxu0 0
    %13943 = vmatpush1.bf16.msra.mxu0 %v13902
    %13944 = vmatprep.subr.bf16.mxu0 0
    %13945 = vmatpush1.bf16.msra.mxu0 %v13903
    %13946 = vmatprep.subr.bf16.mxu0 0
    %13947 = vmatpush1.bf16.msra.mxu0 %v13904
    %13948 = vmatprep.subr.bf16.mxu0 0
    %13949 = vmatpush1.bf16.msra.mxu0 %v13905
    %13950 = vmatprep.subr.bf16.mxu0 0
    %13951 = vmatpush1.bf16.msra.mxu0 %v13906
    %13952 = vmatprep.subr.bf16.mxu0 0
    %13953 = vmatpush1.bf16.msra.mxu0 %v13907
    %13954 = vmatprep.subr.bf16.mxu0 0
    %13955 = vmatpush1.bf16.msra.mxu0 %v13908
    %13956 = vmatprep.subr.bf16.mxu0 0
    %13957 = vmatpush1.bf16.msra.mxu0 %v13909
    %13958 = vmatprep.mubr.bf16.mxu0 %v13790
    %13959 = vmatmul.mubr.bf16.gmra.mrb[0].mxu0 %v13789
    %v13960 = vpop.f32.mrb[0].mxu0
    %v13961 = vadd.f32 %v13828, %v13960
    %v13962 = vpop.f32.mrb[0].mxu0
    %v13963 = vpop.f32.mrb[0].mxu0
    %v13964 = vpop.f32.mrb[0].mxu0
    %13965 = vdwg.mxu0
    %13966 = vst [vmem:[#allocation29] sm:$0xff] %v13961
    // Predicated region
    $region138: #{tpu_custom_call.1} parent=1 // pred_check
      _
    $region139: #{tpu_custom_call.1} parent=1 // pred_check_branch
      %13968 = sbr.rel (0) target = $region141
    $region140: #{tpu_custom_call.1} parent=1 // pred_region
      %s13970 = ssub.s32 128, 128
      %13971 = vsyncadd [#allocation4], %s13970
      %s13973 = sshll.u32 [#allocation29], 4
      %s13974 = int_to_ptr.vmem [resolvable:$true] %s13973
      %13976 = dma.vmem_to_hbm [thread:$0]  %s13974, 128, %s17, [#allocation4]
    $region141: #{tpu_custom_call.1} parent=1 // pred_fallthru
      _
    // Predicated region
    $region142: #{tpu_custom_call.1} parent=1 // pred_check
      _
    $region143: #{tpu_custom_call.1} parent=1 // pred_check_branch
      %13978 = sbr.rel (0) target = $region145
    $region144: #{tpu_custom_call.1} parent=1 // pred_region
      %13979 = dma.done [#allocation4], 128
    $region145: #{tpu_custom_call.1} parent=1 // pred_fallthru
      _
    %13980 = vsyncpa [#allocation3], 1
    %13981 = vsyncpa [#allocation6], 1
    %13982 = vsyncpa [#allocation9], 1
    %13983 = vsyncpa [#allocation12], 1
    %13984 = vsyncpa [#allocation15], 1
    %13985 = vsyncpa [#allocation18], 1
    %13986 = vsyncpa [#allocation21], 1
    %13987 = vsyncpa [#allocation24], 1
    %13988 = vsyncpa [#allocation27], 1
    %13989 = vsyncpa [#allocation4], 1

</llo_original>
